<compile_context>
chip_gen: v7x
topology: tpu7x:2x2x1
jax: 0.10.0
libtpu: 0.0.40
codegen_flags: <defaults>
</compile_context>

<pallas_src>
import math

import jax
import jax.numpy as jnp
from jax import lax
from jax.experimental import pallas as pl
from jax.experimental.pallas import tpu as pltpu

LANE = 128  # padded feature width (lane axis); MXU-native on all generations


# ----------------------------- Pallas kernel ------------------------------

def _make_score_kernel(log_sigma, nlayers):
    inv_2ls = 1.0 / (2.0 * log_sigma)
    quarter_pi = 0.25 * math.pi  # 2*pi * (1/4 from ln_std) * (1/2 from log(var))

    def kernel(x_ref, t_ref, c_ref, w_ref, o_ref):
        # Per-row (BM, 1) column statistics.
        t = t_ref[...]
        var = (jnp.exp((2.0 * log_sigma) * t) - 1.0) * inv_2ls   # std**2
        inv_s1v = lax.rsqrt(1.0 + var)                            # 1/sqrt(1+std^2)
        phase = quarter_pi * jnp.log(var)                         # 2*pi*log(std)/4

        # Fused GaussianFourierProjection + concat, one transcendental:
        #   lanes [0, ndim)               -> x / sqrt(1 + std**2)   (wf=0, off=0)
        #   lanes [ndim, ndim+half)       -> sin(phase * W)         (off=0)
        #   lanes [ndim+half, ndim+2half) -> sin(phase * W + pi/2) = cos(phase * W)
        #   padding lanes                 -> sin(0) = 0
        wf_comb = c_ref[nlayers:nlayers + 1, :]        # (1, LANE)
        offset = c_ref[nlayers + 1:nlayers + 2, :]     # (1, LANE)
        sc = jnp.sin(phase * wf_comb + offset)         # (BM, LANE)
        h = x_ref[...] * inv_s1v + sc                  # fused concat input

        # MLP: (nlayers-1) x [Linear + Tanh], then final Linear.  Weights are
        # indexed statically from the stacked (nlayers, LANE, LANE) operand,
        # biases from rows [0, nlayers) of the consts operand.
        for i in range(nlayers - 1):
            h = jnp.tanh(
                jnp.dot(h, w_ref[i], preferred_element_type=jnp.float32)
                + c_ref[i:i + 1, :])
        pred = (jnp.dot(h, w_ref[nlayers - 1],
                        preferred_element_type=jnp.float32)
                + c_ref[nlayers - 1:nlayers, :])

        # pred / std - x / (1 + std**2).  x is re-read here (cheap vld) rather
        # than kept live across the MLP; 1/(1+std^2) == inv_s1v**2 (no divide).
        inv_std = lax.rsqrt(var)
        o_ref[...] = pred * inv_std - x_ref[...] * (inv_s1v * inv_s1v)

    return kernel


# ----------------------------- Host-side glue ------------------------------

def _round_up(n, m):
    return ((n + m - 1) // m) * m


def _choose_bm(batch):
    """Batch tile: single grid step on single-TC chips (v5e / v6e); >= 2
    parallel grid steps on v7x (2 TensorCores per chip)."""
    try:
        kind = jax.devices()[0].device_kind.lower()
    except Exception:
        kind = ""
    multi_tc = ("v7" in kind) or ("7x" in kind)
    b8 = _round_up(max(batch, 1), 8)
    if multi_tc and b8 >= 16:
        bm = min(256, _round_up(b8 // 2, 8))
    else:
        bm = min(512, b8)
    return max(8, bm)


def init_params(key, ndim=2, nlayers=5, nhidden=50, time_embed_dim=10):
    """Deterministic init matching the PyTorch module's parameter shapes."""
    half = time_embed_dim // 2
    keys = jax.random.split(key, 2 * nlayers + 1)
    wf = jax.random.normal(keys[0], (half,), jnp.float32) * 1.0  # scale=1

    dims = [time_embed_dim + ndim] + [nhidden] * (nlayers - 1) + [ndim]
    weights, biases = [], []
    for i in range(nlayers):
        bound = 1.0 / math.sqrt(dims[i])
        w = jax.random.uniform(keys[2 * i + 1], (dims[i], dims[i + 1]),
                               jnp.float32, -bound, bound)  # stored as (in, out)
        b = jax.random.uniform(keys[2 * i + 2], (dims[i + 1],),
                               jnp.float32, -bound, bound)
        weights.append(w)
        biases.append(b)
    return wf, weights, biases


def pack_params(params, ndim=2):
    """One-time padding/packing of all parameters (hoisted out of forward).

    Returns:
      wstack: (nlayers, LANE, LANE)   zero-padded, stacked Linear weights
      consts: (nlayers + 2, LANE)     rows [0,nlayers) = biases,
                                      row nlayers     = wf on sin AND cos lanes,
                                      row nlayers + 1 = pi/2 on the cos lanes.
    """
    wf, weights, biases = params
    half = wf.shape[0]
    nlayers = len(weights)

    wstack = jnp.zeros((nlayers, LANE, LANE), jnp.float32)
    consts = jnp.zeros((nlayers + 2, LANE), jnp.float32)
    for i, (w, b) in enumerate(zip(weights, biases)):
        wstack = wstack.at[i, :w.shape[0], :w.shape[1]].set(w.astype(jnp.float32))
        consts = consts.at[i, :b.shape[0]].set(b.astype(jnp.float32))
    wf32 = wf.astype(jnp.float32)
    consts = consts.at[nlayers, ndim:ndim + half].set(wf32)
    consts = consts.at[nlayers, ndim + half:ndim + 2 * half].set(wf32)
    consts = consts.at[nlayers + 1, ndim + half:ndim + 2 * half].set(math.pi / 2.0)
    return wstack, consts


def score_model_forward(x, t, packed, sigma, ndim=2, bm=None):
    wstack, consts = packed
    nlayers = int(wstack.shape[0])
    B = x.shape[0]

    if bm is None:
        bm = _choose_bm(B)
    Bp = _round_up(B, bm)

    # Pad activations; padded batch rows get t=1.0 (valid value, rows sliced off).
    x_p = jnp.zeros((Bp, LANE), jnp.float32).at[:B, :ndim].set(x.astype(jnp.float32))
    t_p = jnp.ones((Bp, 1), jnp.float32).at[:B, 0].set(t.astype(jnp.float32))

    cost = pl.CostEstimate(
        flops=2 * Bp * LANE * LANE * nlayers,
        transcendentals=Bp * LANE * nlayers,      # (nlayers-1) tanh + 1 fused sin
        bytes_accessed=4 * (2 * Bp * LANE + Bp
                            + nlayers * LANE * LANE + (nlayers + 2) * LANE),
    )
    kernel = _make_score_kernel(math.log(float(sigma)), nlayers)
    grid = (Bp // bm,)

    def _run(single_buffer):
        if single_buffer:
            # Grid-invariant operands: fetched once, single VMEM buffer.
            c_spec = pl.BlockSpec((nlayers + 2, LANE), lambda i: (0, 0),
                                  pipeline_mode=pl.Buffered(1))
            w_spec = pl.BlockSpec((nlayers, LANE, LANE), lambda i: (0, 0, 0),
                                  pipeline_mode=pl.Buffered(1))
        else:
            c_spec = pl.BlockSpec((nlayers + 2, LANE), lambda i: (0, 0))
            w_spec = pl.BlockSpec((nlayers, LANE, LANE), lambda i: (0, 0, 0))
        in_specs = [
            pl.BlockSpec((bm, LANE), lambda i: (i, 0)),   # x tile
            pl.BlockSpec((bm, 1), lambda i: (i, 0)),      # t tile
            c_spec,                                        # biases + Fourier consts
            w_spec,                                        # stacked weights
        ]
        return pl.pallas_call(
            kernel,
            out_shape=jax.ShapeDtypeStruct((Bp, LANE), jnp.float32),
            grid=grid,
            in_specs=in_specs,
            out_specs=pl.BlockSpec((bm, LANE), lambda i: (i, 0)),
            compiler_params=pltpu.CompilerParams(
                dimension_semantics=("parallel",)),
            cost_estimate=cost,
        )(x_p, t_p, consts, wstack)

    try:
        out = _run(True)
    except Exception:
        # pipeline_mode / pl.Buffered(1) not supported on this jax build;
        # default double-buffering of the (tiny) constants is harmless.
        out = _run(False)

    return out[:B, :ndim]


# ----------------------------- Pure-JAX reference --------------------------

def reference_forward(x, t, params, sigma):
    wf, weights, biases = params
    std = jnp.sqrt((sigma ** (2.0 * t) - 1.0) / (2.0 * math.log(sigma)))[:, None]
    ln_std = jnp.log(std) / 4.0
    t_proj = ln_std * wf[None, :] * 2.0 * math.pi
    t_embed = jnp.concatenate([jnp.sin(t_proj), jnp.cos(t_proj)], axis=-1)
    h = jnp.concatenate([x / jnp.sqrt(1.0 + std ** 2), t_embed], axis=1)
    n = len(weights)
    for i in range(n - 1):
        h = jnp.tanh(h @ weights[i] + biases[i])
    pred = h @ weights[n - 1] + biases[n - 1]
    return pred / std - x / (1.0 + std ** 2)


# --------------------------------- main -------------------------------------

if __name__ == "__main__":
    key = jax.random.PRNGKey(0)
    k_p, k_x, k_t = jax.random.split(key, 3)

    sigma = 25.0
    ndim, nlayers, nhidden, ted = 2, 5, 50, 10
    B = 200  # small batch, non-multiple of the tile -> exercises batch padding

    params = init_params(k_p, ndim=ndim, nlayers=nlayers,
                         nhidden=nhidden, time_embed_dim=ted)
    packed = pack_params(params, ndim=ndim)   # one-time pad/stack of weights

    x = jax.random.normal(k_x, (B, ndim), jnp.float32)
    t = jax.random.uniform(k_t, (B,), jnp.float32, 0.05, 1.0)

    out = score_model_forward(x, t, packed, sigma, ndim=ndim)
    out = jax.block_until_ready(out)

    ref = reference_forward(x, t, params, sigma)
    assert out.shape == (B, ndim)
    max_diff = float(jnp.max(jnp.abs(out - ref)))
    assert jnp.allclose(out, ref, atol=1e-4, rtol=1e-4), (
        f"max abs diff {max_diff}")

    print("KERNEL_OK")
</pallas_src>

<mosaic_0001>
module attributes {stable_mosaic.version = 11 : i64} {
  func.func @kernel(%arg0: i32, %arg1: memref<200x128xf32, #tpu.memory_space<vmem>>, %arg2: memref<200x1xf32, #tpu.memory_space<vmem>>, %arg3: memref<7x128xf32, #tpu.memory_space<vmem>>, %arg4: memref<5x128x128xf32, #tpu.memory_space<vmem>>, %arg5: memref<200x128xf32, #tpu.memory_space<vmem>>) attributes {dimension_semantics = [#tpu.dimension_semantics<parallel>], iteration_bounds = array<i64: 1>, scalar_prefetch = 0 : i64, scratch_operands = 0 : i64, tpu.core_type = #tpu.core_type<tc>, window_params = [{transform_indices = @transform_0, window_bounds = array<i64: 200, 128>}, {transform_indices = @transform_1, window_bounds = array<i64: 200, 1>}, {pipeline_mode = #tpu.pipeline_mode<synchronous>, transform_indices = @transform_2, window_bounds = array<i64: 7, 128>}, {pipeline_mode = #tpu.pipeline_mode<synchronous>, transform_indices = @transform_3, window_bounds = array<i64: 5, 128, 128>}, {transform_indices = @transform_4, window_bounds = array<i64: 200, 128>}]} {
    %c0 = arith.constant 0 : index
    %c0_0 = arith.constant 0 : index
    %0 = vector.load %arg2[%c0, %c0_0] : memref<200x1xf32, #tpu.memory_space<vmem>>, vector<200x1xf32>
    %cst = arith.constant 6.43775177 : f32
    %1 = vector.broadcast %cst : f32 to vector<200x1xf32>
    %2 = arith.mulf %1, %0 : vector<200x1xf32>
    %3 = math.exp %2 : vector<200x1xf32>
    %cst_1 = arith.constant 1.000000e+00 : f32
    %4 = vector.broadcast %cst_1 : f32 to vector<200x1xf32>
    %5 = arith.subf %3, %4 : vector<200x1xf32>
    %cst_2 = arith.constant 0.155333728 : f32
    %6 = vector.broadcast %cst_2 : f32 to vector<200x1xf32>
    %7 = arith.mulf %5, %6 : vector<200x1xf32>
    %cst_3 = arith.constant 1.000000e+00 : f32
    %8 = vector.broadcast %cst_3 : f32 to vector<200x1xf32>
    %9 = arith.addf %8, %7 : vector<200x1xf32>
    %10 = math.rsqrt %9 : vector<200x1xf32>
    %11 = math.log %7 : vector<200x1xf32>
    %cst_4 = arith.constant 0.785398185 : f32
    %12 = vector.broadcast %cst_4 : f32 to vector<200x1xf32>
    %13 = arith.mulf %12, %11 : vector<200x1xf32>
    %c5 = arith.constant 5 : index
    %c0_5 = arith.constant 0 : index
    %14 = vector.load %arg3[%c5, %c0_5] : memref<7x128xf32, #tpu.memory_space<vmem>>, vector<1x128xf32>
    %c6 = arith.constant 6 : index
    %c0_6 = arith.constant 0 : index
    %15 = vector.load %arg3[%c6, %c0_6] : memref<7x128xf32, #tpu.memory_space<vmem>>, vector<1x128xf32>
    %16 = vector.broadcast %13 : vector<200x1xf32> to vector<200x128xf32>
    %17 = vector.broadcast %14 : vector<1x128xf32> to vector<200x128xf32>
    %18 = arith.mulf %16, %17 : vector<200x128xf32>
    %19 = vector.broadcast %15 : vector<1x128xf32> to vector<200x128xf32>
    %20 = arith.addf %18, %19 : vector<200x128xf32>
    %21 = math.sin %20 : vector<200x128xf32>
    %c0_7 = arith.constant 0 : index
    %c0_8 = arith.constant 0 : index
    %22 = vector.load %arg1[%c0_7, %c0_8] : memref<200x128xf32, #tpu.memory_space<vmem>>, vector<200x128xf32>
    %23 = vector.broadcast %10 : vector<200x1xf32> to vector<200x128xf32>
    %24 = arith.mulf %22, %23 : vector<200x128xf32>
    %25 = arith.addf %24, %21 : vector<200x128xf32>
    %c0_9 = arith.constant 0 : index
    %c0_10 = arith.constant 0 : index
    %c0_11 = arith.constant 0 : index
    %26 = vector.load %arg4[%c0_9, %c0_10, %c0_11] : memref<5x128x128xf32, #tpu.memory_space<vmem>>, vector<1x128x128xf32>
    %27 = vector.shape_cast %26 : vector<1x128x128xf32> to vector<128x128xf32>
    %cst_12 = arith.constant dense<0.000000e+00> : vector<200x128xf32>
    %28 = tpu.matmul %25, %27, %cst_12 {dimension_numbers = #tpu.dot_dimension_numbers<[1], [0], [0], [1], [0, 0, 1, 1], [], []>} : vector<200x128xf32>, vector<128x128xf32>, vector<200x128xf32> -> vector<200x128xf32>
    %c0_13 = arith.constant 0 : index
    %c0_14 = arith.constant 0 : index
    %29 = vector.load %arg3[%c0_13, %c0_14] : memref<7x128xf32, #tpu.memory_space<vmem>>, vector<1x128xf32>
    %30 = vector.broadcast %29 : vector<1x128xf32> to vector<200x128xf32>
    %31 = arith.addf %28, %30 : vector<200x128xf32>
    %32 = math.tanh %31 : vector<200x128xf32>
    %c1 = arith.constant 1 : index
    %c0_15 = arith.constant 0 : index
    %c0_16 = arith.constant 0 : index
    %33 = vector.load %arg4[%c1, %c0_15, %c0_16] : memref<5x128x128xf32, #tpu.memory_space<vmem>>, vector<1x128x128xf32>
    %34 = vector.shape_cast %33 : vector<1x128x128xf32> to vector<128x128xf32>
    %cst_17 = arith.constant dense<0.000000e+00> : vector<200x128xf32>
    %35 = tpu.matmul %32, %34, %cst_17 {dimension_numbers = #tpu.dot_dimension_numbers<[1], [0], [0], [1], [0, 0, 1, 1], [], []>} : vector<200x128xf32>, vector<128x128xf32>, vector<200x128xf32> -> vector<200x128xf32>
    %c1_18 = arith.constant 1 : index
    %c0_19 = arith.constant 0 : index
    %36 = vector.load %arg3[%c1_18, %c0_19] : memref<7x128xf32, #tpu.memory_space<vmem>>, vector<1x128xf32>
    %37 = vector.broadcast %36 : vector<1x128xf32> to vector<200x128xf32>
    %38 = arith.addf %35, %37 : vector<200x128xf32>
    %39 = math.tanh %38 : vector<200x128xf32>
    %c2 = arith.constant 2 : index
    %c0_20 = arith.constant 0 : index
    %c0_21 = arith.constant 0 : index
    %40 = vector.load %arg4[%c2, %c0_20, %c0_21] : memref<5x128x128xf32, #tpu.memory_space<vmem>>, vector<1x128x128xf32>
    %41 = vector.shape_cast %40 : vector<1x128x128xf32> to vector<128x128xf32>
    %cst_22 = arith.constant dense<0.000000e+00> : vector<200x128xf32>
    %42 = tpu.matmul %39, %41, %cst_22 {dimension_numbers = #tpu.dot_dimension_numbers<[1], [0], [0], [1], [0, 0, 1, 1], [], []>} : vector<200x128xf32>, vector<128x128xf32>, vector<200x128xf32> -> vector<200x128xf32>
    %c2_23 = arith.constant 2 : index
    %c0_24 = arith.constant 0 : index
    %43 = vector.load %arg3[%c2_23, %c0_24] : memref<7x128xf32, #tpu.memory_space<vmem>>, vector<1x128xf32>
    %44 = vector.broadcast %43 : vector<1x128xf32> to vector<200x128xf32>
    %45 = arith.addf %42, %44 : vector<200x128xf32>
    %46 = math.tanh %45 : vector<200x128xf32>
    %c3 = arith.constant 3 : index
    %c0_25 = arith.constant 0 : index
    %c0_26 = arith.constant 0 : index
    %47 = vector.load %arg4[%c3, %c0_25, %c0_26] : memref<5x128x128xf32, #tpu.memory_space<vmem>>, vector<1x128x128xf32>
    %48 = vector.shape_cast %47 : vector<1x128x128xf32> to vector<128x128xf32>
    %cst_27 = arith.constant dense<0.000000e+00> : vector<200x128xf32>
    %49 = tpu.matmul %46, %48, %cst_27 {dimension_numbers = #tpu.dot_dimension_numbers<[1], [0], [0], [1], [0, 0, 1, 1], [], []>} : vector<200x128xf32>, vector<128x128xf32>, vector<200x128xf32> -> vector<200x128xf32>
    %c3_28 = arith.constant 3 : index
    %c0_29 = arith.constant 0 : index
    %50 = vector.load %arg3[%c3_28, %c0_29] : memref<7x128xf32, #tpu.memory_space<vmem>>, vector<1x128xf32>
    %51 = vector.broadcast %50 : vector<1x128xf32> to vector<200x128xf32>
    %52 = arith.addf %49, %51 : vector<200x128xf32>
    %53 = math.tanh %52 : vector<200x128xf32>
    %c4 = arith.constant 4 : index
    %c0_30 = arith.constant 0 : index
    %c0_31 = arith.constant 0 : index
    %54 = vector.load %arg4[%c4, %c0_30, %c0_31] : memref<5x128x128xf32, #tpu.memory_space<vmem>>, vector<1x128x128xf32>
    %55 = vector.shape_cast %54 : vector<1x128x128xf32> to vector<128x128xf32>
    %cst_32 = arith.constant dense<0.000000e+00> : vector<200x128xf32>
    %56 = tpu.matmul %53, %55, %cst_32 {dimension_numbers = #tpu.dot_dimension_numbers<[1], [0], [0], [1], [0, 0, 1, 1], [], []>} : vector<200x128xf32>, vector<128x128xf32>, vector<200x128xf32> -> vector<200x128xf32>
    %c4_33 = arith.constant 4 : index
    %c0_34 = arith.constant 0 : index
    %57 = vector.load %arg3[%c4_33, %c0_34] : memref<7x128xf32, #tpu.memory_space<vmem>>, vector<1x128xf32>
    %58 = vector.broadcast %57 : vector<1x128xf32> to vector<200x128xf32>
    %59 = arith.addf %56, %58 : vector<200x128xf32>
    %60 = math.rsqrt %7 : vector<200x1xf32>
    %61 = vector.broadcast %60 : vector<200x1xf32> to vector<200x128xf32>
    %62 = arith.mulf %59, %61 : vector<200x128xf32>
    %c0_35 = arith.constant 0 : index
    %c0_36 = arith.constant 0 : index
    %63 = vector.load %arg1[%c0_35, %c0_36] : memref<200x128xf32, #tpu.memory_space<vmem>>, vector<200x128xf32>
    %64 = arith.mulf %10, %10 : vector<200x1xf32>
    %65 = vector.broadcast %64 : vector<200x1xf32> to vector<200x128xf32>
    %66 = arith.mulf %63, %65 : vector<200x128xf32>
    %67 = arith.subf %62, %66 : vector<200x128xf32>
    %c0_37 = arith.constant 0 : index
    %c0_38 = arith.constant 0 : index
    %68 = vector.load %arg5[%c0_37, %c0_38] : memref<200x128xf32, #tpu.memory_space<vmem>>, vector<200x128xf32>
    tpu.vector_store %arg5[%c0_37, %c0_38], %67 {strides = array<i32>} : memref<200x128xf32, #tpu.memory_space<vmem>>, vector<200x128xf32>,
    return
  }
  func.func @transform_0(%arg0: i32) -> (i32, i32) {
    %c0_i32 = arith.constant 0 : i32
    %c0_i32_0 = arith.constant 0 : i32
    return %arg0, %c0_i32 : i32, i32
  }
  func.func @transform_1(%arg0: i32) -> (i32, i32) {
    %c0_i32 = arith.constant 0 : i32
    %c0_i32_0 = arith.constant 0 : i32
    return %arg0, %c0_i32 : i32, i32
  }
  func.func @transform_2(%arg0: i32) -> (i32, i32) {
    %c0_i32 = arith.constant 0 : i32
    %c0_i32_0 = arith.constant 0 : i32
    %c0_i32_1 = arith.constant 0 : i32
    return %c0_i32, %c0_i32_0 : i32, i32
  }
  func.func @transform_3(%arg0: i32) -> (i32, i32, i32) {
    %c0_i32 = arith.constant 0 : i32
    %c0_i32_0 = arith.constant 0 : i32
    %c0_i32_1 = arith.constant 0 : i32
    %c0_i32_2 = arith.constant 0 : i32
    return %c0_i32, %c0_i32_0, %c0_i32_1 : i32, i32, i32
  }
  func.func @transform_4(%arg0: i32) -> (i32, i32) {
    %c0_i32 = arith.constant 0 : i32
    %c0_i32_0 = arith.constant 0 : i32
    return %arg0, %c0_i32 : i32, i32
  }
}

module attributes {stable_mosaic.version = 11 : i64} {
  func.func @kernel(%arg0: i32, %arg1: memref<200x128xf32, #tpu.memory_space<vmem>>, %arg2: memref<200x1xf32, #tpu.memory_space<vmem>>, %arg3: memref<7x128xf32, #tpu.memory_space<vmem>>, %arg4: memref<5x128x128xf32, #tpu.memory_space<vmem>>, %arg5: memref<200x128xf32, #tpu.memory_space<vmem>>) attributes {dimension_semantics = [#tpu.dimension_semantics<parallel>], iteration_bounds = array<i64: 1>, scalar_prefetch = 0 : i64, scratch_operands = 0 : i64, tpu.core_type = #tpu.core_type<tc>, window_params = [{transform_indices = @transform_0, window_bounds = array<i64: 200, 128>}, {transform_indices = @transform_1, window_bounds = array<i64: 200, 1>}, {pipeline_mode = #tpu.pipeline_mode<synchronous>, transform_indices = @transform_2, window_bounds = array<i64: 7, 128>}, {pipeline_mode = #tpu.pipeline_mode<synchronous>, transform_indices = @transform_3, window_bounds = array<i64: 5, 128, 128>}, {transform_indices = @transform_4, window_bounds = array<i64: 200, 128>}]} {
    %c0 = arith.constant 0 : index
    %c0_0 = arith.constant 0 : index
    %0 = vector.load %arg2[%c0, %c0_0] : memref<200x1xf32, #tpu.memory_space<vmem>>, vector<200x1xf32>
    %cst = arith.constant 6.43775177 : f32
    %1 = vector.broadcast %cst : f32 to vector<200x1xf32>
    %2 = arith.mulf %1, %0 : vector<200x1xf32>
    %3 = math.exp %2 : vector<200x1xf32>
    %cst_1 = arith.constant 1.000000e+00 : f32
    %4 = vector.broadcast %cst_1 : f32 to vector<200x1xf32>
    %5 = arith.subf %3, %4 : vector<200x1xf32>
    %cst_2 = arith.constant 0.155333728 : f32
    %6 = vector.broadcast %cst_2 : f32 to vector<200x1xf32>
    %7 = arith.mulf %5, %6 : vector<200x1xf32>
    %cst_3 = arith.constant 1.000000e+00 : f32
    %8 = vector.broadcast %cst_3 : f32 to vector<200x1xf32>
    %9 = arith.addf %8, %7 : vector<200x1xf32>
    %10 = math.rsqrt %9 : vector<200x1xf32>
    %11 = math.log %7 : vector<200x1xf32>
    %cst_4 = arith.constant 0.785398185 : f32
    %12 = vector.broadcast %cst_4 : f32 to vector<200x1xf32>
    %13 = arith.mulf %12, %11 : vector<200x1xf32>
    %c5 = arith.constant 5 : index
    %c0_5 = arith.constant 0 : index
    %14 = vector.load %arg3[%c5, %c0_5] : memref<7x128xf32, #tpu.memory_space<vmem>>, vector<1x128xf32>
    %c6 = arith.constant 6 : index
    %c0_6 = arith.constant 0 : index
    %15 = vector.load %arg3[%c6, %c0_6] : memref<7x128xf32, #tpu.memory_space<vmem>>, vector<1x128xf32>
    %16 = vector.broadcast %13 : vector<200x1xf32> to vector<200x128xf32>
    %17 = vector.broadcast %14 : vector<1x128xf32> to vector<200x128xf32>
    %18 = arith.mulf %16, %17 : vector<200x128xf32>
    %19 = vector.broadcast %15 : vector<1x128xf32> to vector<200x128xf32>
    %20 = arith.addf %18, %19 : vector<200x128xf32>
    %21 = math.sin %20 : vector<200x128xf32>
    %c0_7 = arith.constant 0 : index
    %c0_8 = arith.constant 0 : index
    %22 = vector.load %arg1[%c0_7, %c0_8] : memref<200x128xf32, #tpu.memory_space<vmem>>, vector<200x128xf32>
    %23 = vector.broadcast %10 : vector<200x1xf32> to vector<200x128xf32>
    %24 = arith.mulf %22, %23 : vector<200x128xf32>
    %25 = arith.addf %24, %21 : vector<200x128xf32>
    %c0_9 = arith.constant 0 : index
    %c0_10 = arith.constant 0 : index
    %c0_11 = arith.constant 0 : index
    %26 = vector.load %arg4[%c0_9, %c0_10, %c0_11] : memref<5x128x128xf32, #tpu.memory_space<vmem>>, vector<1x128x128xf32>
    %27 = vector.shape_cast %26 : vector<1x128x128xf32> to vector<128x128xf32>
    %cst_12 = arith.constant dense<0.000000e+00> : vector<200x128xf32>
    %28 = tpu.matmul %25, %27, %cst_12 {dimension_numbers = #tpu.dot_dimension_numbers<[1], [0], [0], [1], [0, 0, 1, 1], [], []>} : vector<200x128xf32>, vector<128x128xf32>, vector<200x128xf32> -> vector<200x128xf32>
    %c0_13 = arith.constant 0 : index
    %c0_14 = arith.constant 0 : index
    %29 = vector.load %arg3[%c0_13, %c0_14] : memref<7x128xf32, #tpu.memory_space<vmem>>, vector<1x128xf32>
    %30 = vector.broadcast %29 : vector<1x128xf32> to vector<200x128xf32>
    %31 = arith.addf %28, %30 : vector<200x128xf32>
    %32 = math.tanh %31 : vector<200x128xf32>
    %c1 = arith.constant 1 : index
    %c0_15 = arith.constant 0 : index
    %c0_16 = arith.constant 0 : index
    %33 = vector.load %arg4[%c1, %c0_15, %c0_16] : memref<5x128x128xf32, #tpu.memory_space<vmem>>, vector<1x128x128xf32>
    %34 = vector.shape_cast %33 : vector<1x128x128xf32> to vector<128x128xf32>
    %cst_17 = arith.constant dense<0.000000e+00> : vector<200x128xf32>
    %35 = tpu.matmul %32, %34, %cst_17 {dimension_numbers = #tpu.dot_dimension_numbers<[1], [0], [0], [1], [0, 0, 1, 1], [], []>} : vector<200x128xf32>, vector<128x128xf32>, vector<200x128xf32> -> vector<200x128xf32>
    %c1_18 = arith.constant 1 : index
    %c0_19 = arith.constant 0 : index
    %36 = vector.load %arg3[%c1_18, %c0_19] : memref<7x128xf32, #tpu.memory_space<vmem>>, vector<1x128xf32>
    %37 = vector.broadcast %36 : vector<1x128xf32> to vector<200x128xf32>
    %38 = arith.addf %35, %37 : vector<200x128xf32>
    %39 = math.tanh %38 : vector<200x128xf32>
    %c2 = arith.constant 2 : index
    %c0_20 = arith.constant 0 : index
    %c0_21 = arith.constant 0 : index
    %40 = vector.load %arg4[%c2, %c0_20, %c0_21] : memref<5x128x128xf32, #tpu.memory_space<vmem>>, vector<1x128x128xf32>
    %41 = vector.shape_cast %40 : vector<1x128x128xf32> to vector<128x128xf32>
    %cst_22 = arith.constant dense<0.000000e+00> : vector<200x128xf32>
    %42 = tpu.matmul %39, %41, %cst_22 {dimension_numbers = #tpu.dot_dimension_numbers<[1], [0], [0], [1], [0, 0, 1, 1], [], []>} : vector<200x128xf32>, vector<128x128xf32>, vector<200x128xf32> -> vector<200x128xf32>
    %c2_23 = arith.constant 2 : index
    %c0_24 = arith.constant 0 : index
    %43 = vector.load %arg3[%c2_23, %c0_24] : memref<7x128xf32, #tpu.memory_space<vmem>>, vector<1x128xf32>
    %44 = vector.broadcast %43 : vector<1x128xf32> to vector<200x128xf32>
    %45 = arith.addf %42, %44 : vector<200x128xf32>
    %46 = math.tanh %45 : vector<200x128xf32>
    %c3 = arith.constant 3 : index
    %c0_25 = arith.constant 0 : index
    %c0_26 = arith.constant 0 : index
    %47 = vector.load %arg4[%c3, %c0_25, %c0_26] : memref<5x128x128xf32, #tpu.memory_space<vmem>>, vector<1x128x128xf32>
    %48 = vector.shape_cast %47 : vector<1x128x128xf32> to vector<128x128xf32>
    %cst_27 = arith.constant dense<0.000000e+00> : vector<200x128xf32>
    %49 = tpu.matmul %46, %48, %cst_27 {dimension_numbers = #tpu.dot_dimension_numbers<[1], [0], [0], [1], [0, 0, 1, 1], [], []>} : vector<200x128xf32>, vector<128x128xf32>, vector<200x128xf32> -> vector<200x128xf32>
    %c3_28 = arith.constant 3 : index
    %c0_29 = arith.constant 0 : index
    %50 = vector.load %arg3[%c3_28, %c0_29] : memref<7x128xf32, #tpu.memory_space<vmem>>, vector<1x128xf32>
    %51 = vector.broadcast %50 : vector<1x128xf32> to vector<200x128xf32>
    %52 = arith.addf %49, %51 : vector<200x128xf32>
    %53 = math.tanh %52 : vector<200x128xf32>
    %c4 = arith.constant 4 : index
    %c0_30 = arith.constant 0 : index
    %c0_31 = arith.constant 0 : index
    %54 = vector.load %arg4[%c4, %c0_30, %c0_31] : memref<5x128x128xf32, #tpu.memory_space<vmem>>, vector<1x128x128xf32>
    %55 = vector.shape_cast %54 : vector<1x128x128xf32> to vector<128x128xf32>
    %cst_32 = arith.constant dense<0.000000e+00> : vector<200x128xf32>
    %56 = tpu.matmul %53, %55, %cst_32 {dimension_numbers = #tpu.dot_dimension_numbers<[1], [0], [0], [1], [0, 0, 1, 1], [], []>} : vector<200x128xf32>, vector<128x128xf32>, vector<200x128xf32> -> vector<200x128xf32>
    %c4_33 = arith.constant 4 : index
    %c0_34 = arith.constant 0 : index
    %57 = vector.load %arg3[%c4_33, %c0_34] : memref<7x128xf32, #tpu.memory_space<vmem>>, vector<1x128xf32>
    %58 = vector.broadcast %57 : vector<1x128xf32> to vector<200x128xf32>
    %59 = arith.addf %56, %58 : vector<200x128xf32>
    %60 = math.rsqrt %7 : vector<200x1xf32>
    %61 = vector.broadcast %60 : vector<200x1xf32> to vector<200x128xf32>
    %62 = arith.mulf %59, %61 : vector<200x128xf32>
    %c0_35 = arith.constant 0 : index
    %c0_36 = arith.constant 0 : index
    %63 = vector.load %arg1[%c0_35, %c0_36] : memref<200x128xf32, #tpu.memory_space<vmem>>, vector<200x128xf32>
    %64 = arith.mulf %10, %10 : vector<200x1xf32>
    %65 = vector.broadcast %64 : vector<200x1xf32> to vector<200x128xf32>
    %66 = arith.mulf %63, %65 : vector<200x128xf32>
    %67 = arith.subf %62, %66 : vector<200x128xf32>
    %c0_37 = arith.constant 0 : index
    %c0_38 = arith.constant 0 : index
    %68 = vector.load %arg5[%c0_37, %c0_38] : memref<200x128xf32, #tpu.memory_space<vmem>>, vector<200x128xf32>
    tpu.vector_store %arg5[%c0_37, %c0_38], %67 {strides = array<i32>} : memref<200x128xf32, #tpu.memory_space<vmem>>, vector<200x128xf32>,
    return
  }
  func.func @transform_0(%arg0: i32) -> (i32, i32) {
    %c0_i32 = arith.constant 0 : i32
    %c0_i32_0 = arith.constant 0 : i32
    return %arg0, %c0_i32 : i32, i32
  }
  func.func @transform_1(%arg0: i32) -> (i32, i32) {
    %c0_i32 = arith.constant 0 : i32
    %c0_i32_0 = arith.constant 0 : i32
    return %arg0, %c0_i32 : i32, i32
  }
  func.func @transform_2(%arg0: i32) -> (i32, i32) {
    %c0_i32 = arith.constant 0 : i32
    %c0_i32_0 = arith.constant 0 : i32
    %c0_i32_1 = arith.constant 0 : i32
    return %c0_i32, %c0_i32_0 : i32, i32
  }
  func.func @transform_3(%arg0: i32) -> (i32, i32, i32) {
    %c0_i32 = arith.constant 0 : i32
    %c0_i32_0 = arith.constant 0 : i32
    %c0_i32_1 = arith.constant 0 : i32
    %c0_i32_2 = arith.constant 0 : i32
    return %c0_i32, %c0_i32_0, %c0_i32_1 : i32, i32, i32
  }
  func.func @transform_4(%arg0: i32) -> (i32, i32) {
    %c0_i32 = arith.constant 0 : i32
    %c0_i32_0 = arith.constant 0 : i32
    return %arg0, %c0_i32 : i32, i32
  }
}

</mosaic_0001>

<llo_original>
// kernel: tpu_custom_call.1
$region0: #{tpu_custom_call.1}
  #allocation0 [shape = 'u32[]', space=smem, size = 0x4, offset = 0x4, fixed_abs, tag = 'smem constant byte address 0x4 - core index']
  #allocation1 [shape = 'u32[144,128]{1,0:T(1,128)}', space=vmem, size = 0x12000, scoped, tag = 'internal scratch']
  %s0 = inlined_call_operand.vmem [shape: f32[200,128], index: 0, kind: input, shape index: {}]
  %s1 = inlined_call_operand.vmem [shape: f32[200,1], index: 1, kind: input, shape index: {}]
  %s2 = inlined_call_operand.vmem [shape: f32[7,128], index: 2, kind: input, shape index: {}]
  %s3 = inlined_call_operand.hbm [shape: f32[5,128,128], index: 3, kind: input, shape index: {}]
  %s4 = inlined_call_operand.hbm [shape: f32[200,128], index: 4, kind: output, shape index: {}]
  %s5 = sld [smem:[#allocation0]]
  $region30: #{tpu_custom_call.1} parent=0
    _
  %s7 = ssub.s32 1, %s5
  %s8 = scalar_select 0, %s7, %s5
  $region1: #{tpu_custom_call.1} parent=0
    #allocation2 [shape = 'u8[327680]{0}', space=vmem, size = 0x50000, scoped, tag = 'input window, operand 3, single buffered']
    #allocation3 [shape = 's32[1]{0}', space=sflag, size = 0x4, scoped, tag = 'scoped memory for tpu_custom_call.1']
    #allocation4 [shape = 's32[1]{0}', space=sflag, size = 0x4, scoped, tag = 'scoped memory for tpu_custom_call.1']
    #allocation5 [shape = 'u8[102400]{0}', space=vmem, size = 0x19000, scoped, tag = 'output window, operand 0, single buffered']
    %9 = vsyncpa [#allocation3], 0
    %10 = vsyncpa [#allocation4], 0
    // Predicated region
    $region2: #{tpu_custom_call.1} parent=1 // pred_check
      _
    $region3: #{tpu_custom_call.1} parent=1 // pred_check_branch
      %12 = sbr.rel (0) target = $region5
    $region4: #{tpu_custom_call.1} parent=1 // pred_region
      _
    $region5: #{tpu_custom_call.1} parent=1 // pred_fallthru
      _
    // Predicated region
    $region6: #{tpu_custom_call.1} parent=1 // pred_check
      _
    $region7: #{tpu_custom_call.1} parent=1 // pred_check_branch
      %14 = sbr.rel (0) target = $region9
    $region8: #{tpu_custom_call.1} parent=1 // pred_region
      _
    $region9: #{tpu_custom_call.1} parent=1 // pred_fallthru
      _
    // Predicated region
    $region10: #{tpu_custom_call.1} parent=1 // pred_check
      _
    $region11: #{tpu_custom_call.1} parent=1 // pred_check_branch
      %16 = sbr.rel (0) target = $region13
    $region12: #{tpu_custom_call.1} parent=1 // pred_region
      _
    $region13: #{tpu_custom_call.1} parent=1 // pred_fallthru
      _
    // Predicated region
    $region14: #{tpu_custom_call.1} parent=1 // pred_check
      _
    $region15: #{tpu_custom_call.1} parent=1 // pred_check_branch
      %18 = sbr.rel (0) target = $region17
    $region16: #{tpu_custom_call.1} parent=1 // pred_region
      %s20 = ssub.s32 10240, 10240
      %21 = vsyncadd [#allocation3], %s20
      %s22 = sshll.u32 [#allocation2], 4
      %s23 = int_to_ptr.vmem [resolvable:$true] %s22
      %28 = dma.hbm_to_vmem [thread:$0]  %s3, 10240, %s23, [#allocation3], 128, 128, 8
    $region17: #{tpu_custom_call.1} parent=1 // pred_fallthru
      _
    // Predicated region
    $region18: #{tpu_custom_call.1} parent=1 // pred_check
      _
    $region19: #{tpu_custom_call.1} parent=1 // pred_check_branch
      %30 = sbr.rel (0) target = $region21
    $region20: #{tpu_custom_call.1} parent=1 // pred_region
      %31 = dma.done [#allocation3], 10240
    $region21: #{tpu_custom_call.1} parent=1 // pred_fallthru
      _
    %v32 = vld [vmem:[%s1] sm:$0xff]
    %v33 = vld [vmem:[%s1 + $0x8] sm:$0xff]
    %v34 = vld [vmem:[%s1 + $0x10] sm:$0xff]
    %v35 = vld [vmem:[%s1 + $0x18] sm:$0xff]
    %v36 = vld [vmem:[%s1 + $0x20] sm:$0xff]
    %v37 = vld [vmem:[%s1 + $0x28] sm:$0xff]
    %v38 = vld [vmem:[%s1 + $0x30] sm:$0xff]
    %v39 = vld [vmem:[%s1 + $0x38] sm:$0xff]
    %v40 = vld [vmem:[%s1 + $0x40] sm:$0xff]
    %v41 = vld [vmem:[%s1 + $0x48] sm:$0xff]
    %v42 = vld [vmem:[%s1 + $0x50] sm:$0xff]
    %v43 = vld [vmem:[%s1 + $0x58] sm:$0xff]
    %v44 = vld [vmem:[%s1 + $0x60] sm:$0xff]
    %v45 = vld [vmem:[%s1 + $0x68] sm:$0xff]
    %v46 = vld [vmem:[%s1 + $0x70] sm:$0xff]
    %v47 = vld [vmem:[%s1 + $0x78] sm:$0xff]
    %v48 = vld [vmem:[%s1 + $0x80] sm:$0xff]
    %v49 = vld [vmem:[%s1 + $0x88] sm:$0xff]
    %v50 = vld [vmem:[%s1 + $0x90] sm:$0xff]
    %v51 = vld [vmem:[%s1 + $0x98] sm:$0xff]
    %v52 = vld [vmem:[%s1 + $0xa0] sm:$0xff]
    %v53 = vld [vmem:[%s1 + $0xa8] sm:$0xff]
    %v54 = vld [vmem:[%s1 + $0xb0] sm:$0xff]
    %v55 = vld [vmem:[%s1 + $0xb8] sm:$0xff]
    %v56 = vld [vmem:[%s1 + $0xc0] sm:$0xff]
    %v57 = vmul.f32 %v32, 6.437752
    %v58 = vmul.f32 %v33, 6.437752
    %v59 = vmul.f32 %v34, 6.437752
    %v60 = vmul.f32 %v35, 6.437752
    %v61 = vmul.f32 %v36, 6.437752
    %v62 = vmul.f32 %v37, 6.437752
    %v63 = vmul.f32 %v38, 6.437752
    %v64 = vmul.f32 %v39, 6.437752
    %v65 = vmul.f32 %v40, 6.437752
    %v66 = vmul.f32 %v41, 6.437752
    %v67 = vmul.f32 %v42, 6.437752
    %v68 = vmul.f32 %v43, 6.437752
    %v69 = vmul.f32 %v44, 6.437752
    %v70 = vmul.f32 %v45, 6.437752
    %v71 = vmul.f32 %v46, 6.437752
    %v72 = vmul.f32 %v47, 6.437752
    %v73 = vmul.f32 %v48, 6.437752
    %v74 = vmul.f32 %v49, 6.437752
    %v75 = vmul.f32 %v50, 6.437752
    %v76 = vmul.f32 %v51, 6.437752
    %v77 = vmul.f32 %v52, 6.437752
    %v78 = vmul.f32 %v53, 6.437752
    %v79 = vmul.f32 %v54, 6.437752
    %v80 = vmul.f32 %v55, 6.437752
    %v81 = vmul.f32 %v56, 6.437752
    %v82 = vmul.f32 %v57, 1.442695
    %v83 = vpow.pop %v82
    %v84 = vmul.f32 %v58, 1.442695
    %v85 = vpow.pop %v84
    %v86 = vmul.f32 %v59, 1.442695
    %v87 = vpow.pop %v86
    %v88 = vmul.f32 %v60, 1.442695
    %v89 = vpow.pop %v88
    %v90 = vmul.f32 %v61, 1.442695
    %v91 = vpow.pop %v90
    %v92 = vmul.f32 %v62, 1.442695
    %v93 = vpow.pop %v92
    %v94 = vmul.f32 %v63, 1.442695
    %v95 = vpow.pop %v94
    %v96 = vmul.f32 %v64, 1.442695
    %v97 = vpow.pop %v96
    %v98 = vmul.f32 %v65, 1.442695
    %v99 = vpow.pop %v98
    %v100 = vmul.f32 %v66, 1.442695
    %v101 = vpow.pop %v100
    %v102 = vmul.f32 %v67, 1.442695
    %v103 = vpow.pop %v102
    %v104 = vmul.f32 %v68, 1.442695
    %v105 = vpow.pop %v104
    %v106 = vmul.f32 %v69, 1.442695
    %v107 = vpow.pop %v106
    %v108 = vmul.f32 %v70, 1.442695
    %v109 = vpow.pop %v108
    %v110 = vmul.f32 %v71, 1.442695
    %v111 = vpow.pop %v110
    %v112 = vmul.f32 %v72, 1.442695
    %v113 = vpow.pop %v112
    %v114 = vmul.f32 %v73, 1.442695
    %v115 = vpow.pop %v114
    %v116 = vmul.f32 %v74, 1.442695
    %v117 = vpow.pop %v116
    %v118 = vmul.f32 %v75, 1.442695
    %v119 = vpow.pop %v118
    %v120 = vmul.f32 %v76, 1.442695
    %v121 = vpow.pop %v120
    %v122 = vmul.f32 %v77, 1.442695
    %v123 = vpow.pop %v122
    %v124 = vmul.f32 %v78, 1.442695
    %v125 = vpow.pop %v124
    %v126 = vmul.f32 %v79, 1.442695
    %v127 = vpow.pop %v126
    %v128 = vmul.f32 %v80, 1.442695
    %v129 = vpow.pop %v128
    %v130 = vmul.f32 %v81, 1.442695
    %v131 = vpow.pop %v130
    %v132 = vsub.f32 %v83, 1.0
    %v133 = vsub.f32 %v85, 1.0
    %v134 = vsub.f32 %v87, 1.0
    %v135 = vsub.f32 %v89, 1.0
    %v136 = vsub.f32 %v91, 1.0
    %v137 = vsub.f32 %v93, 1.0
    %v138 = vsub.f32 %v95, 1.0
    %v139 = vsub.f32 %v97, 1.0
    %v140 = vsub.f32 %v99, 1.0
    %v141 = vsub.f32 %v101, 1.0
    %v142 = vsub.f32 %v103, 1.0
    %v143 = vsub.f32 %v105, 1.0
    %v144 = vsub.f32 %v107, 1.0
    %v145 = vsub.f32 %v109, 1.0
    %v146 = vsub.f32 %v111, 1.0
    %v147 = vsub.f32 %v113, 1.0
    %v148 = vsub.f32 %v115, 1.0
    %v149 = vsub.f32 %v117, 1.0
    %v150 = vsub.f32 %v119, 1.0
    %v151 = vsub.f32 %v121, 1.0
    %v152 = vsub.f32 %v123, 1.0
    %v153 = vsub.f32 %v125, 1.0
    %v154 = vsub.f32 %v127, 1.0
    %v155 = vsub.f32 %v129, 1.0
    %v156 = vsub.f32 %v131, 1.0
    %v157 = vmul.f32 %v132, 0.15533373
    %v158 = vmul.f32 %v133, 0.15533373
    %v159 = vmul.f32 %v134, 0.15533373
    %v160 = vmul.f32 %v135, 0.15533373
    %v161 = vmul.f32 %v136, 0.15533373
    %v162 = vmul.f32 %v137, 0.15533373
    %v163 = vmul.f32 %v138, 0.15533373
    %v164 = vmul.f32 %v139, 0.15533373
    %v165 = vmul.f32 %v140, 0.15533373
    %v166 = vmul.f32 %v141, 0.15533373
    %v167 = vmul.f32 %v142, 0.15533373
    %v168 = vmul.f32 %v143, 0.15533373
    %v169 = vmul.f32 %v144, 0.15533373
    %v170 = vmul.f32 %v145, 0.15533373
    %v171 = vmul.f32 %v146, 0.15533373
    %v172 = vmul.f32 %v147, 0.15533373
    %v173 = vmul.f32 %v148, 0.15533373
    %v174 = vmul.f32 %v149, 0.15533373
    %v175 = vmul.f32 %v150, 0.15533373
    %v176 = vmul.f32 %v151, 0.15533373
    %v177 = vmul.f32 %v152, 0.15533373
    %v178 = vmul.f32 %v153, 0.15533373
    %v179 = vmul.f32 %v154, 0.15533373
    %v180 = vmul.f32 %v155, 0.15533373
    %v181 = vmul.f32 %v156, 0.15533373
    %v182 = vadd.f32 %v157, 1.0
    %v183 = vadd.f32 %v158, 1.0
    %v184 = vadd.f32 %v159, 1.0
    %v185 = vadd.f32 %v160, 1.0
    %v186 = vadd.f32 %v161, 1.0
    %v187 = vadd.f32 %v162, 1.0
    %v188 = vadd.f32 %v163, 1.0
    %v189 = vadd.f32 %v164, 1.0
    %v190 = vadd.f32 %v165, 1.0
    %v191 = vadd.f32 %v166, 1.0
    %v192 = vadd.f32 %v167, 1.0
    %v193 = vadd.f32 %v168, 1.0
    %v194 = vadd.f32 %v169, 1.0
    %v195 = vadd.f32 %v170, 1.0
    %v196 = vadd.f32 %v171, 1.0
    %v197 = vadd.f32 %v172, 1.0
    %v198 = vadd.f32 %v173, 1.0
    %v199 = vadd.f32 %v174, 1.0
    %v200 = vadd.f32 %v175, 1.0
    %v201 = vadd.f32 %v176, 1.0
    %v202 = vadd.f32 %v177, 1.0
    %v203 = vadd.f32 %v178, 1.0
    %v204 = vadd.f32 %v179, 1.0
    %v205 = vadd.f32 %v180, 1.0
    %v206 = vadd.f32 %v181, 1.0
    %v207 = vrsqrt.pop %v182
    %v208 = vrsqrt.pop %v183
    %v209 = vrsqrt.pop %v184
    %v210 = vrsqrt.pop %v185
    %v211 = vrsqrt.pop %v186
    %v212 = vrsqrt.pop %v187
    %v213 = vrsqrt.pop %v188
    %v214 = vrsqrt.pop %v189
    %v215 = vrsqrt.pop %v190
    %v216 = vrsqrt.pop %v191
    %v217 = vrsqrt.pop %v192
    %v218 = vrsqrt.pop %v193
    %v219 = vrsqrt.pop %v194
    %v220 = vrsqrt.pop %v195
    %v221 = vrsqrt.pop %v196
    %v222 = vrsqrt.pop %v197
    %v223 = vrsqrt.pop %v198
    %v224 = vrsqrt.pop %v199
    %v225 = vrsqrt.pop %v200
    %v226 = vrsqrt.pop %v201
    %v227 = vrsqrt.pop %v202
    %v228 = vrsqrt.pop %v203
    %v229 = vrsqrt.pop %v204
    %v230 = vrsqrt.pop %v205
    %v231 = vrsqrt.pop %v206
    %v232 = vlog2.pop %v157
    %v233 = vmul.f32 %v232, 0.6931472
    %v234 = vlog2.pop %v158
    %v235 = vmul.f32 %v234, 0.6931472
    %v236 = vlog2.pop %v159
    %v237 = vmul.f32 %v236, 0.6931472
    %v238 = vlog2.pop %v160
    %v239 = vmul.f32 %v238, 0.6931472
    %v240 = vlog2.pop %v161
    %v241 = vmul.f32 %v240, 0.6931472
    %v242 = vlog2.pop %v162
    %v243 = vmul.f32 %v242, 0.6931472
    %v244 = vlog2.pop %v163
    %v245 = vmul.f32 %v244, 0.6931472
    %v246 = vlog2.pop %v164
    %v247 = vmul.f32 %v246, 0.6931472
    %v248 = vlog2.pop %v165
    %v249 = vmul.f32 %v248, 0.6931472
    %v250 = vlog2.pop %v166
    %v251 = vmul.f32 %v250, 0.6931472
    %v252 = vlog2.pop %v167
    %v253 = vmul.f32 %v252, 0.6931472
    %v254 = vlog2.pop %v168
    %v255 = vmul.f32 %v254, 0.6931472
    %v256 = vlog2.pop %v169
    %v257 = vmul.f32 %v256, 0.6931472
    %v258 = vlog2.pop %v170
    %v259 = vmul.f32 %v258, 0.6931472
    %v260 = vlog2.pop %v171
    %v261 = vmul.f32 %v260, 0.6931472
    %v262 = vlog2.pop %v172
    %v263 = vmul.f32 %v262, 0.6931472
    %v264 = vlog2.pop %v173
    %v265 = vmul.f32 %v264, 0.6931472
    %v266 = vlog2.pop %v174
    %v267 = vmul.f32 %v266, 0.6931472
    %v268 = vlog2.pop %v175
    %v269 = vmul.f32 %v268, 0.6931472
    %v270 = vlog2.pop %v176
    %v271 = vmul.f32 %v270, 0.6931472
    %v272 = vlog2.pop %v177
    %v273 = vmul.f32 %v272, 0.6931472
    %v274 = vlog2.pop %v178
    %v275 = vmul.f32 %v274, 0.6931472
    %v276 = vlog2.pop %v179
    %v277 = vmul.f32 %v276, 0.6931472
    %v278 = vlog2.pop %v180
    %v279 = vmul.f32 %v278, 0.6931472
    %v280 = vlog2.pop %v181
    %v281 = vmul.f32 %v280, 0.6931472
    %v282 = vmul.f32 %v233, 0.7853982
    %v283 = vmul.f32 %v235, 0.7853982
    %v284 = vmul.f32 %v237, 0.7853982
    %v285 = vmul.f32 %v239, 0.7853982
    %v286 = vmul.f32 %v241, 0.7853982
    %v287 = vmul.f32 %v243, 0.7853982
    %v288 = vmul.f32 %v245, 0.7853982
    %v289 = vmul.f32 %v247, 0.7853982
    %v290 = vmul.f32 %v249, 0.7853982
    %v291 = vmul.f32 %v251, 0.7853982
    %v292 = vmul.f32 %v253, 0.7853982
    %v293 = vmul.f32 %v255, 0.7853982
    %v294 = vmul.f32 %v257, 0.7853982
    %v295 = vmul.f32 %v259, 0.7853982
    %v296 = vmul.f32 %v261, 0.7853982
    %v297 = vmul.f32 %v263, 0.7853982
    %v298 = vmul.f32 %v265, 0.7853982
    %v299 = vmul.f32 %v267, 0.7853982
    %v300 = vmul.f32 %v269, 0.7853982
    %v301 = vmul.f32 %v271, 0.7853982
    %v302 = vmul.f32 %v273, 0.7853982
    %v303 = vmul.f32 %v275, 0.7853982
    %v304 = vmul.f32 %v277, 0.7853982
    %v305 = vmul.f32 %v279, 0.7853982
    %v306 = vmul.f32 %v281, 0.7853982
    %v307 = vld [vmem:[%s2 + $0x5] sm:$0x1]
    %v308 = vld [vmem:[%s2 + $0x6] sm:$0x1]
    %310 = vset.pattern.permute.xlu0 0
    %311 = vperm.xlu0 %310, %v282
    %v312 = vpop.permute.xlu0 %311
    %315 = vset.pattern.permute.xlu0 0
    %316 = vperm.xlu0 %315, %v283
    %v317 = vpop.permute.xlu0 %316
    %320 = vset.pattern.permute.xlu0 0
    %321 = vperm.xlu0 %320, %v284
    %v322 = vpop.permute.xlu0 %321
    %325 = vset.pattern.permute.xlu0 0
    %326 = vperm.xlu0 %325, %v285
    %v327 = vpop.permute.xlu0 %326
    %330 = vset.pattern.permute.xlu0 0
    %331 = vperm.xlu0 %330, %v286
    %v332 = vpop.permute.xlu0 %331
    %335 = vset.pattern.permute.xlu0 0
    %336 = vperm.xlu0 %335, %v287
    %v337 = vpop.permute.xlu0 %336
    %340 = vset.pattern.permute.xlu0 0
    %341 = vperm.xlu0 %340, %v288
    %v342 = vpop.permute.xlu0 %341
    %345 = vset.pattern.permute.xlu0 0
    %346 = vperm.xlu0 %345, %v289
    %v347 = vpop.permute.xlu0 %346
    %350 = vset.pattern.permute.xlu0 0
    %351 = vperm.xlu0 %350, %v290
    %v352 = vpop.permute.xlu0 %351
    %355 = vset.pattern.permute.xlu0 0
    %356 = vperm.xlu0 %355, %v291
    %v357 = vpop.permute.xlu0 %356
    %360 = vset.pattern.permute.xlu0 0
    %361 = vperm.xlu0 %360, %v292
    %v362 = vpop.permute.xlu0 %361
    %365 = vset.pattern.permute.xlu0 0
    %366 = vperm.xlu0 %365, %v293
    %v367 = vpop.permute.xlu0 %366
    %370 = vset.pattern.permute.xlu0 0
    %371 = vperm.xlu0 %370, %v294
    %v372 = vpop.permute.xlu0 %371
    %375 = vset.pattern.permute.xlu0 0
    %376 = vperm.xlu0 %375, %v295
    %v377 = vpop.permute.xlu0 %376
    %380 = vset.pattern.permute.xlu0 0
    %381 = vperm.xlu0 %380, %v296
    %v382 = vpop.permute.xlu0 %381
    %385 = vset.pattern.permute.xlu0 0
    %386 = vperm.xlu0 %385, %v297
    %v387 = vpop.permute.xlu0 %386
    %390 = vset.pattern.permute.xlu0 0
    %391 = vperm.xlu0 %390, %v298
    %v392 = vpop.permute.xlu0 %391
    %395 = vset.pattern.permute.xlu0 0
    %396 = vperm.xlu0 %395, %v299
    %v397 = vpop.permute.xlu0 %396
    %400 = vset.pattern.permute.xlu0 0
    %401 = vperm.xlu0 %400, %v300
    %v402 = vpop.permute.xlu0 %401
    %405 = vset.pattern.permute.xlu0 0
    %406 = vperm.xlu0 %405, %v301
    %v407 = vpop.permute.xlu0 %406
    %410 = vset.pattern.permute.xlu0 0
    %411 = vperm.xlu0 %410, %v302
    %v412 = vpop.permute.xlu0 %411
    %415 = vset.pattern.permute.xlu0 0
    %416 = vperm.xlu0 %415, %v303
    %v417 = vpop.permute.xlu0 %416
    %420 = vset.pattern.permute.xlu0 0
    %421 = vperm.xlu0 %420, %v304
    %v422 = vpop.permute.xlu0 %421
    %425 = vset.pattern.permute.xlu0 0
    %426 = vperm.xlu0 %425, %v305
    %v427 = vpop.permute.xlu0 %426
    %430 = vset.pattern.permute.xlu0 0
    %431 = vperm.xlu0 %430, %v306
    %v432 = vpop.permute.xlu0 %431
    %v434 = vlaneseq
    %v435 = vshrl.u32 %v434, 7
    %v436 = vsub.s32 0, %v435
    %v437 = vrot.slane %v307, %v436
    %v438 = vmul.f32 %v312, %v437
    %v439 = vmul.f32 %v317, %v437
    %v440 = vmul.f32 %v322, %v437
    %v441 = vmul.f32 %v327, %v437
    %v442 = vmul.f32 %v332, %v437
    %v443 = vmul.f32 %v337, %v437
    %v444 = vmul.f32 %v342, %v437
    %v445 = vmul.f32 %v347, %v437
    %v446 = vmul.f32 %v352, %v437
    %v447 = vmul.f32 %v357, %v437
    %v448 = vmul.f32 %v362, %v437
    %v449 = vmul.f32 %v367, %v437
    %v450 = vmul.f32 %v372, %v437
    %v451 = vmul.f32 %v377, %v437
    %v452 = vmul.f32 %v382, %v437
    %v453 = vmul.f32 %v387, %v437
    %v454 = vmul.f32 %v392, %v437
    %v455 = vmul.f32 %v397, %v437
    %v456 = vmul.f32 %v402, %v437
    %v457 = vmul.f32 %v407, %v437
    %v458 = vmul.f32 %v412, %v437
    %v459 = vmul.f32 %v417, %v437
    %v460 = vmul.f32 %v422, %v437
    %v461 = vmul.f32 %v427, %v437
    %v462 = vmul.f32 %v432, %v437
    %v463 = vlaneseq
    %v464 = vshrl.u32 %v463, 7
    %v465 = vsub.s32 0, %v464
    %v466 = vrot.slane %v308, %v465
    %v467 = vadd.f32 %v438, %v466
    %v468 = vadd.f32 %v439, %v466
    %v469 = vadd.f32 %v440, %v466
    %v470 = vadd.f32 %v441, %v466
    %v471 = vadd.f32 %v442, %v466
    %v472 = vadd.f32 %v443, %v466
    %v473 = vadd.f32 %v444, %v466
    %v474 = vadd.f32 %v445, %v466
    %v475 = vadd.f32 %v446, %v466
    %v476 = vadd.f32 %v447, %v466
    %v477 = vadd.f32 %v448, %v466
    %v478 = vadd.f32 %v449, %v466
    %v479 = vadd.f32 %v450, %v466
    %v480 = vadd.f32 %v451, %v466
    %v481 = vadd.f32 %v452, %v466
    %v482 = vadd.f32 %v453, %v466
    %v483 = vadd.f32 %v454, %v466
    %v484 = vadd.f32 %v455, %v466
    %v485 = vadd.f32 %v456, %v466
    %v486 = vadd.f32 %v457, %v466
    %v487 = vadd.f32 %v458, %v466
    %v488 = vadd.f32 %v459, %v466
    %v489 = vadd.f32 %v460, %v466
    %v490 = vadd.f32 %v461, %v466
    %v491 = vadd.f32 %v462, %v466
    %v492 = vand.u32 2147483647, %v467
    %vm493 = vcmp.le.f32.partialorder %v492, 0.7853982
    %vm494 = vcmp.lt.s32.totalorder %v467, 0
    %v495 = vand.u32 %v467, 2139095040
    %v496 = vshrl.u32 %v495, 23
    %v497 = vsub.s32 %v496, 127
    %v498 = vand.u32 2147483647, %v467
    %v499 = vand.u32 %v498, 8388607
    %v500 = vor.u32 %v499, 8388608
    %v501 = vsub.s32 0, %v500
    %v502 = vadd.s32 %v497, 1
    %vm503 = vcmp.gt.s32.totalorder %v502, 0
    %v504 = vsel %vm503, %v502, 0
    %v505 = vshrl.u32 %v504, 5
    %v506 = vand.u32 %v504, 31
    %v507 = vsub.s32 32, %v506
    %v508 = vshrl.u32 683565275, %v507
    %v509 = vshll.u32 683565275, %v506
    %v510 = vshrl.u32 2475754826, %v507
    %v511 = vor.u32 %v509, %v510
    %v512 = vshll.u32 2475754826, %v506
    %v513 = vshrl.u32 2131351028, %v507
    %v514 = vor.u32 %v512, %v513
    %v515 = vshll.u32 2131351028, %v506
    %v516 = vshrl.u32 2102212464, %v507
    %v517 = vor.u32 %v515, %v516
    %v518 = vshll.u32 2102212464, %v506
    %v519 = vshrl.u32 920167782, %v507
    %v520 = vor.u32 %v518, %v519
    %v521 = vshll.u32 920167782, %v506
    %v522 = vshrl.u32 1326507024, %v507
    %v523 = vor.u32 %v521, %v522
    %vm524 = vcmp.lt.s32.totalorder %v505, 1
    %vm525 = vcmp.lt.s32.totalorder %v505, 2
    %vm526 = vcmp.lt.s32.totalorder %v505, 3
    %vm527 = vcmp.lt.s32.totalorder %v505, 4
    %v528 = vsel %vm524, %v508, %v511
    %v529 = vsel %vm527, %v517, 2102212464
    %v530 = vsel %vm526, %v514, %v529
    %v531 = vsel %vm525, %v528, %v530
    %v532 = vsel %vm524, %v511, %v514
    %v533 = vsel %vm527, %v520, 920167782
    %v534 = vsel %vm526, %v517, %v533
    %v535 = vsel %vm525, %v532, %v534
    %v536 = vsel %vm524, %v514, %v517
    %v537 = vsel %vm527, %v523, 1326507024
    %v538 = vsel %vm526, %v520, %v537
    %v539 = vsel %vm525, %v536, %v538
    %v540 = vshll.u32 %v500, 8
    %v541 = vmul.u32.u64.compose %v540, %v539
    %v542 = vextract.low.u32 %v541
    %v543 = vextract.high.u32 %v541
    %v544 = vmul.u32.u64.compose %v540, %v535
    %v545 = vextract.low.u32 %v544
    %v546 = vextract.high.u32 %v544
    %v547 = vmul.u32 %v540, %v531
    %v548 = vadd.s32 %v543, %v545
    %vm549 = vc.u32 %v543, %v545
    %v550 = vadd.s32 %v546, 1
    %v551 = vsel %vm549, %v550, %v546
    %v552 = vadd.s32 %v547, %v551
    %v553 = vadd.s32 %v552, 536870912
    %v554 = vshrl.u32 %v553, 30
    %v555 = vshll.u32 %v554, 30
    %v556 = vsub.s32 %v552, %v555
    %vm557 = vcmp.lt.s32.totalorder %v556, 0
    %v558 = vsub.s32 0, %v556
    %v559 = vsel %vm557, %v558, %v556
    %v560 = vclz %v559
    %v561 = vsub.s32 %v560, 2
    %vm562 = vcmp.gt.s32.totalorder 0, %v561
    %v563 = vsel %vm562, 0, %v561
    %v564 = vsub.s32 32, %v563
    %v565 = vshll.u32 %v556, %v563
    %v566 = vshrl.u32 %v548, %v564
    %v567 = vor.u32 %v565, %v566
    %v568 = vsub.s32 4294967266, %v563
    %v569 = vadd.s32 %v568, 127
    %v570 = vshll.u32 %v569, 23
    %v571 = vor.u32 4788187, %v570
    %v572 = vand.u32 2147483647, %v571
    %v574 = vcvt.s32.f32 %v567
    %v575 = vmul.f32 %v574, %v572
    %v576 = vxor.u32 %v575, 2147483648
    %v577 = vsel %vm494, %v576, %v575
    %v578 = vsub.s32 4, %v554
    %v579 = vsel %vm494, %v578, %v554
    %v580 = vsel %vm493, %v467, %v577
    %v581 = vsel %vm493, 0, %v579
    %v582 = vcosq.f32.pop %v580
    %v583 = vsinq.f32.pop %v580
    %vm584 = vweird.f32 %v467
    %v585 = vadd.s32 %v581, 3
    %v586 = vand.u32 %v585, 3
    %vm587 = vcmp.lt.s32.totalorder %v586, 2
    %vm588 = vcmp.eq.s32.totalorder %v586, 0
    %v589 = vxor.u32 %v583, 2147483648
    %v590 = vsel %vm588, %v582, %v589
    %vm591 = vcmp.eq.s32.totalorder %v586, 2
    %v592 = vxor.u32 %v582, 2147483648
    %v593 = vsel %vm591, %v592, %v583
    %v594 = vsel %vm587, %v590, %v593
    %v595 = vsel %vm584, nan, %v594
    %v596 = vand.u32 2147483647, %v468
    %vm597 = vcmp.le.f32.partialorder %v596, 0.7853982
    %vm598 = vcmp.lt.s32.totalorder %v468, 0
    %v599 = vand.u32 %v468, 2139095040
    %v600 = vshrl.u32 %v599, 23
    %v601 = vsub.s32 %v600, 127
    %v602 = vand.u32 2147483647, %v468
    %v603 = vand.u32 %v602, 8388607
    %v604 = vor.u32 %v603, 8388608
    %v605 = vsub.s32 0, %v604
    %v606 = vadd.s32 %v601, 1
    %vm607 = vcmp.gt.s32.totalorder %v606, 0
    %v608 = vsel %vm607, %v606, 0
    %v609 = vshrl.u32 %v608, 5
    %v610 = vand.u32 %v608, 31
    %v611 = vsub.s32 32, %v610
    %v612 = vshrl.u32 683565275, %v611
    %v613 = vshll.u32 683565275, %v610
    %v614 = vshrl.u32 2475754826, %v611
    %v615 = vor.u32 %v613, %v614
    %v616 = vshll.u32 2475754826, %v610
    %v617 = vshrl.u32 2131351028, %v611
    %v618 = vor.u32 %v616, %v617
    %v619 = vshll.u32 2131351028, %v610
    %v620 = vshrl.u32 2102212464, %v611
    %v621 = vor.u32 %v619, %v620
    %v622 = vshll.u32 2102212464, %v610
    %v623 = vshrl.u32 920167782, %v611
    %v624 = vor.u32 %v622, %v623
    %v625 = vshll.u32 920167782, %v610
    %v626 = vshrl.u32 1326507024, %v611
    %v627 = vor.u32 %v625, %v626
    %vm628 = vcmp.lt.s32.totalorder %v609, 1
    %vm629 = vcmp.lt.s32.totalorder %v609, 2
    %vm630 = vcmp.lt.s32.totalorder %v609, 3
    %vm631 = vcmp.lt.s32.totalorder %v609, 4
    %v632 = vsel %vm628, %v612, %v615
    %v633 = vsel %vm631, %v621, 2102212464
    %v634 = vsel %vm630, %v618, %v633
    %v635 = vsel %vm629, %v632, %v634
    %v636 = vsel %vm628, %v615, %v618
    %v637 = vsel %vm631, %v624, 920167782
    %v638 = vsel %vm630, %v621, %v637
    %v639 = vsel %vm629, %v636, %v638
    %v640 = vsel %vm628, %v618, %v621
    %v641 = vsel %vm631, %v627, 1326507024
    %v642 = vsel %vm630, %v624, %v641
    %v643 = vsel %vm629, %v640, %v642
    %v644 = vshll.u32 %v604, 8
    %v645 = vmul.u32.u64.compose %v644, %v643
    %v646 = vextract.low.u32 %v645
    %v647 = vextract.high.u32 %v645
    %v648 = vmul.u32.u64.compose %v644, %v639
    %v649 = vextract.low.u32 %v648
    %v650 = vextract.high.u32 %v648
    %v651 = vmul.u32 %v644, %v635
    %v652 = vadd.s32 %v647, %v649
    %vm653 = vc.u32 %v647, %v649
    %v654 = vadd.s32 %v650, 1
    %v655 = vsel %vm653, %v654, %v650
    %v656 = vadd.s32 %v651, %v655
    %v657 = vadd.s32 %v656, 536870912
    %v658 = vshrl.u32 %v657, 30
    %v659 = vshll.u32 %v658, 30
    %v660 = vsub.s32 %v656, %v659
    %vm661 = vcmp.lt.s32.totalorder %v660, 0
    %v662 = vsub.s32 0, %v660
    %v663 = vsel %vm661, %v662, %v660
    %v664 = vclz %v663
    %v665 = vsub.s32 %v664, 2
    %vm666 = vcmp.gt.s32.totalorder 0, %v665
    %v667 = vsel %vm666, 0, %v665
    %v668 = vsub.s32 32, %v667
    %v669 = vshll.u32 %v660, %v667
    %v670 = vshrl.u32 %v652, %v668
    %v671 = vor.u32 %v669, %v670
    %v672 = vsub.s32 4294967266, %v667
    %v673 = vadd.s32 %v672, 127
    %v674 = vshll.u32 %v673, 23
    %v675 = vor.u32 4788187, %v674
    %v676 = vand.u32 2147483647, %v675
    %v678 = vcvt.s32.f32 %v671
    %v679 = vmul.f32 %v678, %v676
    %v680 = vxor.u32 %v679, 2147483648
    %v681 = vsel %vm598, %v680, %v679
    %v682 = vsub.s32 4, %v658
    %v683 = vsel %vm598, %v682, %v658
    %v684 = vsel %vm597, %v468, %v681
    %v685 = vsel %vm597, 0, %v683
    %v686 = vcosq.f32.pop %v684
    %v687 = vsinq.f32.pop %v684
    %vm688 = vweird.f32 %v468
    %v689 = vadd.s32 %v685, 3
    %v690 = vand.u32 %v689, 3
    %vm691 = vcmp.lt.s32.totalorder %v690, 2
    %vm692 = vcmp.eq.s32.totalorder %v690, 0
    %v693 = vxor.u32 %v687, 2147483648
    %v694 = vsel %vm692, %v686, %v693
    %vm695 = vcmp.eq.s32.totalorder %v690, 2
    %v696 = vxor.u32 %v686, 2147483648
    %v697 = vsel %vm695, %v696, %v687
    %v698 = vsel %vm691, %v694, %v697
    %v699 = vsel %vm688, nan, %v698
    %v700 = vand.u32 2147483647, %v469
    %vm701 = vcmp.le.f32.partialorder %v700, 0.7853982
    %vm702 = vcmp.lt.s32.totalorder %v469, 0
    %v703 = vand.u32 %v469, 2139095040
    %v704 = vshrl.u32 %v703, 23
    %v705 = vsub.s32 %v704, 127
    %v706 = vand.u32 2147483647, %v469
    %v707 = vand.u32 %v706, 8388607
    %v708 = vor.u32 %v707, 8388608
    %v709 = vsub.s32 0, %v708
    %v710 = vadd.s32 %v705, 1
    %vm711 = vcmp.gt.s32.totalorder %v710, 0
    %v712 = vsel %vm711, %v710, 0
    %v713 = vshrl.u32 %v712, 5
    %v714 = vand.u32 %v712, 31
    %v715 = vsub.s32 32, %v714
    %v716 = vshrl.u32 683565275, %v715
    %v717 = vshll.u32 683565275, %v714
    %v718 = vshrl.u32 2475754826, %v715
    %v719 = vor.u32 %v717, %v718
    %v720 = vshll.u32 2475754826, %v714
    %v721 = vshrl.u32 2131351028, %v715
    %v722 = vor.u32 %v720, %v721
    %v723 = vshll.u32 2131351028, %v714
    %v724 = vshrl.u32 2102212464, %v715
    %v725 = vor.u32 %v723, %v724
    %v726 = vshll.u32 2102212464, %v714
    %v727 = vshrl.u32 920167782, %v715
    %v728 = vor.u32 %v726, %v727
    %v729 = vshll.u32 920167782, %v714
    %v730 = vshrl.u32 1326507024, %v715
    %v731 = vor.u32 %v729, %v730
    %vm732 = vcmp.lt.s32.totalorder %v713, 1
    %vm733 = vcmp.lt.s32.totalorder %v713, 2
    %vm734 = vcmp.lt.s32.totalorder %v713, 3
    %vm735 = vcmp.lt.s32.totalorder %v713, 4
    %v736 = vsel %vm732, %v716, %v719
    %v737 = vsel %vm735, %v725, 2102212464
    %v738 = vsel %vm734, %v722, %v737
    %v739 = vsel %vm733, %v736, %v738
    %v740 = vsel %vm732, %v719, %v722
    %v741 = vsel %vm735, %v728, 920167782
    %v742 = vsel %vm734, %v725, %v741
    %v743 = vsel %vm733, %v740, %v742
    %v744 = vsel %vm732, %v722, %v725
    %v745 = vsel %vm735, %v731, 1326507024
    %v746 = vsel %vm734, %v728, %v745
    %v747 = vsel %vm733, %v744, %v746
    %v748 = vshll.u32 %v708, 8
    %v749 = vmul.u32.u64.compose %v748, %v747
    %v750 = vextract.low.u32 %v749
    %v751 = vextract.high.u32 %v749
    %v752 = vmul.u32.u64.compose %v748, %v743
    %v753 = vextract.low.u32 %v752
    %v754 = vextract.high.u32 %v752
    %v755 = vmul.u32 %v748, %v739
    %v756 = vadd.s32 %v751, %v753
    %vm757 = vc.u32 %v751, %v753
    %v758 = vadd.s32 %v754, 1
    %v759 = vsel %vm757, %v758, %v754
    %v760 = vadd.s32 %v755, %v759
    %v761 = vadd.s32 %v760, 536870912
    %v762 = vshrl.u32 %v761, 30
    %v763 = vshll.u32 %v762, 30
    %v764 = vsub.s32 %v760, %v763
    %vm765 = vcmp.lt.s32.totalorder %v764, 0
    %v766 = vsub.s32 0, %v764
    %v767 = vsel %vm765, %v766, %v764
    %v768 = vclz %v767
    %v769 = vsub.s32 %v768, 2
    %vm770 = vcmp.gt.s32.totalorder 0, %v769
    %v771 = vsel %vm770, 0, %v769
    %v772 = vsub.s32 32, %v771
    %v773 = vshll.u32 %v764, %v771
    %v774 = vshrl.u32 %v756, %v772
    %v775 = vor.u32 %v773, %v774
    %v776 = vsub.s32 4294967266, %v771
    %v777 = vadd.s32 %v776, 127
    %v778 = vshll.u32 %v777, 23
    %v779 = vor.u32 4788187, %v778
    %v780 = vand.u32 2147483647, %v779
    %v782 = vcvt.s32.f32 %v775
    %v783 = vmul.f32 %v782, %v780
    %v784 = vxor.u32 %v783, 2147483648
    %v785 = vsel %vm702, %v784, %v783
    %v786 = vsub.s32 4, %v762
    %v787 = vsel %vm702, %v786, %v762
    %v788 = vsel %vm701, %v469, %v785
    %v789 = vsel %vm701, 0, %v787
    %v790 = vcosq.f32.pop %v788
    %v791 = vsinq.f32.pop %v788
    %vm792 = vweird.f32 %v469
    %v793 = vadd.s32 %v789, 3
    %v794 = vand.u32 %v793, 3
    %vm795 = vcmp.lt.s32.totalorder %v794, 2
    %vm796 = vcmp.eq.s32.totalorder %v794, 0
    %v797 = vxor.u32 %v791, 2147483648
    %v798 = vsel %vm796, %v790, %v797
    %vm799 = vcmp.eq.s32.totalorder %v794, 2
    %v800 = vxor.u32 %v790, 2147483648
    %v801 = vsel %vm799, %v800, %v791
    %v802 = vsel %vm795, %v798, %v801
    %v803 = vsel %vm792, nan, %v802
    %v804 = vand.u32 2147483647, %v470
    %vm805 = vcmp.le.f32.partialorder %v804, 0.7853982
    %vm806 = vcmp.lt.s32.totalorder %v470, 0
    %v807 = vand.u32 %v470, 2139095040
    %v808 = vshrl.u32 %v807, 23
    %v809 = vsub.s32 %v808, 127
    %v810 = vand.u32 2147483647, %v470
    %v811 = vand.u32 %v810, 8388607
    %v812 = vor.u32 %v811, 8388608
    %v813 = vsub.s32 0, %v812
    %v814 = vadd.s32 %v809, 1
    %vm815 = vcmp.gt.s32.totalorder %v814, 0
    %v816 = vsel %vm815, %v814, 0
    %v817 = vshrl.u32 %v816, 5
    %v818 = vand.u32 %v816, 31
    %v819 = vsub.s32 32, %v818
    %v820 = vshrl.u32 683565275, %v819
    %v821 = vshll.u32 683565275, %v818
    %v822 = vshrl.u32 2475754826, %v819
    %v823 = vor.u32 %v821, %v822
    %v824 = vshll.u32 2475754826, %v818
    %v825 = vshrl.u32 2131351028, %v819
    %v826 = vor.u32 %v824, %v825
    %v827 = vshll.u32 2131351028, %v818
    %v828 = vshrl.u32 2102212464, %v819
    %v829 = vor.u32 %v827, %v828
    %v830 = vshll.u32 2102212464, %v818
    %v831 = vshrl.u32 920167782, %v819
    %v832 = vor.u32 %v830, %v831
    %v833 = vshll.u32 920167782, %v818
    %v834 = vshrl.u32 1326507024, %v819
    %v835 = vor.u32 %v833, %v834
    %vm836 = vcmp.lt.s32.totalorder %v817, 1
    %vm837 = vcmp.lt.s32.totalorder %v817, 2
    %vm838 = vcmp.lt.s32.totalorder %v817, 3
    %vm839 = vcmp.lt.s32.totalorder %v817, 4
    %v840 = vsel %vm836, %v820, %v823
    %v841 = vsel %vm839, %v829, 2102212464
    %v842 = vsel %vm838, %v826, %v841
    %v843 = vsel %vm837, %v840, %v842
    %v844 = vsel %vm836, %v823, %v826
    %v845 = vsel %vm839, %v832, 920167782
    %v846 = vsel %vm838, %v829, %v845
    %v847 = vsel %vm837, %v844, %v846
    %v848 = vsel %vm836, %v826, %v829
    %v849 = vsel %vm839, %v835, 1326507024
    %v850 = vsel %vm838, %v832, %v849
    %v851 = vsel %vm837, %v848, %v850
    %v852 = vshll.u32 %v812, 8
    %v853 = vmul.u32.u64.compose %v852, %v851
    %v854 = vextract.low.u32 %v853
    %v855 = vextract.high.u32 %v853
    %v856 = vmul.u32.u64.compose %v852, %v847
    %v857 = vextract.low.u32 %v856
    %v858 = vextract.high.u32 %v856
    %v859 = vmul.u32 %v852, %v843
    %v860 = vadd.s32 %v855, %v857
    %vm861 = vc.u32 %v855, %v857
    %v862 = vadd.s32 %v858, 1
    %v863 = vsel %vm861, %v862, %v858
    %v864 = vadd.s32 %v859, %v863
    %v865 = vadd.s32 %v864, 536870912
    %v866 = vshrl.u32 %v865, 30
    %v867 = vshll.u32 %v866, 30
    %v868 = vsub.s32 %v864, %v867
    %vm869 = vcmp.lt.s32.totalorder %v868, 0
    %v870 = vsub.s32 0, %v868
    %v871 = vsel %vm869, %v870, %v868
    %v872 = vclz %v871
    %v873 = vsub.s32 %v872, 2
    %vm874 = vcmp.gt.s32.totalorder 0, %v873
    %v875 = vsel %vm874, 0, %v873
    %v876 = vsub.s32 32, %v875
    %v877 = vshll.u32 %v868, %v875
    %v878 = vshrl.u32 %v860, %v876
    %v879 = vor.u32 %v877, %v878
    %v880 = vsub.s32 4294967266, %v875
    %v881 = vadd.s32 %v880, 127
    %v882 = vshll.u32 %v881, 23
    %v883 = vor.u32 4788187, %v882
    %v884 = vand.u32 2147483647, %v883
    %v886 = vcvt.s32.f32 %v879
    %v887 = vmul.f32 %v886, %v884
    %v888 = vxor.u32 %v887, 2147483648
    %v889 = vsel %vm806, %v888, %v887
    %v890 = vsub.s32 4, %v866
    %v891 = vsel %vm806, %v890, %v866
    %v892 = vsel %vm805, %v470, %v889
    %v893 = vsel %vm805, 0, %v891
    %v894 = vcosq.f32.pop %v892
    %v895 = vsinq.f32.pop %v892
    %vm896 = vweird.f32 %v470
    %v897 = vadd.s32 %v893, 3
    %v898 = vand.u32 %v897, 3
    %vm899 = vcmp.lt.s32.totalorder %v898, 2
    %vm900 = vcmp.eq.s32.totalorder %v898, 0
    %v901 = vxor.u32 %v895, 2147483648
    %v902 = vsel %vm900, %v894, %v901
    %vm903 = vcmp.eq.s32.totalorder %v898, 2
    %v904 = vxor.u32 %v894, 2147483648
    %v905 = vsel %vm903, %v904, %v895
    %v906 = vsel %vm899, %v902, %v905
    %v907 = vsel %vm896, nan, %v906
    %v908 = vand.u32 2147483647, %v471
    %vm909 = vcmp.le.f32.partialorder %v908, 0.7853982
    %vm910 = vcmp.lt.s32.totalorder %v471, 0
    %v911 = vand.u32 %v471, 2139095040
    %v912 = vshrl.u32 %v911, 23
    %v913 = vsub.s32 %v912, 127
    %v914 = vand.u32 2147483647, %v471
    %v915 = vand.u32 %v914, 8388607
    %v916 = vor.u32 %v915, 8388608
    %v917 = vsub.s32 0, %v916
    %v918 = vadd.s32 %v913, 1
    %vm919 = vcmp.gt.s32.totalorder %v918, 0
    %v920 = vsel %vm919, %v918, 0
    %v921 = vshrl.u32 %v920, 5
    %v922 = vand.u32 %v920, 31
    %v923 = vsub.s32 32, %v922
    %v924 = vshrl.u32 683565275, %v923
    %v925 = vshll.u32 683565275, %v922
    %v926 = vshrl.u32 2475754826, %v923
    %v927 = vor.u32 %v925, %v926
    %v928 = vshll.u32 2475754826, %v922
    %v929 = vshrl.u32 2131351028, %v923
    %v930 = vor.u32 %v928, %v929
    %v931 = vshll.u32 2131351028, %v922
    %v932 = vshrl.u32 2102212464, %v923
    %v933 = vor.u32 %v931, %v932
    %v934 = vshll.u32 2102212464, %v922
    %v935 = vshrl.u32 920167782, %v923
    %v936 = vor.u32 %v934, %v935
    %v937 = vshll.u32 920167782, %v922
    %v938 = vshrl.u32 1326507024, %v923
    %v939 = vor.u32 %v937, %v938
    %vm940 = vcmp.lt.s32.totalorder %v921, 1
    %vm941 = vcmp.lt.s32.totalorder %v921, 2
    %vm942 = vcmp.lt.s32.totalorder %v921, 3
    %vm943 = vcmp.lt.s32.totalorder %v921, 4
    %v944 = vsel %vm940, %v924, %v927
    %v945 = vsel %vm943, %v933, 2102212464
    %v946 = vsel %vm942, %v930, %v945
    %v947 = vsel %vm941, %v944, %v946
    %v948 = vsel %vm940, %v927, %v930
    %v949 = vsel %vm943, %v936, 920167782
    %v950 = vsel %vm942, %v933, %v949
    %v951 = vsel %vm941, %v948, %v950
    %v952 = vsel %vm940, %v930, %v933
    %v953 = vsel %vm943, %v939, 1326507024
    %v954 = vsel %vm942, %v936, %v953
    %v955 = vsel %vm941, %v952, %v954
    %v956 = vshll.u32 %v916, 8
    %v957 = vmul.u32.u64.compose %v956, %v955
    %v958 = vextract.low.u32 %v957
    %v959 = vextract.high.u32 %v957
    %v960 = vmul.u32.u64.compose %v956, %v951
    %v961 = vextract.low.u32 %v960
    %v962 = vextract.high.u32 %v960
    %v963 = vmul.u32 %v956, %v947
    %v964 = vadd.s32 %v959, %v961
    %vm965 = vc.u32 %v959, %v961
    %v966 = vadd.s32 %v962, 1
    %v967 = vsel %vm965, %v966, %v962
    %v968 = vadd.s32 %v963, %v967
    %v969 = vadd.s32 %v968, 536870912
    %v970 = vshrl.u32 %v969, 30
    %v971 = vshll.u32 %v970, 30
    %v972 = vsub.s32 %v968, %v971
    %vm973 = vcmp.lt.s32.totalorder %v972, 0
    %v974 = vsub.s32 0, %v972
    %v975 = vsel %vm973, %v974, %v972
    %v976 = vclz %v975
    %v977 = vsub.s32 %v976, 2
    %vm978 = vcmp.gt.s32.totalorder 0, %v977
    %v979 = vsel %vm978, 0, %v977
    %v980 = vsub.s32 32, %v979
    %v981 = vshll.u32 %v972, %v979
    %v982 = vshrl.u32 %v964, %v980
    %v983 = vor.u32 %v981, %v982
    %v984 = vsub.s32 4294967266, %v979
    %v985 = vadd.s32 %v984, 127
    %v986 = vshll.u32 %v985, 23
    %v987 = vor.u32 4788187, %v986
    %v988 = vand.u32 2147483647, %v987
    %v990 = vcvt.s32.f32 %v983
    %v991 = vmul.f32 %v990, %v988
    %v992 = vxor.u32 %v991, 2147483648
    %v993 = vsel %vm910, %v992, %v991
    %v994 = vsub.s32 4, %v970
    %v995 = vsel %vm910, %v994, %v970
    %v996 = vsel %vm909, %v471, %v993
    %v997 = vsel %vm909, 0, %v995
    %v998 = vcosq.f32.pop %v996
    %v999 = vsinq.f32.pop %v996
    %vm1000 = vweird.f32 %v471
    %v1001 = vadd.s32 %v997, 3
    %v1002 = vand.u32 %v1001, 3
    %vm1003 = vcmp.lt.s32.totalorder %v1002, 2
    %vm1004 = vcmp.eq.s32.totalorder %v1002, 0
    %v1005 = vxor.u32 %v999, 2147483648
    %v1006 = vsel %vm1004, %v998, %v1005
    %vm1007 = vcmp.eq.s32.totalorder %v1002, 2
    %v1008 = vxor.u32 %v998, 2147483648
    %v1009 = vsel %vm1007, %v1008, %v999
    %v1010 = vsel %vm1003, %v1006, %v1009
    %v1011 = vsel %vm1000, nan, %v1010
    %v1012 = vand.u32 2147483647, %v472
    %vm1013 = vcmp.le.f32.partialorder %v1012, 0.7853982
    %vm1014 = vcmp.lt.s32.totalorder %v472, 0
    %v1015 = vand.u32 %v472, 2139095040
    %v1016 = vshrl.u32 %v1015, 23
    %v1017 = vsub.s32 %v1016, 127
    %v1018 = vand.u32 2147483647, %v472
    %v1019 = vand.u32 %v1018, 8388607
    %v1020 = vor.u32 %v1019, 8388608
    %v1021 = vsub.s32 0, %v1020
    %v1022 = vadd.s32 %v1017, 1
    %vm1023 = vcmp.gt.s32.totalorder %v1022, 0
    %v1024 = vsel %vm1023, %v1022, 0
    %v1025 = vshrl.u32 %v1024, 5
    %v1026 = vand.u32 %v1024, 31
    %v1027 = vsub.s32 32, %v1026
    %v1028 = vshrl.u32 683565275, %v1027
    %v1029 = vshll.u32 683565275, %v1026
    %v1030 = vshrl.u32 2475754826, %v1027
    %v1031 = vor.u32 %v1029, %v1030
    %v1032 = vshll.u32 2475754826, %v1026
    %v1033 = vshrl.u32 2131351028, %v1027
    %v1034 = vor.u32 %v1032, %v1033
    %v1035 = vshll.u32 2131351028, %v1026
    %v1036 = vshrl.u32 2102212464, %v1027
    %v1037 = vor.u32 %v1035, %v1036
    %v1038 = vshll.u32 2102212464, %v1026
    %v1039 = vshrl.u32 920167782, %v1027
    %v1040 = vor.u32 %v1038, %v1039
    %v1041 = vshll.u32 920167782, %v1026
    %v1042 = vshrl.u32 1326507024, %v1027
    %v1043 = vor.u32 %v1041, %v1042
    %vm1044 = vcmp.lt.s32.totalorder %v1025, 1
    %vm1045 = vcmp.lt.s32.totalorder %v1025, 2
    %vm1046 = vcmp.lt.s32.totalorder %v1025, 3
    %vm1047 = vcmp.lt.s32.totalorder %v1025, 4
    %v1048 = vsel %vm1044, %v1028, %v1031
    %v1049 = vsel %vm1047, %v1037, 2102212464
    %v1050 = vsel %vm1046, %v1034, %v1049
    %v1051 = vsel %vm1045, %v1048, %v1050
    %v1052 = vsel %vm1044, %v1031, %v1034
    %v1053 = vsel %vm1047, %v1040, 920167782
    %v1054 = vsel %vm1046, %v1037, %v1053
    %v1055 = vsel %vm1045, %v1052, %v1054
    %v1056 = vsel %vm1044, %v1034, %v1037
    %v1057 = vsel %vm1047, %v1043, 1326507024
    %v1058 = vsel %vm1046, %v1040, %v1057
    %v1059 = vsel %vm1045, %v1056, %v1058
    %v1060 = vshll.u32 %v1020, 8
    %v1061 = vmul.u32.u64.compose %v1060, %v1059
    %v1062 = vextract.low.u32 %v1061
    %v1063 = vextract.high.u32 %v1061
    %v1064 = vmul.u32.u64.compose %v1060, %v1055
    %v1065 = vextract.low.u32 %v1064
    %v1066 = vextract.high.u32 %v1064
    %v1067 = vmul.u32 %v1060, %v1051
    %v1068 = vadd.s32 %v1063, %v1065
    %vm1069 = vc.u32 %v1063, %v1065
    %v1070 = vadd.s32 %v1066, 1
    %v1071 = vsel %vm1069, %v1070, %v1066
    %v1072 = vadd.s32 %v1067, %v1071
    %v1073 = vadd.s32 %v1072, 536870912
    %v1074 = vshrl.u32 %v1073, 30
    %v1075 = vshll.u32 %v1074, 30
    %v1076 = vsub.s32 %v1072, %v1075
    %vm1077 = vcmp.lt.s32.totalorder %v1076, 0
    %v1078 = vsub.s32 0, %v1076
    %v1079 = vsel %vm1077, %v1078, %v1076
    %v1080 = vclz %v1079
    %v1081 = vsub.s32 %v1080, 2
    %vm1082 = vcmp.gt.s32.totalorder 0, %v1081
    %v1083 = vsel %vm1082, 0, %v1081
    %v1084 = vsub.s32 32, %v1083
    %v1085 = vshll.u32 %v1076, %v1083
    %v1086 = vshrl.u32 %v1068, %v1084
    %v1087 = vor.u32 %v1085, %v1086
    %v1088 = vsub.s32 4294967266, %v1083
    %v1089 = vadd.s32 %v1088, 127
    %v1090 = vshll.u32 %v1089, 23
    %v1091 = vor.u32 4788187, %v1090
    %v1092 = vand.u32 2147483647, %v1091
    %v1094 = vcvt.s32.f32 %v1087
    %v1095 = vmul.f32 %v1094, %v1092
    %v1096 = vxor.u32 %v1095, 2147483648
    %v1097 = vsel %vm1014, %v1096, %v1095
    %v1098 = vsub.s32 4, %v1074
    %v1099 = vsel %vm1014, %v1098, %v1074
    %v1100 = vsel %vm1013, %v472, %v1097
    %v1101 = vsel %vm1013, 0, %v1099
    %v1102 = vcosq.f32.pop %v1100
    %v1103 = vsinq.f32.pop %v1100
    %vm1104 = vweird.f32 %v472
    %v1105 = vadd.s32 %v1101, 3
    %v1106 = vand.u32 %v1105, 3
    %vm1107 = vcmp.lt.s32.totalorder %v1106, 2
    %vm1108 = vcmp.eq.s32.totalorder %v1106, 0
    %v1109 = vxor.u32 %v1103, 2147483648
    %v1110 = vsel %vm1108, %v1102, %v1109
    %vm1111 = vcmp.eq.s32.totalorder %v1106, 2
    %v1112 = vxor.u32 %v1102, 2147483648
    %v1113 = vsel %vm1111, %v1112, %v1103
    %v1114 = vsel %vm1107, %v1110, %v1113
    %v1115 = vsel %vm1104, nan, %v1114
    %v1116 = vand.u32 2147483647, %v473
    %vm1117 = vcmp.le.f32.partialorder %v1116, 0.7853982
    %vm1118 = vcmp.lt.s32.totalorder %v473, 0
    %v1119 = vand.u32 %v473, 2139095040
    %v1120 = vshrl.u32 %v1119, 23
    %v1121 = vsub.s32 %v1120, 127
    %v1122 = vand.u32 2147483647, %v473
    %v1123 = vand.u32 %v1122, 8388607
    %v1124 = vor.u32 %v1123, 8388608
    %v1125 = vsub.s32 0, %v1124
    %v1126 = vadd.s32 %v1121, 1
    %vm1127 = vcmp.gt.s32.totalorder %v1126, 0
    %v1128 = vsel %vm1127, %v1126, 0
    %v1129 = vshrl.u32 %v1128, 5
    %v1130 = vand.u32 %v1128, 31
    %v1131 = vsub.s32 32, %v1130
    %v1132 = vshrl.u32 683565275, %v1131
    %v1133 = vshll.u32 683565275, %v1130
    %v1134 = vshrl.u32 2475754826, %v1131
    %v1135 = vor.u32 %v1133, %v1134
    %v1136 = vshll.u32 2475754826, %v1130
    %v1137 = vshrl.u32 2131351028, %v1131
    %v1138 = vor.u32 %v1136, %v1137
    %v1139 = vshll.u32 2131351028, %v1130
    %v1140 = vshrl.u32 2102212464, %v1131
    %v1141 = vor.u32 %v1139, %v1140
    %v1142 = vshll.u32 2102212464, %v1130
    %v1143 = vshrl.u32 920167782, %v1131
    %v1144 = vor.u32 %v1142, %v1143
    %v1145 = vshll.u32 920167782, %v1130
    %v1146 = vshrl.u32 1326507024, %v1131
    %v1147 = vor.u32 %v1145, %v1146
    %vm1148 = vcmp.lt.s32.totalorder %v1129, 1
    %vm1149 = vcmp.lt.s32.totalorder %v1129, 2
    %vm1150 = vcmp.lt.s32.totalorder %v1129, 3
    %vm1151 = vcmp.lt.s32.totalorder %v1129, 4
    %v1152 = vsel %vm1148, %v1132, %v1135
    %v1153 = vsel %vm1151, %v1141, 2102212464
    %v1154 = vsel %vm1150, %v1138, %v1153
    %v1155 = vsel %vm1149, %v1152, %v1154
    %v1156 = vsel %vm1148, %v1135, %v1138
    %v1157 = vsel %vm1151, %v1144, 920167782
    %v1158 = vsel %vm1150, %v1141, %v1157
    %v1159 = vsel %vm1149, %v1156, %v1158
    %v1160 = vsel %vm1148, %v1138, %v1141
    %v1161 = vsel %vm1151, %v1147, 1326507024
    %v1162 = vsel %vm1150, %v1144, %v1161
    %v1163 = vsel %vm1149, %v1160, %v1162
    %v1164 = vshll.u32 %v1124, 8
    %v1165 = vmul.u32.u64.compose %v1164, %v1163
    %v1166 = vextract.low.u32 %v1165
    %v1167 = vextract.high.u32 %v1165
    %v1168 = vmul.u32.u64.compose %v1164, %v1159
    %v1169 = vextract.low.u32 %v1168
    %v1170 = vextract.high.u32 %v1168
    %v1171 = vmul.u32 %v1164, %v1155
    %v1172 = vadd.s32 %v1167, %v1169
    %vm1173 = vc.u32 %v1167, %v1169
    %v1174 = vadd.s32 %v1170, 1
    %v1175 = vsel %vm1173, %v1174, %v1170
    %v1176 = vadd.s32 %v1171, %v1175
    %v1177 = vadd.s32 %v1176, 536870912
    %v1178 = vshrl.u32 %v1177, 30
    %v1179 = vshll.u32 %v1178, 30
    %v1180 = vsub.s32 %v1176, %v1179
    %vm1181 = vcmp.lt.s32.totalorder %v1180, 0
    %v1182 = vsub.s32 0, %v1180
    %v1183 = vsel %vm1181, %v1182, %v1180
    %v1184 = vclz %v1183
    %v1185 = vsub.s32 %v1184, 2
    %vm1186 = vcmp.gt.s32.totalorder 0, %v1185
    %v1187 = vsel %vm1186, 0, %v1185
    %v1188 = vsub.s32 32, %v1187
    %v1189 = vshll.u32 %v1180, %v1187
    %v1190 = vshrl.u32 %v1172, %v1188
    %v1191 = vor.u32 %v1189, %v1190
    %v1192 = vsub.s32 4294967266, %v1187
    %v1193 = vadd.s32 %v1192, 127
    %v1194 = vshll.u32 %v1193, 23
    %v1195 = vor.u32 4788187, %v1194
    %v1196 = vand.u32 2147483647, %v1195
    %v1198 = vcvt.s32.f32 %v1191
    %v1199 = vmul.f32 %v1198, %v1196
    %v1200 = vxor.u32 %v1199, 2147483648
    %v1201 = vsel %vm1118, %v1200, %v1199
    %v1202 = vsub.s32 4, %v1178
    %v1203 = vsel %vm1118, %v1202, %v1178
    %v1204 = vsel %vm1117, %v473, %v1201
    %v1205 = vsel %vm1117, 0, %v1203
    %v1206 = vcosq.f32.pop %v1204
    %v1207 = vsinq.f32.pop %v1204
    %vm1208 = vweird.f32 %v473
    %v1209 = vadd.s32 %v1205, 3
    %v1210 = vand.u32 %v1209, 3
    %vm1211 = vcmp.lt.s32.totalorder %v1210, 2
    %vm1212 = vcmp.eq.s32.totalorder %v1210, 0
    %v1213 = vxor.u32 %v1207, 2147483648
    %v1214 = vsel %vm1212, %v1206, %v1213
    %vm1215 = vcmp.eq.s32.totalorder %v1210, 2
    %v1216 = vxor.u32 %v1206, 2147483648
    %v1217 = vsel %vm1215, %v1216, %v1207
    %v1218 = vsel %vm1211, %v1214, %v1217
    %v1219 = vsel %vm1208, nan, %v1218
    %v1220 = vand.u32 2147483647, %v474
    %vm1221 = vcmp.le.f32.partialorder %v1220, 0.7853982
    %vm1222 = vcmp.lt.s32.totalorder %v474, 0
    %v1223 = vand.u32 %v474, 2139095040
    %v1224 = vshrl.u32 %v1223, 23
    %v1225 = vsub.s32 %v1224, 127
    %v1226 = vand.u32 2147483647, %v474
    %v1227 = vand.u32 %v1226, 8388607
    %v1228 = vor.u32 %v1227, 8388608
    %v1229 = vsub.s32 0, %v1228
    %v1230 = vadd.s32 %v1225, 1
    %vm1231 = vcmp.gt.s32.totalorder %v1230, 0
    %v1232 = vsel %vm1231, %v1230, 0
    %v1233 = vshrl.u32 %v1232, 5
    %v1234 = vand.u32 %v1232, 31
    %v1235 = vsub.s32 32, %v1234
    %v1236 = vshrl.u32 683565275, %v1235
    %v1237 = vshll.u32 683565275, %v1234
    %v1238 = vshrl.u32 2475754826, %v1235
    %v1239 = vor.u32 %v1237, %v1238
    %v1240 = vshll.u32 2475754826, %v1234
    %v1241 = vshrl.u32 2131351028, %v1235
    %v1242 = vor.u32 %v1240, %v1241
    %v1243 = vshll.u32 2131351028, %v1234
    %v1244 = vshrl.u32 2102212464, %v1235
    %v1245 = vor.u32 %v1243, %v1244
    %v1246 = vshll.u32 2102212464, %v1234
    %v1247 = vshrl.u32 920167782, %v1235
    %v1248 = vor.u32 %v1246, %v1247
    %v1249 = vshll.u32 920167782, %v1234
    %v1250 = vshrl.u32 1326507024, %v1235
    %v1251 = vor.u32 %v1249, %v1250
    %vm1252 = vcmp.lt.s32.totalorder %v1233, 1
    %vm1253 = vcmp.lt.s32.totalorder %v1233, 2
    %vm1254 = vcmp.lt.s32.totalorder %v1233, 3
    %vm1255 = vcmp.lt.s32.totalorder %v1233, 4
    %v1256 = vsel %vm1252, %v1236, %v1239
    %v1257 = vsel %vm1255, %v1245, 2102212464
    %v1258 = vsel %vm1254, %v1242, %v1257
    %v1259 = vsel %vm1253, %v1256, %v1258
    %v1260 = vsel %vm1252, %v1239, %v1242
    %v1261 = vsel %vm1255, %v1248, 920167782
    %v1262 = vsel %vm1254, %v1245, %v1261
    %v1263 = vsel %vm1253, %v1260, %v1262
    %v1264 = vsel %vm1252, %v1242, %v1245
    %v1265 = vsel %vm1255, %v1251, 1326507024
    %v1266 = vsel %vm1254, %v1248, %v1265
    %v1267 = vsel %vm1253, %v1264, %v1266
    %v1268 = vshll.u32 %v1228, 8
    %v1269 = vmul.u32.u64.compose %v1268, %v1267
    %v1270 = vextract.low.u32 %v1269
    %v1271 = vextract.high.u32 %v1269
    %v1272 = vmul.u32.u64.compose %v1268, %v1263
    %v1273 = vextract.low.u32 %v1272
    %v1274 = vextract.high.u32 %v1272
    %v1275 = vmul.u32 %v1268, %v1259
    %v1276 = vadd.s32 %v1271, %v1273
    %vm1277 = vc.u32 %v1271, %v1273
    %v1278 = vadd.s32 %v1274, 1
    %v1279 = vsel %vm1277, %v1278, %v1274
    %v1280 = vadd.s32 %v1275, %v1279
    %v1281 = vadd.s32 %v1280, 536870912
    %v1282 = vshrl.u32 %v1281, 30
    %v1283 = vshll.u32 %v1282, 30
    %v1284 = vsub.s32 %v1280, %v1283
    %vm1285 = vcmp.lt.s32.totalorder %v1284, 0
    %v1286 = vsub.s32 0, %v1284
    %v1287 = vsel %vm1285, %v1286, %v1284
    %v1288 = vclz %v1287
    %v1289 = vsub.s32 %v1288, 2
    %vm1290 = vcmp.gt.s32.totalorder 0, %v1289
    %v1291 = vsel %vm1290, 0, %v1289
    %v1292 = vsub.s32 32, %v1291
    %v1293 = vshll.u32 %v1284, %v1291
    %v1294 = vshrl.u32 %v1276, %v1292
    %v1295 = vor.u32 %v1293, %v1294
    %v1296 = vsub.s32 4294967266, %v1291
    %v1297 = vadd.s32 %v1296, 127
    %v1298 = vshll.u32 %v1297, 23
    %v1299 = vor.u32 4788187, %v1298
    %v1300 = vand.u32 2147483647, %v1299
    %v1302 = vcvt.s32.f32 %v1295
    %v1303 = vmul.f32 %v1302, %v1300
    %v1304 = vxor.u32 %v1303, 2147483648
    %v1305 = vsel %vm1222, %v1304, %v1303
    %v1306 = vsub.s32 4, %v1282
    %v1307 = vsel %vm1222, %v1306, %v1282
    %v1308 = vsel %vm1221, %v474, %v1305
    %v1309 = vsel %vm1221, 0, %v1307
    %v1310 = vcosq.f32.pop %v1308
    %v1311 = vsinq.f32.pop %v1308
    %vm1312 = vweird.f32 %v474
    %v1313 = vadd.s32 %v1309, 3
    %v1314 = vand.u32 %v1313, 3
    %vm1315 = vcmp.lt.s32.totalorder %v1314, 2
    %vm1316 = vcmp.eq.s32.totalorder %v1314, 0
    %v1317 = vxor.u32 %v1311, 2147483648
    %v1318 = vsel %vm1316, %v1310, %v1317
    %vm1319 = vcmp.eq.s32.totalorder %v1314, 2
    %v1320 = vxor.u32 %v1310, 2147483648
    %v1321 = vsel %vm1319, %v1320, %v1311
    %v1322 = vsel %vm1315, %v1318, %v1321
    %v1323 = vsel %vm1312, nan, %v1322
    %v1324 = vand.u32 2147483647, %v475
    %vm1325 = vcmp.le.f32.partialorder %v1324, 0.7853982
    %vm1326 = vcmp.lt.s32.totalorder %v475, 0
    %v1327 = vand.u32 %v475, 2139095040
    %v1328 = vshrl.u32 %v1327, 23
    %v1329 = vsub.s32 %v1328, 127
    %v1330 = vand.u32 2147483647, %v475
    %v1331 = vand.u32 %v1330, 8388607
    %v1332 = vor.u32 %v1331, 8388608
    %v1333 = vsub.s32 0, %v1332
    %v1334 = vadd.s32 %v1329, 1
    %vm1335 = vcmp.gt.s32.totalorder %v1334, 0
    %v1336 = vsel %vm1335, %v1334, 0
    %v1337 = vshrl.u32 %v1336, 5
    %v1338 = vand.u32 %v1336, 31
    %v1339 = vsub.s32 32, %v1338
    %v1340 = vshrl.u32 683565275, %v1339
    %v1341 = vshll.u32 683565275, %v1338
    %v1342 = vshrl.u32 2475754826, %v1339
    %v1343 = vor.u32 %v1341, %v1342
    %v1344 = vshll.u32 2475754826, %v1338
    %v1345 = vshrl.u32 2131351028, %v1339
    %v1346 = vor.u32 %v1344, %v1345
    %v1347 = vshll.u32 2131351028, %v1338
    %v1348 = vshrl.u32 2102212464, %v1339
    %v1349 = vor.u32 %v1347, %v1348
    %v1350 = vshll.u32 2102212464, %v1338
    %v1351 = vshrl.u32 920167782, %v1339
    %v1352 = vor.u32 %v1350, %v1351
    %v1353 = vshll.u32 920167782, %v1338
    %v1354 = vshrl.u32 1326507024, %v1339
    %v1355 = vor.u32 %v1353, %v1354
    %vm1356 = vcmp.lt.s32.totalorder %v1337, 1
    %vm1357 = vcmp.lt.s32.totalorder %v1337, 2
    %vm1358 = vcmp.lt.s32.totalorder %v1337, 3
    %vm1359 = vcmp.lt.s32.totalorder %v1337, 4
    %v1360 = vsel %vm1356, %v1340, %v1343
    %v1361 = vsel %vm1359, %v1349, 2102212464
    %v1362 = vsel %vm1358, %v1346, %v1361
    %v1363 = vsel %vm1357, %v1360, %v1362
    %v1364 = vsel %vm1356, %v1343, %v1346
    %v1365 = vsel %vm1359, %v1352, 920167782
    %v1366 = vsel %vm1358, %v1349, %v1365
    %v1367 = vsel %vm1357, %v1364, %v1366
    %v1368 = vsel %vm1356, %v1346, %v1349
    %v1369 = vsel %vm1359, %v1355, 1326507024
    %v1370 = vsel %vm1358, %v1352, %v1369
    %v1371 = vsel %vm1357, %v1368, %v1370
    %v1372 = vshll.u32 %v1332, 8
    %v1373 = vmul.u32.u64.compose %v1372, %v1371
    %v1374 = vextract.low.u32 %v1373
    %v1375 = vextract.high.u32 %v1373
    %v1376 = vmul.u32.u64.compose %v1372, %v1367
    %v1377 = vextract.low.u32 %v1376
    %v1378 = vextract.high.u32 %v1376
    %v1379 = vmul.u32 %v1372, %v1363
    %v1380 = vadd.s32 %v1375, %v1377
    %vm1381 = vc.u32 %v1375, %v1377
    %v1382 = vadd.s32 %v1378, 1
    %v1383 = vsel %vm1381, %v1382, %v1378
    %v1384 = vadd.s32 %v1379, %v1383
    %v1385 = vadd.s32 %v1384, 536870912
    %v1386 = vshrl.u32 %v1385, 30
    %v1387 = vshll.u32 %v1386, 30
    %v1388 = vsub.s32 %v1384, %v1387
    %vm1389 = vcmp.lt.s32.totalorder %v1388, 0
    %v1390 = vsub.s32 0, %v1388
    %v1391 = vsel %vm1389, %v1390, %v1388
    %v1392 = vclz %v1391
    %v1393 = vsub.s32 %v1392, 2
    %vm1394 = vcmp.gt.s32.totalorder 0, %v1393
    %v1395 = vsel %vm1394, 0, %v1393
    %v1396 = vsub.s32 32, %v1395
    %v1397 = vshll.u32 %v1388, %v1395
    %v1398 = vshrl.u32 %v1380, %v1396
    %v1399 = vor.u32 %v1397, %v1398
    %v1400 = vsub.s32 4294967266, %v1395
    %v1401 = vadd.s32 %v1400, 127
    %v1402 = vshll.u32 %v1401, 23
    %v1403 = vor.u32 4788187, %v1402
    %v1404 = vand.u32 2147483647, %v1403
    %v1406 = vcvt.s32.f32 %v1399
    %v1407 = vmul.f32 %v1406, %v1404
    %v1408 = vxor.u32 %v1407, 2147483648
    %v1409 = vsel %vm1326, %v1408, %v1407
    %v1410 = vsub.s32 4, %v1386
    %v1411 = vsel %vm1326, %v1410, %v1386
    %v1412 = vsel %vm1325, %v475, %v1409
    %v1413 = vsel %vm1325, 0, %v1411
    %v1414 = vcosq.f32.pop %v1412
    %v1415 = vsinq.f32.pop %v1412
    %vm1416 = vweird.f32 %v475
    %v1417 = vadd.s32 %v1413, 3
    %v1418 = vand.u32 %v1417, 3
    %vm1419 = vcmp.lt.s32.totalorder %v1418, 2
    %vm1420 = vcmp.eq.s32.totalorder %v1418, 0
    %v1421 = vxor.u32 %v1415, 2147483648
    %v1422 = vsel %vm1420, %v1414, %v1421
    %vm1423 = vcmp.eq.s32.totalorder %v1418, 2
    %v1424 = vxor.u32 %v1414, 2147483648
    %v1425 = vsel %vm1423, %v1424, %v1415
    %v1426 = vsel %vm1419, %v1422, %v1425
    %v1427 = vsel %vm1416, nan, %v1426
    %v1428 = vand.u32 2147483647, %v476
    %vm1429 = vcmp.le.f32.partialorder %v1428, 0.7853982
    %vm1430 = vcmp.lt.s32.totalorder %v476, 0
    %v1431 = vand.u32 %v476, 2139095040
    %v1432 = vshrl.u32 %v1431, 23
    %v1433 = vsub.s32 %v1432, 127
    %v1434 = vand.u32 2147483647, %v476
    %v1435 = vand.u32 %v1434, 8388607
    %v1436 = vor.u32 %v1435, 8388608
    %v1437 = vsub.s32 0, %v1436
    %v1438 = vadd.s32 %v1433, 1
    %vm1439 = vcmp.gt.s32.totalorder %v1438, 0
    %v1440 = vsel %vm1439, %v1438, 0
    %v1441 = vshrl.u32 %v1440, 5
    %v1442 = vand.u32 %v1440, 31
    %v1443 = vsub.s32 32, %v1442
    %v1444 = vshrl.u32 683565275, %v1443
    %v1445 = vshll.u32 683565275, %v1442
    %v1446 = vshrl.u32 2475754826, %v1443
    %v1447 = vor.u32 %v1445, %v1446
    %v1448 = vshll.u32 2475754826, %v1442
    %v1449 = vshrl.u32 2131351028, %v1443
    %v1450 = vor.u32 %v1448, %v1449
    %v1451 = vshll.u32 2131351028, %v1442
    %v1452 = vshrl.u32 2102212464, %v1443
    %v1453 = vor.u32 %v1451, %v1452
    %v1454 = vshll.u32 2102212464, %v1442
    %v1455 = vshrl.u32 920167782, %v1443
    %v1456 = vor.u32 %v1454, %v1455
    %v1457 = vshll.u32 920167782, %v1442
    %v1458 = vshrl.u32 1326507024, %v1443
    %v1459 = vor.u32 %v1457, %v1458
    %vm1460 = vcmp.lt.s32.totalorder %v1441, 1
    %vm1461 = vcmp.lt.s32.totalorder %v1441, 2
    %vm1462 = vcmp.lt.s32.totalorder %v1441, 3
    %vm1463 = vcmp.lt.s32.totalorder %v1441, 4
    %v1464 = vsel %vm1460, %v1444, %v1447
    %v1465 = vsel %vm1463, %v1453, 2102212464
    %v1466 = vsel %vm1462, %v1450, %v1465
    %v1467 = vsel %vm1461, %v1464, %v1466
    %v1468 = vsel %vm1460, %v1447, %v1450
    %v1469 = vsel %vm1463, %v1456, 920167782
    %v1470 = vsel %vm1462, %v1453, %v1469
    %v1471 = vsel %vm1461, %v1468, %v1470
    %v1472 = vsel %vm1460, %v1450, %v1453
    %v1473 = vsel %vm1463, %v1459, 1326507024
    %v1474 = vsel %vm1462, %v1456, %v1473
    %v1475 = vsel %vm1461, %v1472, %v1474
    %v1476 = vshll.u32 %v1436, 8
    %v1477 = vmul.u32.u64.compose %v1476, %v1475
    %v1478 = vextract.low.u32 %v1477
    %v1479 = vextract.high.u32 %v1477
    %v1480 = vmul.u32.u64.compose %v1476, %v1471
    %v1481 = vextract.low.u32 %v1480
    %v1482 = vextract.high.u32 %v1480
    %v1483 = vmul.u32 %v1476, %v1467
    %v1484 = vadd.s32 %v1479, %v1481
    %vm1485 = vc.u32 %v1479, %v1481
    %v1486 = vadd.s32 %v1482, 1
    %v1487 = vsel %vm1485, %v1486, %v1482
    %v1488 = vadd.s32 %v1483, %v1487
    %v1489 = vadd.s32 %v1488, 536870912
    %v1490 = vshrl.u32 %v1489, 30
    %v1491 = vshll.u32 %v1490, 30
    %v1492 = vsub.s32 %v1488, %v1491
    %vm1493 = vcmp.lt.s32.totalorder %v1492, 0
    %v1494 = vsub.s32 0, %v1492
    %v1495 = vsel %vm1493, %v1494, %v1492
    %v1496 = vclz %v1495
    %v1497 = vsub.s32 %v1496, 2
    %vm1498 = vcmp.gt.s32.totalorder 0, %v1497
    %v1499 = vsel %vm1498, 0, %v1497
    %v1500 = vsub.s32 32, %v1499
    %v1501 = vshll.u32 %v1492, %v1499
    %v1502 = vshrl.u32 %v1484, %v1500
    %v1503 = vor.u32 %v1501, %v1502
    %v1504 = vsub.s32 4294967266, %v1499
    %v1505 = vadd.s32 %v1504, 127
    %v1506 = vshll.u32 %v1505, 23
    %v1507 = vor.u32 4788187, %v1506
    %v1508 = vand.u32 2147483647, %v1507
    %v1510 = vcvt.s32.f32 %v1503
    %v1511 = vmul.f32 %v1510, %v1508
    %v1512 = vxor.u32 %v1511, 2147483648
    %v1513 = vsel %vm1430, %v1512, %v1511
    %v1514 = vsub.s32 4, %v1490
    %v1515 = vsel %vm1430, %v1514, %v1490
    %v1516 = vsel %vm1429, %v476, %v1513
    %v1517 = vsel %vm1429, 0, %v1515
    %v1518 = vcosq.f32.pop %v1516
    %v1519 = vsinq.f32.pop %v1516
    %vm1520 = vweird.f32 %v476
    %v1521 = vadd.s32 %v1517, 3
    %v1522 = vand.u32 %v1521, 3
    %vm1523 = vcmp.lt.s32.totalorder %v1522, 2
    %vm1524 = vcmp.eq.s32.totalorder %v1522, 0
    %v1525 = vxor.u32 %v1519, 2147483648
    %v1526 = vsel %vm1524, %v1518, %v1525
    %vm1527 = vcmp.eq.s32.totalorder %v1522, 2
    %v1528 = vxor.u32 %v1518, 2147483648
    %v1529 = vsel %vm1527, %v1528, %v1519
    %v1530 = vsel %vm1523, %v1526, %v1529
    %v1531 = vsel %vm1520, nan, %v1530
    %v1532 = vand.u32 2147483647, %v477
    %vm1533 = vcmp.le.f32.partialorder %v1532, 0.7853982
    %vm1534 = vcmp.lt.s32.totalorder %v477, 0
    %v1535 = vand.u32 %v477, 2139095040
    %v1536 = vshrl.u32 %v1535, 23
    %v1537 = vsub.s32 %v1536, 127
    %v1538 = vand.u32 2147483647, %v477
    %v1539 = vand.u32 %v1538, 8388607
    %v1540 = vor.u32 %v1539, 8388608
    %v1541 = vsub.s32 0, %v1540
    %v1542 = vadd.s32 %v1537, 1
    %vm1543 = vcmp.gt.s32.totalorder %v1542, 0
    %v1544 = vsel %vm1543, %v1542, 0
    %v1545 = vshrl.u32 %v1544, 5
    %v1546 = vand.u32 %v1544, 31
    %v1547 = vsub.s32 32, %v1546
    %v1548 = vshrl.u32 683565275, %v1547
    %v1549 = vshll.u32 683565275, %v1546
    %v1550 = vshrl.u32 2475754826, %v1547
    %v1551 = vor.u32 %v1549, %v1550
    %v1552 = vshll.u32 2475754826, %v1546
    %v1553 = vshrl.u32 2131351028, %v1547
    %v1554 = vor.u32 %v1552, %v1553
    %v1555 = vshll.u32 2131351028, %v1546
    %v1556 = vshrl.u32 2102212464, %v1547
    %v1557 = vor.u32 %v1555, %v1556
    %v1558 = vshll.u32 2102212464, %v1546
    %v1559 = vshrl.u32 920167782, %v1547
    %v1560 = vor.u32 %v1558, %v1559
    %v1561 = vshll.u32 920167782, %v1546
    %v1562 = vshrl.u32 1326507024, %v1547
    %v1563 = vor.u32 %v1561, %v1562
    %vm1564 = vcmp.lt.s32.totalorder %v1545, 1
    %vm1565 = vcmp.lt.s32.totalorder %v1545, 2
    %vm1566 = vcmp.lt.s32.totalorder %v1545, 3
    %vm1567 = vcmp.lt.s32.totalorder %v1545, 4
    %v1568 = vsel %vm1564, %v1548, %v1551
    %v1569 = vsel %vm1567, %v1557, 2102212464
    %v1570 = vsel %vm1566, %v1554, %v1569
    %v1571 = vsel %vm1565, %v1568, %v1570
    %v1572 = vsel %vm1564, %v1551, %v1554
    %v1573 = vsel %vm1567, %v1560, 920167782
    %v1574 = vsel %vm1566, %v1557, %v1573
    %v1575 = vsel %vm1565, %v1572, %v1574
    %v1576 = vsel %vm1564, %v1554, %v1557
    %v1577 = vsel %vm1567, %v1563, 1326507024
    %v1578 = vsel %vm1566, %v1560, %v1577
    %v1579 = vsel %vm1565, %v1576, %v1578
    %v1580 = vshll.u32 %v1540, 8
    %v1581 = vmul.u32.u64.compose %v1580, %v1579
    %v1582 = vextract.low.u32 %v1581
    %v1583 = vextract.high.u32 %v1581
    %v1584 = vmul.u32.u64.compose %v1580, %v1575
    %v1585 = vextract.low.u32 %v1584
    %v1586 = vextract.high.u32 %v1584
    %v1587 = vmul.u32 %v1580, %v1571
    %v1588 = vadd.s32 %v1583, %v1585
    %vm1589 = vc.u32 %v1583, %v1585
    %v1590 = vadd.s32 %v1586, 1
    %v1591 = vsel %vm1589, %v1590, %v1586
    %v1592 = vadd.s32 %v1587, %v1591
    %v1593 = vadd.s32 %v1592, 536870912
    %v1594 = vshrl.u32 %v1593, 30
    %v1595 = vshll.u32 %v1594, 30
    %v1596 = vsub.s32 %v1592, %v1595
    %vm1597 = vcmp.lt.s32.totalorder %v1596, 0
    %v1598 = vsub.s32 0, %v1596
    %v1599 = vsel %vm1597, %v1598, %v1596
    %v1600 = vclz %v1599
    %v1601 = vsub.s32 %v1600, 2
    %vm1602 = vcmp.gt.s32.totalorder 0, %v1601
    %v1603 = vsel %vm1602, 0, %v1601
    %v1604 = vsub.s32 32, %v1603
    %v1605 = vshll.u32 %v1596, %v1603
    %v1606 = vshrl.u32 %v1588, %v1604
    %v1607 = vor.u32 %v1605, %v1606
    %v1608 = vsub.s32 4294967266, %v1603
    %v1609 = vadd.s32 %v1608, 127
    %v1610 = vshll.u32 %v1609, 23
    %v1611 = vor.u32 4788187, %v1610
    %v1612 = vand.u32 2147483647, %v1611
    %v1614 = vcvt.s32.f32 %v1607
    %v1615 = vmul.f32 %v1614, %v1612
    %v1616 = vxor.u32 %v1615, 2147483648
    %v1617 = vsel %vm1534, %v1616, %v1615
    %v1618 = vsub.s32 4, %v1594
    %v1619 = vsel %vm1534, %v1618, %v1594
    %v1620 = vsel %vm1533, %v477, %v1617
    %v1621 = vsel %vm1533, 0, %v1619
    %v1622 = vcosq.f32.pop %v1620
    %v1623 = vsinq.f32.pop %v1620
    %vm1624 = vweird.f32 %v477
    %v1625 = vadd.s32 %v1621, 3
    %v1626 = vand.u32 %v1625, 3
    %vm1627 = vcmp.lt.s32.totalorder %v1626, 2
    %vm1628 = vcmp.eq.s32.totalorder %v1626, 0
    %v1629 = vxor.u32 %v1623, 2147483648
    %v1630 = vsel %vm1628, %v1622, %v1629
    %vm1631 = vcmp.eq.s32.totalorder %v1626, 2
    %v1632 = vxor.u32 %v1622, 2147483648
    %v1633 = vsel %vm1631, %v1632, %v1623
    %v1634 = vsel %vm1627, %v1630, %v1633
    %v1635 = vsel %vm1624, nan, %v1634
    %v1636 = vand.u32 2147483647, %v478
    %vm1637 = vcmp.le.f32.partialorder %v1636, 0.7853982
    %vm1638 = vcmp.lt.s32.totalorder %v478, 0
    %v1639 = vand.u32 %v478, 2139095040
    %v1640 = vshrl.u32 %v1639, 23
    %v1641 = vsub.s32 %v1640, 127
    %v1642 = vand.u32 2147483647, %v478
    %v1643 = vand.u32 %v1642, 8388607
    %v1644 = vor.u32 %v1643, 8388608
    %v1645 = vsub.s32 0, %v1644
    %v1646 = vadd.s32 %v1641, 1
    %vm1647 = vcmp.gt.s32.totalorder %v1646, 0
    %v1648 = vsel %vm1647, %v1646, 0
    %v1649 = vshrl.u32 %v1648, 5
    %v1650 = vand.u32 %v1648, 31
    %v1651 = vsub.s32 32, %v1650
    %v1652 = vshrl.u32 683565275, %v1651
    %v1653 = vshll.u32 683565275, %v1650
    %v1654 = vshrl.u32 2475754826, %v1651
    %v1655 = vor.u32 %v1653, %v1654
    %v1656 = vshll.u32 2475754826, %v1650
    %v1657 = vshrl.u32 2131351028, %v1651
    %v1658 = vor.u32 %v1656, %v1657
    %v1659 = vshll.u32 2131351028, %v1650
    %v1660 = vshrl.u32 2102212464, %v1651
    %v1661 = vor.u32 %v1659, %v1660
    %v1662 = vshll.u32 2102212464, %v1650
    %v1663 = vshrl.u32 920167782, %v1651
    %v1664 = vor.u32 %v1662, %v1663
    %v1665 = vshll.u32 920167782, %v1650
    %v1666 = vshrl.u32 1326507024, %v1651
    %v1667 = vor.u32 %v1665, %v1666
    %vm1668 = vcmp.lt.s32.totalorder %v1649, 1
    %vm1669 = vcmp.lt.s32.totalorder %v1649, 2
    %vm1670 = vcmp.lt.s32.totalorder %v1649, 3
    %vm1671 = vcmp.lt.s32.totalorder %v1649, 4
    %v1672 = vsel %vm1668, %v1652, %v1655
    %v1673 = vsel %vm1671, %v1661, 2102212464
    %v1674 = vsel %vm1670, %v1658, %v1673
    %v1675 = vsel %vm1669, %v1672, %v1674
    %v1676 = vsel %vm1668, %v1655, %v1658
    %v1677 = vsel %vm1671, %v1664, 920167782
    %v1678 = vsel %vm1670, %v1661, %v1677
    %v1679 = vsel %vm1669, %v1676, %v1678
    %v1680 = vsel %vm1668, %v1658, %v1661
    %v1681 = vsel %vm1671, %v1667, 1326507024
    %v1682 = vsel %vm1670, %v1664, %v1681
    %v1683 = vsel %vm1669, %v1680, %v1682
    %v1684 = vshll.u32 %v1644, 8
    %v1685 = vmul.u32.u64.compose %v1684, %v1683
    %v1686 = vextract.low.u32 %v1685
    %v1687 = vextract.high.u32 %v1685
    %v1688 = vmul.u32.u64.compose %v1684, %v1679
    %v1689 = vextract.low.u32 %v1688
    %v1690 = vextract.high.u32 %v1688
    %v1691 = vmul.u32 %v1684, %v1675
    %v1692 = vadd.s32 %v1687, %v1689
    %vm1693 = vc.u32 %v1687, %v1689
    %v1694 = vadd.s32 %v1690, 1
    %v1695 = vsel %vm1693, %v1694, %v1690
    %v1696 = vadd.s32 %v1691, %v1695
    %v1697 = vadd.s32 %v1696, 536870912
    %v1698 = vshrl.u32 %v1697, 30
    %v1699 = vshll.u32 %v1698, 30
    %v1700 = vsub.s32 %v1696, %v1699
    %vm1701 = vcmp.lt.s32.totalorder %v1700, 0
    %v1702 = vsub.s32 0, %v1700
    %v1703 = vsel %vm1701, %v1702, %v1700
    %v1704 = vclz %v1703
    %v1705 = vsub.s32 %v1704, 2
    %vm1706 = vcmp.gt.s32.totalorder 0, %v1705
    %v1707 = vsel %vm1706, 0, %v1705
    %v1708 = vsub.s32 32, %v1707
    %v1709 = vshll.u32 %v1700, %v1707
    %v1710 = vshrl.u32 %v1692, %v1708
    %v1711 = vor.u32 %v1709, %v1710
    %v1712 = vsub.s32 4294967266, %v1707
    %v1713 = vadd.s32 %v1712, 127
    %v1714 = vshll.u32 %v1713, 23
    %v1715 = vor.u32 4788187, %v1714
    %v1716 = vand.u32 2147483647, %v1715
    %v1718 = vcvt.s32.f32 %v1711
    %v1719 = vmul.f32 %v1718, %v1716
    %v1720 = vxor.u32 %v1719, 2147483648
    %v1721 = vsel %vm1638, %v1720, %v1719
    %v1722 = vsub.s32 4, %v1698
    %v1723 = vsel %vm1638, %v1722, %v1698
    %v1724 = vsel %vm1637, %v478, %v1721
    %v1725 = vsel %vm1637, 0, %v1723
    %v1726 = vcosq.f32.pop %v1724
    %v1727 = vsinq.f32.pop %v1724
    %vm1728 = vweird.f32 %v478
    %v1729 = vadd.s32 %v1725, 3
    %v1730 = vand.u32 %v1729, 3
    %vm1731 = vcmp.lt.s32.totalorder %v1730, 2
    %vm1732 = vcmp.eq.s32.totalorder %v1730, 0
    %v1733 = vxor.u32 %v1727, 2147483648
    %v1734 = vsel %vm1732, %v1726, %v1733
    %vm1735 = vcmp.eq.s32.totalorder %v1730, 2
    %v1736 = vxor.u32 %v1726, 2147483648
    %v1737 = vsel %vm1735, %v1736, %v1727
    %v1738 = vsel %vm1731, %v1734, %v1737
    %v1739 = vsel %vm1728, nan, %v1738
    %v1740 = vand.u32 2147483647, %v479
    %vm1741 = vcmp.le.f32.partialorder %v1740, 0.7853982
    %vm1742 = vcmp.lt.s32.totalorder %v479, 0
    %v1743 = vand.u32 %v479, 2139095040
    %v1744 = vshrl.u32 %v1743, 23
    %v1745 = vsub.s32 %v1744, 127
    %v1746 = vand.u32 2147483647, %v479
    %v1747 = vand.u32 %v1746, 8388607
    %v1748 = vor.u32 %v1747, 8388608
    %v1749 = vsub.s32 0, %v1748
    %v1750 = vadd.s32 %v1745, 1
    %vm1751 = vcmp.gt.s32.totalorder %v1750, 0
    %v1752 = vsel %vm1751, %v1750, 0
    %v1753 = vshrl.u32 %v1752, 5
    %v1754 = vand.u32 %v1752, 31
    %v1755 = vsub.s32 32, %v1754
    %v1756 = vshrl.u32 683565275, %v1755
    %v1757 = vshll.u32 683565275, %v1754
    %v1758 = vshrl.u32 2475754826, %v1755
    %v1759 = vor.u32 %v1757, %v1758
    %v1760 = vshll.u32 2475754826, %v1754
    %v1761 = vshrl.u32 2131351028, %v1755
    %v1762 = vor.u32 %v1760, %v1761
    %v1763 = vshll.u32 2131351028, %v1754
    %v1764 = vshrl.u32 2102212464, %v1755
    %v1765 = vor.u32 %v1763, %v1764
    %v1766 = vshll.u32 2102212464, %v1754
    %v1767 = vshrl.u32 920167782, %v1755
    %v1768 = vor.u32 %v1766, %v1767
    %v1769 = vshll.u32 920167782, %v1754
    %v1770 = vshrl.u32 1326507024, %v1755
    %v1771 = vor.u32 %v1769, %v1770
    %vm1772 = vcmp.lt.s32.totalorder %v1753, 1
    %vm1773 = vcmp.lt.s32.totalorder %v1753, 2
    %vm1774 = vcmp.lt.s32.totalorder %v1753, 3
    %vm1775 = vcmp.lt.s32.totalorder %v1753, 4
    %v1776 = vsel %vm1772, %v1756, %v1759
    %v1777 = vsel %vm1775, %v1765, 2102212464
    %v1778 = vsel %vm1774, %v1762, %v1777
    %v1779 = vsel %vm1773, %v1776, %v1778
    %v1780 = vsel %vm1772, %v1759, %v1762
    %v1781 = vsel %vm1775, %v1768, 920167782
    %v1782 = vsel %vm1774, %v1765, %v1781
    %v1783 = vsel %vm1773, %v1780, %v1782
    %v1784 = vsel %vm1772, %v1762, %v1765
    %v1785 = vsel %vm1775, %v1771, 1326507024
    %v1786 = vsel %vm1774, %v1768, %v1785
    %v1787 = vsel %vm1773, %v1784, %v1786
    %v1788 = vshll.u32 %v1748, 8
    %v1789 = vmul.u32.u64.compose %v1788, %v1787
    %v1790 = vextract.low.u32 %v1789
    %v1791 = vextract.high.u32 %v1789
    %v1792 = vmul.u32.u64.compose %v1788, %v1783
    %v1793 = vextract.low.u32 %v1792
    %v1794 = vextract.high.u32 %v1792
    %v1795 = vmul.u32 %v1788, %v1779
    %v1796 = vadd.s32 %v1791, %v1793
    %vm1797 = vc.u32 %v1791, %v1793
    %v1798 = vadd.s32 %v1794, 1
    %v1799 = vsel %vm1797, %v1798, %v1794
    %v1800 = vadd.s32 %v1795, %v1799
    %v1801 = vadd.s32 %v1800, 536870912
    %v1802 = vshrl.u32 %v1801, 30
    %v1803 = vshll.u32 %v1802, 30
    %v1804 = vsub.s32 %v1800, %v1803
    %vm1805 = vcmp.lt.s32.totalorder %v1804, 0
    %v1806 = vsub.s32 0, %v1804
    %v1807 = vsel %vm1805, %v1806, %v1804
    %v1808 = vclz %v1807
    %v1809 = vsub.s32 %v1808, 2
    %vm1810 = vcmp.gt.s32.totalorder 0, %v1809
    %v1811 = vsel %vm1810, 0, %v1809
    %v1812 = vsub.s32 32, %v1811
    %v1813 = vshll.u32 %v1804, %v1811
    %v1814 = vshrl.u32 %v1796, %v1812
    %v1815 = vor.u32 %v1813, %v1814
    %v1816 = vsub.s32 4294967266, %v1811
    %v1817 = vadd.s32 %v1816, 127
    %v1818 = vshll.u32 %v1817, 23
    %v1819 = vor.u32 4788187, %v1818
    %v1820 = vand.u32 2147483647, %v1819
    %v1822 = vcvt.s32.f32 %v1815
    %v1823 = vmul.f32 %v1822, %v1820
    %v1824 = vxor.u32 %v1823, 2147483648
    %v1825 = vsel %vm1742, %v1824, %v1823
    %v1826 = vsub.s32 4, %v1802
    %v1827 = vsel %vm1742, %v1826, %v1802
    %v1828 = vsel %vm1741, %v479, %v1825
    %v1829 = vsel %vm1741, 0, %v1827
    %v1830 = vcosq.f32.pop %v1828
    %v1831 = vsinq.f32.pop %v1828
    %vm1832 = vweird.f32 %v479
    %v1833 = vadd.s32 %v1829, 3
    %v1834 = vand.u32 %v1833, 3
    %vm1835 = vcmp.lt.s32.totalorder %v1834, 2
    %vm1836 = vcmp.eq.s32.totalorder %v1834, 0
    %v1837 = vxor.u32 %v1831, 2147483648
    %v1838 = vsel %vm1836, %v1830, %v1837
    %vm1839 = vcmp.eq.s32.totalorder %v1834, 2
    %v1840 = vxor.u32 %v1830, 2147483648
    %v1841 = vsel %vm1839, %v1840, %v1831
    %v1842 = vsel %vm1835, %v1838, %v1841
    %v1843 = vsel %vm1832, nan, %v1842
    %v1844 = vand.u32 2147483647, %v480
    %vm1845 = vcmp.le.f32.partialorder %v1844, 0.7853982
    %vm1846 = vcmp.lt.s32.totalorder %v480, 0
    %v1847 = vand.u32 %v480, 2139095040
    %v1848 = vshrl.u32 %v1847, 23
    %v1849 = vsub.s32 %v1848, 127
    %v1850 = vand.u32 2147483647, %v480
    %v1851 = vand.u32 %v1850, 8388607
    %v1852 = vor.u32 %v1851, 8388608
    %v1853 = vsub.s32 0, %v1852
    %v1854 = vadd.s32 %v1849, 1
    %vm1855 = vcmp.gt.s32.totalorder %v1854, 0
    %v1856 = vsel %vm1855, %v1854, 0
    %v1857 = vshrl.u32 %v1856, 5
    %v1858 = vand.u32 %v1856, 31
    %v1859 = vsub.s32 32, %v1858
    %v1860 = vshrl.u32 683565275, %v1859
    %v1861 = vshll.u32 683565275, %v1858
    %v1862 = vshrl.u32 2475754826, %v1859
    %v1863 = vor.u32 %v1861, %v1862
    %v1864 = vshll.u32 2475754826, %v1858
    %v1865 = vshrl.u32 2131351028, %v1859
    %v1866 = vor.u32 %v1864, %v1865
    %v1867 = vshll.u32 2131351028, %v1858
    %v1868 = vshrl.u32 2102212464, %v1859
    %v1869 = vor.u32 %v1867, %v1868
    %v1870 = vshll.u32 2102212464, %v1858
    %v1871 = vshrl.u32 920167782, %v1859
    %v1872 = vor.u32 %v1870, %v1871
    %v1873 = vshll.u32 920167782, %v1858
    %v1874 = vshrl.u32 1326507024, %v1859
    %v1875 = vor.u32 %v1873, %v1874
    %vm1876 = vcmp.lt.s32.totalorder %v1857, 1
    %vm1877 = vcmp.lt.s32.totalorder %v1857, 2
    %vm1878 = vcmp.lt.s32.totalorder %v1857, 3
    %vm1879 = vcmp.lt.s32.totalorder %v1857, 4
    %v1880 = vsel %vm1876, %v1860, %v1863
    %v1881 = vsel %vm1879, %v1869, 2102212464
    %v1882 = vsel %vm1878, %v1866, %v1881
    %v1883 = vsel %vm1877, %v1880, %v1882
    %v1884 = vsel %vm1876, %v1863, %v1866
    %v1885 = vsel %vm1879, %v1872, 920167782
    %v1886 = vsel %vm1878, %v1869, %v1885
    %v1887 = vsel %vm1877, %v1884, %v1886
    %v1888 = vsel %vm1876, %v1866, %v1869
    %v1889 = vsel %vm1879, %v1875, 1326507024
    %v1890 = vsel %vm1878, %v1872, %v1889
    %v1891 = vsel %vm1877, %v1888, %v1890
    %v1892 = vshll.u32 %v1852, 8
    %v1893 = vmul.u32.u64.compose %v1892, %v1891
    %v1894 = vextract.low.u32 %v1893
    %v1895 = vextract.high.u32 %v1893
    %v1896 = vmul.u32.u64.compose %v1892, %v1887
    %v1897 = vextract.low.u32 %v1896
    %v1898 = vextract.high.u32 %v1896
    %v1899 = vmul.u32 %v1892, %v1883
    %v1900 = vadd.s32 %v1895, %v1897
    %vm1901 = vc.u32 %v1895, %v1897
    %v1902 = vadd.s32 %v1898, 1
    %v1903 = vsel %vm1901, %v1902, %v1898
    %v1904 = vadd.s32 %v1899, %v1903
    %v1905 = vadd.s32 %v1904, 536870912
    %v1906 = vshrl.u32 %v1905, 30
    %v1907 = vshll.u32 %v1906, 30
    %v1908 = vsub.s32 %v1904, %v1907
    %vm1909 = vcmp.lt.s32.totalorder %v1908, 0
    %v1910 = vsub.s32 0, %v1908
    %v1911 = vsel %vm1909, %v1910, %v1908
    %v1912 = vclz %v1911
    %v1913 = vsub.s32 %v1912, 2
    %vm1914 = vcmp.gt.s32.totalorder 0, %v1913
    %v1915 = vsel %vm1914, 0, %v1913
    %v1916 = vsub.s32 32, %v1915
    %v1917 = vshll.u32 %v1908, %v1915
    %v1918 = vshrl.u32 %v1900, %v1916
    %v1919 = vor.u32 %v1917, %v1918
    %v1920 = vsub.s32 4294967266, %v1915
    %v1921 = vadd.s32 %v1920, 127
    %v1922 = vshll.u32 %v1921, 23
    %v1923 = vor.u32 4788187, %v1922
    %v1924 = vand.u32 2147483647, %v1923
    %v1926 = vcvt.s32.f32 %v1919
    %v1927 = vmul.f32 %v1926, %v1924
    %v1928 = vxor.u32 %v1927, 2147483648
    %v1929 = vsel %vm1846, %v1928, %v1927
    %v1930 = vsub.s32 4, %v1906
    %v1931 = vsel %vm1846, %v1930, %v1906
    %v1932 = vsel %vm1845, %v480, %v1929
    %v1933 = vsel %vm1845, 0, %v1931
    %v1934 = vcosq.f32.pop %v1932
    %v1935 = vsinq.f32.pop %v1932
    %vm1936 = vweird.f32 %v480
    %v1937 = vadd.s32 %v1933, 3
    %v1938 = vand.u32 %v1937, 3
    %vm1939 = vcmp.lt.s32.totalorder %v1938, 2
    %vm1940 = vcmp.eq.s32.totalorder %v1938, 0
    %v1941 = vxor.u32 %v1935, 2147483648
    %v1942 = vsel %vm1940, %v1934, %v1941
    %vm1943 = vcmp.eq.s32.totalorder %v1938, 2
    %v1944 = vxor.u32 %v1934, 2147483648
    %v1945 = vsel %vm1943, %v1944, %v1935
    %v1946 = vsel %vm1939, %v1942, %v1945
    %v1947 = vsel %vm1936, nan, %v1946
    %v1948 = vand.u32 2147483647, %v481
    %vm1949 = vcmp.le.f32.partialorder %v1948, 0.7853982
    %vm1950 = vcmp.lt.s32.totalorder %v481, 0
    %v1951 = vand.u32 %v481, 2139095040
    %v1952 = vshrl.u32 %v1951, 23
    %v1953 = vsub.s32 %v1952, 127
    %v1954 = vand.u32 2147483647, %v481
    %v1955 = vand.u32 %v1954, 8388607
    %v1956 = vor.u32 %v1955, 8388608
    %v1957 = vsub.s32 0, %v1956
    %v1958 = vadd.s32 %v1953, 1
    %vm1959 = vcmp.gt.s32.totalorder %v1958, 0
    %v1960 = vsel %vm1959, %v1958, 0
    %v1961 = vshrl.u32 %v1960, 5
    %v1962 = vand.u32 %v1960, 31
    %v1963 = vsub.s32 32, %v1962
    %v1964 = vshrl.u32 683565275, %v1963
    %v1965 = vshll.u32 683565275, %v1962
    %v1966 = vshrl.u32 2475754826, %v1963
    %v1967 = vor.u32 %v1965, %v1966
    %v1968 = vshll.u32 2475754826, %v1962
    %v1969 = vshrl.u32 2131351028, %v1963
    %v1970 = vor.u32 %v1968, %v1969
    %v1971 = vshll.u32 2131351028, %v1962
    %v1972 = vshrl.u32 2102212464, %v1963
    %v1973 = vor.u32 %v1971, %v1972
    %v1974 = vshll.u32 2102212464, %v1962
    %v1975 = vshrl.u32 920167782, %v1963
    %v1976 = vor.u32 %v1974, %v1975
    %v1977 = vshll.u32 920167782, %v1962
    %v1978 = vshrl.u32 1326507024, %v1963
    %v1979 = vor.u32 %v1977, %v1978
    %vm1980 = vcmp.lt.s32.totalorder %v1961, 1
    %vm1981 = vcmp.lt.s32.totalorder %v1961, 2
    %vm1982 = vcmp.lt.s32.totalorder %v1961, 3
    %vm1983 = vcmp.lt.s32.totalorder %v1961, 4
    %v1984 = vsel %vm1980, %v1964, %v1967
    %v1985 = vsel %vm1983, %v1973, 2102212464
    %v1986 = vsel %vm1982, %v1970, %v1985
    %v1987 = vsel %vm1981, %v1984, %v1986
    %v1988 = vsel %vm1980, %v1967, %v1970
    %v1989 = vsel %vm1983, %v1976, 920167782
    %v1990 = vsel %vm1982, %v1973, %v1989
    %v1991 = vsel %vm1981, %v1988, %v1990
    %v1992 = vsel %vm1980, %v1970, %v1973
    %v1993 = vsel %vm1983, %v1979, 1326507024
    %v1994 = vsel %vm1982, %v1976, %v1993
    %v1995 = vsel %vm1981, %v1992, %v1994
    %v1996 = vshll.u32 %v1956, 8
    %v1997 = vmul.u32.u64.compose %v1996, %v1995
    %v1998 = vextract.low.u32 %v1997
    %v1999 = vextract.high.u32 %v1997
    %v2000 = vmul.u32.u64.compose %v1996, %v1991
    %v2001 = vextract.low.u32 %v2000
    %v2002 = vextract.high.u32 %v2000
    %v2003 = vmul.u32 %v1996, %v1987
    %v2004 = vadd.s32 %v1999, %v2001
    %vm2005 = vc.u32 %v1999, %v2001
    %v2006 = vadd.s32 %v2002, 1
    %v2007 = vsel %vm2005, %v2006, %v2002
    %v2008 = vadd.s32 %v2003, %v2007
    %v2009 = vadd.s32 %v2008, 536870912
    %v2010 = vshrl.u32 %v2009, 30
    %v2011 = vshll.u32 %v2010, 30
    %v2012 = vsub.s32 %v2008, %v2011
    %vm2013 = vcmp.lt.s32.totalorder %v2012, 0
    %v2014 = vsub.s32 0, %v2012
    %v2015 = vsel %vm2013, %v2014, %v2012
    %v2016 = vclz %v2015
    %v2017 = vsub.s32 %v2016, 2
    %vm2018 = vcmp.gt.s32.totalorder 0, %v2017
    %v2019 = vsel %vm2018, 0, %v2017
    %v2020 = vsub.s32 32, %v2019
    %v2021 = vshll.u32 %v2012, %v2019
    %v2022 = vshrl.u32 %v2004, %v2020
    %v2023 = vor.u32 %v2021, %v2022
    %v2024 = vsub.s32 4294967266, %v2019
    %v2025 = vadd.s32 %v2024, 127
    %v2026 = vshll.u32 %v2025, 23
    %v2027 = vor.u32 4788187, %v2026
    %v2028 = vand.u32 2147483647, %v2027
    %v2030 = vcvt.s32.f32 %v2023
    %v2031 = vmul.f32 %v2030, %v2028
    %v2032 = vxor.u32 %v2031, 2147483648
    %v2033 = vsel %vm1950, %v2032, %v2031
    %v2034 = vsub.s32 4, %v2010
    %v2035 = vsel %vm1950, %v2034, %v2010
    %v2036 = vsel %vm1949, %v481, %v2033
    %v2037 = vsel %vm1949, 0, %v2035
    %v2038 = vcosq.f32.pop %v2036
    %v2039 = vsinq.f32.pop %v2036
    %vm2040 = vweird.f32 %v481
    %v2041 = vadd.s32 %v2037, 3
    %v2042 = vand.u32 %v2041, 3
    %vm2043 = vcmp.lt.s32.totalorder %v2042, 2
    %vm2044 = vcmp.eq.s32.totalorder %v2042, 0
    %v2045 = vxor.u32 %v2039, 2147483648
    %v2046 = vsel %vm2044, %v2038, %v2045
    %vm2047 = vcmp.eq.s32.totalorder %v2042, 2
    %v2048 = vxor.u32 %v2038, 2147483648
    %v2049 = vsel %vm2047, %v2048, %v2039
    %v2050 = vsel %vm2043, %v2046, %v2049
    %v2051 = vsel %vm2040, nan, %v2050
    %v2052 = vand.u32 2147483647, %v482
    %vm2053 = vcmp.le.f32.partialorder %v2052, 0.7853982
    %vm2054 = vcmp.lt.s32.totalorder %v482, 0
    %v2055 = vand.u32 %v482, 2139095040
    %v2056 = vshrl.u32 %v2055, 23
    %v2057 = vsub.s32 %v2056, 127
    %v2058 = vand.u32 2147483647, %v482
    %v2059 = vand.u32 %v2058, 8388607
    %v2060 = vor.u32 %v2059, 8388608
    %v2061 = vsub.s32 0, %v2060
    %v2062 = vadd.s32 %v2057, 1
    %vm2063 = vcmp.gt.s32.totalorder %v2062, 0
    %v2064 = vsel %vm2063, %v2062, 0
    %v2065 = vshrl.u32 %v2064, 5
    %v2066 = vand.u32 %v2064, 31
    %v2067 = vsub.s32 32, %v2066
    %v2068 = vshrl.u32 683565275, %v2067
    %v2069 = vshll.u32 683565275, %v2066
    %v2070 = vshrl.u32 2475754826, %v2067
    %v2071 = vor.u32 %v2069, %v2070
    %v2072 = vshll.u32 2475754826, %v2066
    %v2073 = vshrl.u32 2131351028, %v2067
    %v2074 = vor.u32 %v2072, %v2073
    %v2075 = vshll.u32 2131351028, %v2066
    %v2076 = vshrl.u32 2102212464, %v2067
    %v2077 = vor.u32 %v2075, %v2076
    %v2078 = vshll.u32 2102212464, %v2066
    %v2079 = vshrl.u32 920167782, %v2067
    %v2080 = vor.u32 %v2078, %v2079
    %v2081 = vshll.u32 920167782, %v2066
    %v2082 = vshrl.u32 1326507024, %v2067
    %v2083 = vor.u32 %v2081, %v2082
    %vm2084 = vcmp.lt.s32.totalorder %v2065, 1
    %vm2085 = vcmp.lt.s32.totalorder %v2065, 2
    %vm2086 = vcmp.lt.s32.totalorder %v2065, 3
    %vm2087 = vcmp.lt.s32.totalorder %v2065, 4
    %v2088 = vsel %vm2084, %v2068, %v2071
    %v2089 = vsel %vm2087, %v2077, 2102212464
    %v2090 = vsel %vm2086, %v2074, %v2089
    %v2091 = vsel %vm2085, %v2088, %v2090
    %v2092 = vsel %vm2084, %v2071, %v2074
    %v2093 = vsel %vm2087, %v2080, 920167782
    %v2094 = vsel %vm2086, %v2077, %v2093
    %v2095 = vsel %vm2085, %v2092, %v2094
    %v2096 = vsel %vm2084, %v2074, %v2077
    %v2097 = vsel %vm2087, %v2083, 1326507024
    %v2098 = vsel %vm2086, %v2080, %v2097
    %v2099 = vsel %vm2085, %v2096, %v2098
    %v2100 = vshll.u32 %v2060, 8
    %v2101 = vmul.u32.u64.compose %v2100, %v2099
    %v2102 = vextract.low.u32 %v2101
    %v2103 = vextract.high.u32 %v2101
    %v2104 = vmul.u32.u64.compose %v2100, %v2095
    %v2105 = vextract.low.u32 %v2104
    %v2106 = vextract.high.u32 %v2104
    %v2107 = vmul.u32 %v2100, %v2091
    %v2108 = vadd.s32 %v2103, %v2105
    %vm2109 = vc.u32 %v2103, %v2105
    %v2110 = vadd.s32 %v2106, 1
    %v2111 = vsel %vm2109, %v2110, %v2106
    %v2112 = vadd.s32 %v2107, %v2111
    %v2113 = vadd.s32 %v2112, 536870912
    %v2114 = vshrl.u32 %v2113, 30
    %v2115 = vshll.u32 %v2114, 30
    %v2116 = vsub.s32 %v2112, %v2115
    %vm2117 = vcmp.lt.s32.totalorder %v2116, 0
    %v2118 = vsub.s32 0, %v2116
    %v2119 = vsel %vm2117, %v2118, %v2116
    %v2120 = vclz %v2119
    %v2121 = vsub.s32 %v2120, 2
    %vm2122 = vcmp.gt.s32.totalorder 0, %v2121
    %v2123 = vsel %vm2122, 0, %v2121
    %v2124 = vsub.s32 32, %v2123
    %v2125 = vshll.u32 %v2116, %v2123
    %v2126 = vshrl.u32 %v2108, %v2124
    %v2127 = vor.u32 %v2125, %v2126
    %v2128 = vsub.s32 4294967266, %v2123
    %v2129 = vadd.s32 %v2128, 127
    %v2130 = vshll.u32 %v2129, 23
    %v2131 = vor.u32 4788187, %v2130
    %v2132 = vand.u32 2147483647, %v2131
    %v2134 = vcvt.s32.f32 %v2127
    %v2135 = vmul.f32 %v2134, %v2132
    %v2136 = vxor.u32 %v2135, 2147483648
    %v2137 = vsel %vm2054, %v2136, %v2135
    %v2138 = vsub.s32 4, %v2114
    %v2139 = vsel %vm2054, %v2138, %v2114
    %v2140 = vsel %vm2053, %v482, %v2137
    %v2141 = vsel %vm2053, 0, %v2139
    %v2142 = vcosq.f32.pop %v2140
    %v2143 = vsinq.f32.pop %v2140
    %vm2144 = vweird.f32 %v482
    %v2145 = vadd.s32 %v2141, 3
    %v2146 = vand.u32 %v2145, 3
    %vm2147 = vcmp.lt.s32.totalorder %v2146, 2
    %vm2148 = vcmp.eq.s32.totalorder %v2146, 0
    %v2149 = vxor.u32 %v2143, 2147483648
    %v2150 = vsel %vm2148, %v2142, %v2149
    %vm2151 = vcmp.eq.s32.totalorder %v2146, 2
    %v2152 = vxor.u32 %v2142, 2147483648
    %v2153 = vsel %vm2151, %v2152, %v2143
    %v2154 = vsel %vm2147, %v2150, %v2153
    %v2155 = vsel %vm2144, nan, %v2154
    %v2156 = vand.u32 2147483647, %v483
    %vm2157 = vcmp.le.f32.partialorder %v2156, 0.7853982
    %vm2158 = vcmp.lt.s32.totalorder %v483, 0
    %v2159 = vand.u32 %v483, 2139095040
    %v2160 = vshrl.u32 %v2159, 23
    %v2161 = vsub.s32 %v2160, 127
    %v2162 = vand.u32 2147483647, %v483
    %v2163 = vand.u32 %v2162, 8388607
    %v2164 = vor.u32 %v2163, 8388608
    %v2165 = vsub.s32 0, %v2164
    %v2166 = vadd.s32 %v2161, 1
    %vm2167 = vcmp.gt.s32.totalorder %v2166, 0
    %v2168 = vsel %vm2167, %v2166, 0
    %v2169 = vshrl.u32 %v2168, 5
    %v2170 = vand.u32 %v2168, 31
    %v2171 = vsub.s32 32, %v2170
    %v2172 = vshrl.u32 683565275, %v2171
    %v2173 = vshll.u32 683565275, %v2170
    %v2174 = vshrl.u32 2475754826, %v2171
    %v2175 = vor.u32 %v2173, %v2174
    %v2176 = vshll.u32 2475754826, %v2170
    %v2177 = vshrl.u32 2131351028, %v2171
    %v2178 = vor.u32 %v2176, %v2177
    %v2179 = vshll.u32 2131351028, %v2170
    %v2180 = vshrl.u32 2102212464, %v2171
    %v2181 = vor.u32 %v2179, %v2180
    %v2182 = vshll.u32 2102212464, %v2170
    %v2183 = vshrl.u32 920167782, %v2171
    %v2184 = vor.u32 %v2182, %v2183
    %v2185 = vshll.u32 920167782, %v2170
    %v2186 = vshrl.u32 1326507024, %v2171
    %v2187 = vor.u32 %v2185, %v2186
    %vm2188 = vcmp.lt.s32.totalorder %v2169, 1
    %vm2189 = vcmp.lt.s32.totalorder %v2169, 2
    %vm2190 = vcmp.lt.s32.totalorder %v2169, 3
    %vm2191 = vcmp.lt.s32.totalorder %v2169, 4
    %v2192 = vsel %vm2188, %v2172, %v2175
    %v2193 = vsel %vm2191, %v2181, 2102212464
    %v2194 = vsel %vm2190, %v2178, %v2193
    %v2195 = vsel %vm2189, %v2192, %v2194
    %v2196 = vsel %vm2188, %v2175, %v2178
    %v2197 = vsel %vm2191, %v2184, 920167782
    %v2198 = vsel %vm2190, %v2181, %v2197
    %v2199 = vsel %vm2189, %v2196, %v2198
    %v2200 = vsel %vm2188, %v2178, %v2181
    %v2201 = vsel %vm2191, %v2187, 1326507024
    %v2202 = vsel %vm2190, %v2184, %v2201
    %v2203 = vsel %vm2189, %v2200, %v2202
    %v2204 = vshll.u32 %v2164, 8
    %v2205 = vmul.u32.u64.compose %v2204, %v2203
    %v2206 = vextract.low.u32 %v2205
    %v2207 = vextract.high.u32 %v2205
    %v2208 = vmul.u32.u64.compose %v2204, %v2199
    %v2209 = vextract.low.u32 %v2208
    %v2210 = vextract.high.u32 %v2208
    %v2211 = vmul.u32 %v2204, %v2195
    %v2212 = vadd.s32 %v2207, %v2209
    %vm2213 = vc.u32 %v2207, %v2209
    %v2214 = vadd.s32 %v2210, 1
    %v2215 = vsel %vm2213, %v2214, %v2210
    %v2216 = vadd.s32 %v2211, %v2215
    %v2217 = vadd.s32 %v2216, 536870912
    %v2218 = vshrl.u32 %v2217, 30
    %v2219 = vshll.u32 %v2218, 30
    %v2220 = vsub.s32 %v2216, %v2219
    %vm2221 = vcmp.lt.s32.totalorder %v2220, 0
    %v2222 = vsub.s32 0, %v2220
    %v2223 = vsel %vm2221, %v2222, %v2220
    %v2224 = vclz %v2223
    %v2225 = vsub.s32 %v2224, 2
    %vm2226 = vcmp.gt.s32.totalorder 0, %v2225
    %v2227 = vsel %vm2226, 0, %v2225
    %v2228 = vsub.s32 32, %v2227
    %v2229 = vshll.u32 %v2220, %v2227
    %v2230 = vshrl.u32 %v2212, %v2228
    %v2231 = vor.u32 %v2229, %v2230
    %v2232 = vsub.s32 4294967266, %v2227
    %v2233 = vadd.s32 %v2232, 127
    %v2234 = vshll.u32 %v2233, 23
    %v2235 = vor.u32 4788187, %v2234
    %v2236 = vand.u32 2147483647, %v2235
    %v2238 = vcvt.s32.f32 %v2231
    %v2239 = vmul.f32 %v2238, %v2236
    %v2240 = vxor.u32 %v2239, 2147483648
    %v2241 = vsel %vm2158, %v2240, %v2239
    %v2242 = vsub.s32 4, %v2218
    %v2243 = vsel %vm2158, %v2242, %v2218
    %v2244 = vsel %vm2157, %v483, %v2241
    %v2245 = vsel %vm2157, 0, %v2243
    %v2246 = vcosq.f32.pop %v2244
    %v2247 = vsinq.f32.pop %v2244
    %vm2248 = vweird.f32 %v483
    %v2249 = vadd.s32 %v2245, 3
    %v2250 = vand.u32 %v2249, 3
    %vm2251 = vcmp.lt.s32.totalorder %v2250, 2
    %vm2252 = vcmp.eq.s32.totalorder %v2250, 0
    %v2253 = vxor.u32 %v2247, 2147483648
    %v2254 = vsel %vm2252, %v2246, %v2253
    %vm2255 = vcmp.eq.s32.totalorder %v2250, 2
    %v2256 = vxor.u32 %v2246, 2147483648
    %v2257 = vsel %vm2255, %v2256, %v2247
    %v2258 = vsel %vm2251, %v2254, %v2257
    %v2259 = vsel %vm2248, nan, %v2258
    %v2260 = vand.u32 2147483647, %v484
    %vm2261 = vcmp.le.f32.partialorder %v2260, 0.7853982
    %vm2262 = vcmp.lt.s32.totalorder %v484, 0
    %v2263 = vand.u32 %v484, 2139095040
    %v2264 = vshrl.u32 %v2263, 23
    %v2265 = vsub.s32 %v2264, 127
    %v2266 = vand.u32 2147483647, %v484
    %v2267 = vand.u32 %v2266, 8388607
    %v2268 = vor.u32 %v2267, 8388608
    %v2269 = vsub.s32 0, %v2268
    %v2270 = vadd.s32 %v2265, 1
    %vm2271 = vcmp.gt.s32.totalorder %v2270, 0
    %v2272 = vsel %vm2271, %v2270, 0
    %v2273 = vshrl.u32 %v2272, 5
    %v2274 = vand.u32 %v2272, 31
    %v2275 = vsub.s32 32, %v2274
    %v2276 = vshrl.u32 683565275, %v2275
    %v2277 = vshll.u32 683565275, %v2274
    %v2278 = vshrl.u32 2475754826, %v2275
    %v2279 = vor.u32 %v2277, %v2278
    %v2280 = vshll.u32 2475754826, %v2274
    %v2281 = vshrl.u32 2131351028, %v2275
    %v2282 = vor.u32 %v2280, %v2281
    %v2283 = vshll.u32 2131351028, %v2274
    %v2284 = vshrl.u32 2102212464, %v2275
    %v2285 = vor.u32 %v2283, %v2284
    %v2286 = vshll.u32 2102212464, %v2274
    %v2287 = vshrl.u32 920167782, %v2275
    %v2288 = vor.u32 %v2286, %v2287
    %v2289 = vshll.u32 920167782, %v2274
    %v2290 = vshrl.u32 1326507024, %v2275
    %v2291 = vor.u32 %v2289, %v2290
    %vm2292 = vcmp.lt.s32.totalorder %v2273, 1
    %vm2293 = vcmp.lt.s32.totalorder %v2273, 2
    %vm2294 = vcmp.lt.s32.totalorder %v2273, 3
    %vm2295 = vcmp.lt.s32.totalorder %v2273, 4
    %v2296 = vsel %vm2292, %v2276, %v2279
    %v2297 = vsel %vm2295, %v2285, 2102212464
    %v2298 = vsel %vm2294, %v2282, %v2297
    %v2299 = vsel %vm2293, %v2296, %v2298
    %v2300 = vsel %vm2292, %v2279, %v2282
    %v2301 = vsel %vm2295, %v2288, 920167782
    %v2302 = vsel %vm2294, %v2285, %v2301
    %v2303 = vsel %vm2293, %v2300, %v2302
    %v2304 = vsel %vm2292, %v2282, %v2285
    %v2305 = vsel %vm2295, %v2291, 1326507024
    %v2306 = vsel %vm2294, %v2288, %v2305
    %v2307 = vsel %vm2293, %v2304, %v2306
    %v2308 = vshll.u32 %v2268, 8
    %v2309 = vmul.u32.u64.compose %v2308, %v2307
    %v2310 = vextract.low.u32 %v2309
    %v2311 = vextract.high.u32 %v2309
    %v2312 = vmul.u32.u64.compose %v2308, %v2303
    %v2313 = vextract.low.u32 %v2312
    %v2314 = vextract.high.u32 %v2312
    %v2315 = vmul.u32 %v2308, %v2299
    %v2316 = vadd.s32 %v2311, %v2313
    %vm2317 = vc.u32 %v2311, %v2313
    %v2318 = vadd.s32 %v2314, 1
    %v2319 = vsel %vm2317, %v2318, %v2314
    %v2320 = vadd.s32 %v2315, %v2319
    %v2321 = vadd.s32 %v2320, 536870912
    %v2322 = vshrl.u32 %v2321, 30
    %v2323 = vshll.u32 %v2322, 30
    %v2324 = vsub.s32 %v2320, %v2323
    %vm2325 = vcmp.lt.s32.totalorder %v2324, 0
    %v2326 = vsub.s32 0, %v2324
    %v2327 = vsel %vm2325, %v2326, %v2324
    %v2328 = vclz %v2327
    %v2329 = vsub.s32 %v2328, 2
    %vm2330 = vcmp.gt.s32.totalorder 0, %v2329
    %v2331 = vsel %vm2330, 0, %v2329
    %v2332 = vsub.s32 32, %v2331
    %v2333 = vshll.u32 %v2324, %v2331
    %v2334 = vshrl.u32 %v2316, %v2332
    %v2335 = vor.u32 %v2333, %v2334
    %v2336 = vsub.s32 4294967266, %v2331
    %v2337 = vadd.s32 %v2336, 127
    %v2338 = vshll.u32 %v2337, 23
    %v2339 = vor.u32 4788187, %v2338
    %v2340 = vand.u32 2147483647, %v2339
    %v2342 = vcvt.s32.f32 %v2335
    %v2343 = vmul.f32 %v2342, %v2340
    %v2344 = vxor.u32 %v2343, 2147483648
    %v2345 = vsel %vm2262, %v2344, %v2343
    %v2346 = vsub.s32 4, %v2322
    %v2347 = vsel %vm2262, %v2346, %v2322
    %v2348 = vsel %vm2261, %v484, %v2345
    %v2349 = vsel %vm2261, 0, %v2347
    %v2350 = vcosq.f32.pop %v2348
    %v2351 = vsinq.f32.pop %v2348
    %vm2352 = vweird.f32 %v484
    %v2353 = vadd.s32 %v2349, 3
    %v2354 = vand.u32 %v2353, 3
    %vm2355 = vcmp.lt.s32.totalorder %v2354, 2
    %vm2356 = vcmp.eq.s32.totalorder %v2354, 0
    %v2357 = vxor.u32 %v2351, 2147483648
    %v2358 = vsel %vm2356, %v2350, %v2357
    %vm2359 = vcmp.eq.s32.totalorder %v2354, 2
    %v2360 = vxor.u32 %v2350, 2147483648
    %v2361 = vsel %vm2359, %v2360, %v2351
    %v2362 = vsel %vm2355, %v2358, %v2361
    %v2363 = vsel %vm2352, nan, %v2362
    %v2364 = vand.u32 2147483647, %v485
    %vm2365 = vcmp.le.f32.partialorder %v2364, 0.7853982
    %vm2366 = vcmp.lt.s32.totalorder %v485, 0
    %v2367 = vand.u32 %v485, 2139095040
    %v2368 = vshrl.u32 %v2367, 23
    %v2369 = vsub.s32 %v2368, 127
    %v2370 = vand.u32 2147483647, %v485
    %v2371 = vand.u32 %v2370, 8388607
    %v2372 = vor.u32 %v2371, 8388608
    %v2373 = vsub.s32 0, %v2372
    %v2374 = vadd.s32 %v2369, 1
    %vm2375 = vcmp.gt.s32.totalorder %v2374, 0
    %v2376 = vsel %vm2375, %v2374, 0
    %v2377 = vshrl.u32 %v2376, 5
    %v2378 = vand.u32 %v2376, 31
    %v2379 = vsub.s32 32, %v2378
    %v2380 = vshrl.u32 683565275, %v2379
    %v2381 = vshll.u32 683565275, %v2378
    %v2382 = vshrl.u32 2475754826, %v2379
    %v2383 = vor.u32 %v2381, %v2382
    %v2384 = vshll.u32 2475754826, %v2378
    %v2385 = vshrl.u32 2131351028, %v2379
    %v2386 = vor.u32 %v2384, %v2385
    %v2387 = vshll.u32 2131351028, %v2378
    %v2388 = vshrl.u32 2102212464, %v2379
    %v2389 = vor.u32 %v2387, %v2388
    %v2390 = vshll.u32 2102212464, %v2378
    %v2391 = vshrl.u32 920167782, %v2379
    %v2392 = vor.u32 %v2390, %v2391
    %v2393 = vshll.u32 920167782, %v2378
    %v2394 = vshrl.u32 1326507024, %v2379
    %v2395 = vor.u32 %v2393, %v2394
    %vm2396 = vcmp.lt.s32.totalorder %v2377, 1
    %vm2397 = vcmp.lt.s32.totalorder %v2377, 2
    %vm2398 = vcmp.lt.s32.totalorder %v2377, 3
    %vm2399 = vcmp.lt.s32.totalorder %v2377, 4
    %v2400 = vsel %vm2396, %v2380, %v2383
    %v2401 = vsel %vm2399, %v2389, 2102212464
    %v2402 = vsel %vm2398, %v2386, %v2401
    %v2403 = vsel %vm2397, %v2400, %v2402
    %v2404 = vsel %vm2396, %v2383, %v2386
    %v2405 = vsel %vm2399, %v2392, 920167782
    %v2406 = vsel %vm2398, %v2389, %v2405
    %v2407 = vsel %vm2397, %v2404, %v2406
    %v2408 = vsel %vm2396, %v2386, %v2389
    %v2409 = vsel %vm2399, %v2395, 1326507024
    %v2410 = vsel %vm2398, %v2392, %v2409
    %v2411 = vsel %vm2397, %v2408, %v2410
    %v2412 = vshll.u32 %v2372, 8
    %v2413 = vmul.u32.u64.compose %v2412, %v2411
    %v2414 = vextract.low.u32 %v2413
    %v2415 = vextract.high.u32 %v2413
    %v2416 = vmul.u32.u64.compose %v2412, %v2407
    %v2417 = vextract.low.u32 %v2416
    %v2418 = vextract.high.u32 %v2416
    %v2419 = vmul.u32 %v2412, %v2403
    %v2420 = vadd.s32 %v2415, %v2417
    %vm2421 = vc.u32 %v2415, %v2417
    %v2422 = vadd.s32 %v2418, 1
    %v2423 = vsel %vm2421, %v2422, %v2418
    %v2424 = vadd.s32 %v2419, %v2423
    %v2425 = vadd.s32 %v2424, 536870912
    %v2426 = vshrl.u32 %v2425, 30
    %v2427 = vshll.u32 %v2426, 30
    %v2428 = vsub.s32 %v2424, %v2427
    %vm2429 = vcmp.lt.s32.totalorder %v2428, 0
    %v2430 = vsub.s32 0, %v2428
    %v2431 = vsel %vm2429, %v2430, %v2428
    %v2432 = vclz %v2431
    %v2433 = vsub.s32 %v2432, 2
    %vm2434 = vcmp.gt.s32.totalorder 0, %v2433
    %v2435 = vsel %vm2434, 0, %v2433
    %v2436 = vsub.s32 32, %v2435
    %v2437 = vshll.u32 %v2428, %v2435
    %v2438 = vshrl.u32 %v2420, %v2436
    %v2439 = vor.u32 %v2437, %v2438
    %v2440 = vsub.s32 4294967266, %v2435
    %v2441 = vadd.s32 %v2440, 127
    %v2442 = vshll.u32 %v2441, 23
    %v2443 = vor.u32 4788187, %v2442
    %v2444 = vand.u32 2147483647, %v2443
    %v2446 = vcvt.s32.f32 %v2439
    %v2447 = vmul.f32 %v2446, %v2444
    %v2448 = vxor.u32 %v2447, 2147483648
    %v2449 = vsel %vm2366, %v2448, %v2447
    %v2450 = vsub.s32 4, %v2426
    %v2451 = vsel %vm2366, %v2450, %v2426
    %v2452 = vsel %vm2365, %v485, %v2449
    %v2453 = vsel %vm2365, 0, %v2451
    %v2454 = vcosq.f32.pop %v2452
    %v2455 = vsinq.f32.pop %v2452
    %vm2456 = vweird.f32 %v485
    %v2457 = vadd.s32 %v2453, 3
    %v2458 = vand.u32 %v2457, 3
    %vm2459 = vcmp.lt.s32.totalorder %v2458, 2
    %vm2460 = vcmp.eq.s32.totalorder %v2458, 0
    %v2461 = vxor.u32 %v2455, 2147483648
    %v2462 = vsel %vm2460, %v2454, %v2461
    %vm2463 = vcmp.eq.s32.totalorder %v2458, 2
    %v2464 = vxor.u32 %v2454, 2147483648
    %v2465 = vsel %vm2463, %v2464, %v2455
    %v2466 = vsel %vm2459, %v2462, %v2465
    %v2467 = vsel %vm2456, nan, %v2466
    %v2468 = vand.u32 2147483647, %v486
    %vm2469 = vcmp.le.f32.partialorder %v2468, 0.7853982
    %vm2470 = vcmp.lt.s32.totalorder %v486, 0
    %v2471 = vand.u32 %v486, 2139095040
    %v2472 = vshrl.u32 %v2471, 23
    %v2473 = vsub.s32 %v2472, 127
    %v2474 = vand.u32 2147483647, %v486
    %v2475 = vand.u32 %v2474, 8388607
    %v2476 = vor.u32 %v2475, 8388608
    %v2477 = vsub.s32 0, %v2476
    %v2478 = vadd.s32 %v2473, 1
    %vm2479 = vcmp.gt.s32.totalorder %v2478, 0
    %v2480 = vsel %vm2479, %v2478, 0
    %v2481 = vshrl.u32 %v2480, 5
    %v2482 = vand.u32 %v2480, 31
    %v2483 = vsub.s32 32, %v2482
    %v2484 = vshrl.u32 683565275, %v2483
    %v2485 = vshll.u32 683565275, %v2482
    %v2486 = vshrl.u32 2475754826, %v2483
    %v2487 = vor.u32 %v2485, %v2486
    %v2488 = vshll.u32 2475754826, %v2482
    %v2489 = vshrl.u32 2131351028, %v2483
    %v2490 = vor.u32 %v2488, %v2489
    %v2491 = vshll.u32 2131351028, %v2482
    %v2492 = vshrl.u32 2102212464, %v2483
    %v2493 = vor.u32 %v2491, %v2492
    %v2494 = vshll.u32 2102212464, %v2482
    %v2495 = vshrl.u32 920167782, %v2483
    %v2496 = vor.u32 %v2494, %v2495
    %v2497 = vshll.u32 920167782, %v2482
    %v2498 = vshrl.u32 1326507024, %v2483
    %v2499 = vor.u32 %v2497, %v2498
    %vm2500 = vcmp.lt.s32.totalorder %v2481, 1
    %vm2501 = vcmp.lt.s32.totalorder %v2481, 2
    %vm2502 = vcmp.lt.s32.totalorder %v2481, 3
    %vm2503 = vcmp.lt.s32.totalorder %v2481, 4
    %v2504 = vsel %vm2500, %v2484, %v2487
    %v2505 = vsel %vm2503, %v2493, 2102212464
    %v2506 = vsel %vm2502, %v2490, %v2505
    %v2507 = vsel %vm2501, %v2504, %v2506
    %v2508 = vsel %vm2500, %v2487, %v2490
    %v2509 = vsel %vm2503, %v2496, 920167782
    %v2510 = vsel %vm2502, %v2493, %v2509
    %v2511 = vsel %vm2501, %v2508, %v2510
    %v2512 = vsel %vm2500, %v2490, %v2493
    %v2513 = vsel %vm2503, %v2499, 1326507024
    %v2514 = vsel %vm2502, %v2496, %v2513
    %v2515 = vsel %vm2501, %v2512, %v2514
    %v2516 = vshll.u32 %v2476, 8
    %v2517 = vmul.u32.u64.compose %v2516, %v2515
    %v2518 = vextract.low.u32 %v2517
    %v2519 = vextract.high.u32 %v2517
    %v2520 = vmul.u32.u64.compose %v2516, %v2511
    %v2521 = vextract.low.u32 %v2520
    %v2522 = vextract.high.u32 %v2520
    %v2523 = vmul.u32 %v2516, %v2507
    %v2524 = vadd.s32 %v2519, %v2521
    %vm2525 = vc.u32 %v2519, %v2521
    %v2526 = vadd.s32 %v2522, 1
    %v2527 = vsel %vm2525, %v2526, %v2522
    %v2528 = vadd.s32 %v2523, %v2527
    %v2529 = vadd.s32 %v2528, 536870912
    %v2530 = vshrl.u32 %v2529, 30
    %v2531 = vshll.u32 %v2530, 30
    %v2532 = vsub.s32 %v2528, %v2531
    %vm2533 = vcmp.lt.s32.totalorder %v2532, 0
    %v2534 = vsub.s32 0, %v2532
    %v2535 = vsel %vm2533, %v2534, %v2532
    %v2536 = vclz %v2535
    %v2537 = vsub.s32 %v2536, 2
    %vm2538 = vcmp.gt.s32.totalorder 0, %v2537
    %v2539 = vsel %vm2538, 0, %v2537
    %v2540 = vsub.s32 32, %v2539
    %v2541 = vshll.u32 %v2532, %v2539
    %v2542 = vshrl.u32 %v2524, %v2540
    %v2543 = vor.u32 %v2541, %v2542
    %v2544 = vsub.s32 4294967266, %v2539
    %v2545 = vadd.s32 %v2544, 127
    %v2546 = vshll.u32 %v2545, 23
    %v2547 = vor.u32 4788187, %v2546
    %v2548 = vand.u32 2147483647, %v2547
    %v2550 = vcvt.s32.f32 %v2543
    %v2551 = vmul.f32 %v2550, %v2548
    %v2552 = vxor.u32 %v2551, 2147483648
    %v2553 = vsel %vm2470, %v2552, %v2551
    %v2554 = vsub.s32 4, %v2530
    %v2555 = vsel %vm2470, %v2554, %v2530
    %v2556 = vsel %vm2469, %v486, %v2553
    %v2557 = vsel %vm2469, 0, %v2555
    %v2558 = vcosq.f32.pop %v2556
    %v2559 = vsinq.f32.pop %v2556
    %vm2560 = vweird.f32 %v486
    %v2561 = vadd.s32 %v2557, 3
    %v2562 = vand.u32 %v2561, 3
    %vm2563 = vcmp.lt.s32.totalorder %v2562, 2
    %vm2564 = vcmp.eq.s32.totalorder %v2562, 0
    %v2565 = vxor.u32 %v2559, 2147483648
    %v2566 = vsel %vm2564, %v2558, %v2565
    %vm2567 = vcmp.eq.s32.totalorder %v2562, 2
    %v2568 = vxor.u32 %v2558, 2147483648
    %v2569 = vsel %vm2567, %v2568, %v2559
    %v2570 = vsel %vm2563, %v2566, %v2569
    %v2571 = vsel %vm2560, nan, %v2570
    %v2572 = vand.u32 2147483647, %v487
    %vm2573 = vcmp.le.f32.partialorder %v2572, 0.7853982
    %vm2574 = vcmp.lt.s32.totalorder %v487, 0
    %v2575 = vand.u32 %v487, 2139095040
    %v2576 = vshrl.u32 %v2575, 23
    %v2577 = vsub.s32 %v2576, 127
    %v2578 = vand.u32 2147483647, %v487
    %v2579 = vand.u32 %v2578, 8388607
    %v2580 = vor.u32 %v2579, 8388608
    %v2581 = vsub.s32 0, %v2580
    %v2582 = vadd.s32 %v2577, 1
    %vm2583 = vcmp.gt.s32.totalorder %v2582, 0
    %v2584 = vsel %vm2583, %v2582, 0
    %v2585 = vshrl.u32 %v2584, 5
    %v2586 = vand.u32 %v2584, 31
    %v2587 = vsub.s32 32, %v2586
    %v2588 = vshrl.u32 683565275, %v2587
    %v2589 = vshll.u32 683565275, %v2586
    %v2590 = vshrl.u32 2475754826, %v2587
    %v2591 = vor.u32 %v2589, %v2590
    %v2592 = vshll.u32 2475754826, %v2586
    %v2593 = vshrl.u32 2131351028, %v2587
    %v2594 = vor.u32 %v2592, %v2593
    %v2595 = vshll.u32 2131351028, %v2586
    %v2596 = vshrl.u32 2102212464, %v2587
    %v2597 = vor.u32 %v2595, %v2596
    %v2598 = vshll.u32 2102212464, %v2586
    %v2599 = vshrl.u32 920167782, %v2587
    %v2600 = vor.u32 %v2598, %v2599
    %v2601 = vshll.u32 920167782, %v2586
    %v2602 = vshrl.u32 1326507024, %v2587
    %v2603 = vor.u32 %v2601, %v2602
    %vm2604 = vcmp.lt.s32.totalorder %v2585, 1
    %vm2605 = vcmp.lt.s32.totalorder %v2585, 2
    %vm2606 = vcmp.lt.s32.totalorder %v2585, 3
    %vm2607 = vcmp.lt.s32.totalorder %v2585, 4
    %v2608 = vsel %vm2604, %v2588, %v2591
    %v2609 = vsel %vm2607, %v2597, 2102212464
    %v2610 = vsel %vm2606, %v2594, %v2609
    %v2611 = vsel %vm2605, %v2608, %v2610
    %v2612 = vsel %vm2604, %v2591, %v2594
    %v2613 = vsel %vm2607, %v2600, 920167782
    %v2614 = vsel %vm2606, %v2597, %v2613
    %v2615 = vsel %vm2605, %v2612, %v2614
    %v2616 = vsel %vm2604, %v2594, %v2597
    %v2617 = vsel %vm2607, %v2603, 1326507024
    %v2618 = vsel %vm2606, %v2600, %v2617
    %v2619 = vsel %vm2605, %v2616, %v2618
    %v2620 = vshll.u32 %v2580, 8
    %v2621 = vmul.u32.u64.compose %v2620, %v2619
    %v2622 = vextract.low.u32 %v2621
    %v2623 = vextract.high.u32 %v2621
    %v2624 = vmul.u32.u64.compose %v2620, %v2615
    %v2625 = vextract.low.u32 %v2624
    %v2626 = vextract.high.u32 %v2624
    %v2627 = vmul.u32 %v2620, %v2611
    %v2628 = vadd.s32 %v2623, %v2625
    %vm2629 = vc.u32 %v2623, %v2625
    %v2630 = vadd.s32 %v2626, 1
    %v2631 = vsel %vm2629, %v2630, %v2626
    %v2632 = vadd.s32 %v2627, %v2631
    %v2633 = vadd.s32 %v2632, 536870912
    %v2634 = vshrl.u32 %v2633, 30
    %v2635 = vshll.u32 %v2634, 30
    %v2636 = vsub.s32 %v2632, %v2635
    %vm2637 = vcmp.lt.s32.totalorder %v2636, 0
    %v2638 = vsub.s32 0, %v2636
    %v2639 = vsel %vm2637, %v2638, %v2636
    %v2640 = vclz %v2639
    %v2641 = vsub.s32 %v2640, 2
    %vm2642 = vcmp.gt.s32.totalorder 0, %v2641
    %v2643 = vsel %vm2642, 0, %v2641
    %v2644 = vsub.s32 32, %v2643
    %v2645 = vshll.u32 %v2636, %v2643
    %v2646 = vshrl.u32 %v2628, %v2644
    %v2647 = vor.u32 %v2645, %v2646
    %v2648 = vsub.s32 4294967266, %v2643
    %v2649 = vadd.s32 %v2648, 127
    %v2650 = vshll.u32 %v2649, 23
    %v2651 = vor.u32 4788187, %v2650
    %v2652 = vand.u32 2147483647, %v2651
    %v2654 = vcvt.s32.f32 %v2647
    %v2655 = vmul.f32 %v2654, %v2652
    %v2656 = vxor.u32 %v2655, 2147483648
    %v2657 = vsel %vm2574, %v2656, %v2655
    %v2658 = vsub.s32 4, %v2634
    %v2659 = vsel %vm2574, %v2658, %v2634
    %v2660 = vsel %vm2573, %v487, %v2657
    %v2661 = vsel %vm2573, 0, %v2659
    %v2662 = vcosq.f32.pop %v2660
    %v2663 = vsinq.f32.pop %v2660
    %vm2664 = vweird.f32 %v487
    %v2665 = vadd.s32 %v2661, 3
    %v2666 = vand.u32 %v2665, 3
    %vm2667 = vcmp.lt.s32.totalorder %v2666, 2
    %vm2668 = vcmp.eq.s32.totalorder %v2666, 0
    %v2669 = vxor.u32 %v2663, 2147483648
    %v2670 = vsel %vm2668, %v2662, %v2669
    %vm2671 = vcmp.eq.s32.totalorder %v2666, 2
    %v2672 = vxor.u32 %v2662, 2147483648
    %v2673 = vsel %vm2671, %v2672, %v2663
    %v2674 = vsel %vm2667, %v2670, %v2673
    %v2675 = vsel %vm2664, nan, %v2674
    %v2676 = vand.u32 2147483647, %v488
    %vm2677 = vcmp.le.f32.partialorder %v2676, 0.7853982
    %vm2678 = vcmp.lt.s32.totalorder %v488, 0
    %v2679 = vand.u32 %v488, 2139095040
    %v2680 = vshrl.u32 %v2679, 23
    %v2681 = vsub.s32 %v2680, 127
    %v2682 = vand.u32 2147483647, %v488
    %v2683 = vand.u32 %v2682, 8388607
    %v2684 = vor.u32 %v2683, 8388608
    %v2685 = vsub.s32 0, %v2684
    %v2686 = vadd.s32 %v2681, 1
    %vm2687 = vcmp.gt.s32.totalorder %v2686, 0
    %v2688 = vsel %vm2687, %v2686, 0
    %v2689 = vshrl.u32 %v2688, 5
    %v2690 = vand.u32 %v2688, 31
    %v2691 = vsub.s32 32, %v2690
    %v2692 = vshrl.u32 683565275, %v2691
    %v2693 = vshll.u32 683565275, %v2690
    %v2694 = vshrl.u32 2475754826, %v2691
    %v2695 = vor.u32 %v2693, %v2694
    %v2696 = vshll.u32 2475754826, %v2690
    %v2697 = vshrl.u32 2131351028, %v2691
    %v2698 = vor.u32 %v2696, %v2697
    %v2699 = vshll.u32 2131351028, %v2690
    %v2700 = vshrl.u32 2102212464, %v2691
    %v2701 = vor.u32 %v2699, %v2700
    %v2702 = vshll.u32 2102212464, %v2690
    %v2703 = vshrl.u32 920167782, %v2691
    %v2704 = vor.u32 %v2702, %v2703
    %v2705 = vshll.u32 920167782, %v2690
    %v2706 = vshrl.u32 1326507024, %v2691
    %v2707 = vor.u32 %v2705, %v2706
    %vm2708 = vcmp.lt.s32.totalorder %v2689, 1
    %vm2709 = vcmp.lt.s32.totalorder %v2689, 2
    %vm2710 = vcmp.lt.s32.totalorder %v2689, 3
    %vm2711 = vcmp.lt.s32.totalorder %v2689, 4
    %v2712 = vsel %vm2708, %v2692, %v2695
    %v2713 = vsel %vm2711, %v2701, 2102212464
    %v2714 = vsel %vm2710, %v2698, %v2713
    %v2715 = vsel %vm2709, %v2712, %v2714
    %v2716 = vsel %vm2708, %v2695, %v2698
    %v2717 = vsel %vm2711, %v2704, 920167782
    %v2718 = vsel %vm2710, %v2701, %v2717
    %v2719 = vsel %vm2709, %v2716, %v2718
    %v2720 = vsel %vm2708, %v2698, %v2701
    %v2721 = vsel %vm2711, %v2707, 1326507024
    %v2722 = vsel %vm2710, %v2704, %v2721
    %v2723 = vsel %vm2709, %v2720, %v2722
    %v2724 = vshll.u32 %v2684, 8
    %v2725 = vmul.u32.u64.compose %v2724, %v2723
    %v2726 = vextract.low.u32 %v2725
    %v2727 = vextract.high.u32 %v2725
    %v2728 = vmul.u32.u64.compose %v2724, %v2719
    %v2729 = vextract.low.u32 %v2728
    %v2730 = vextract.high.u32 %v2728
    %v2731 = vmul.u32 %v2724, %v2715
    %v2732 = vadd.s32 %v2727, %v2729
    %vm2733 = vc.u32 %v2727, %v2729
    %v2734 = vadd.s32 %v2730, 1
    %v2735 = vsel %vm2733, %v2734, %v2730
    %v2736 = vadd.s32 %v2731, %v2735
    %v2737 = vadd.s32 %v2736, 536870912
    %v2738 = vshrl.u32 %v2737, 30
    %v2739 = vshll.u32 %v2738, 30
    %v2740 = vsub.s32 %v2736, %v2739
    %vm2741 = vcmp.lt.s32.totalorder %v2740, 0
    %v2742 = vsub.s32 0, %v2740
    %v2743 = vsel %vm2741, %v2742, %v2740
    %v2744 = vclz %v2743
    %v2745 = vsub.s32 %v2744, 2
    %vm2746 = vcmp.gt.s32.totalorder 0, %v2745
    %v2747 = vsel %vm2746, 0, %v2745
    %v2748 = vsub.s32 32, %v2747
    %v2749 = vshll.u32 %v2740, %v2747
    %v2750 = vshrl.u32 %v2732, %v2748
    %v2751 = vor.u32 %v2749, %v2750
    %v2752 = vsub.s32 4294967266, %v2747
    %v2753 = vadd.s32 %v2752, 127
    %v2754 = vshll.u32 %v2753, 23
    %v2755 = vor.u32 4788187, %v2754
    %v2756 = vand.u32 2147483647, %v2755
    %v2758 = vcvt.s32.f32 %v2751
    %v2759 = vmul.f32 %v2758, %v2756
    %v2760 = vxor.u32 %v2759, 2147483648
    %v2761 = vsel %vm2678, %v2760, %v2759
    %v2762 = vsub.s32 4, %v2738
    %v2763 = vsel %vm2678, %v2762, %v2738
    %v2764 = vsel %vm2677, %v488, %v2761
    %v2765 = vsel %vm2677, 0, %v2763
    %v2766 = vcosq.f32.pop %v2764
    %v2767 = vsinq.f32.pop %v2764
    %vm2768 = vweird.f32 %v488
    %v2769 = vadd.s32 %v2765, 3
    %v2770 = vand.u32 %v2769, 3
    %vm2771 = vcmp.lt.s32.totalorder %v2770, 2
    %vm2772 = vcmp.eq.s32.totalorder %v2770, 0
    %v2773 = vxor.u32 %v2767, 2147483648
    %v2774 = vsel %vm2772, %v2766, %v2773
    %vm2775 = vcmp.eq.s32.totalorder %v2770, 2
    %v2776 = vxor.u32 %v2766, 2147483648
    %v2777 = vsel %vm2775, %v2776, %v2767
    %v2778 = vsel %vm2771, %v2774, %v2777
    %v2779 = vsel %vm2768, nan, %v2778
    %v2780 = vand.u32 2147483647, %v489
    %vm2781 = vcmp.le.f32.partialorder %v2780, 0.7853982
    %vm2782 = vcmp.lt.s32.totalorder %v489, 0
    %v2783 = vand.u32 %v489, 2139095040
    %v2784 = vshrl.u32 %v2783, 23
    %v2785 = vsub.s32 %v2784, 127
    %v2786 = vand.u32 2147483647, %v489
    %v2787 = vand.u32 %v2786, 8388607
    %v2788 = vor.u32 %v2787, 8388608
    %v2789 = vsub.s32 0, %v2788
    %v2790 = vadd.s32 %v2785, 1
    %vm2791 = vcmp.gt.s32.totalorder %v2790, 0
    %v2792 = vsel %vm2791, %v2790, 0
    %v2793 = vshrl.u32 %v2792, 5
    %v2794 = vand.u32 %v2792, 31
    %v2795 = vsub.s32 32, %v2794
    %v2796 = vshrl.u32 683565275, %v2795
    %v2797 = vshll.u32 683565275, %v2794
    %v2798 = vshrl.u32 2475754826, %v2795
    %v2799 = vor.u32 %v2797, %v2798
    %v2800 = vshll.u32 2475754826, %v2794
    %v2801 = vshrl.u32 2131351028, %v2795
    %v2802 = vor.u32 %v2800, %v2801
    %v2803 = vshll.u32 2131351028, %v2794
    %v2804 = vshrl.u32 2102212464, %v2795
    %v2805 = vor.u32 %v2803, %v2804
    %v2806 = vshll.u32 2102212464, %v2794
    %v2807 = vshrl.u32 920167782, %v2795
    %v2808 = vor.u32 %v2806, %v2807
    %v2809 = vshll.u32 920167782, %v2794
    %v2810 = vshrl.u32 1326507024, %v2795
    %v2811 = vor.u32 %v2809, %v2810
    %vm2812 = vcmp.lt.s32.totalorder %v2793, 1
    %vm2813 = vcmp.lt.s32.totalorder %v2793, 2
    %vm2814 = vcmp.lt.s32.totalorder %v2793, 3
    %vm2815 = vcmp.lt.s32.totalorder %v2793, 4
    %v2816 = vsel %vm2812, %v2796, %v2799
    %v2817 = vsel %vm2815, %v2805, 2102212464
    %v2818 = vsel %vm2814, %v2802, %v2817
    %v2819 = vsel %vm2813, %v2816, %v2818
    %v2820 = vsel %vm2812, %v2799, %v2802
    %v2821 = vsel %vm2815, %v2808, 920167782
    %v2822 = vsel %vm2814, %v2805, %v2821
    %v2823 = vsel %vm2813, %v2820, %v2822
    %v2824 = vsel %vm2812, %v2802, %v2805
    %v2825 = vsel %vm2815, %v2811, 1326507024
    %v2826 = vsel %vm2814, %v2808, %v2825
    %v2827 = vsel %vm2813, %v2824, %v2826
    %v2828 = vshll.u32 %v2788, 8
    %v2829 = vmul.u32.u64.compose %v2828, %v2827
    %v2830 = vextract.low.u32 %v2829
    %v2831 = vextract.high.u32 %v2829
    %v2832 = vmul.u32.u64.compose %v2828, %v2823
    %v2833 = vextract.low.u32 %v2832
    %v2834 = vextract.high.u32 %v2832
    %v2835 = vmul.u32 %v2828, %v2819
    %v2836 = vadd.s32 %v2831, %v2833
    %vm2837 = vc.u32 %v2831, %v2833
    %v2838 = vadd.s32 %v2834, 1
    %v2839 = vsel %vm2837, %v2838, %v2834
    %v2840 = vadd.s32 %v2835, %v2839
    %v2841 = vadd.s32 %v2840, 536870912
    %v2842 = vshrl.u32 %v2841, 30
    %v2843 = vshll.u32 %v2842, 30
    %v2844 = vsub.s32 %v2840, %v2843
    %vm2845 = vcmp.lt.s32.totalorder %v2844, 0
    %v2846 = vsub.s32 0, %v2844
    %v2847 = vsel %vm2845, %v2846, %v2844
    %v2848 = vclz %v2847
    %v2849 = vsub.s32 %v2848, 2
    %vm2850 = vcmp.gt.s32.totalorder 0, %v2849
    %v2851 = vsel %vm2850, 0, %v2849
    %v2852 = vsub.s32 32, %v2851
    %v2853 = vshll.u32 %v2844, %v2851
    %v2854 = vshrl.u32 %v2836, %v2852
    %v2855 = vor.u32 %v2853, %v2854
    %v2856 = vsub.s32 4294967266, %v2851
    %v2857 = vadd.s32 %v2856, 127
    %v2858 = vshll.u32 %v2857, 23
    %v2859 = vor.u32 4788187, %v2858
    %v2860 = vand.u32 2147483647, %v2859
    %v2862 = vcvt.s32.f32 %v2855
    %v2863 = vmul.f32 %v2862, %v2860
    %v2864 = vxor.u32 %v2863, 2147483648
    %v2865 = vsel %vm2782, %v2864, %v2863
    %v2866 = vsub.s32 4, %v2842
    %v2867 = vsel %vm2782, %v2866, %v2842
    %v2868 = vsel %vm2781, %v489, %v2865
    %v2869 = vsel %vm2781, 0, %v2867
    %v2870 = vcosq.f32.pop %v2868
    %v2871 = vsinq.f32.pop %v2868
    %vm2872 = vweird.f32 %v489
    %v2873 = vadd.s32 %v2869, 3
    %v2874 = vand.u32 %v2873, 3
    %vm2875 = vcmp.lt.s32.totalorder %v2874, 2
    %vm2876 = vcmp.eq.s32.totalorder %v2874, 0
    %v2877 = vxor.u32 %v2871, 2147483648
    %v2878 = vsel %vm2876, %v2870, %v2877
    %vm2879 = vcmp.eq.s32.totalorder %v2874, 2
    %v2880 = vxor.u32 %v2870, 2147483648
    %v2881 = vsel %vm2879, %v2880, %v2871
    %v2882 = vsel %vm2875, %v2878, %v2881
    %v2883 = vsel %vm2872, nan, %v2882
    %v2884 = vand.u32 2147483647, %v490
    %vm2885 = vcmp.le.f32.partialorder %v2884, 0.7853982
    %vm2886 = vcmp.lt.s32.totalorder %v490, 0
    %v2887 = vand.u32 %v490, 2139095040
    %v2888 = vshrl.u32 %v2887, 23
    %v2889 = vsub.s32 %v2888, 127
    %v2890 = vand.u32 2147483647, %v490
    %v2891 = vand.u32 %v2890, 8388607
    %v2892 = vor.u32 %v2891, 8388608
    %v2893 = vsub.s32 0, %v2892
    %v2894 = vadd.s32 %v2889, 1
    %vm2895 = vcmp.gt.s32.totalorder %v2894, 0
    %v2896 = vsel %vm2895, %v2894, 0
    %v2897 = vshrl.u32 %v2896, 5
    %v2898 = vand.u32 %v2896, 31
    %v2899 = vsub.s32 32, %v2898
    %v2900 = vshrl.u32 683565275, %v2899
    %v2901 = vshll.u32 683565275, %v2898
    %v2902 = vshrl.u32 2475754826, %v2899
    %v2903 = vor.u32 %v2901, %v2902
    %v2904 = vshll.u32 2475754826, %v2898
    %v2905 = vshrl.u32 2131351028, %v2899
    %v2906 = vor.u32 %v2904, %v2905
    %v2907 = vshll.u32 2131351028, %v2898
    %v2908 = vshrl.u32 2102212464, %v2899
    %v2909 = vor.u32 %v2907, %v2908
    %v2910 = vshll.u32 2102212464, %v2898
    %v2911 = vshrl.u32 920167782, %v2899
    %v2912 = vor.u32 %v2910, %v2911
    %v2913 = vshll.u32 920167782, %v2898
    %v2914 = vshrl.u32 1326507024, %v2899
    %v2915 = vor.u32 %v2913, %v2914
    %vm2916 = vcmp.lt.s32.totalorder %v2897, 1
    %vm2917 = vcmp.lt.s32.totalorder %v2897, 2
    %vm2918 = vcmp.lt.s32.totalorder %v2897, 3
    %vm2919 = vcmp.lt.s32.totalorder %v2897, 4
    %v2920 = vsel %vm2916, %v2900, %v2903
    %v2921 = vsel %vm2919, %v2909, 2102212464
    %v2922 = vsel %vm2918, %v2906, %v2921
    %v2923 = vsel %vm2917, %v2920, %v2922
    %v2924 = vsel %vm2916, %v2903, %v2906
    %v2925 = vsel %vm2919, %v2912, 920167782
    %v2926 = vsel %vm2918, %v2909, %v2925
    %v2927 = vsel %vm2917, %v2924, %v2926
    %v2928 = vsel %vm2916, %v2906, %v2909
    %v2929 = vsel %vm2919, %v2915, 1326507024
    %v2930 = vsel %vm2918, %v2912, %v2929
    %v2931 = vsel %vm2917, %v2928, %v2930
    %v2932 = vshll.u32 %v2892, 8
    %v2933 = vmul.u32.u64.compose %v2932, %v2931
    %v2934 = vextract.low.u32 %v2933
    %v2935 = vextract.high.u32 %v2933
    %v2936 = vmul.u32.u64.compose %v2932, %v2927
    %v2937 = vextract.low.u32 %v2936
    %v2938 = vextract.high.u32 %v2936
    %v2939 = vmul.u32 %v2932, %v2923
    %v2940 = vadd.s32 %v2935, %v2937
    %vm2941 = vc.u32 %v2935, %v2937
    %v2942 = vadd.s32 %v2938, 1
    %v2943 = vsel %vm2941, %v2942, %v2938
    %v2944 = vadd.s32 %v2939, %v2943
    %v2945 = vadd.s32 %v2944, 536870912
    %v2946 = vshrl.u32 %v2945, 30
    %v2947 = vshll.u32 %v2946, 30
    %v2948 = vsub.s32 %v2944, %v2947
    %vm2949 = vcmp.lt.s32.totalorder %v2948, 0
    %v2950 = vsub.s32 0, %v2948
    %v2951 = vsel %vm2949, %v2950, %v2948
    %v2952 = vclz %v2951
    %v2953 = vsub.s32 %v2952, 2
    %vm2954 = vcmp.gt.s32.totalorder 0, %v2953
    %v2955 = vsel %vm2954, 0, %v2953
    %v2956 = vsub.s32 32, %v2955
    %v2957 = vshll.u32 %v2948, %v2955
    %v2958 = vshrl.u32 %v2940, %v2956
    %v2959 = vor.u32 %v2957, %v2958
    %v2960 = vsub.s32 4294967266, %v2955
    %v2961 = vadd.s32 %v2960, 127
    %v2962 = vshll.u32 %v2961, 23
    %v2963 = vor.u32 4788187, %v2962
    %v2964 = vand.u32 2147483647, %v2963
    %v2966 = vcvt.s32.f32 %v2959
    %v2967 = vmul.f32 %v2966, %v2964
    %v2968 = vxor.u32 %v2967, 2147483648
    %v2969 = vsel %vm2886, %v2968, %v2967
    %v2970 = vsub.s32 4, %v2946
    %v2971 = vsel %vm2886, %v2970, %v2946
    %v2972 = vsel %vm2885, %v490, %v2969
    %v2973 = vsel %vm2885, 0, %v2971
    %v2974 = vcosq.f32.pop %v2972
    %v2975 = vsinq.f32.pop %v2972
    %vm2976 = vweird.f32 %v490
    %v2977 = vadd.s32 %v2973, 3
    %v2978 = vand.u32 %v2977, 3
    %vm2979 = vcmp.lt.s32.totalorder %v2978, 2
    %vm2980 = vcmp.eq.s32.totalorder %v2978, 0
    %v2981 = vxor.u32 %v2975, 2147483648
    %v2982 = vsel %vm2980, %v2974, %v2981
    %vm2983 = vcmp.eq.s32.totalorder %v2978, 2
    %v2984 = vxor.u32 %v2974, 2147483648
    %v2985 = vsel %vm2983, %v2984, %v2975
    %v2986 = vsel %vm2979, %v2982, %v2985
    %v2987 = vsel %vm2976, nan, %v2986
    %v2988 = vand.u32 2147483647, %v491
    %vm2989 = vcmp.le.f32.partialorder %v2988, 0.7853982
    %vm2990 = vcmp.lt.s32.totalorder %v491, 0
    %v2991 = vand.u32 %v491, 2139095040
    %v2992 = vshrl.u32 %v2991, 23
    %v2993 = vsub.s32 %v2992, 127
    %v2994 = vand.u32 2147483647, %v491
    %v2995 = vand.u32 %v2994, 8388607
    %v2996 = vor.u32 %v2995, 8388608
    %v2997 = vsub.s32 0, %v2996
    %v2998 = vadd.s32 %v2993, 1
    %vm2999 = vcmp.gt.s32.totalorder %v2998, 0
    %v3000 = vsel %vm2999, %v2998, 0
    %v3001 = vshrl.u32 %v3000, 5
    %v3002 = vand.u32 %v3000, 31
    %v3003 = vsub.s32 32, %v3002
    %v3004 = vshrl.u32 683565275, %v3003
    %v3005 = vshll.u32 683565275, %v3002
    %v3006 = vshrl.u32 2475754826, %v3003
    %v3007 = vor.u32 %v3005, %v3006
    %v3008 = vshll.u32 2475754826, %v3002
    %v3009 = vshrl.u32 2131351028, %v3003
    %v3010 = vor.u32 %v3008, %v3009
    %v3011 = vshll.u32 2131351028, %v3002
    %v3012 = vshrl.u32 2102212464, %v3003
    %v3013 = vor.u32 %v3011, %v3012
    %v3014 = vshll.u32 2102212464, %v3002
    %v3015 = vshrl.u32 920167782, %v3003
    %v3016 = vor.u32 %v3014, %v3015
    %v3017 = vshll.u32 920167782, %v3002
    %v3018 = vshrl.u32 1326507024, %v3003
    %v3019 = vor.u32 %v3017, %v3018
    %vm3020 = vcmp.lt.s32.totalorder %v3001, 1
    %vm3021 = vcmp.lt.s32.totalorder %v3001, 2
    %vm3022 = vcmp.lt.s32.totalorder %v3001, 3
    %vm3023 = vcmp.lt.s32.totalorder %v3001, 4
    %v3024 = vsel %vm3020, %v3004, %v3007
    %v3025 = vsel %vm3023, %v3013, 2102212464
    %v3026 = vsel %vm3022, %v3010, %v3025
    %v3027 = vsel %vm3021, %v3024, %v3026
    %v3028 = vsel %vm3020, %v3007, %v3010
    %v3029 = vsel %vm3023, %v3016, 920167782
    %v3030 = vsel %vm3022, %v3013, %v3029
    %v3031 = vsel %vm3021, %v3028, %v3030
    %v3032 = vsel %vm3020, %v3010, %v3013
    %v3033 = vsel %vm3023, %v3019, 1326507024
    %v3034 = vsel %vm3022, %v3016, %v3033
    %v3035 = vsel %vm3021, %v3032, %v3034
    %v3036 = vshll.u32 %v2996, 8
    %v3037 = vmul.u32.u64.compose %v3036, %v3035
    %v3038 = vextract.low.u32 %v3037
    %v3039 = vextract.high.u32 %v3037
    %v3040 = vmul.u32.u64.compose %v3036, %v3031
    %v3041 = vextract.low.u32 %v3040
    %v3042 = vextract.high.u32 %v3040
    %v3043 = vmul.u32 %v3036, %v3027
    %v3044 = vadd.s32 %v3039, %v3041
    %vm3045 = vc.u32 %v3039, %v3041
    %v3046 = vadd.s32 %v3042, 1
    %v3047 = vsel %vm3045, %v3046, %v3042
    %v3048 = vadd.s32 %v3043, %v3047
    %v3049 = vadd.s32 %v3048, 536870912
    %v3050 = vshrl.u32 %v3049, 30
    %v3051 = vshll.u32 %v3050, 30
    %v3052 = vsub.s32 %v3048, %v3051
    %vm3053 = vcmp.lt.s32.totalorder %v3052, 0
    %v3054 = vsub.s32 0, %v3052
    %v3055 = vsel %vm3053, %v3054, %v3052
    %v3056 = vclz %v3055
    %v3057 = vsub.s32 %v3056, 2
    %vm3058 = vcmp.gt.s32.totalorder 0, %v3057
    %v3059 = vsel %vm3058, 0, %v3057
    %v3060 = vsub.s32 32, %v3059
    %v3061 = vshll.u32 %v3052, %v3059
    %v3062 = vshrl.u32 %v3044, %v3060
    %v3063 = vor.u32 %v3061, %v3062
    %v3064 = vsub.s32 4294967266, %v3059
    %v3065 = vadd.s32 %v3064, 127
    %v3066 = vshll.u32 %v3065, 23
    %v3067 = vor.u32 4788187, %v3066
    %v3068 = vand.u32 2147483647, %v3067
    %v3070 = vcvt.s32.f32 %v3063
    %v3071 = vmul.f32 %v3070, %v3068
    %v3072 = vxor.u32 %v3071, 2147483648
    %v3073 = vsel %vm2990, %v3072, %v3071
    %v3074 = vsub.s32 4, %v3050
    %v3075 = vsel %vm2990, %v3074, %v3050
    %v3076 = vsel %vm2989, %v491, %v3073
    %v3077 = vsel %vm2989, 0, %v3075
    %v3078 = vcosq.f32.pop %v3076
    %v3079 = vsinq.f32.pop %v3076
    %vm3080 = vweird.f32 %v491
    %v3081 = vadd.s32 %v3077, 3
    %v3082 = vand.u32 %v3081, 3
    %vm3083 = vcmp.lt.s32.totalorder %v3082, 2
    %vm3084 = vcmp.eq.s32.totalorder %v3082, 0
    %v3085 = vxor.u32 %v3079, 2147483648
    %v3086 = vsel %vm3084, %v3078, %v3085
    %vm3087 = vcmp.eq.s32.totalorder %v3082, 2
    %v3088 = vxor.u32 %v3078, 2147483648
    %v3089 = vsel %vm3087, %v3088, %v3079
    %v3090 = vsel %vm3083, %v3086, %v3089
    %v3091 = vsel %vm3080, nan, %v3090
    %v3092 = vld [vmem:[%s0] sm:$0xff]
    %v3093 = vld [vmem:[%s0 + $0x8] sm:$0xff]
    %v3094 = vld [vmem:[%s0 + $0x10] sm:$0xff]
    %v3095 = vld [vmem:[%s0 + $0x18] sm:$0xff]
    %v3096 = vld [vmem:[%s0 + $0x20] sm:$0xff]
    %v3097 = vld [vmem:[%s0 + $0x28] sm:$0xff]
    %v3098 = vld [vmem:[%s0 + $0x30] sm:$0xff]
    %v3099 = vld [vmem:[%s0 + $0x38] sm:$0xff]
    %v3100 = vld [vmem:[%s0 + $0x40] sm:$0xff]
    %v3101 = vld [vmem:[%s0 + $0x48] sm:$0xff]
    %v3102 = vld [vmem:[%s0 + $0x50] sm:$0xff]
    %v3103 = vld [vmem:[%s0 + $0x58] sm:$0xff]
    %v3104 = vld [vmem:[%s0 + $0x60] sm:$0xff]
    %v3105 = vld [vmem:[%s0 + $0x68] sm:$0xff]
    %v3106 = vld [vmem:[%s0 + $0x70] sm:$0xff]
    %v3107 = vld [vmem:[%s0 + $0x78] sm:$0xff]
    %v3108 = vld [vmem:[%s0 + $0x80] sm:$0xff]
    %v3109 = vld [vmem:[%s0 + $0x88] sm:$0xff]
    %v3110 = vld [vmem:[%s0 + $0x90] sm:$0xff]
    %v3111 = vld [vmem:[%s0 + $0x98] sm:$0xff]
    %v3112 = vld [vmem:[%s0 + $0xa0] sm:$0xff]
    %v3113 = vld [vmem:[%s0 + $0xa8] sm:$0xff]
    %v3114 = vld [vmem:[%s0 + $0xb0] sm:$0xff]
    %v3115 = vld [vmem:[%s0 + $0xb8] sm:$0xff]
    %v3116 = vld [vmem:[%s0 + $0xc0] sm:$0xff]
    %3118 = vset.pattern.permute.xlu0 0
    %3119 = vperm.xlu0 %3118, %v207
    %v3120 = vpop.permute.xlu0 %3119
    %3123 = vset.pattern.permute.xlu0 0
    %3124 = vperm.xlu0 %3123, %v208
    %v3125 = vpop.permute.xlu0 %3124
    %3128 = vset.pattern.permute.xlu0 0
    %3129 = vperm.xlu0 %3128, %v209
    %v3130 = vpop.permute.xlu0 %3129
    %3133 = vset.pattern.permute.xlu0 0
    %3134 = vperm.xlu0 %3133, %v210
    %v3135 = vpop.permute.xlu0 %3134
    %3138 = vset.pattern.permute.xlu0 0
    %3139 = vperm.xlu0 %3138, %v211
    %v3140 = vpop.permute.xlu0 %3139
    %3143 = vset.pattern.permute.xlu0 0
    %3144 = vperm.xlu0 %3143, %v212
    %v3145 = vpop.permute.xlu0 %3144
    %3148 = vset.pattern.permute.xlu0 0
    %3149 = vperm.xlu0 %3148, %v213
    %v3150 = vpop.permute.xlu0 %3149
    %3153 = vset.pattern.permute.xlu0 0
    %3154 = vperm.xlu0 %3153, %v214
    %v3155 = vpop.permute.xlu0 %3154
    %3158 = vset.pattern.permute.xlu0 0
    %3159 = vperm.xlu0 %3158, %v215
    %v3160 = vpop.permute.xlu0 %3159
    %3163 = vset.pattern.permute.xlu0 0
    %3164 = vperm.xlu0 %3163, %v216
    %v3165 = vpop.permute.xlu0 %3164
    %3168 = vset.pattern.permute.xlu0 0
    %3169 = vperm.xlu0 %3168, %v217
    %v3170 = vpop.permute.xlu0 %3169
    %3173 = vset.pattern.permute.xlu0 0
    %3174 = vperm.xlu0 %3173, %v218
    %v3175 = vpop.permute.xlu0 %3174
    %3178 = vset.pattern.permute.xlu0 0
    %3179 = vperm.xlu0 %3178, %v219
    %v3180 = vpop.permute.xlu0 %3179
    %3183 = vset.pattern.permute.xlu0 0
    %3184 = vperm.xlu0 %3183, %v220
    %v3185 = vpop.permute.xlu0 %3184
    %3188 = vset.pattern.permute.xlu0 0
    %3189 = vperm.xlu0 %3188, %v221
    %v3190 = vpop.permute.xlu0 %3189
    %3193 = vset.pattern.permute.xlu0 0
    %3194 = vperm.xlu0 %3193, %v222
    %v3195 = vpop.permute.xlu0 %3194
    %3198 = vset.pattern.permute.xlu0 0
    %3199 = vperm.xlu0 %3198, %v223
    %v3200 = vpop.permute.xlu0 %3199
    %3203 = vset.pattern.permute.xlu0 0
    %3204 = vperm.xlu0 %3203, %v224
    %v3205 = vpop.permute.xlu0 %3204
    %3208 = vset.pattern.permute.xlu0 0
    %3209 = vperm.xlu0 %3208, %v225
    %v3210 = vpop.permute.xlu0 %3209
    %3213 = vset.pattern.permute.xlu0 0
    %3214 = vperm.xlu0 %3213, %v226
    %v3215 = vpop.permute.xlu0 %3214
    %3218 = vset.pattern.permute.xlu0 0
    %3219 = vperm.xlu0 %3218, %v227
    %v3220 = vpop.permute.xlu0 %3219
    %3223 = vset.pattern.permute.xlu0 0
    %3224 = vperm.xlu0 %3223, %v228
    %v3225 = vpop.permute.xlu0 %3224
    %3228 = vset.pattern.permute.xlu0 0
    %3229 = vperm.xlu0 %3228, %v229
    %v3230 = vpop.permute.xlu0 %3229
    %3233 = vset.pattern.permute.xlu0 0
    %3234 = vperm.xlu0 %3233, %v230
    %v3235 = vpop.permute.xlu0 %3234
    %3238 = vset.pattern.permute.xlu0 0
    %3239 = vperm.xlu0 %3238, %v231
    %v3240 = vpop.permute.xlu0 %3239
    %v3242 = vmul.f32 %v3092, %v3120
    %v3243 = vmul.f32 %v3093, %v3125
    %v3244 = vmul.f32 %v3094, %v3130
    %v3245 = vmul.f32 %v3095, %v3135
    %v3246 = vmul.f32 %v3096, %v3140
    %v3247 = vmul.f32 %v3097, %v3145
    %v3248 = vmul.f32 %v3098, %v3150
    %v3249 = vmul.f32 %v3099, %v3155
    %v3250 = vmul.f32 %v3100, %v3160
    %v3251 = vmul.f32 %v3101, %v3165
    %v3252 = vmul.f32 %v3102, %v3170
    %v3253 = vmul.f32 %v3103, %v3175
    %v3254 = vmul.f32 %v3104, %v3180
    %v3255 = vmul.f32 %v3105, %v3185
    %v3256 = vmul.f32 %v3106, %v3190
    %v3257 = vmul.f32 %v3107, %v3195
    %v3258 = vmul.f32 %v3108, %v3200
    %v3259 = vmul.f32 %v3109, %v3205
    %v3260 = vmul.f32 %v3110, %v3210
    %v3261 = vmul.f32 %v3111, %v3215
    %v3262 = vmul.f32 %v3112, %v3220
    %v3263 = vmul.f32 %v3113, %v3225
    %v3264 = vmul.f32 %v3114, %v3230
    %v3265 = vmul.f32 %v3115, %v3235
    %v3266 = vmul.f32 %v3116, %v3240
    %v3267 = vadd.f32 %v3242, %v595
    %v3268 = vadd.f32 %v3243, %v699
    %v3269 = vadd.f32 %v3244, %v803
    %v3270 = vadd.f32 %v3245, %v907
    %v3271 = vadd.f32 %v3246, %v1011
    %v3272 = vadd.f32 %v3247, %v1115
    %v3273 = vadd.f32 %v3248, %v1219
    %v3274 = vadd.f32 %v3249, %v1323
    %v3275 = vadd.f32 %v3250, %v1427
    %v3276 = vadd.f32 %v3251, %v1531
    %v3277 = vadd.f32 %v3252, %v1635
    %v3278 = vadd.f32 %v3253, %v1739
    %v3279 = vadd.f32 %v3254, %v1843
    %v3280 = vadd.f32 %v3255, %v1947
    %v3281 = vadd.f32 %v3256, %v2051
    %v3282 = vadd.f32 %v3257, %v2155
    %v3283 = vadd.f32 %v3258, %v2259
    %v3284 = vadd.f32 %v3259, %v2363
    %v3285 = vadd.f32 %v3260, %v2467
    %v3286 = vadd.f32 %v3261, %v2571
    %v3287 = vadd.f32 %v3262, %v2675
    %v3288 = vadd.f32 %v3263, %v2779
    %v3289 = vadd.f32 %v3264, %v2883
    %v3290 = vadd.f32 %v3265, %v2987
    %v3291 = vadd.f32 %v3266, %v3091
    %v3292 = vld [vmem:[#allocation2] sm:$0xff]
    %v3293 = vld [vmem:[#allocation2 + $0x8] sm:$0xff]
    %v3294 = vld [vmem:[#allocation2 + $0x10] sm:$0xff]
    %v3295 = vld [vmem:[#allocation2 + $0x18] sm:$0xff]
    %v3296 = vld [vmem:[#allocation2 + $0x20] sm:$0xff]
    %v3297 = vld [vmem:[#allocation2 + $0x28] sm:$0xff]
    %v3298 = vld [vmem:[#allocation2 + $0x30] sm:$0xff]
    %v3299 = vld [vmem:[#allocation2 + $0x38] sm:$0xff]
    %v3300 = vld [vmem:[#allocation2 + $0x40] sm:$0xff]
    %v3301 = vld [vmem:[#allocation2 + $0x48] sm:$0xff]
    %v3302 = vld [vmem:[#allocation2 + $0x50] sm:$0xff]
    %v3303 = vld [vmem:[#allocation2 + $0x58] sm:$0xff]
    %v3304 = vld [vmem:[#allocation2 + $0x60] sm:$0xff]
    %v3305 = vld [vmem:[#allocation2 + $0x68] sm:$0xff]
    %v3306 = vld [vmem:[#allocation2 + $0x70] sm:$0xff]
    %v3307 = vld [vmem:[#allocation2 + $0x78] sm:$0xff]
    %v3308 = vld [vmem:[%s2] sm:$0x1]
    %v3309 = vlaneseq
    %v3310 = vshrl.u32 %v3309, 7
    %v3311 = vsub.s32 0, %v3310
    %v3312 = vrot.slane %v3308, %v3311
    %3313 = vmatprep.subr.mxu0 0.0
    %3314 = vmatpush1.msra.mxu0 %v3292
    %3315 = vmatprep.subr.mxu0 0.0
    %3316 = vmatpush1.msra.mxu0 %v3293
    %3317 = vmatprep.subr.mxu0 0.0
    %3318 = vmatpush1.msra.mxu0 %v3294
    %3319 = vmatprep.subr.mxu0 0.0
    %3320 = vmatpush1.msra.mxu0 %v3295
    %3321 = vmatprep.subr.mxu0 0.0
    %3322 = vmatpush1.msra.mxu0 %v3296
    %3323 = vmatprep.subr.mxu0 0.0
    %3324 = vmatpush1.msra.mxu0 %v3297
    %3325 = vmatprep.subr.mxu0 0.0
    %3326 = vmatpush1.msra.mxu0 %v3298
    %3327 = vmatprep.subr.mxu0 0.0
    %3328 = vmatpush1.msra.mxu0 %v3299
    %3329 = vmatprep.subr.mxu0 0.0
    %3330 = vmatpush1.msra.mxu0 %v3300
    %3331 = vmatprep.subr.mxu0 0.0
    %3332 = vmatpush1.msra.mxu0 %v3301
    %3333 = vmatprep.subr.mxu0 0.0
    %3334 = vmatpush1.msra.mxu0 %v3302
    %3335 = vmatprep.subr.mxu0 0.0
    %3336 = vmatpush1.msra.mxu0 %v3303
    %3337 = vmatprep.subr.mxu0 0.0
    %3338 = vmatpush1.msra.mxu0 %v3304
    %3339 = vmatprep.subr.mxu0 0.0
    %3340 = vmatpush1.msra.mxu0 %v3305
    %3341 = vmatprep.subr.mxu0 0.0
    %3342 = vmatpush1.msra.mxu0 %v3306
    %3343 = vmatprep.subr.mxu0 0.0
    %3344 = vmatpush1.msra.mxu0 %v3307
    %3345 = vmatprep.subr.mxu0 0.0
    %3346 = vmatpush1.msra.mxu0 0.0
    %3347 = vmatprep.subr.mxu0 0.0
    %3348 = vmatpush1.msra.mxu0 0.0
    %3349 = vmatprep.subr.mxu0 0.0
    %3350 = vmatpush1.msra.mxu0 0.0
    %3351 = vmatprep.subr.mxu0 0.0
    %3352 = vmatpush1.msra.mxu0 0.0
    %3353 = vmatprep.subr.mxu0 0.0
    %3354 = vmatpush1.msra.mxu0 0.0
    %3355 = vmatprep.subr.mxu0 0.0
    %3356 = vmatpush1.msra.mxu0 0.0
    %3357 = vmatprep.subr.mxu0 0.0
    %3358 = vmatpush1.msra.mxu0 0.0
    %3359 = vmatprep.subr.mxu0 0.0
    %3360 = vmatpush1.msra.mxu0 0.0
    %3361 = vmatprep.subr.mxu0 0.0
    %3362 = vmatpush1.msra.mxu0 0.0
    %3363 = vmatprep.subr.mxu0 0.0
    %3364 = vmatpush1.msra.mxu0 0.0
    %3365 = vmatprep.subr.mxu0 0.0
    %3366 = vmatpush1.msra.mxu0 0.0
    %3367 = vmatprep.subr.mxu0 0.0
    %3368 = vmatpush1.msra.mxu0 0.0
    %3369 = vmatprep.subr.mxu0 0.0
    %3370 = vmatpush1.msra.mxu0 0.0
    %3371 = vmatprep.subr.mxu0 0.0
    %3372 = vmatpush1.msra.mxu0 0.0
    %3373 = vmatprep.subr.mxu0 0.0
    %3374 = vmatpush1.msra.mxu0 0.0
    %3375 = vmatprep.subr.mxu0 0.0
    %3376 = vmatpush1.msra.mxu0 0.0
    %3377 = vmatprep.mubr.f32.mxu0 0.0
    %3378 = vmatmul.mubr.f32.gmra.mrb[0].mxu0 %v3267
    %v3379 = vpop.f32.mrb[0].mxu0
    %v3380 = vadd.f32 %v3312, %v3379
    %v3381 = vpop.f32.mrb[0].mxu0
    %3382 = vmatprep.mubr.f32.mxu0 0.0
    %3383 = vmatmul.mubr.f32.gmra.mrb[0].mxu0 %v3268
    %v3384 = vpop.f32.mrb[0].mxu0
    %v3385 = vadd.f32 %v3312, %v3384
    %v3386 = vpop.f32.mrb[0].mxu0
    %3387 = vmatprep.mubr.f32.mxu0 0.0
    %3388 = vmatmul.mubr.f32.gmra.mrb[0].mxu0 %v3269
    %v3389 = vpop.f32.mrb[0].mxu0
    %v3390 = vadd.f32 %v3312, %v3389
    %v3391 = vpop.f32.mrb[0].mxu0
    %3392 = vmatprep.mubr.f32.mxu0 0.0
    %3393 = vmatmul.mubr.f32.gmra.mrb[0].mxu0 %v3270
    %v3394 = vpop.f32.mrb[0].mxu0
    %v3395 = vadd.f32 %v3312, %v3394
    %v3396 = vpop.f32.mrb[0].mxu0
    %3397 = vmatprep.mubr.f32.mxu0 0.0
    %3398 = vmatmul.mubr.f32.gmra.mrb[0].mxu0 %v3271
    %v3399 = vpop.f32.mrb[0].mxu0
    %v3400 = vadd.f32 %v3312, %v3399
    %v3401 = vpop.f32.mrb[0].mxu0
    %3402 = vmatprep.mubr.f32.mxu0 0.0
    %3403 = vmatmul.mubr.f32.gmra.mrb[0].mxu0 %v3272
    %v3404 = vpop.f32.mrb[0].mxu0
    %v3405 = vadd.f32 %v3312, %v3404
    %v3406 = vpop.f32.mrb[0].mxu0
    %3407 = vmatprep.mubr.f32.mxu0 0.0
    %3408 = vmatmul.mubr.f32.gmra.mrb[0].mxu0 %v3273
    %v3409 = vpop.f32.mrb[0].mxu0
    %v3410 = vadd.f32 %v3312, %v3409
    %v3411 = vpop.f32.mrb[0].mxu0
    %3412 = vmatprep.mubr.f32.mxu0 0.0
    %3413 = vmatmul.mubr.f32.gmra.mrb[0].mxu0 %v3274
    %v3414 = vpop.f32.mrb[0].mxu0
    %v3415 = vadd.f32 %v3312, %v3414
    %v3416 = vpop.f32.mrb[0].mxu0
    %3417 = vmatprep.mubr.f32.mxu0 0.0
    %3418 = vmatmul.mubr.f32.gmra.mrb[0].mxu0 %v3275
    %v3419 = vpop.f32.mrb[0].mxu0
    %v3420 = vadd.f32 %v3312, %v3419
    %v3421 = vpop.f32.mrb[0].mxu0
    %3422 = vmatprep.mubr.f32.mxu0 0.0
    %3423 = vmatmul.mubr.f32.gmra.mrb[0].mxu0 %v3276
    %v3424 = vpop.f32.mrb[0].mxu0
    %v3425 = vadd.f32 %v3312, %v3424
    %v3426 = vpop.f32.mrb[0].mxu0
    %3427 = vmatprep.mubr.f32.mxu0 0.0
    %3428 = vmatmul.mubr.f32.gmra.mrb[0].mxu0 %v3277
    %v3429 = vpop.f32.mrb[0].mxu0
    %v3430 = vadd.f32 %v3312, %v3429
    %v3431 = vpop.f32.mrb[0].mxu0
    %3432 = vmatprep.mubr.f32.mxu0 0.0
    %3433 = vmatmul.mubr.f32.gmra.mrb[0].mxu0 %v3278
    %v3434 = vpop.f32.mrb[0].mxu0
    %v3435 = vadd.f32 %v3312, %v3434
    %v3436 = vpop.f32.mrb[0].mxu0
    %3437 = vmatprep.mubr.f32.mxu0 0.0
    %3438 = vmatmul.mubr.f32.gmra.mrb[0].mxu0 %v3279
    %v3439 = vpop.f32.mrb[0].mxu0
    %v3440 = vadd.f32 %v3312, %v3439
    %v3441 = vpop.f32.mrb[0].mxu0
    %3442 = vmatprep.mubr.f32.mxu0 0.0
    %3443 = vmatmul.mubr.f32.gmra.mrb[0].mxu0 %v3280
    %v3444 = vpop.f32.mrb[0].mxu0
    %v3445 = vadd.f32 %v3312, %v3444
    %v3446 = vpop.f32.mrb[0].mxu0
    %3447 = vmatprep.mubr.f32.mxu0 0.0
    %3448 = vmatmul.mubr.f32.gmra.mrb[0].mxu0 %v3281
    %v3449 = vpop.f32.mrb[0].mxu0
    %v3450 = vadd.f32 %v3312, %v3449
    %v3451 = vpop.f32.mrb[0].mxu0
    %3452 = vmatprep.mubr.f32.mxu0 0.0
    %3453 = vmatmul.mubr.f32.gmra.mrb[0].mxu0 %v3282
    %v3454 = vpop.f32.mrb[0].mxu0
    %v3455 = vadd.f32 %v3312, %v3454
    %v3456 = vpop.f32.mrb[0].mxu0
    %3457 = vmatprep.mubr.f32.mxu0 0.0
    %3458 = vmatmul.mubr.f32.gmra.mrb[0].mxu0 %v3283
    %v3459 = vpop.f32.mrb[0].mxu0
    %v3460 = vadd.f32 %v3312, %v3459
    %v3461 = vpop.f32.mrb[0].mxu0
    %3462 = vmatprep.mubr.f32.mxu0 0.0
    %3463 = vmatmul.mubr.f32.gmra.mrb[0].mxu0 %v3284
    %v3464 = vpop.f32.mrb[0].mxu0
    %v3465 = vadd.f32 %v3312, %v3464
    %v3466 = vpop.f32.mrb[0].mxu0
    %3467 = vmatprep.mubr.f32.mxu0 0.0
    %3468 = vmatmul.mubr.f32.gmra.mrb[0].mxu0 %v3285
    %v3469 = vpop.f32.mrb[0].mxu0
    %v3470 = vadd.f32 %v3312, %v3469
    %v3471 = vpop.f32.mrb[0].mxu0
    %3472 = vmatprep.mubr.f32.mxu0 0.0
    %3473 = vmatmul.mubr.f32.gmra.mrb[0].mxu0 %v3286
    %v3474 = vpop.f32.mrb[0].mxu0
    %v3475 = vadd.f32 %v3312, %v3474
    %v3476 = vpop.f32.mrb[0].mxu0
    %3477 = vmatprep.mubr.f32.mxu0 0.0
    %3478 = vmatmul.mubr.f32.gmra.mrb[0].mxu0 %v3287
    %v3479 = vpop.f32.mrb[0].mxu0
    %v3480 = vadd.f32 %v3312, %v3479
    %v3481 = vpop.f32.mrb[0].mxu0
    %3482 = vmatprep.mubr.f32.mxu0 0.0
    %3483 = vmatmul.mubr.f32.gmra.mrb[0].mxu0 %v3288
    %v3484 = vpop.f32.mrb[0].mxu0
    %v3485 = vadd.f32 %v3312, %v3484
    %v3486 = vpop.f32.mrb[0].mxu0
    %3487 = vmatprep.mubr.f32.mxu0 0.0
    %3488 = vmatmul.mubr.f32.gmra.mrb[0].mxu0 %v3289
    %v3489 = vpop.f32.mrb[0].mxu0
    %v3490 = vadd.f32 %v3312, %v3489
    %v3491 = vpop.f32.mrb[0].mxu0
    %3492 = vmatprep.mubr.f32.mxu0 0.0
    %3493 = vmatmul.mubr.f32.gmra.mrb[0].mxu0 %v3290
    %v3494 = vpop.f32.mrb[0].mxu0
    %v3495 = vadd.f32 %v3312, %v3494
    %v3496 = vpop.f32.mrb[0].mxu0
    %3497 = vmatprep.mubr.f32.mxu0 0.0
    %3498 = vmatmul.mubr.f32.gmra.mrb[0].mxu0 %v3291
    %v3499 = vpop.f32.mrb[0].mxu0
    %v3500 = vadd.f32 %v3312, %v3499
    %v3501 = vpop.f32.mrb[0].mxu0
    %3502 = vdwg.mxu0
    %v3503 = vtanh.pop %v3380
    %v3504 = vtanh.pop %v3385
    %v3505 = vtanh.pop %v3390
    %v3506 = vtanh.pop %v3395
    %v3507 = vtanh.pop %v3400
    %v3508 = vtanh.pop %v3405
    %v3509 = vtanh.pop %v3410
    %v3510 = vtanh.pop %v3415
    %v3511 = vtanh.pop %v3420
    %v3512 = vtanh.pop %v3425
    %v3513 = vtanh.pop %v3430
    %v3514 = vtanh.pop %v3435
    %v3515 = vtanh.pop %v3440
    %v3516 = vtanh.pop %v3445
    %v3517 = vtanh.pop %v3450
    %v3518 = vtanh.pop %v3455
    %v3519 = vtanh.pop %v3460
    %v3520 = vtanh.pop %v3465
    %v3521 = vtanh.pop %v3470
    %v3522 = vtanh.pop %v3475
    %v3523 = vtanh.pop %v3480
    %v3524 = vtanh.pop %v3485
    %v3525 = vtanh.pop %v3490
    %v3526 = vtanh.pop %v3495
    %v3527 = vtanh.pop %v3500
    %s3528 = scalar_lea.vmem [#allocation2], 128
    %v3529 = vld [vmem:[%s3528] sm:$0xff]
    %v3530 = vld [vmem:[%s3528 + $0x8] sm:$0xff]
    %v3531 = vld [vmem:[%s3528 + $0x10] sm:$0xff]
    %v3532 = vld [vmem:[%s3528 + $0x18] sm:$0xff]
    %v3533 = vld [vmem:[%s3528 + $0x20] sm:$0xff]
    %v3534 = vld [vmem:[%s3528 + $0x28] sm:$0xff]
    %v3535 = vld [vmem:[%s3528 + $0x30] sm:$0xff]
    %v3536 = vld [vmem:[%s3528 + $0x38] sm:$0xff]
    %v3537 = vld [vmem:[%s3528 + $0x40] sm:$0xff]
    %v3538 = vld [vmem:[%s3528 + $0x48] sm:$0xff]
    %v3539 = vld [vmem:[%s3528 + $0x50] sm:$0xff]
    %v3540 = vld [vmem:[%s3528 + $0x58] sm:$0xff]
    %v3541 = vld [vmem:[%s3528 + $0x60] sm:$0xff]
    %v3542 = vld [vmem:[%s3528 + $0x68] sm:$0xff]
    %v3543 = vld [vmem:[%s3528 + $0x70] sm:$0xff]
    %v3544 = vld [vmem:[%s3528 + $0x78] sm:$0xff]
    %v3545 = vld [vmem:[%s2 + $0x1] sm:$0x1]
    %v3546 = vlaneseq
    %v3547 = vshrl.u32 %v3546, 7
    %v3548 = vsub.s32 0, %v3547
    %v3549 = vrot.slane %v3545, %v3548
    %3550 = vmatprep.subr.mxu0 0.0
    %3551 = vmatpush1.msra.mxu0 %v3529
    %3552 = vmatprep.subr.mxu0 0.0
    %3553 = vmatpush1.msra.mxu0 %v3530
    %3554 = vmatprep.subr.mxu0 0.0
    %3555 = vmatpush1.msra.mxu0 %v3531
    %3556 = vmatprep.subr.mxu0 0.0
    %3557 = vmatpush1.msra.mxu0 %v3532
    %3558 = vmatprep.subr.mxu0 0.0
    %3559 = vmatpush1.msra.mxu0 %v3533
    %3560 = vmatprep.subr.mxu0 0.0
    %3561 = vmatpush1.msra.mxu0 %v3534
    %3562 = vmatprep.subr.mxu0 0.0
    %3563 = vmatpush1.msra.mxu0 %v3535
    %3564 = vmatprep.subr.mxu0 0.0
    %3565 = vmatpush1.msra.mxu0 %v3536
    %3566 = vmatprep.subr.mxu0 0.0
    %3567 = vmatpush1.msra.mxu0 %v3537
    %3568 = vmatprep.subr.mxu0 0.0
    %3569 = vmatpush1.msra.mxu0 %v3538
    %3570 = vmatprep.subr.mxu0 0.0
    %3571 = vmatpush1.msra.mxu0 %v3539
    %3572 = vmatprep.subr.mxu0 0.0
    %3573 = vmatpush1.msra.mxu0 %v3540
    %3574 = vmatprep.subr.mxu0 0.0
    %3575 = vmatpush1.msra.mxu0 %v3541
    %3576 = vmatprep.subr.mxu0 0.0
    %3577 = vmatpush1.msra.mxu0 %v3542
    %3578 = vmatprep.subr.mxu0 0.0
    %3579 = vmatpush1.msra.mxu0 %v3543
    %3580 = vmatprep.subr.mxu0 0.0
    %3581 = vmatpush1.msra.mxu0 %v3544
    %3582 = vmatprep.subr.mxu0 0.0
    %3583 = vmatpush1.msra.mxu0 0.0
    %3584 = vmatprep.subr.mxu0 0.0
    %3585 = vmatpush1.msra.mxu0 0.0
    %3586 = vmatprep.subr.mxu0 0.0
    %3587 = vmatpush1.msra.mxu0 0.0
    %3588 = vmatprep.subr.mxu0 0.0
    %3589 = vmatpush1.msra.mxu0 0.0
    %3590 = vmatprep.subr.mxu0 0.0
    %3591 = vmatpush1.msra.mxu0 0.0
    %3592 = vmatprep.subr.mxu0 0.0
    %3593 = vmatpush1.msra.mxu0 0.0
    %3594 = vmatprep.subr.mxu0 0.0
    %3595 = vmatpush1.msra.mxu0 0.0
    %3596 = vmatprep.subr.mxu0 0.0
    %3597 = vmatpush1.msra.mxu0 0.0
    %3598 = vmatprep.subr.mxu0 0.0
    %3599 = vmatpush1.msra.mxu0 0.0
    %3600 = vmatprep.subr.mxu0 0.0
    %3601 = vmatpush1.msra.mxu0 0.0
    %3602 = vmatprep.subr.mxu0 0.0
    %3603 = vmatpush1.msra.mxu0 0.0
    %3604 = vmatprep.subr.mxu0 0.0
    %3605 = vmatpush1.msra.mxu0 0.0
    %3606 = vmatprep.subr.mxu0 0.0
    %3607 = vmatpush1.msra.mxu0 0.0
    %3608 = vmatprep.subr.mxu0 0.0
    %3609 = vmatpush1.msra.mxu0 0.0
    %3610 = vmatprep.subr.mxu0 0.0
    %3611 = vmatpush1.msra.mxu0 0.0
    %3612 = vmatprep.subr.mxu0 0.0
    %3613 = vmatpush1.msra.mxu0 0.0
    %3614 = vmatprep.mubr.f32.mxu0 0.0
    %3615 = vmatmul.mubr.f32.gmra.mrb[0].mxu0 %v3503
    %v3616 = vpop.f32.mrb[0].mxu0
    %v3617 = vadd.f32 %v3549, %v3616
    %v3618 = vpop.f32.mrb[0].mxu0
    %3619 = vmatprep.mubr.f32.mxu0 0.0
    %3620 = vmatmul.mubr.f32.gmra.mrb[0].mxu0 %v3504
    %v3621 = vpop.f32.mrb[0].mxu0
    %v3622 = vadd.f32 %v3549, %v3621
    %v3623 = vpop.f32.mrb[0].mxu0
    %3624 = vmatprep.mubr.f32.mxu0 0.0
    %3625 = vmatmul.mubr.f32.gmra.mrb[0].mxu0 %v3505
    %v3626 = vpop.f32.mrb[0].mxu0
    %v3627 = vadd.f32 %v3549, %v3626
    %v3628 = vpop.f32.mrb[0].mxu0
    %3629 = vmatprep.mubr.f32.mxu0 0.0
    %3630 = vmatmul.mubr.f32.gmra.mrb[0].mxu0 %v3506
    %v3631 = vpop.f32.mrb[0].mxu0
    %v3632 = vadd.f32 %v3549, %v3631
    %v3633 = vpop.f32.mrb[0].mxu0
    %3634 = vmatprep.mubr.f32.mxu0 0.0
    %3635 = vmatmul.mubr.f32.gmra.mrb[0].mxu0 %v3507
    %v3636 = vpop.f32.mrb[0].mxu0
    %v3637 = vadd.f32 %v3549, %v3636
    %v3638 = vpop.f32.mrb[0].mxu0
    %3639 = vmatprep.mubr.f32.mxu0 0.0
    %3640 = vmatmul.mubr.f32.gmra.mrb[0].mxu0 %v3508
    %v3641 = vpop.f32.mrb[0].mxu0
    %v3642 = vadd.f32 %v3549, %v3641
    %v3643 = vpop.f32.mrb[0].mxu0
    %3644 = vmatprep.mubr.f32.mxu0 0.0
    %3645 = vmatmul.mubr.f32.gmra.mrb[0].mxu0 %v3509
    %v3646 = vpop.f32.mrb[0].mxu0
    %v3647 = vadd.f32 %v3549, %v3646
    %v3648 = vpop.f32.mrb[0].mxu0
    %3649 = vmatprep.mubr.f32.mxu0 0.0
    %3650 = vmatmul.mubr.f32.gmra.mrb[0].mxu0 %v3510
    %v3651 = vpop.f32.mrb[0].mxu0
    %v3652 = vadd.f32 %v3549, %v3651
    %v3653 = vpop.f32.mrb[0].mxu0
    %3654 = vmatprep.mubr.f32.mxu0 0.0
    %3655 = vmatmul.mubr.f32.gmra.mrb[0].mxu0 %v3511
    %v3656 = vpop.f32.mrb[0].mxu0
    %v3657 = vadd.f32 %v3549, %v3656
    %v3658 = vpop.f32.mrb[0].mxu0
    %3659 = vmatprep.mubr.f32.mxu0 0.0
    %3660 = vmatmul.mubr.f32.gmra.mrb[0].mxu0 %v3512
    %v3661 = vpop.f32.mrb[0].mxu0
    %v3662 = vadd.f32 %v3549, %v3661
    %v3663 = vpop.f32.mrb[0].mxu0
    %3664 = vmatprep.mubr.f32.mxu0 0.0
    %3665 = vmatmul.mubr.f32.gmra.mrb[0].mxu0 %v3513
    %v3666 = vpop.f32.mrb[0].mxu0
    %v3667 = vadd.f32 %v3549, %v3666
    %v3668 = vpop.f32.mrb[0].mxu0
    %3669 = vmatprep.mubr.f32.mxu0 0.0
    %3670 = vmatmul.mubr.f32.gmra.mrb[0].mxu0 %v3514
    %v3671 = vpop.f32.mrb[0].mxu0
    %v3672 = vadd.f32 %v3549, %v3671
    %v3673 = vpop.f32.mrb[0].mxu0
    %3674 = vmatprep.mubr.f32.mxu0 0.0
    %3675 = vmatmul.mubr.f32.gmra.mrb[0].mxu0 %v3515
    %v3676 = vpop.f32.mrb[0].mxu0
    %v3677 = vadd.f32 %v3549, %v3676
    %v3678 = vpop.f32.mrb[0].mxu0
    %3679 = vmatprep.mubr.f32.mxu0 0.0
    %3680 = vmatmul.mubr.f32.gmra.mrb[0].mxu0 %v3516
    %v3681 = vpop.f32.mrb[0].mxu0
    %v3682 = vadd.f32 %v3549, %v3681
    %v3683 = vpop.f32.mrb[0].mxu0
    %3684 = vmatprep.mubr.f32.mxu0 0.0
    %3685 = vmatmul.mubr.f32.gmra.mrb[0].mxu0 %v3517
    %v3686 = vpop.f32.mrb[0].mxu0
    %v3687 = vadd.f32 %v3549, %v3686
    %v3688 = vpop.f32.mrb[0].mxu0
    %3689 = vmatprep.mubr.f32.mxu0 0.0
    %3690 = vmatmul.mubr.f32.gmra.mrb[0].mxu0 %v3518
    %v3691 = vpop.f32.mrb[0].mxu0
    %v3692 = vadd.f32 %v3549, %v3691
    %v3693 = vpop.f32.mrb[0].mxu0
    %3694 = vmatprep.mubr.f32.mxu0 0.0
    %3695 = vmatmul.mubr.f32.gmra.mrb[0].mxu0 %v3519
    %v3696 = vpop.f32.mrb[0].mxu0
    %v3697 = vadd.f32 %v3549, %v3696
    %v3698 = vpop.f32.mrb[0].mxu0
    %3699 = vmatprep.mubr.f32.mxu0 0.0
    %3700 = vmatmul.mubr.f32.gmra.mrb[0].mxu0 %v3520
    %v3701 = vpop.f32.mrb[0].mxu0
    %v3702 = vadd.f32 %v3549, %v3701
    %v3703 = vpop.f32.mrb[0].mxu0
    %3704 = vmatprep.mubr.f32.mxu0 0.0
    %3705 = vmatmul.mubr.f32.gmra.mrb[0].mxu0 %v3521
    %v3706 = vpop.f32.mrb[0].mxu0
    %v3707 = vadd.f32 %v3549, %v3706
    %v3708 = vpop.f32.mrb[0].mxu0
    %3709 = vmatprep.mubr.f32.mxu0 0.0
    %3710 = vmatmul.mubr.f32.gmra.mrb[0].mxu0 %v3522
    %v3711 = vpop.f32.mrb[0].mxu0
    %v3712 = vadd.f32 %v3549, %v3711
    %v3713 = vpop.f32.mrb[0].mxu0
    %3714 = vmatprep.mubr.f32.mxu0 0.0
    %3715 = vmatmul.mubr.f32.gmra.mrb[0].mxu0 %v3523
    %v3716 = vpop.f32.mrb[0].mxu0
    %v3717 = vadd.f32 %v3549, %v3716
    %v3718 = vpop.f32.mrb[0].mxu0
    %3719 = vmatprep.mubr.f32.mxu0 0.0
    %3720 = vmatmul.mubr.f32.gmra.mrb[0].mxu0 %v3524
    %v3721 = vpop.f32.mrb[0].mxu0
    %v3722 = vadd.f32 %v3549, %v3721
    %v3723 = vpop.f32.mrb[0].mxu0
    %3724 = vmatprep.mubr.f32.mxu0 0.0
    %3725 = vmatmul.mubr.f32.gmra.mrb[0].mxu0 %v3525
    %v3726 = vpop.f32.mrb[0].mxu0
    %v3727 = vadd.f32 %v3549, %v3726
    %v3728 = vpop.f32.mrb[0].mxu0
    %3729 = vmatprep.mubr.f32.mxu0 0.0
    %3730 = vmatmul.mubr.f32.gmra.mrb[0].mxu0 %v3526
    %v3731 = vpop.f32.mrb[0].mxu0
    %v3732 = vadd.f32 %v3549, %v3731
    %v3733 = vpop.f32.mrb[0].mxu0
    %3734 = vmatprep.mubr.f32.mxu0 0.0
    %3735 = vmatmul.mubr.f32.gmra.mrb[0].mxu0 %v3527
    %v3736 = vpop.f32.mrb[0].mxu0
    %v3737 = vadd.f32 %v3549, %v3736
    %v3738 = vpop.f32.mrb[0].mxu0
    %3739 = vdwg.mxu0
    %v3740 = vtanh.pop %v3617
    %v3741 = vtanh.pop %v3622
    %v3742 = vtanh.pop %v3627
    %v3743 = vtanh.pop %v3632
    %v3744 = vtanh.pop %v3637
    %v3745 = vtanh.pop %v3642
    %v3746 = vtanh.pop %v3647
    %v3747 = vtanh.pop %v3652
    %v3748 = vtanh.pop %v3657
    %v3749 = vtanh.pop %v3662
    %v3750 = vtanh.pop %v3667
    %v3751 = vtanh.pop %v3672
    %v3752 = vtanh.pop %v3677
    %v3753 = vtanh.pop %v3682
    %v3754 = vtanh.pop %v3687
    %v3755 = vtanh.pop %v3692
    %v3756 = vtanh.pop %v3697
    %v3757 = vtanh.pop %v3702
    %v3758 = vtanh.pop %v3707
    %v3759 = vtanh.pop %v3712
    %v3760 = vtanh.pop %v3717
    %v3761 = vtanh.pop %v3722
    %v3762 = vtanh.pop %v3727
    %v3763 = vtanh.pop %v3732
    %v3764 = vtanh.pop %v3737
    %s3765 = scalar_lea.vmem [#allocation2], 256
    %v3766 = vld [vmem:[%s3765] sm:$0xff]
    %v3767 = vld [vmem:[%s3765 + $0x8] sm:$0xff]
    %v3768 = vld [vmem:[%s3765 + $0x10] sm:$0xff]
    %v3769 = vld [vmem:[%s3765 + $0x18] sm:$0xff]
    %v3770 = vld [vmem:[%s3765 + $0x20] sm:$0xff]
    %v3771 = vld [vmem:[%s3765 + $0x28] sm:$0xff]
    %v3772 = vld [vmem:[%s3765 + $0x30] sm:$0xff]
    %v3773 = vld [vmem:[%s3765 + $0x38] sm:$0xff]
    %v3774 = vld [vmem:[%s3765 + $0x40] sm:$0xff]
    %v3775 = vld [vmem:[%s3765 + $0x48] sm:$0xff]
    %v3776 = vld [vmem:[%s3765 + $0x50] sm:$0xff]
    %v3777 = vld [vmem:[%s3765 + $0x58] sm:$0xff]
    %v3778 = vld [vmem:[%s3765 + $0x60] sm:$0xff]
    %v3779 = vld [vmem:[%s3765 + $0x68] sm:$0xff]
    %v3780 = vld [vmem:[%s3765 + $0x70] sm:$0xff]
    %v3781 = vld [vmem:[%s3765 + $0x78] sm:$0xff]
    %v3782 = vld [vmem:[%s2 + $0x2] sm:$0x1]
    %v3783 = vlaneseq
    %v3784 = vshrl.u32 %v3783, 7
    %v3785 = vsub.s32 0, %v3784
    %v3786 = vrot.slane %v3782, %v3785
    %3787 = vmatprep.subr.mxu0 0.0
    %3788 = vmatpush1.msra.mxu0 %v3766
    %3789 = vmatprep.subr.mxu0 0.0
    %3790 = vmatpush1.msra.mxu0 %v3767
    %3791 = vmatprep.subr.mxu0 0.0
    %3792 = vmatpush1.msra.mxu0 %v3768
    %3793 = vmatprep.subr.mxu0 0.0
    %3794 = vmatpush1.msra.mxu0 %v3769
    %3795 = vmatprep.subr.mxu0 0.0
    %3796 = vmatpush1.msra.mxu0 %v3770
    %3797 = vmatprep.subr.mxu0 0.0
    %3798 = vmatpush1.msra.mxu0 %v3771
    %3799 = vmatprep.subr.mxu0 0.0
    %3800 = vmatpush1.msra.mxu0 %v3772
    %3801 = vmatprep.subr.mxu0 0.0
    %3802 = vmatpush1.msra.mxu0 %v3773
    %3803 = vmatprep.subr.mxu0 0.0
    %3804 = vmatpush1.msra.mxu0 %v3774
    %3805 = vmatprep.subr.mxu0 0.0
    %3806 = vmatpush1.msra.mxu0 %v3775
    %3807 = vmatprep.subr.mxu0 0.0
    %3808 = vmatpush1.msra.mxu0 %v3776
    %3809 = vmatprep.subr.mxu0 0.0
    %3810 = vmatpush1.msra.mxu0 %v3777
    %3811 = vmatprep.subr.mxu0 0.0
    %3812 = vmatpush1.msra.mxu0 %v3778
    %3813 = vmatprep.subr.mxu0 0.0
    %3814 = vmatpush1.msra.mxu0 %v3779
    %3815 = vmatprep.subr.mxu0 0.0
    %3816 = vmatpush1.msra.mxu0 %v3780
    %3817 = vmatprep.subr.mxu0 0.0
    %3818 = vmatpush1.msra.mxu0 %v3781
    %3819 = vmatprep.subr.mxu0 0.0
    %3820 = vmatpush1.msra.mxu0 0.0
    %3821 = vmatprep.subr.mxu0 0.0
    %3822 = vmatpush1.msra.mxu0 0.0
    %3823 = vmatprep.subr.mxu0 0.0
    %3824 = vmatpush1.msra.mxu0 0.0
    %3825 = vmatprep.subr.mxu0 0.0
    %3826 = vmatpush1.msra.mxu0 0.0
    %3827 = vmatprep.subr.mxu0 0.0
    %3828 = vmatpush1.msra.mxu0 0.0
    %3829 = vmatprep.subr.mxu0 0.0
    %3830 = vmatpush1.msra.mxu0 0.0
    %3831 = vmatprep.subr.mxu0 0.0
    %3832 = vmatpush1.msra.mxu0 0.0
    %3833 = vmatprep.subr.mxu0 0.0
    %3834 = vmatpush1.msra.mxu0 0.0
    %3835 = vmatprep.subr.mxu0 0.0
    %3836 = vmatpush1.msra.mxu0 0.0
    %3837 = vmatprep.subr.mxu0 0.0
    %3838 = vmatpush1.msra.mxu0 0.0
    %3839 = vmatprep.subr.mxu0 0.0
    %3840 = vmatpush1.msra.mxu0 0.0
    %3841 = vmatprep.subr.mxu0 0.0
    %3842 = vmatpush1.msra.mxu0 0.0
    %3843 = vmatprep.subr.mxu0 0.0
    %3844 = vmatpush1.msra.mxu0 0.0
    %3845 = vmatprep.subr.mxu0 0.0
    %3846 = vmatpush1.msra.mxu0 0.0
    %3847 = vmatprep.subr.mxu0 0.0
    %3848 = vmatpush1.msra.mxu0 0.0
    %3849 = vmatprep.subr.mxu0 0.0
    %3850 = vmatpush1.msra.mxu0 0.0
    %3851 = vmatprep.mubr.f32.mxu0 0.0
    %3852 = vmatmul.mubr.f32.gmra.mrb[0].mxu0 %v3740
    %v3853 = vpop.f32.mrb[0].mxu0
    %v3854 = vadd.f32 %v3786, %v3853
    %v3855 = vpop.f32.mrb[0].mxu0
    %3856 = vmatprep.mubr.f32.mxu0 0.0
    %3857 = vmatmul.mubr.f32.gmra.mrb[0].mxu0 %v3741
    %v3858 = vpop.f32.mrb[0].mxu0
    %v3859 = vadd.f32 %v3786, %v3858
    %v3860 = vpop.f32.mrb[0].mxu0
    %3861 = vmatprep.mubr.f32.mxu0 0.0
    %3862 = vmatmul.mubr.f32.gmra.mrb[0].mxu0 %v3742
    %v3863 = vpop.f32.mrb[0].mxu0
    %v3864 = vadd.f32 %v3786, %v3863
    %v3865 = vpop.f32.mrb[0].mxu0
    %3866 = vmatprep.mubr.f32.mxu0 0.0
    %3867 = vmatmul.mubr.f32.gmra.mrb[0].mxu0 %v3743
    %v3868 = vpop.f32.mrb[0].mxu0
    %v3869 = vadd.f32 %v3786, %v3868
    %v3870 = vpop.f32.mrb[0].mxu0
    %3871 = vmatprep.mubr.f32.mxu0 0.0
    %3872 = vmatmul.mubr.f32.gmra.mrb[0].mxu0 %v3744
    %v3873 = vpop.f32.mrb[0].mxu0
    %v3874 = vadd.f32 %v3786, %v3873
    %v3875 = vpop.f32.mrb[0].mxu0
    %3876 = vmatprep.mubr.f32.mxu0 0.0
    %3877 = vmatmul.mubr.f32.gmra.mrb[0].mxu0 %v3745
    %v3878 = vpop.f32.mrb[0].mxu0
    %v3879 = vadd.f32 %v3786, %v3878
    %v3880 = vpop.f32.mrb[0].mxu0
    %3881 = vmatprep.mubr.f32.mxu0 0.0
    %3882 = vmatmul.mubr.f32.gmra.mrb[0].mxu0 %v3746
    %v3883 = vpop.f32.mrb[0].mxu0
    %v3884 = vadd.f32 %v3786, %v3883
    %v3885 = vpop.f32.mrb[0].mxu0
    %3886 = vmatprep.mubr.f32.mxu0 0.0
    %3887 = vmatmul.mubr.f32.gmra.mrb[0].mxu0 %v3747
    %v3888 = vpop.f32.mrb[0].mxu0
    %v3889 = vadd.f32 %v3786, %v3888
    %v3890 = vpop.f32.mrb[0].mxu0
    %3891 = vmatprep.mubr.f32.mxu0 0.0
    %3892 = vmatmul.mubr.f32.gmra.mrb[0].mxu0 %v3748
    %v3893 = vpop.f32.mrb[0].mxu0
    %v3894 = vadd.f32 %v3786, %v3893
    %v3895 = vpop.f32.mrb[0].mxu0
    %3896 = vmatprep.mubr.f32.mxu0 0.0
    %3897 = vmatmul.mubr.f32.gmra.mrb[0].mxu0 %v3749
    %v3898 = vpop.f32.mrb[0].mxu0
    %v3899 = vadd.f32 %v3786, %v3898
    %v3900 = vpop.f32.mrb[0].mxu0
    %3901 = vmatprep.mubr.f32.mxu0 0.0
    %3902 = vmatmul.mubr.f32.gmra.mrb[0].mxu0 %v3750
    %v3903 = vpop.f32.mrb[0].mxu0
    %v3904 = vadd.f32 %v3786, %v3903
    %v3905 = vpop.f32.mrb[0].mxu0
    %3906 = vmatprep.mubr.f32.mxu0 0.0
    %3907 = vmatmul.mubr.f32.gmra.mrb[0].mxu0 %v3751
    %v3908 = vpop.f32.mrb[0].mxu0
    %v3909 = vadd.f32 %v3786, %v3908
    %v3910 = vpop.f32.mrb[0].mxu0
    %3911 = vmatprep.mubr.f32.mxu0 0.0
    %3912 = vmatmul.mubr.f32.gmra.mrb[0].mxu0 %v3752
    %v3913 = vpop.f32.mrb[0].mxu0
    %v3914 = vadd.f32 %v3786, %v3913
    %v3915 = vpop.f32.mrb[0].mxu0
    %3916 = vmatprep.mubr.f32.mxu0 0.0
    %3917 = vmatmul.mubr.f32.gmra.mrb[0].mxu0 %v3753
    %v3918 = vpop.f32.mrb[0].mxu0
    %v3919 = vadd.f32 %v3786, %v3918
    %v3920 = vpop.f32.mrb[0].mxu0
    %3921 = vmatprep.mubr.f32.mxu0 0.0
    %3922 = vmatmul.mubr.f32.gmra.mrb[0].mxu0 %v3754
    %v3923 = vpop.f32.mrb[0].mxu0
    %v3924 = vadd.f32 %v3786, %v3923
    %v3925 = vpop.f32.mrb[0].mxu0
    %3926 = vmatprep.mubr.f32.mxu0 0.0
    %3927 = vmatmul.mubr.f32.gmra.mrb[0].mxu0 %v3755
    %v3928 = vpop.f32.mrb[0].mxu0
    %v3929 = vadd.f32 %v3786, %v3928
    %v3930 = vpop.f32.mrb[0].mxu0
    %3931 = vmatprep.mubr.f32.mxu0 0.0
    %3932 = vmatmul.mubr.f32.gmra.mrb[0].mxu0 %v3756
    %v3933 = vpop.f32.mrb[0].mxu0
    %v3934 = vadd.f32 %v3786, %v3933
    %v3935 = vpop.f32.mrb[0].mxu0
    %3936 = vmatprep.mubr.f32.mxu0 0.0
    %3937 = vmatmul.mubr.f32.gmra.mrb[0].mxu0 %v3757
    %v3938 = vpop.f32.mrb[0].mxu0
    %v3939 = vadd.f32 %v3786, %v3938
    %v3940 = vpop.f32.mrb[0].mxu0
    %3941 = vmatprep.mubr.f32.mxu0 0.0
    %3942 = vmatmul.mubr.f32.gmra.mrb[0].mxu0 %v3758
    %v3943 = vpop.f32.mrb[0].mxu0
    %v3944 = vadd.f32 %v3786, %v3943
    %v3945 = vpop.f32.mrb[0].mxu0
    %3946 = vmatprep.mubr.f32.mxu0 0.0
    %3947 = vmatmul.mubr.f32.gmra.mrb[0].mxu0 %v3759
    %v3948 = vpop.f32.mrb[0].mxu0
    %v3949 = vadd.f32 %v3786, %v3948
    %v3950 = vpop.f32.mrb[0].mxu0
    %3951 = vmatprep.mubr.f32.mxu0 0.0
    %3952 = vmatmul.mubr.f32.gmra.mrb[0].mxu0 %v3760
    %v3953 = vpop.f32.mrb[0].mxu0
    %v3954 = vadd.f32 %v3786, %v3953
    %v3955 = vpop.f32.mrb[0].mxu0
    %3956 = vmatprep.mubr.f32.mxu0 0.0
    %3957 = vmatmul.mubr.f32.gmra.mrb[0].mxu0 %v3761
    %v3958 = vpop.f32.mrb[0].mxu0
    %v3959 = vadd.f32 %v3786, %v3958
    %v3960 = vpop.f32.mrb[0].mxu0
    %3961 = vmatprep.mubr.f32.mxu0 0.0
    %3962 = vmatmul.mubr.f32.gmra.mrb[0].mxu0 %v3762
    %v3963 = vpop.f32.mrb[0].mxu0
    %v3964 = vadd.f32 %v3786, %v3963
    %v3965 = vpop.f32.mrb[0].mxu0
    %3966 = vmatprep.mubr.f32.mxu0 0.0
    %3967 = vmatmul.mubr.f32.gmra.mrb[0].mxu0 %v3763
    %v3968 = vpop.f32.mrb[0].mxu0
    %v3969 = vadd.f32 %v3786, %v3968
    %v3970 = vpop.f32.mrb[0].mxu0
    %3971 = vmatprep.mubr.f32.mxu0 0.0
    %3972 = vmatmul.mubr.f32.gmra.mrb[0].mxu0 %v3764
    %v3973 = vpop.f32.mrb[0].mxu0
    %v3974 = vadd.f32 %v3786, %v3973
    %v3975 = vpop.f32.mrb[0].mxu0
    %3976 = vdwg.mxu0
    %v3977 = vtanh.pop %v3854
    %v3978 = vtanh.pop %v3859
    %v3979 = vtanh.pop %v3864
    %v3980 = vtanh.pop %v3869
    %v3981 = vtanh.pop %v3874
    %v3982 = vtanh.pop %v3879
    %v3983 = vtanh.pop %v3884
    %v3984 = vtanh.pop %v3889
    %v3985 = vtanh.pop %v3894
    %v3986 = vtanh.pop %v3899
    %v3987 = vtanh.pop %v3904
    %v3988 = vtanh.pop %v3909
    %v3989 = vtanh.pop %v3914
    %v3990 = vtanh.pop %v3919
    %v3991 = vtanh.pop %v3924
    %v3992 = vtanh.pop %v3929
    %v3993 = vtanh.pop %v3934
    %v3994 = vtanh.pop %v3939
    %v3995 = vtanh.pop %v3944
    %v3996 = vtanh.pop %v3949
    %v3997 = vtanh.pop %v3954
    %v3998 = vtanh.pop %v3959
    %v3999 = vtanh.pop %v3964
    %v4000 = vtanh.pop %v3969
    %v4001 = vtanh.pop %v3974
    %s4002 = scalar_lea.vmem [#allocation2], 384
    %v4003 = vld [vmem:[%s4002] sm:$0xff]
    %v4004 = vld [vmem:[%s4002 + $0x8] sm:$0xff]
    %v4005 = vld [vmem:[%s4002 + $0x10] sm:$0xff]
    %v4006 = vld [vmem:[%s4002 + $0x18] sm:$0xff]
    %v4007 = vld [vmem:[%s4002 + $0x20] sm:$0xff]
    %v4008 = vld [vmem:[%s4002 + $0x28] sm:$0xff]
    %v4009 = vld [vmem:[%s4002 + $0x30] sm:$0xff]
    %v4010 = vld [vmem:[%s4002 + $0x38] sm:$0xff]
    %v4011 = vld [vmem:[%s4002 + $0x40] sm:$0xff]
    %v4012 = vld [vmem:[%s4002 + $0x48] sm:$0xff]
    %v4013 = vld [vmem:[%s4002 + $0x50] sm:$0xff]
    %v4014 = vld [vmem:[%s4002 + $0x58] sm:$0xff]
    %v4015 = vld [vmem:[%s4002 + $0x60] sm:$0xff]
    %v4016 = vld [vmem:[%s4002 + $0x68] sm:$0xff]
    %v4017 = vld [vmem:[%s4002 + $0x70] sm:$0xff]
    %v4018 = vld [vmem:[%s4002 + $0x78] sm:$0xff]
    %v4019 = vld [vmem:[%s2 + $0x3] sm:$0x1]
    %v4020 = vlaneseq
    %v4021 = vshrl.u32 %v4020, 7
    %v4022 = vsub.s32 0, %v4021
    %v4023 = vrot.slane %v4019, %v4022
    %4024 = vmatprep.subr.mxu0 0.0
    %4025 = vmatpush1.msra.mxu0 %v4003
    %4026 = vmatprep.subr.mxu0 0.0
    %4027 = vmatpush1.msra.mxu0 %v4004
    %4028 = vmatprep.subr.mxu0 0.0
    %4029 = vmatpush1.msra.mxu0 %v4005
    %4030 = vmatprep.subr.mxu0 0.0
    %4031 = vmatpush1.msra.mxu0 %v4006
    %4032 = vmatprep.subr.mxu0 0.0
    %4033 = vmatpush1.msra.mxu0 %v4007
    %4034 = vmatprep.subr.mxu0 0.0
    %4035 = vmatpush1.msra.mxu0 %v4008
    %4036 = vmatprep.subr.mxu0 0.0
    %4037 = vmatpush1.msra.mxu0 %v4009
    %4038 = vmatprep.subr.mxu0 0.0
    %4039 = vmatpush1.msra.mxu0 %v4010
    %4040 = vmatprep.subr.mxu0 0.0
    %4041 = vmatpush1.msra.mxu0 %v4011
    %4042 = vmatprep.subr.mxu0 0.0
    %4043 = vmatpush1.msra.mxu0 %v4012
    %4044 = vmatprep.subr.mxu0 0.0
    %4045 = vmatpush1.msra.mxu0 %v4013
    %4046 = vmatprep.subr.mxu0 0.0
    %4047 = vmatpush1.msra.mxu0 %v4014
    %4048 = vmatprep.subr.mxu0 0.0
    %4049 = vmatpush1.msra.mxu0 %v4015
    %4050 = vmatprep.subr.mxu0 0.0
    %4051 = vmatpush1.msra.mxu0 %v4016
    %4052 = vmatprep.subr.mxu0 0.0
    %4053 = vmatpush1.msra.mxu0 %v4017
    %4054 = vmatprep.subr.mxu0 0.0
    %4055 = vmatpush1.msra.mxu0 %v4018
    %4056 = vmatprep.subr.mxu0 0.0
    %4057 = vmatpush1.msra.mxu0 0.0
    %4058 = vmatprep.subr.mxu0 0.0
    %4059 = vmatpush1.msra.mxu0 0.0
    %4060 = vmatprep.subr.mxu0 0.0
    %4061 = vmatpush1.msra.mxu0 0.0
    %4062 = vmatprep.subr.mxu0 0.0
    %4063 = vmatpush1.msra.mxu0 0.0
    %4064 = vmatprep.subr.mxu0 0.0
    %4065 = vmatpush1.msra.mxu0 0.0
    %4066 = vmatprep.subr.mxu0 0.0
    %4067 = vmatpush1.msra.mxu0 0.0
    %4068 = vmatprep.subr.mxu0 0.0
    %4069 = vmatpush1.msra.mxu0 0.0
    %4070 = vmatprep.subr.mxu0 0.0
    %4071 = vmatpush1.msra.mxu0 0.0
    %4072 = vmatprep.subr.mxu0 0.0
    %4073 = vmatpush1.msra.mxu0 0.0
    %4074 = vmatprep.subr.mxu0 0.0
    %4075 = vmatpush1.msra.mxu0 0.0
    %4076 = vmatprep.subr.mxu0 0.0
    %4077 = vmatpush1.msra.mxu0 0.0
    %4078 = vmatprep.subr.mxu0 0.0
    %4079 = vmatpush1.msra.mxu0 0.0
    %4080 = vmatprep.subr.mxu0 0.0
    %4081 = vmatpush1.msra.mxu0 0.0
    %4082 = vmatprep.subr.mxu0 0.0
    %4083 = vmatpush1.msra.mxu0 0.0
    %4084 = vmatprep.subr.mxu0 0.0
    %4085 = vmatpush1.msra.mxu0 0.0
    %4086 = vmatprep.subr.mxu0 0.0
    %4087 = vmatpush1.msra.mxu0 0.0
    %4088 = vmatprep.mubr.f32.mxu0 0.0
    %4089 = vmatmul.mubr.f32.gmra.mrb[0].mxu0 %v3977
    %v4090 = vpop.f32.mrb[0].mxu0
    %v4091 = vadd.f32 %v4023, %v4090
    %v4092 = vpop.f32.mrb[0].mxu0
    %4093 = vmatprep.mubr.f32.mxu0 0.0
    %4094 = vmatmul.mubr.f32.gmra.mrb[0].mxu0 %v3978
    %v4095 = vpop.f32.mrb[0].mxu0
    %v4096 = vadd.f32 %v4023, %v4095
    %v4097 = vpop.f32.mrb[0].mxu0
    %4098 = vmatprep.mubr.f32.mxu0 0.0
    %4099 = vmatmul.mubr.f32.gmra.mrb[0].mxu0 %v3979
    %v4100 = vpop.f32.mrb[0].mxu0
    %v4101 = vadd.f32 %v4023, %v4100
    %v4102 = vpop.f32.mrb[0].mxu0
    %4103 = vmatprep.mubr.f32.mxu0 0.0
    %4104 = vmatmul.mubr.f32.gmra.mrb[0].mxu0 %v3980
    %v4105 = vpop.f32.mrb[0].mxu0
    %v4106 = vadd.f32 %v4023, %v4105
    %v4107 = vpop.f32.mrb[0].mxu0
    %4108 = vmatprep.mubr.f32.mxu0 0.0
    %4109 = vmatmul.mubr.f32.gmra.mrb[0].mxu0 %v3981
    %v4110 = vpop.f32.mrb[0].mxu0
    %v4111 = vadd.f32 %v4023, %v4110
    %v4112 = vpop.f32.mrb[0].mxu0
    %4113 = vmatprep.mubr.f32.mxu0 0.0
    %4114 = vmatmul.mubr.f32.gmra.mrb[0].mxu0 %v3982
    %v4115 = vpop.f32.mrb[0].mxu0
    %v4116 = vadd.f32 %v4023, %v4115
    %v4117 = vpop.f32.mrb[0].mxu0
    %4118 = vmatprep.mubr.f32.mxu0 0.0
    %4119 = vmatmul.mubr.f32.gmra.mrb[0].mxu0 %v3983
    %v4120 = vpop.f32.mrb[0].mxu0
    %v4121 = vadd.f32 %v4023, %v4120
    %v4122 = vpop.f32.mrb[0].mxu0
    %4123 = vmatprep.mubr.f32.mxu0 0.0
    %4124 = vmatmul.mubr.f32.gmra.mrb[0].mxu0 %v3984
    %v4125 = vpop.f32.mrb[0].mxu0
    %v4126 = vadd.f32 %v4023, %v4125
    %v4127 = vpop.f32.mrb[0].mxu0
    %4128 = vmatprep.mubr.f32.mxu0 0.0
    %4129 = vmatmul.mubr.f32.gmra.mrb[0].mxu0 %v3985
    %v4130 = vpop.f32.mrb[0].mxu0
    %v4131 = vadd.f32 %v4023, %v4130
    %v4132 = vpop.f32.mrb[0].mxu0
    %4133 = vmatprep.mubr.f32.mxu0 0.0
    %4134 = vmatmul.mubr.f32.gmra.mrb[0].mxu0 %v3986
    %v4135 = vpop.f32.mrb[0].mxu0
    %v4136 = vadd.f32 %v4023, %v4135
    %v4137 = vpop.f32.mrb[0].mxu0
    %4138 = vmatprep.mubr.f32.mxu0 0.0
    %4139 = vmatmul.mubr.f32.gmra.mrb[0].mxu0 %v3987
    %v4140 = vpop.f32.mrb[0].mxu0
    %v4141 = vadd.f32 %v4023, %v4140
    %v4142 = vpop.f32.mrb[0].mxu0
    %4143 = vmatprep.mubr.f32.mxu0 0.0
    %4144 = vmatmul.mubr.f32.gmra.mrb[0].mxu0 %v3988
    %v4145 = vpop.f32.mrb[0].mxu0
    %v4146 = vadd.f32 %v4023, %v4145
    %v4147 = vpop.f32.mrb[0].mxu0
    %4148 = vmatprep.mubr.f32.mxu0 0.0
    %4149 = vmatmul.mubr.f32.gmra.mrb[0].mxu0 %v3989
    %v4150 = vpop.f32.mrb[0].mxu0
    %v4151 = vadd.f32 %v4023, %v4150
    %v4152 = vpop.f32.mrb[0].mxu0
    %4153 = vmatprep.mubr.f32.mxu0 0.0
    %4154 = vmatmul.mubr.f32.gmra.mrb[0].mxu0 %v3990
    %v4155 = vpop.f32.mrb[0].mxu0
    %v4156 = vadd.f32 %v4023, %v4155
    %v4157 = vpop.f32.mrb[0].mxu0
    %4158 = vmatprep.mubr.f32.mxu0 0.0
    %4159 = vmatmul.mubr.f32.gmra.mrb[0].mxu0 %v3991
    %v4160 = vpop.f32.mrb[0].mxu0
    %v4161 = vadd.f32 %v4023, %v4160
    %v4162 = vpop.f32.mrb[0].mxu0
    %4163 = vmatprep.mubr.f32.mxu0 0.0
    %4164 = vmatmul.mubr.f32.gmra.mrb[0].mxu0 %v3992
    %v4165 = vpop.f32.mrb[0].mxu0
    %v4166 = vadd.f32 %v4023, %v4165
    %v4167 = vpop.f32.mrb[0].mxu0
    %4168 = vmatprep.mubr.f32.mxu0 0.0
    %4169 = vmatmul.mubr.f32.gmra.mrb[0].mxu0 %v3993
    %v4170 = vpop.f32.mrb[0].mxu0
    %v4171 = vadd.f32 %v4023, %v4170
    %v4172 = vpop.f32.mrb[0].mxu0
    %4173 = vmatprep.mubr.f32.mxu0 0.0
    %4174 = vmatmul.mubr.f32.gmra.mrb[0].mxu0 %v3994
    %v4175 = vpop.f32.mrb[0].mxu0
    %v4176 = vadd.f32 %v4023, %v4175
    %v4177 = vpop.f32.mrb[0].mxu0
    %4178 = vmatprep.mubr.f32.mxu0 0.0
    %4179 = vmatmul.mubr.f32.gmra.mrb[0].mxu0 %v3995
    %v4180 = vpop.f32.mrb[0].mxu0
    %v4181 = vadd.f32 %v4023, %v4180
    %v4182 = vpop.f32.mrb[0].mxu0
    %4183 = vmatprep.mubr.f32.mxu0 0.0
    %4184 = vmatmul.mubr.f32.gmra.mrb[0].mxu0 %v3996
    %v4185 = vpop.f32.mrb[0].mxu0
    %v4186 = vadd.f32 %v4023, %v4185
    %v4187 = vpop.f32.mrb[0].mxu0
    %4188 = vmatprep.mubr.f32.mxu0 0.0
    %4189 = vmatmul.mubr.f32.gmra.mrb[0].mxu0 %v3997
    %v4190 = vpop.f32.mrb[0].mxu0
    %v4191 = vadd.f32 %v4023, %v4190
    %v4192 = vpop.f32.mrb[0].mxu0
    %4193 = vmatprep.mubr.f32.mxu0 0.0
    %4194 = vmatmul.mubr.f32.gmra.mrb[0].mxu0 %v3998
    %v4195 = vpop.f32.mrb[0].mxu0
    %v4196 = vadd.f32 %v4023, %v4195
    %v4197 = vpop.f32.mrb[0].mxu0
    %4198 = vmatprep.mubr.f32.mxu0 0.0
    %4199 = vmatmul.mubr.f32.gmra.mrb[0].mxu0 %v3999
    %v4200 = vpop.f32.mrb[0].mxu0
    %v4201 = vadd.f32 %v4023, %v4200
    %v4202 = vpop.f32.mrb[0].mxu0
    %4203 = vmatprep.mubr.f32.mxu0 0.0
    %4204 = vmatmul.mubr.f32.gmra.mrb[0].mxu0 %v4000
    %v4205 = vpop.f32.mrb[0].mxu0
    %v4206 = vadd.f32 %v4023, %v4205
    %v4207 = vpop.f32.mrb[0].mxu0
    %4208 = vmatprep.mubr.f32.mxu0 0.0
    %4209 = vmatmul.mubr.f32.gmra.mrb[0].mxu0 %v4001
    %v4210 = vpop.f32.mrb[0].mxu0
    %v4211 = vadd.f32 %v4023, %v4210
    %v4212 = vpop.f32.mrb[0].mxu0
    %4213 = vdwg.mxu0
    %v4214 = vtanh.pop %v4091
    %v4215 = vtanh.pop %v4096
    %v4216 = vtanh.pop %v4101
    %v4217 = vtanh.pop %v4106
    %v4218 = vtanh.pop %v4111
    %v4219 = vtanh.pop %v4116
    %v4220 = vtanh.pop %v4121
    %v4221 = vtanh.pop %v4126
    %v4222 = vtanh.pop %v4131
    %v4223 = vtanh.pop %v4136
    %v4224 = vtanh.pop %v4141
    %v4225 = vtanh.pop %v4146
    %v4226 = vtanh.pop %v4151
    %v4227 = vtanh.pop %v4156
    %v4228 = vtanh.pop %v4161
    %v4229 = vtanh.pop %v4166
    %v4230 = vtanh.pop %v4171
    %v4231 = vtanh.pop %v4176
    %v4232 = vtanh.pop %v4181
    %v4233 = vtanh.pop %v4186
    %v4234 = vtanh.pop %v4191
    %v4235 = vtanh.pop %v4196
    %v4236 = vtanh.pop %v4201
    %v4237 = vtanh.pop %v4206
    %v4238 = vtanh.pop %v4211
    %s4239 = scalar_lea.vmem [#allocation2], 512
    %v4240 = vld [vmem:[%s4239] sm:$0xff]
    %v4241 = vld [vmem:[%s4239 + $0x8] sm:$0xff]
    %v4242 = vld [vmem:[%s4239 + $0x10] sm:$0xff]
    %v4243 = vld [vmem:[%s4239 + $0x18] sm:$0xff]
    %v4244 = vld [vmem:[%s4239 + $0x20] sm:$0xff]
    %v4245 = vld [vmem:[%s4239 + $0x28] sm:$0xff]
    %v4246 = vld [vmem:[%s4239 + $0x30] sm:$0xff]
    %v4247 = vld [vmem:[%s4239 + $0x38] sm:$0xff]
    %v4248 = vld [vmem:[%s4239 + $0x40] sm:$0xff]
    %v4249 = vld [vmem:[%s4239 + $0x48] sm:$0xff]
    %v4250 = vld [vmem:[%s4239 + $0x50] sm:$0xff]
    %v4251 = vld [vmem:[%s4239 + $0x58] sm:$0xff]
    %v4252 = vld [vmem:[%s4239 + $0x60] sm:$0xff]
    %v4253 = vld [vmem:[%s4239 + $0x68] sm:$0xff]
    %v4254 = vld [vmem:[%s4239 + $0x70] sm:$0xff]
    %v4255 = vld [vmem:[%s4239 + $0x78] sm:$0xff]
    %v4256 = vld [vmem:[%s2 + $0x4] sm:$0x1]
    %v4257 = vlaneseq
    %v4258 = vshrl.u32 %v4257, 7
    %v4259 = vsub.s32 0, %v4258
    %v4260 = vrot.slane %v4256, %v4259
    %4261 = vmatprep.subr.mxu0 0.0
    %4262 = vmatpush1.msra.mxu0 %v4240
    %4263 = vmatprep.subr.mxu0 0.0
    %4264 = vmatpush1.msra.mxu0 %v4241
    %4265 = vmatprep.subr.mxu0 0.0
    %4266 = vmatpush1.msra.mxu0 %v4242
    %4267 = vmatprep.subr.mxu0 0.0
    %4268 = vmatpush1.msra.mxu0 %v4243
    %4269 = vmatprep.subr.mxu0 0.0
    %4270 = vmatpush1.msra.mxu0 %v4244
    %4271 = vmatprep.subr.mxu0 0.0
    %4272 = vmatpush1.msra.mxu0 %v4245
    %4273 = vmatprep.subr.mxu0 0.0
    %4274 = vmatpush1.msra.mxu0 %v4246
    %4275 = vmatprep.subr.mxu0 0.0
    %4276 = vmatpush1.msra.mxu0 %v4247
    %4277 = vmatprep.subr.mxu0 0.0
    %4278 = vmatpush1.msra.mxu0 %v4248
    %4279 = vmatprep.subr.mxu0 0.0
    %4280 = vmatpush1.msra.mxu0 %v4249
    %4281 = vmatprep.subr.mxu0 0.0
    %4282 = vmatpush1.msra.mxu0 %v4250
    %4283 = vmatprep.subr.mxu0 0.0
    %4284 = vmatpush1.msra.mxu0 %v4251
    %4285 = vmatprep.subr.mxu0 0.0
    %4286 = vmatpush1.msra.mxu0 %v4252
    %4287 = vmatprep.subr.mxu0 0.0
    %4288 = vmatpush1.msra.mxu0 %v4253
    %4289 = vmatprep.subr.mxu0 0.0
    %4290 = vmatpush1.msra.mxu0 %v4254
    %4291 = vmatprep.subr.mxu0 0.0
    %4292 = vmatpush1.msra.mxu0 %v4255
    %4293 = vmatprep.subr.mxu0 0.0
    %4294 = vmatpush1.msra.mxu0 0.0
    %4295 = vmatprep.subr.mxu0 0.0
    %4296 = vmatpush1.msra.mxu0 0.0
    %4297 = vmatprep.subr.mxu0 0.0
    %4298 = vmatpush1.msra.mxu0 0.0
    %4299 = vmatprep.subr.mxu0 0.0
    %4300 = vmatpush1.msra.mxu0 0.0
    %4301 = vmatprep.subr.mxu0 0.0
    %4302 = vmatpush1.msra.mxu0 0.0
    %4303 = vmatprep.subr.mxu0 0.0
    %4304 = vmatpush1.msra.mxu0 0.0
    %4305 = vmatprep.subr.mxu0 0.0
    %4306 = vmatpush1.msra.mxu0 0.0
    %4307 = vmatprep.subr.mxu0 0.0
    %4308 = vmatpush1.msra.mxu0 0.0
    %4309 = vmatprep.subr.mxu0 0.0
    %4310 = vmatpush1.msra.mxu0 0.0
    %4311 = vmatprep.subr.mxu0 0.0
    %4312 = vmatpush1.msra.mxu0 0.0
    %4313 = vmatprep.subr.mxu0 0.0
    %4314 = vmatpush1.msra.mxu0 0.0
    %4315 = vmatprep.subr.mxu0 0.0
    %4316 = vmatpush1.msra.mxu0 0.0
    %4317 = vmatprep.subr.mxu0 0.0
    %4318 = vmatpush1.msra.mxu0 0.0
    %4319 = vmatprep.subr.mxu0 0.0
    %4320 = vmatpush1.msra.mxu0 0.0
    %4321 = vmatprep.subr.mxu0 0.0
    %4322 = vmatpush1.msra.mxu0 0.0
    %4323 = vmatprep.subr.mxu0 0.0
    %4324 = vmatpush1.msra.mxu0 0.0
    %4325 = vmatprep.mubr.f32.mxu0 0.0
    %4326 = vmatmul.mubr.f32.gmra.mrb[0].mxu0 %v4214
    %v4327 = vpop.f32.mrb[0].mxu0
    %v4328 = vadd.f32 %v4260, %v4327
    %v4329 = vpop.f32.mrb[0].mxu0
    %4330 = vmatprep.mubr.f32.mxu0 0.0
    %4331 = vmatmul.mubr.f32.gmra.mrb[0].mxu0 %v4215
    %v4332 = vpop.f32.mrb[0].mxu0
    %v4333 = vadd.f32 %v4260, %v4332
    %v4334 = vpop.f32.mrb[0].mxu0
    %4335 = vmatprep.mubr.f32.mxu0 0.0
    %4336 = vmatmul.mubr.f32.gmra.mrb[0].mxu0 %v4216
    %v4337 = vpop.f32.mrb[0].mxu0
    %v4338 = vadd.f32 %v4260, %v4337
    %v4339 = vpop.f32.mrb[0].mxu0
    %4340 = vmatprep.mubr.f32.mxu0 0.0
    %4341 = vmatmul.mubr.f32.gmra.mrb[0].mxu0 %v4217
    %v4342 = vpop.f32.mrb[0].mxu0
    %v4343 = vadd.f32 %v4260, %v4342
    %v4344 = vpop.f32.mrb[0].mxu0
    %4345 = vmatprep.mubr.f32.mxu0 0.0
    %4346 = vmatmul.mubr.f32.gmra.mrb[0].mxu0 %v4218
    %v4347 = vpop.f32.mrb[0].mxu0
    %v4348 = vadd.f32 %v4260, %v4347
    %v4349 = vpop.f32.mrb[0].mxu0
    %4350 = vmatprep.mubr.f32.mxu0 0.0
    %4351 = vmatmul.mubr.f32.gmra.mrb[0].mxu0 %v4219
    %v4352 = vpop.f32.mrb[0].mxu0
    %v4353 = vadd.f32 %v4260, %v4352
    %v4354 = vpop.f32.mrb[0].mxu0
    %4355 = vmatprep.mubr.f32.mxu0 0.0
    %4356 = vmatmul.mubr.f32.gmra.mrb[0].mxu0 %v4220
    %v4357 = vpop.f32.mrb[0].mxu0
    %v4358 = vadd.f32 %v4260, %v4357
    %v4359 = vpop.f32.mrb[0].mxu0
    %4360 = vmatprep.mubr.f32.mxu0 0.0
    %4361 = vmatmul.mubr.f32.gmra.mrb[0].mxu0 %v4221
    %v4362 = vpop.f32.mrb[0].mxu0
    %v4363 = vadd.f32 %v4260, %v4362
    %v4364 = vpop.f32.mrb[0].mxu0
    %4365 = vmatprep.mubr.f32.mxu0 0.0
    %4366 = vmatmul.mubr.f32.gmra.mrb[0].mxu0 %v4222
    %v4367 = vpop.f32.mrb[0].mxu0
    %v4368 = vadd.f32 %v4260, %v4367
    %v4369 = vpop.f32.mrb[0].mxu0
    %4370 = vmatprep.mubr.f32.mxu0 0.0
    %4371 = vmatmul.mubr.f32.gmra.mrb[0].mxu0 %v4223
    %v4372 = vpop.f32.mrb[0].mxu0
    %v4373 = vadd.f32 %v4260, %v4372
    %v4374 = vpop.f32.mrb[0].mxu0
    %4375 = vmatprep.mubr.f32.mxu0 0.0
    %4376 = vmatmul.mubr.f32.gmra.mrb[0].mxu0 %v4224
    %v4377 = vpop.f32.mrb[0].mxu0
    %v4378 = vadd.f32 %v4260, %v4377
    %v4379 = vpop.f32.mrb[0].mxu0
    %4380 = vmatprep.mubr.f32.mxu0 0.0
    %4381 = vmatmul.mubr.f32.gmra.mrb[0].mxu0 %v4225
    %v4382 = vpop.f32.mrb[0].mxu0
    %v4383 = vadd.f32 %v4260, %v4382
    %v4384 = vpop.f32.mrb[0].mxu0
    %4385 = vmatprep.mubr.f32.mxu0 0.0
    %4386 = vmatmul.mubr.f32.gmra.mrb[0].mxu0 %v4226
    %v4387 = vpop.f32.mrb[0].mxu0
    %v4388 = vadd.f32 %v4260, %v4387
    %v4389 = vpop.f32.mrb[0].mxu0
    %4390 = vmatprep.mubr.f32.mxu0 0.0
    %4391 = vmatmul.mubr.f32.gmra.mrb[0].mxu0 %v4227
    %v4392 = vpop.f32.mrb[0].mxu0
    %v4393 = vadd.f32 %v4260, %v4392
    %v4394 = vpop.f32.mrb[0].mxu0
    %4395 = vmatprep.mubr.f32.mxu0 0.0
    %4396 = vmatmul.mubr.f32.gmra.mrb[0].mxu0 %v4228
    %v4397 = vpop.f32.mrb[0].mxu0
    %v4398 = vadd.f32 %v4260, %v4397
    %v4399 = vpop.f32.mrb[0].mxu0
    %4400 = vmatprep.mubr.f32.mxu0 0.0
    %4401 = vmatmul.mubr.f32.gmra.mrb[0].mxu0 %v4229
    %v4402 = vpop.f32.mrb[0].mxu0
    %v4403 = vadd.f32 %v4260, %v4402
    %v4404 = vpop.f32.mrb[0].mxu0
    %4405 = vmatprep.mubr.f32.mxu0 0.0
    %4406 = vmatmul.mubr.f32.gmra.mrb[0].mxu0 %v4230
    %v4407 = vpop.f32.mrb[0].mxu0
    %v4408 = vadd.f32 %v4260, %v4407
    %v4409 = vpop.f32.mrb[0].mxu0
    %4410 = vmatprep.mubr.f32.mxu0 0.0
    %4411 = vmatmul.mubr.f32.gmra.mrb[0].mxu0 %v4231
    %v4412 = vpop.f32.mrb[0].mxu0
    %v4413 = vadd.f32 %v4260, %v4412
    %v4414 = vpop.f32.mrb[0].mxu0
    %4415 = vmatprep.mubr.f32.mxu0 0.0
    %4416 = vmatmul.mubr.f32.gmra.mrb[0].mxu0 %v4232
    %v4417 = vpop.f32.mrb[0].mxu0
    %v4418 = vadd.f32 %v4260, %v4417
    %v4419 = vpop.f32.mrb[0].mxu0
    %4420 = vmatprep.mubr.f32.mxu0 0.0
    %4421 = vmatmul.mubr.f32.gmra.mrb[0].mxu0 %v4233
    %v4422 = vpop.f32.mrb[0].mxu0
    %v4423 = vadd.f32 %v4260, %v4422
    %v4424 = vpop.f32.mrb[0].mxu0
    %4425 = vmatprep.mubr.f32.mxu0 0.0
    %4426 = vmatmul.mubr.f32.gmra.mrb[0].mxu0 %v4234
    %v4427 = vpop.f32.mrb[0].mxu0
    %v4428 = vadd.f32 %v4260, %v4427
    %v4429 = vpop.f32.mrb[0].mxu0
    %4430 = vmatprep.mubr.f32.mxu0 0.0
    %4431 = vmatmul.mubr.f32.gmra.mrb[0].mxu0 %v4235
    %v4432 = vpop.f32.mrb[0].mxu0
    %v4433 = vadd.f32 %v4260, %v4432
    %v4434 = vpop.f32.mrb[0].mxu0
    %4435 = vmatprep.mubr.f32.mxu0 0.0
    %4436 = vmatmul.mubr.f32.gmra.mrb[0].mxu0 %v4236
    %v4437 = vpop.f32.mrb[0].mxu0
    %v4438 = vadd.f32 %v4260, %v4437
    %v4439 = vpop.f32.mrb[0].mxu0
    %4440 = vmatprep.mubr.f32.mxu0 0.0
    %4441 = vmatmul.mubr.f32.gmra.mrb[0].mxu0 %v4237
    %v4442 = vpop.f32.mrb[0].mxu0
    %v4443 = vadd.f32 %v4260, %v4442
    %v4444 = vpop.f32.mrb[0].mxu0
    %4445 = vmatprep.mubr.f32.mxu0 0.0
    %4446 = vmatmul.mubr.f32.gmra.mrb[0].mxu0 %v4238
    %v4447 = vpop.f32.mrb[0].mxu0
    %v4448 = vadd.f32 %v4260, %v4447
    %v4449 = vpop.f32.mrb[0].mxu0
    %4450 = vdwg.mxu0
    %v4451 = vrsqrt.pop %v157
    %v4452 = vrsqrt.pop %v158
    %v4453 = vrsqrt.pop %v159
    %v4454 = vrsqrt.pop %v160
    %v4455 = vrsqrt.pop %v161
    %v4456 = vrsqrt.pop %v162
    %v4457 = vrsqrt.pop %v163
    %v4458 = vrsqrt.pop %v164
    %v4459 = vrsqrt.pop %v165
    %v4460 = vrsqrt.pop %v166
    %v4461 = vrsqrt.pop %v167
    %v4462 = vrsqrt.pop %v168
    %v4463 = vrsqrt.pop %v169
    %v4464 = vrsqrt.pop %v170
    %v4465 = vrsqrt.pop %v171
    %v4466 = vrsqrt.pop %v172
    %v4467 = vrsqrt.pop %v173
    %v4468 = vrsqrt.pop %v174
    %v4469 = vrsqrt.pop %v175
    %v4470 = vrsqrt.pop %v176
    %v4471 = vrsqrt.pop %v177
    %v4472 = vrsqrt.pop %v178
    %v4473 = vrsqrt.pop %v179
    %v4474 = vrsqrt.pop %v180
    %v4475 = vrsqrt.pop %v181
    %4477 = vset.pattern.permute.xlu0 0
    %4478 = vperm.xlu0 %4477, %v4451
    %v4479 = vpop.permute.xlu0 %4478
    %4482 = vset.pattern.permute.xlu0 0
    %4483 = vperm.xlu0 %4482, %v4452
    %v4484 = vpop.permute.xlu0 %4483
    %4487 = vset.pattern.permute.xlu0 0
    %4488 = vperm.xlu0 %4487, %v4453
    %v4489 = vpop.permute.xlu0 %4488
    %4492 = vset.pattern.permute.xlu0 0
    %4493 = vperm.xlu0 %4492, %v4454
    %v4494 = vpop.permute.xlu0 %4493
    %4497 = vset.pattern.permute.xlu0 0
    %4498 = vperm.xlu0 %4497, %v4455
    %v4499 = vpop.permute.xlu0 %4498
    %4502 = vset.pattern.permute.xlu0 0
    %4503 = vperm.xlu0 %4502, %v4456
    %v4504 = vpop.permute.xlu0 %4503
    %4507 = vset.pattern.permute.xlu0 0
    %4508 = vperm.xlu0 %4507, %v4457
    %v4509 = vpop.permute.xlu0 %4508
    %4512 = vset.pattern.permute.xlu0 0
    %4513 = vperm.xlu0 %4512, %v4458
    %v4514 = vpop.permute.xlu0 %4513
    %4517 = vset.pattern.permute.xlu0 0
    %4518 = vperm.xlu0 %4517, %v4459
    %v4519 = vpop.permute.xlu0 %4518
    %4522 = vset.pattern.permute.xlu0 0
    %4523 = vperm.xlu0 %4522, %v4460
    %v4524 = vpop.permute.xlu0 %4523
    %4527 = vset.pattern.permute.xlu0 0
    %4528 = vperm.xlu0 %4527, %v4461
    %v4529 = vpop.permute.xlu0 %4528
    %4532 = vset.pattern.permute.xlu0 0
    %4533 = vperm.xlu0 %4532, %v4462
    %v4534 = vpop.permute.xlu0 %4533
    %4537 = vset.pattern.permute.xlu0 0
    %4538 = vperm.xlu0 %4537, %v4463
    %v4539 = vpop.permute.xlu0 %4538
    %4542 = vset.pattern.permute.xlu0 0
    %4543 = vperm.xlu0 %4542, %v4464
    %v4544 = vpop.permute.xlu0 %4543
    %4547 = vset.pattern.permute.xlu0 0
    %4548 = vperm.xlu0 %4547, %v4465
    %v4549 = vpop.permute.xlu0 %4548
    %4552 = vset.pattern.permute.xlu0 0
    %4553 = vperm.xlu0 %4552, %v4466
    %v4554 = vpop.permute.xlu0 %4553
    %4557 = vset.pattern.permute.xlu0 0
    %4558 = vperm.xlu0 %4557, %v4467
    %v4559 = vpop.permute.xlu0 %4558
    %4562 = vset.pattern.permute.xlu0 0
    %4563 = vperm.xlu0 %4562, %v4468
    %v4564 = vpop.permute.xlu0 %4563
    %4567 = vset.pattern.permute.xlu0 0
    %4568 = vperm.xlu0 %4567, %v4469
    %v4569 = vpop.permute.xlu0 %4568
    %4572 = vset.pattern.permute.xlu0 0
    %4573 = vperm.xlu0 %4572, %v4470
    %v4574 = vpop.permute.xlu0 %4573
    %4577 = vset.pattern.permute.xlu0 0
    %4578 = vperm.xlu0 %4577, %v4471
    %v4579 = vpop.permute.xlu0 %4578
    %4582 = vset.pattern.permute.xlu0 0
    %4583 = vperm.xlu0 %4582, %v4472
    %v4584 = vpop.permute.xlu0 %4583
    %4587 = vset.pattern.permute.xlu0 0
    %4588 = vperm.xlu0 %4587, %v4473
    %v4589 = vpop.permute.xlu0 %4588
    %4592 = vset.pattern.permute.xlu0 0
    %4593 = vperm.xlu0 %4592, %v4474
    %v4594 = vpop.permute.xlu0 %4593
    %4597 = vset.pattern.permute.xlu0 0
    %4598 = vperm.xlu0 %4597, %v4475
    %v4599 = vpop.permute.xlu0 %4598
    %v4601 = vmul.f32 %v4328, %v4479
    %v4602 = vmul.f32 %v4333, %v4484
    %v4603 = vmul.f32 %v4338, %v4489
    %v4604 = vmul.f32 %v4343, %v4494
    %v4605 = vmul.f32 %v4348, %v4499
    %v4606 = vmul.f32 %v4353, %v4504
    %v4607 = vmul.f32 %v4358, %v4509
    %v4608 = vmul.f32 %v4363, %v4514
    %v4609 = vmul.f32 %v4368, %v4519
    %v4610 = vmul.f32 %v4373, %v4524
    %v4611 = vmul.f32 %v4378, %v4529
    %v4612 = vmul.f32 %v4383, %v4534
    %v4613 = vmul.f32 %v4388, %v4539
    %v4614 = vmul.f32 %v4393, %v4544
    %v4615 = vmul.f32 %v4398, %v4549
    %v4616 = vmul.f32 %v4403, %v4554
    %v4617 = vmul.f32 %v4408, %v4559
    %v4618 = vmul.f32 %v4413, %v4564
    %v4619 = vmul.f32 %v4418, %v4569
    %v4620 = vmul.f32 %v4423, %v4574
    %v4621 = vmul.f32 %v4428, %v4579
    %v4622 = vmul.f32 %v4433, %v4584
    %v4623 = vmul.f32 %v4438, %v4589
    %v4624 = vmul.f32 %v4443, %v4594
    %v4625 = vmul.f32 %v4448, %v4599
    %v4626 = vmul.f32 %v207, %v207
    %v4627 = vmul.f32 %v208, %v208
    %v4628 = vmul.f32 %v209, %v209
    %v4629 = vmul.f32 %v210, %v210
    %v4630 = vmul.f32 %v211, %v211
    %v4631 = vmul.f32 %v212, %v212
    %v4632 = vmul.f32 %v213, %v213
    %v4633 = vmul.f32 %v214, %v214
    %v4634 = vmul.f32 %v215, %v215
    %v4635 = vmul.f32 %v216, %v216
    %v4636 = vmul.f32 %v217, %v217
    %v4637 = vmul.f32 %v218, %v218
    %v4638 = vmul.f32 %v219, %v219
    %v4639 = vmul.f32 %v220, %v220
    %v4640 = vmul.f32 %v221, %v221
    %v4641 = vmul.f32 %v222, %v222
    %v4642 = vmul.f32 %v223, %v223
    %v4643 = vmul.f32 %v224, %v224
    %v4644 = vmul.f32 %v225, %v225
    %v4645 = vmul.f32 %v226, %v226
    %v4646 = vmul.f32 %v227, %v227
    %v4647 = vmul.f32 %v228, %v228
    %v4648 = vmul.f32 %v229, %v229
    %v4649 = vmul.f32 %v230, %v230
    %v4650 = vmul.f32 %v231, %v231
    %4652 = vset.pattern.permute.xlu0 0
    %4653 = vperm.xlu0 %4652, %v4626
    %v4654 = vpop.permute.xlu0 %4653
    %4657 = vset.pattern.permute.xlu0 0
    %4658 = vperm.xlu0 %4657, %v4627
    %v4659 = vpop.permute.xlu0 %4658
    %4662 = vset.pattern.permute.xlu0 0
    %4663 = vperm.xlu0 %4662, %v4628
    %v4664 = vpop.permute.xlu0 %4663
    %4667 = vset.pattern.permute.xlu0 0
    %4668 = vperm.xlu0 %4667, %v4629
    %v4669 = vpop.permute.xlu0 %4668
    %4672 = vset.pattern.permute.xlu0 0
    %4673 = vperm.xlu0 %4672, %v4630
    %v4674 = vpop.permute.xlu0 %4673
    %4677 = vset.pattern.permute.xlu0 0
    %4678 = vperm.xlu0 %4677, %v4631
    %v4679 = vpop.permute.xlu0 %4678
    %4682 = vset.pattern.permute.xlu0 0
    %4683 = vperm.xlu0 %4682, %v4632
    %v4684 = vpop.permute.xlu0 %4683
    %4687 = vset.pattern.permute.xlu0 0
    %4688 = vperm.xlu0 %4687, %v4633
    %v4689 = vpop.permute.xlu0 %4688
    %4692 = vset.pattern.permute.xlu0 0
    %4693 = vperm.xlu0 %4692, %v4634
    %v4694 = vpop.permute.xlu0 %4693
    %4697 = vset.pattern.permute.xlu0 0
    %4698 = vperm.xlu0 %4697, %v4635
    %v4699 = vpop.permute.xlu0 %4698
    %4702 = vset.pattern.permute.xlu0 0
    %4703 = vperm.xlu0 %4702, %v4636
    %v4704 = vpop.permute.xlu0 %4703
    %4707 = vset.pattern.permute.xlu0 0
    %4708 = vperm.xlu0 %4707, %v4637
    %v4709 = vpop.permute.xlu0 %4708
    %4712 = vset.pattern.permute.xlu0 0
    %4713 = vperm.xlu0 %4712, %v4638
    %v4714 = vpop.permute.xlu0 %4713
    %4717 = vset.pattern.permute.xlu0 0
    %4718 = vperm.xlu0 %4717, %v4639
    %v4719 = vpop.permute.xlu0 %4718
    %4722 = vset.pattern.permute.xlu0 0
    %4723 = vperm.xlu0 %4722, %v4640
    %v4724 = vpop.permute.xlu0 %4723
    %4727 = vset.pattern.permute.xlu0 0
    %4728 = vperm.xlu0 %4727, %v4641
    %v4729 = vpop.permute.xlu0 %4728
    %4732 = vset.pattern.permute.xlu0 0
    %4733 = vperm.xlu0 %4732, %v4642
    %v4734 = vpop.permute.xlu0 %4733
    %4737 = vset.pattern.permute.xlu0 0
    %4738 = vperm.xlu0 %4737, %v4643
    %v4739 = vpop.permute.xlu0 %4738
    %4742 = vset.pattern.permute.xlu0 0
    %4743 = vperm.xlu0 %4742, %v4644
    %v4744 = vpop.permute.xlu0 %4743
    %4747 = vset.pattern.permute.xlu0 0
    %4748 = vperm.xlu0 %4747, %v4645
    %v4749 = vpop.permute.xlu0 %4748
    %4752 = vset.pattern.permute.xlu0 0
    %4753 = vperm.xlu0 %4752, %v4646
    %v4754 = vpop.permute.xlu0 %4753
    %4757 = vset.pattern.permute.xlu0 0
    %4758 = vperm.xlu0 %4757, %v4647
    %v4759 = vpop.permute.xlu0 %4758
    %4762 = vset.pattern.permute.xlu0 0
    %4763 = vperm.xlu0 %4762, %v4648
    %v4764 = vpop.permute.xlu0 %4763
    %4767 = vset.pattern.permute.xlu0 0
    %4768 = vperm.xlu0 %4767, %v4649
    %v4769 = vpop.permute.xlu0 %4768
    %4772 = vset.pattern.permute.xlu0 0
    %4773 = vperm.xlu0 %4772, %v4650
    %v4774 = vpop.permute.xlu0 %4773
    %v4776 = vmul.f32 %v3092, %v4654
    %v4777 = vmul.f32 %v3093, %v4659
    %v4778 = vmul.f32 %v3094, %v4664
    %v4779 = vmul.f32 %v3095, %v4669
    %v4780 = vmul.f32 %v3096, %v4674
    %v4781 = vmul.f32 %v3097, %v4679
    %v4782 = vmul.f32 %v3098, %v4684
    %v4783 = vmul.f32 %v3099, %v4689
    %v4784 = vmul.f32 %v3100, %v4694
    %v4785 = vmul.f32 %v3101, %v4699
    %v4786 = vmul.f32 %v3102, %v4704
    %v4787 = vmul.f32 %v3103, %v4709
    %v4788 = vmul.f32 %v3104, %v4714
    %v4789 = vmul.f32 %v3105, %v4719
    %v4790 = vmul.f32 %v3106, %v4724
    %v4791 = vmul.f32 %v3107, %v4729
    %v4792 = vmul.f32 %v3108, %v4734
    %v4793 = vmul.f32 %v3109, %v4739
    %v4794 = vmul.f32 %v3110, %v4744
    %v4795 = vmul.f32 %v3111, %v4749
    %v4796 = vmul.f32 %v3112, %v4754
    %v4797 = vmul.f32 %v3113, %v4759
    %v4798 = vmul.f32 %v3114, %v4764
    %v4799 = vmul.f32 %v3115, %v4769
    %v4800 = vmul.f32 %v3116, %v4774
    %v4801 = vsub.f32 %v4601, %v4776
    %v4802 = vsub.f32 %v4602, %v4777
    %v4803 = vsub.f32 %v4603, %v4778
    %v4804 = vsub.f32 %v4604, %v4779
    %v4805 = vsub.f32 %v4605, %v4780
    %v4806 = vsub.f32 %v4606, %v4781
    %v4807 = vsub.f32 %v4607, %v4782
    %v4808 = vsub.f32 %v4608, %v4783
    %v4809 = vsub.f32 %v4609, %v4784
    %v4810 = vsub.f32 %v4610, %v4785
    %v4811 = vsub.f32 %v4611, %v4786
    %v4812 = vsub.f32 %v4612, %v4787
    %v4813 = vsub.f32 %v4613, %v4788
    %v4814 = vsub.f32 %v4614, %v4789
    %v4815 = vsub.f32 %v4615, %v4790
    %v4816 = vsub.f32 %v4616, %v4791
    %v4817 = vsub.f32 %v4617, %v4792
    %v4818 = vsub.f32 %v4618, %v4793
    %v4819 = vsub.f32 %v4619, %v4794
    %v4820 = vsub.f32 %v4620, %v4795
    %v4821 = vsub.f32 %v4621, %v4796
    %v4822 = vsub.f32 %v4622, %v4797
    %v4823 = vsub.f32 %v4623, %v4798
    %v4824 = vsub.f32 %v4624, %v4799
    %v4825 = vsub.f32 %v4625, %v4800
    %4826 = vst [vmem:[#allocation5] sm:$0xff] %v4801
    %4827 = vst [vmem:[#allocation5 + $0x8] sm:$0xff] %v4802
    %4828 = vst [vmem:[#allocation5 + $0x10] sm:$0xff] %v4803
    %4829 = vst [vmem:[#allocation5 + $0x18] sm:$0xff] %v4804
    %4830 = vst [vmem:[#allocation5 + $0x20] sm:$0xff] %v4805
    %4831 = vst [vmem:[#allocation5 + $0x28] sm:$0xff] %v4806
    %4832 = vst [vmem:[#allocation5 + $0x30] sm:$0xff] %v4807
    %4833 = vst [vmem:[#allocation5 + $0x38] sm:$0xff] %v4808
    %4834 = vst [vmem:[#allocation5 + $0x40] sm:$0xff] %v4809
    %4835 = vst [vmem:[#allocation5 + $0x48] sm:$0xff] %v4810
    %4836 = vst [vmem:[#allocation5 + $0x50] sm:$0xff] %v4811
    %4837 = vst [vmem:[#allocation5 + $0x58] sm:$0xff] %v4812
    %4838 = vst [vmem:[#allocation5 + $0x60] sm:$0xff] %v4813
    %4839 = vst [vmem:[#allocation5 + $0x68] sm:$0xff] %v4814
    %4840 = vst [vmem:[#allocation5 + $0x70] sm:$0xff] %v4815
    %4841 = vst [vmem:[#allocation5 + $0x78] sm:$0xff] %v4816
    %4842 = vst [vmem:[#allocation5 + $0x80] sm:$0xff] %v4817
    %4843 = vst [vmem:[#allocation5 + $0x88] sm:$0xff] %v4818
    %4844 = vst [vmem:[#allocation5 + $0x90] sm:$0xff] %v4819
    %4845 = vst [vmem:[#allocation5 + $0x98] sm:$0xff] %v4820
    %4846 = vst [vmem:[#allocation5 + $0xa0] sm:$0xff] %v4821
    %4847 = vst [vmem:[#allocation5 + $0xa8] sm:$0xff] %v4822
    %4848 = vst [vmem:[#allocation5 + $0xb0] sm:$0xff] %v4823
    %4849 = vst [vmem:[#allocation5 + $0xb8] sm:$0xff] %v4824
    %4850 = vst [vmem:[#allocation5 + $0xc0] sm:$0xff] %v4825
    // Predicated region
    $region22: #{tpu_custom_call.1} parent=1 // pred_check
      _
    $region23: #{tpu_custom_call.1} parent=1 // pred_check_branch
      %4852 = sbr.rel (0) target = $region25
    $region24: #{tpu_custom_call.1} parent=1 // pred_region
      %s4854 = ssub.s32 3200, 3200
      %4855 = vsyncadd [#allocation4], %s4854
      %s4856 = sshll.u32 [#allocation5], 4
      %s4857 = int_to_ptr.vmem [resolvable:$true] %s4856
      %4862 = dma.vmem_to_hbm [thread:$0]  %s4857, 3200, %s4, [#allocation4], 128, 128, 8
    $region25: #{tpu_custom_call.1} parent=1 // pred_fallthru
      _
    // Predicated region
    $region26: #{tpu_custom_call.1} parent=1 // pred_check
      _
    $region27: #{tpu_custom_call.1} parent=1 // pred_check_branch
      %4864 = sbr.rel (0) target = $region29
    $region28: #{tpu_custom_call.1} parent=1 // pred_region
      %4865 = dma.done [#allocation4], 3200
    $region29: #{tpu_custom_call.1} parent=1 // pred_fallthru
      _
    %4866 = vsyncpa [#allocation3], 1
    %4867 = vsyncpa [#allocation4], 1

// kernel: tpu_custom_call.1
$region0: #{tpu_custom_call.1}
  #allocation0 [shape = 'u32[]', space=smem, size = 0x4, offset = 0x4, fixed_abs, tag = 'smem constant byte address 0x4 - core index']
  #allocation1 [shape = 'u32[144,128]{1,0:T(1,128)}', space=vmem, size = 0x12000, scoped, tag = 'internal scratch']
  %s0 = inlined_call_operand.vmem [shape: f32[200,128], index: 0, kind: input, shape index: {}]
  %s1 = inlined_call_operand.vmem [shape: f32[200,1], index: 1, kind: input, shape index: {}]
  %s2 = inlined_call_operand.vmem [shape: f32[7,128], index: 2, kind: input, shape index: {}]
  %s3 = inlined_call_operand.hbm [shape: f32[5,128,128], index: 3, kind: input, shape index: {}]
  %s4 = inlined_call_operand.hbm [shape: f32[200,128], index: 4, kind: output, shape index: {}]
  %s5 = sld [smem:[#allocation0]]
  $region30: #{tpu_custom_call.1} parent=0
    _
  %s7 = ssub.s32 1, %s5
  %s8 = scalar_select 0, %s7, %s5
  $region1: #{tpu_custom_call.1} parent=0
    #allocation2 [shape = 'u8[327680]{0}', space=vmem, size = 0x50000, scoped, tag = 'input window, operand 3, single buffered']
    #allocation3 [shape = 's32[1]{0}', space=sflag, size = 0x4, scoped, tag = 'scoped memory for tpu_custom_call.1']
    #allocation4 [shape = 's32[1]{0}', space=sflag, size = 0x4, scoped, tag = 'scoped memory for tpu_custom_call.1']
    #allocation5 [shape = 'u8[102400]{0}', space=vmem, size = 0x19000, scoped, tag = 'output window, operand 0, single buffered']
    %9 = vsyncpa [#allocation3], 0
    %10 = vsyncpa [#allocation4], 0
    // Predicated region
    $region2: #{tpu_custom_call.1} parent=1 // pred_check
      _
    $region3: #{tpu_custom_call.1} parent=1 // pred_check_branch
      %12 = sbr.rel (0) target = $region5
    $region4: #{tpu_custom_call.1} parent=1 // pred_region
      _
    $region5: #{tpu_custom_call.1} parent=1 // pred_fallthru
      _
    // Predicated region
    $region6: #{tpu_custom_call.1} parent=1 // pred_check
      _
    $region7: #{tpu_custom_call.1} parent=1 // pred_check_branch
      %14 = sbr.rel (0) target = $region9
    $region8: #{tpu_custom_call.1} parent=1 // pred_region
      _
    $region9: #{tpu_custom_call.1} parent=1 // pred_fallthru
      _
    // Predicated region
    $region10: #{tpu_custom_call.1} parent=1 // pred_check
      _
    $region11: #{tpu_custom_call.1} parent=1 // pred_check_branch
      %16 = sbr.rel (0) target = $region13
    $region12: #{tpu_custom_call.1} parent=1 // pred_region
      _
    $region13: #{tpu_custom_call.1} parent=1 // pred_fallthru
      _
    // Predicated region
    $region14: #{tpu_custom_call.1} parent=1 // pred_check
      _
    $region15: #{tpu_custom_call.1} parent=1 // pred_check_branch
      %18 = sbr.rel (0) target = $region17
    $region16: #{tpu_custom_call.1} parent=1 // pred_region
      %s20 = ssub.s32 10240, 10240
      %21 = vsyncadd [#allocation3], %s20
      %s22 = sshll.u32 [#allocation2], 4
      %s23 = int_to_ptr.vmem [resolvable:$true] %s22
      %28 = dma.hbm_to_vmem [thread:$0]  %s3, 10240, %s23, [#allocation3], 128, 128, 8
    $region17: #{tpu_custom_call.1} parent=1 // pred_fallthru
      _
    // Predicated region
    $region18: #{tpu_custom_call.1} parent=1 // pred_check
      _
    $region19: #{tpu_custom_call.1} parent=1 // pred_check_branch
      %30 = sbr.rel (0) target = $region21
    $region20: #{tpu_custom_call.1} parent=1 // pred_region
      %31 = dma.done [#allocation3], 10240
    $region21: #{tpu_custom_call.1} parent=1 // pred_fallthru
      _
    %v32 = vld [vmem:[%s1] sm:$0xff]
    %v33 = vld [vmem:[%s1 + $0x8] sm:$0xff]
    %v34 = vld [vmem:[%s1 + $0x10] sm:$0xff]
    %v35 = vld [vmem:[%s1 + $0x18] sm:$0xff]
    %v36 = vld [vmem:[%s1 + $0x20] sm:$0xff]
    %v37 = vld [vmem:[%s1 + $0x28] sm:$0xff]
    %v38 = vld [vmem:[%s1 + $0x30] sm:$0xff]
    %v39 = vld [vmem:[%s1 + $0x38] sm:$0xff]
    %v40 = vld [vmem:[%s1 + $0x40] sm:$0xff]
    %v41 = vld [vmem:[%s1 + $0x48] sm:$0xff]
    %v42 = vld [vmem:[%s1 + $0x50] sm:$0xff]
    %v43 = vld [vmem:[%s1 + $0x58] sm:$0xff]
    %v44 = vld [vmem:[%s1 + $0x60] sm:$0xff]
    %v45 = vld [vmem:[%s1 + $0x68] sm:$0xff]
    %v46 = vld [vmem:[%s1 + $0x70] sm:$0xff]
    %v47 = vld [vmem:[%s1 + $0x78] sm:$0xff]
    %v48 = vld [vmem:[%s1 + $0x80] sm:$0xff]
    %v49 = vld [vmem:[%s1 + $0x88] sm:$0xff]
    %v50 = vld [vmem:[%s1 + $0x90] sm:$0xff]
    %v51 = vld [vmem:[%s1 + $0x98] sm:$0xff]
    %v52 = vld [vmem:[%s1 + $0xa0] sm:$0xff]
    %v53 = vld [vmem:[%s1 + $0xa8] sm:$0xff]
    %v54 = vld [vmem:[%s1 + $0xb0] sm:$0xff]
    %v55 = vld [vmem:[%s1 + $0xb8] sm:$0xff]
    %v56 = vld [vmem:[%s1 + $0xc0] sm:$0xff]
    %v57 = vmul.f32 %v32, 6.437752
    %v58 = vmul.f32 %v33, 6.437752
    %v59 = vmul.f32 %v34, 6.437752
    %v60 = vmul.f32 %v35, 6.437752
    %v61 = vmul.f32 %v36, 6.437752
    %v62 = vmul.f32 %v37, 6.437752
    %v63 = vmul.f32 %v38, 6.437752
    %v64 = vmul.f32 %v39, 6.437752
    %v65 = vmul.f32 %v40, 6.437752
    %v66 = vmul.f32 %v41, 6.437752
    %v67 = vmul.f32 %v42, 6.437752
    %v68 = vmul.f32 %v43, 6.437752
    %v69 = vmul.f32 %v44, 6.437752
    %v70 = vmul.f32 %v45, 6.437752
    %v71 = vmul.f32 %v46, 6.437752
    %v72 = vmul.f32 %v47, 6.437752
    %v73 = vmul.f32 %v48, 6.437752
    %v74 = vmul.f32 %v49, 6.437752
    %v75 = vmul.f32 %v50, 6.437752
    %v76 = vmul.f32 %v51, 6.437752
    %v77 = vmul.f32 %v52, 6.437752
    %v78 = vmul.f32 %v53, 6.437752
    %v79 = vmul.f32 %v54, 6.437752
    %v80 = vmul.f32 %v55, 6.437752
    %v81 = vmul.f32 %v56, 6.437752
    %v82 = vmul.f32 %v57, 1.442695
    %v83 = vpow.pop %v82
    %v84 = vmul.f32 %v58, 1.442695
    %v85 = vpow.pop %v84
    %v86 = vmul.f32 %v59, 1.442695
    %v87 = vpow.pop %v86
    %v88 = vmul.f32 %v60, 1.442695
    %v89 = vpow.pop %v88
    %v90 = vmul.f32 %v61, 1.442695
    %v91 = vpow.pop %v90
    %v92 = vmul.f32 %v62, 1.442695
    %v93 = vpow.pop %v92
    %v94 = vmul.f32 %v63, 1.442695
    %v95 = vpow.pop %v94
    %v96 = vmul.f32 %v64, 1.442695
    %v97 = vpow.pop %v96
    %v98 = vmul.f32 %v65, 1.442695
    %v99 = vpow.pop %v98
    %v100 = vmul.f32 %v66, 1.442695
    %v101 = vpow.pop %v100
    %v102 = vmul.f32 %v67, 1.442695
    %v103 = vpow.pop %v102
    %v104 = vmul.f32 %v68, 1.442695
    %v105 = vpow.pop %v104
    %v106 = vmul.f32 %v69, 1.442695
    %v107 = vpow.pop %v106
    %v108 = vmul.f32 %v70, 1.442695
    %v109 = vpow.pop %v108
    %v110 = vmul.f32 %v71, 1.442695
    %v111 = vpow.pop %v110
    %v112 = vmul.f32 %v72, 1.442695
    %v113 = vpow.pop %v112
    %v114 = vmul.f32 %v73, 1.442695
    %v115 = vpow.pop %v114
    %v116 = vmul.f32 %v74, 1.442695
    %v117 = vpow.pop %v116
    %v118 = vmul.f32 %v75, 1.442695
    %v119 = vpow.pop %v118
    %v120 = vmul.f32 %v76, 1.442695
    %v121 = vpow.pop %v120
    %v122 = vmul.f32 %v77, 1.442695
    %v123 = vpow.pop %v122
    %v124 = vmul.f32 %v78, 1.442695
    %v125 = vpow.pop %v124
    %v126 = vmul.f32 %v79, 1.442695
    %v127 = vpow.pop %v126
    %v128 = vmul.f32 %v80, 1.442695
    %v129 = vpow.pop %v128
    %v130 = vmul.f32 %v81, 1.442695
    %v131 = vpow.pop %v130
    %v132 = vsub.f32 %v83, 1.0
    %v133 = vsub.f32 %v85, 1.0
    %v134 = vsub.f32 %v87, 1.0
    %v135 = vsub.f32 %v89, 1.0
    %v136 = vsub.f32 %v91, 1.0
    %v137 = vsub.f32 %v93, 1.0
    %v138 = vsub.f32 %v95, 1.0
    %v139 = vsub.f32 %v97, 1.0
    %v140 = vsub.f32 %v99, 1.0
    %v141 = vsub.f32 %v101, 1.0
    %v142 = vsub.f32 %v103, 1.0
    %v143 = vsub.f32 %v105, 1.0
    %v144 = vsub.f32 %v107, 1.0
    %v145 = vsub.f32 %v109, 1.0
    %v146 = vsub.f32 %v111, 1.0
    %v147 = vsub.f32 %v113, 1.0
    %v148 = vsub.f32 %v115, 1.0
    %v149 = vsub.f32 %v117, 1.0
    %v150 = vsub.f32 %v119, 1.0
    %v151 = vsub.f32 %v121, 1.0
    %v152 = vsub.f32 %v123, 1.0
    %v153 = vsub.f32 %v125, 1.0
    %v154 = vsub.f32 %v127, 1.0
    %v155 = vsub.f32 %v129, 1.0
    %v156 = vsub.f32 %v131, 1.0
    %v157 = vmul.f32 %v132, 0.15533373
    %v158 = vmul.f32 %v133, 0.15533373
    %v159 = vmul.f32 %v134, 0.15533373
    %v160 = vmul.f32 %v135, 0.15533373
    %v161 = vmul.f32 %v136, 0.15533373
    %v162 = vmul.f32 %v137, 0.15533373
    %v163 = vmul.f32 %v138, 0.15533373
    %v164 = vmul.f32 %v139, 0.15533373
    %v165 = vmul.f32 %v140, 0.15533373
    %v166 = vmul.f32 %v141, 0.15533373
    %v167 = vmul.f32 %v142, 0.15533373
    %v168 = vmul.f32 %v143, 0.15533373
    %v169 = vmul.f32 %v144, 0.15533373
    %v170 = vmul.f32 %v145, 0.15533373
    %v171 = vmul.f32 %v146, 0.15533373
    %v172 = vmul.f32 %v147, 0.15533373
    %v173 = vmul.f32 %v148, 0.15533373
    %v174 = vmul.f32 %v149, 0.15533373
    %v175 = vmul.f32 %v150, 0.15533373
    %v176 = vmul.f32 %v151, 0.15533373
    %v177 = vmul.f32 %v152, 0.15533373
    %v178 = vmul.f32 %v153, 0.15533373
    %v179 = vmul.f32 %v154, 0.15533373
    %v180 = vmul.f32 %v155, 0.15533373
    %v181 = vmul.f32 %v156, 0.15533373
    %v182 = vadd.f32 %v157, 1.0
    %v183 = vadd.f32 %v158, 1.0
    %v184 = vadd.f32 %v159, 1.0
    %v185 = vadd.f32 %v160, 1.0
    %v186 = vadd.f32 %v161, 1.0
    %v187 = vadd.f32 %v162, 1.0
    %v188 = vadd.f32 %v163, 1.0
    %v189 = vadd.f32 %v164, 1.0
    %v190 = vadd.f32 %v165, 1.0
    %v191 = vadd.f32 %v166, 1.0
    %v192 = vadd.f32 %v167, 1.0
    %v193 = vadd.f32 %v168, 1.0
    %v194 = vadd.f32 %v169, 1.0
    %v195 = vadd.f32 %v170, 1.0
    %v196 = vadd.f32 %v171, 1.0
    %v197 = vadd.f32 %v172, 1.0
    %v198 = vadd.f32 %v173, 1.0
    %v199 = vadd.f32 %v174, 1.0
    %v200 = vadd.f32 %v175, 1.0
    %v201 = vadd.f32 %v176, 1.0
    %v202 = vadd.f32 %v177, 1.0
    %v203 = vadd.f32 %v178, 1.0
    %v204 = vadd.f32 %v179, 1.0
    %v205 = vadd.f32 %v180, 1.0
    %v206 = vadd.f32 %v181, 1.0
    %v207 = vrsqrt.pop %v182
    %v208 = vrsqrt.pop %v183
    %v209 = vrsqrt.pop %v184
    %v210 = vrsqrt.pop %v185
    %v211 = vrsqrt.pop %v186
    %v212 = vrsqrt.pop %v187
    %v213 = vrsqrt.pop %v188
    %v214 = vrsqrt.pop %v189
    %v215 = vrsqrt.pop %v190
    %v216 = vrsqrt.pop %v191
    %v217 = vrsqrt.pop %v192
    %v218 = vrsqrt.pop %v193
    %v219 = vrsqrt.pop %v194
    %v220 = vrsqrt.pop %v195
    %v221 = vrsqrt.pop %v196
    %v222 = vrsqrt.pop %v197
    %v223 = vrsqrt.pop %v198
    %v224 = vrsqrt.pop %v199
    %v225 = vrsqrt.pop %v200
    %v226 = vrsqrt.pop %v201
    %v227 = vrsqrt.pop %v202
    %v228 = vrsqrt.pop %v203
    %v229 = vrsqrt.pop %v204
    %v230 = vrsqrt.pop %v205
    %v231 = vrsqrt.pop %v206
    %v232 = vlog2.pop %v157
    %v233 = vmul.f32 %v232, 0.6931472
    %v234 = vlog2.pop %v158
    %v235 = vmul.f32 %v234, 0.6931472
    %v236 = vlog2.pop %v159
    %v237 = vmul.f32 %v236, 0.6931472
    %v238 = vlog2.pop %v160
    %v239 = vmul.f32 %v238, 0.6931472
    %v240 = vlog2.pop %v161
    %v241 = vmul.f32 %v240, 0.6931472
    %v242 = vlog2.pop %v162
    %v243 = vmul.f32 %v242, 0.6931472
    %v244 = vlog2.pop %v163
    %v245 = vmul.f32 %v244, 0.6931472
    %v246 = vlog2.pop %v164
    %v247 = vmul.f32 %v246, 0.6931472
    %v248 = vlog2.pop %v165
    %v249 = vmul.f32 %v248, 0.6931472
    %v250 = vlog2.pop %v166
    %v251 = vmul.f32 %v250, 0.6931472
    %v252 = vlog2.pop %v167
    %v253 = vmul.f32 %v252, 0.6931472
    %v254 = vlog2.pop %v168
    %v255 = vmul.f32 %v254, 0.6931472
    %v256 = vlog2.pop %v169
    %v257 = vmul.f32 %v256, 0.6931472
    %v258 = vlog2.pop %v170
    %v259 = vmul.f32 %v258, 0.6931472
    %v260 = vlog2.pop %v171
    %v261 = vmul.f32 %v260, 0.6931472
    %v262 = vlog2.pop %v172
    %v263 = vmul.f32 %v262, 0.6931472
    %v264 = vlog2.pop %v173
    %v265 = vmul.f32 %v264, 0.6931472
    %v266 = vlog2.pop %v174
    %v267 = vmul.f32 %v266, 0.6931472
    %v268 = vlog2.pop %v175
    %v269 = vmul.f32 %v268, 0.6931472
    %v270 = vlog2.pop %v176
    %v271 = vmul.f32 %v270, 0.6931472
    %v272 = vlog2.pop %v177
    %v273 = vmul.f32 %v272, 0.6931472
    %v274 = vlog2.pop %v178
    %v275 = vmul.f32 %v274, 0.6931472
    %v276 = vlog2.pop %v179
    %v277 = vmul.f32 %v276, 0.6931472
    %v278 = vlog2.pop %v180
    %v279 = vmul.f32 %v278, 0.6931472
    %v280 = vlog2.pop %v181
    %v281 = vmul.f32 %v280, 0.6931472
    %v282 = vmul.f32 %v233, 0.7853982
    %v283 = vmul.f32 %v235, 0.7853982
    %v284 = vmul.f32 %v237, 0.7853982
    %v285 = vmul.f32 %v239, 0.7853982
    %v286 = vmul.f32 %v241, 0.7853982
    %v287 = vmul.f32 %v243, 0.7853982
    %v288 = vmul.f32 %v245, 0.7853982
    %v289 = vmul.f32 %v247, 0.7853982
    %v290 = vmul.f32 %v249, 0.7853982
    %v291 = vmul.f32 %v251, 0.7853982
    %v292 = vmul.f32 %v253, 0.7853982
    %v293 = vmul.f32 %v255, 0.7853982
    %v294 = vmul.f32 %v257, 0.7853982
    %v295 = vmul.f32 %v259, 0.7853982
    %v296 = vmul.f32 %v261, 0.7853982
    %v297 = vmul.f32 %v263, 0.7853982
    %v298 = vmul.f32 %v265, 0.7853982
    %v299 = vmul.f32 %v267, 0.7853982
    %v300 = vmul.f32 %v269, 0.7853982
    %v301 = vmul.f32 %v271, 0.7853982
    %v302 = vmul.f32 %v273, 0.7853982
    %v303 = vmul.f32 %v275, 0.7853982
    %v304 = vmul.f32 %v277, 0.7853982
    %v305 = vmul.f32 %v279, 0.7853982
    %v306 = vmul.f32 %v281, 0.7853982
    %v307 = vld [vmem:[%s2 + $0x5] sm:$0x1]
    %v308 = vld [vmem:[%s2 + $0x6] sm:$0x1]
    %310 = vset.pattern.permute.xlu0 0
    %311 = vperm.xlu0 %310, %v282
    %v312 = vpop.permute.xlu0 %311
    %315 = vset.pattern.permute.xlu0 0
    %316 = vperm.xlu0 %315, %v283
    %v317 = vpop.permute.xlu0 %316
    %320 = vset.pattern.permute.xlu0 0
    %321 = vperm.xlu0 %320, %v284
    %v322 = vpop.permute.xlu0 %321
    %325 = vset.pattern.permute.xlu0 0
    %326 = vperm.xlu0 %325, %v285
    %v327 = vpop.permute.xlu0 %326
    %330 = vset.pattern.permute.xlu0 0
    %331 = vperm.xlu0 %330, %v286
    %v332 = vpop.permute.xlu0 %331
    %335 = vset.pattern.permute.xlu0 0
    %336 = vperm.xlu0 %335, %v287
    %v337 = vpop.permute.xlu0 %336
    %340 = vset.pattern.permute.xlu0 0
    %341 = vperm.xlu0 %340, %v288
    %v342 = vpop.permute.xlu0 %341
    %345 = vset.pattern.permute.xlu0 0
    %346 = vperm.xlu0 %345, %v289
    %v347 = vpop.permute.xlu0 %346
    %350 = vset.pattern.permute.xlu0 0
    %351 = vperm.xlu0 %350, %v290
    %v352 = vpop.permute.xlu0 %351
    %355 = vset.pattern.permute.xlu0 0
    %356 = vperm.xlu0 %355, %v291
    %v357 = vpop.permute.xlu0 %356
    %360 = vset.pattern.permute.xlu0 0
    %361 = vperm.xlu0 %360, %v292
    %v362 = vpop.permute.xlu0 %361
    %365 = vset.pattern.permute.xlu0 0
    %366 = vperm.xlu0 %365, %v293
    %v367 = vpop.permute.xlu0 %366
    %370 = vset.pattern.permute.xlu0 0
    %371 = vperm.xlu0 %370, %v294
    %v372 = vpop.permute.xlu0 %371
    %375 = vset.pattern.permute.xlu0 0
    %376 = vperm.xlu0 %375, %v295
    %v377 = vpop.permute.xlu0 %376
    %380 = vset.pattern.permute.xlu0 0
    %381 = vperm.xlu0 %380, %v296
    %v382 = vpop.permute.xlu0 %381
    %385 = vset.pattern.permute.xlu0 0
    %386 = vperm.xlu0 %385, %v297
    %v387 = vpop.permute.xlu0 %386
    %390 = vset.pattern.permute.xlu0 0
    %391 = vperm.xlu0 %390, %v298
    %v392 = vpop.permute.xlu0 %391
    %395 = vset.pattern.permute.xlu0 0
    %396 = vperm.xlu0 %395, %v299
    %v397 = vpop.permute.xlu0 %396
    %400 = vset.pattern.permute.xlu0 0
    %401 = vperm.xlu0 %400, %v300
    %v402 = vpop.permute.xlu0 %401
    %405 = vset.pattern.permute.xlu0 0
    %406 = vperm.xlu0 %405, %v301
    %v407 = vpop.permute.xlu0 %406
    %410 = vset.pattern.permute.xlu0 0
    %411 = vperm.xlu0 %410, %v302
    %v412 = vpop.permute.xlu0 %411
    %415 = vset.pattern.permute.xlu0 0
    %416 = vperm.xlu0 %415, %v303
    %v417 = vpop.permute.xlu0 %416
    %420 = vset.pattern.permute.xlu0 0
    %421 = vperm.xlu0 %420, %v304
    %v422 = vpop.permute.xlu0 %421
    %425 = vset.pattern.permute.xlu0 0
    %426 = vperm.xlu0 %425, %v305
    %v427 = vpop.permute.xlu0 %426
    %430 = vset.pattern.permute.xlu0 0
    %431 = vperm.xlu0 %430, %v306
    %v432 = vpop.permute.xlu0 %431
    %v434 = vlaneseq
    %v435 = vshrl.u32 %v434, 7
    %v436 = vsub.s32 0, %v435
    %v437 = vrot.slane %v307, %v436
    %v438 = vmul.f32 %v312, %v437
    %v439 = vmul.f32 %v317, %v437
    %v440 = vmul.f32 %v322, %v437
    %v441 = vmul.f32 %v327, %v437
    %v442 = vmul.f32 %v332, %v437
    %v443 = vmul.f32 %v337, %v437
    %v444 = vmul.f32 %v342, %v437
    %v445 = vmul.f32 %v347, %v437
    %v446 = vmul.f32 %v352, %v437
    %v447 = vmul.f32 %v357, %v437
    %v448 = vmul.f32 %v362, %v437
    %v449 = vmul.f32 %v367, %v437
    %v450 = vmul.f32 %v372, %v437
    %v451 = vmul.f32 %v377, %v437
    %v452 = vmul.f32 %v382, %v437
    %v453 = vmul.f32 %v387, %v437
    %v454 = vmul.f32 %v392, %v437
    %v455 = vmul.f32 %v397, %v437
    %v456 = vmul.f32 %v402, %v437
    %v457 = vmul.f32 %v407, %v437
    %v458 = vmul.f32 %v412, %v437
    %v459 = vmul.f32 %v417, %v437
    %v460 = vmul.f32 %v422, %v437
    %v461 = vmul.f32 %v427, %v437
    %v462 = vmul.f32 %v432, %v437
    %v463 = vlaneseq
    %v464 = vshrl.u32 %v463, 7
    %v465 = vsub.s32 0, %v464
    %v466 = vrot.slane %v308, %v465
    %v467 = vadd.f32 %v438, %v466
    %v468 = vadd.f32 %v439, %v466
    %v469 = vadd.f32 %v440, %v466
    %v470 = vadd.f32 %v441, %v466
    %v471 = vadd.f32 %v442, %v466
    %v472 = vadd.f32 %v443, %v466
    %v473 = vadd.f32 %v444, %v466
    %v474 = vadd.f32 %v445, %v466
    %v475 = vadd.f32 %v446, %v466
    %v476 = vadd.f32 %v447, %v466
    %v477 = vadd.f32 %v448, %v466
    %v478 = vadd.f32 %v449, %v466
    %v479 = vadd.f32 %v450, %v466
    %v480 = vadd.f32 %v451, %v466
    %v481 = vadd.f32 %v452, %v466
    %v482 = vadd.f32 %v453, %v466
    %v483 = vadd.f32 %v454, %v466
    %v484 = vadd.f32 %v455, %v466
    %v485 = vadd.f32 %v456, %v466
    %v486 = vadd.f32 %v457, %v466
    %v487 = vadd.f32 %v458, %v466
    %v488 = vadd.f32 %v459, %v466
    %v489 = vadd.f32 %v460, %v466
    %v490 = vadd.f32 %v461, %v466
    %v491 = vadd.f32 %v462, %v466
    %v492 = vand.u32 2147483647, %v467
    %vm493 = vcmp.le.f32.partialorder %v492, 0.7853982
    %vm494 = vcmp.lt.s32.totalorder %v467, 0
    %v495 = vand.u32 %v467, 2139095040
    %v496 = vshrl.u32 %v495, 23
    %v497 = vsub.s32 %v496, 127
    %v498 = vand.u32 2147483647, %v467
    %v499 = vand.u32 %v498, 8388607
    %v500 = vor.u32 %v499, 8388608
    %v501 = vsub.s32 0, %v500
    %v502 = vadd.s32 %v497, 1
    %vm503 = vcmp.gt.s32.totalorder %v502, 0
    %v504 = vsel %vm503, %v502, 0
    %v505 = vshrl.u32 %v504, 5
    %v506 = vand.u32 %v504, 31
    %v507 = vsub.s32 32, %v506
    %v508 = vshrl.u32 683565275, %v507
    %v509 = vshll.u32 683565275, %v506
    %v510 = vshrl.u32 2475754826, %v507
    %v511 = vor.u32 %v509, %v510
    %v512 = vshll.u32 2475754826, %v506
    %v513 = vshrl.u32 2131351028, %v507
    %v514 = vor.u32 %v512, %v513
    %v515 = vshll.u32 2131351028, %v506
    %v516 = vshrl.u32 2102212464, %v507
    %v517 = vor.u32 %v515, %v516
    %v518 = vshll.u32 2102212464, %v506
    %v519 = vshrl.u32 920167782, %v507
    %v520 = vor.u32 %v518, %v519
    %v521 = vshll.u32 920167782, %v506
    %v522 = vshrl.u32 1326507024, %v507
    %v523 = vor.u32 %v521, %v522
    %vm524 = vcmp.lt.s32.totalorder %v505, 1
    %vm525 = vcmp.lt.s32.totalorder %v505, 2
    %vm526 = vcmp.lt.s32.totalorder %v505, 3
    %vm527 = vcmp.lt.s32.totalorder %v505, 4
    %v528 = vsel %vm524, %v508, %v511
    %v529 = vsel %vm527, %v517, 2102212464
    %v530 = vsel %vm526, %v514, %v529
    %v531 = vsel %vm525, %v528, %v530
    %v532 = vsel %vm524, %v511, %v514
    %v533 = vsel %vm527, %v520, 920167782
    %v534 = vsel %vm526, %v517, %v533
    %v535 = vsel %vm525, %v532, %v534
    %v536 = vsel %vm524, %v514, %v517
    %v537 = vsel %vm527, %v523, 1326507024
    %v538 = vsel %vm526, %v520, %v537
    %v539 = vsel %vm525, %v536, %v538
    %v540 = vshll.u32 %v500, 8
    %v541 = vmul.u32.u64.compose %v540, %v539
    %v542 = vextract.low.u32 %v541
    %v543 = vextract.high.u32 %v541
    %v544 = vmul.u32.u64.compose %v540, %v535
    %v545 = vextract.low.u32 %v544
    %v546 = vextract.high.u32 %v544
    %v547 = vmul.u32 %v540, %v531
    %v548 = vadd.s32 %v543, %v545
    %vm549 = vc.u32 %v543, %v545
    %v550 = vadd.s32 %v546, 1
    %v551 = vsel %vm549, %v550, %v546
    %v552 = vadd.s32 %v547, %v551
    %v553 = vadd.s32 %v552, 536870912
    %v554 = vshrl.u32 %v553, 30
    %v555 = vshll.u32 %v554, 30
    %v556 = vsub.s32 %v552, %v555
    %vm557 = vcmp.lt.s32.totalorder %v556, 0
    %v558 = vsub.s32 0, %v556
    %v559 = vsel %vm557, %v558, %v556
    %v560 = vclz %v559
    %v561 = vsub.s32 %v560, 2
    %vm562 = vcmp.gt.s32.totalorder 0, %v561
    %v563 = vsel %vm562, 0, %v561
    %v564 = vsub.s32 32, %v563
    %v565 = vshll.u32 %v556, %v563
    %v566 = vshrl.u32 %v548, %v564
    %v567 = vor.u32 %v565, %v566
    %v568 = vsub.s32 4294967266, %v563
    %v569 = vadd.s32 %v568, 127
    %v570 = vshll.u32 %v569, 23
    %v571 = vor.u32 4788187, %v570
    %v572 = vand.u32 2147483647, %v571
    %v574 = vcvt.s32.f32 %v567
    %v575 = vmul.f32 %v574, %v572
    %v576 = vxor.u32 %v575, 2147483648
    %v577 = vsel %vm494, %v576, %v575
    %v578 = vsub.s32 4, %v554
    %v579 = vsel %vm494, %v578, %v554
    %v580 = vsel %vm493, %v467, %v577
    %v581 = vsel %vm493, 0, %v579
    %v582 = vcosq.f32.pop %v580
    %v583 = vsinq.f32.pop %v580
    %vm584 = vweird.f32 %v467
    %v585 = vadd.s32 %v581, 3
    %v586 = vand.u32 %v585, 3
    %vm587 = vcmp.lt.s32.totalorder %v586, 2
    %vm588 = vcmp.eq.s32.totalorder %v586, 0
    %v589 = vxor.u32 %v583, 2147483648
    %v590 = vsel %vm588, %v582, %v589
    %vm591 = vcmp.eq.s32.totalorder %v586, 2
    %v592 = vxor.u32 %v582, 2147483648
    %v593 = vsel %vm591, %v592, %v583
    %v594 = vsel %vm587, %v590, %v593
    %v595 = vsel %vm584, nan, %v594
    %v596 = vand.u32 2147483647, %v468
    %vm597 = vcmp.le.f32.partialorder %v596, 0.7853982
    %vm598 = vcmp.lt.s32.totalorder %v468, 0
    %v599 = vand.u32 %v468, 2139095040
    %v600 = vshrl.u32 %v599, 23
    %v601 = vsub.s32 %v600, 127
    %v602 = vand.u32 2147483647, %v468
    %v603 = vand.u32 %v602, 8388607
    %v604 = vor.u32 %v603, 8388608
    %v605 = vsub.s32 0, %v604
    %v606 = vadd.s32 %v601, 1
    %vm607 = vcmp.gt.s32.totalorder %v606, 0
    %v608 = vsel %vm607, %v606, 0
    %v609 = vshrl.u32 %v608, 5
    %v610 = vand.u32 %v608, 31
    %v611 = vsub.s32 32, %v610
    %v612 = vshrl.u32 683565275, %v611
    %v613 = vshll.u32 683565275, %v610
    %v614 = vshrl.u32 2475754826, %v611
    %v615 = vor.u32 %v613, %v614
    %v616 = vshll.u32 2475754826, %v610
    %v617 = vshrl.u32 2131351028, %v611
    %v618 = vor.u32 %v616, %v617
    %v619 = vshll.u32 2131351028, %v610
    %v620 = vshrl.u32 2102212464, %v611
    %v621 = vor.u32 %v619, %v620
    %v622 = vshll.u32 2102212464, %v610
    %v623 = vshrl.u32 920167782, %v611
    %v624 = vor.u32 %v622, %v623
    %v625 = vshll.u32 920167782, %v610
    %v626 = vshrl.u32 1326507024, %v611
    %v627 = vor.u32 %v625, %v626
    %vm628 = vcmp.lt.s32.totalorder %v609, 1
    %vm629 = vcmp.lt.s32.totalorder %v609, 2
    %vm630 = vcmp.lt.s32.totalorder %v609, 3
    %vm631 = vcmp.lt.s32.totalorder %v609, 4
    %v632 = vsel %vm628, %v612, %v615
    %v633 = vsel %vm631, %v621, 2102212464
    %v634 = vsel %vm630, %v618, %v633
    %v635 = vsel %vm629, %v632, %v634
    %v636 = vsel %vm628, %v615, %v618
    %v637 = vsel %vm631, %v624, 920167782
    %v638 = vsel %vm630, %v621, %v637
    %v639 = vsel %vm629, %v636, %v638
    %v640 = vsel %vm628, %v618, %v621
    %v641 = vsel %vm631, %v627, 1326507024
    %v642 = vsel %vm630, %v624, %v641
    %v643 = vsel %vm629, %v640, %v642
    %v644 = vshll.u32 %v604, 8
    %v645 = vmul.u32.u64.compose %v644, %v643
    %v646 = vextract.low.u32 %v645
    %v647 = vextract.high.u32 %v645
    %v648 = vmul.u32.u64.compose %v644, %v639
    %v649 = vextract.low.u32 %v648
    %v650 = vextract.high.u32 %v648
    %v651 = vmul.u32 %v644, %v635
    %v652 = vadd.s32 %v647, %v649
    %vm653 = vc.u32 %v647, %v649
    %v654 = vadd.s32 %v650, 1
    %v655 = vsel %vm653, %v654, %v650
    %v656 = vadd.s32 %v651, %v655
    %v657 = vadd.s32 %v656, 536870912
    %v658 = vshrl.u32 %v657, 30
    %v659 = vshll.u32 %v658, 30
    %v660 = vsub.s32 %v656, %v659
    %vm661 = vcmp.lt.s32.totalorder %v660, 0
    %v662 = vsub.s32 0, %v660
    %v663 = vsel %vm661, %v662, %v660
    %v664 = vclz %v663
    %v665 = vsub.s32 %v664, 2
    %vm666 = vcmp.gt.s32.totalorder 0, %v665
    %v667 = vsel %vm666, 0, %v665
    %v668 = vsub.s32 32, %v667
    %v669 = vshll.u32 %v660, %v667
    %v670 = vshrl.u32 %v652, %v668
    %v671 = vor.u32 %v669, %v670
    %v672 = vsub.s32 4294967266, %v667
    %v673 = vadd.s32 %v672, 127
    %v674 = vshll.u32 %v673, 23
    %v675 = vor.u32 4788187, %v674
    %v676 = vand.u32 2147483647, %v675
    %v678 = vcvt.s32.f32 %v671
    %v679 = vmul.f32 %v678, %v676
    %v680 = vxor.u32 %v679, 2147483648
    %v681 = vsel %vm598, %v680, %v679
    %v682 = vsub.s32 4, %v658
    %v683 = vsel %vm598, %v682, %v658
    %v684 = vsel %vm597, %v468, %v681
    %v685 = vsel %vm597, 0, %v683
    %v686 = vcosq.f32.pop %v684
    %v687 = vsinq.f32.pop %v684
    %vm688 = vweird.f32 %v468
    %v689 = vadd.s32 %v685, 3
    %v690 = vand.u32 %v689, 3
    %vm691 = vcmp.lt.s32.totalorder %v690, 2
    %vm692 = vcmp.eq.s32.totalorder %v690, 0
    %v693 = vxor.u32 %v687, 2147483648
    %v694 = vsel %vm692, %v686, %v693
    %vm695 = vcmp.eq.s32.totalorder %v690, 2
    %v696 = vxor.u32 %v686, 2147483648
    %v697 = vsel %vm695, %v696, %v687
    %v698 = vsel %vm691, %v694, %v697
    %v699 = vsel %vm688, nan, %v698
    %v700 = vand.u32 2147483647, %v469
    %vm701 = vcmp.le.f32.partialorder %v700, 0.7853982
    %vm702 = vcmp.lt.s32.totalorder %v469, 0
    %v703 = vand.u32 %v469, 2139095040
    %v704 = vshrl.u32 %v703, 23
    %v705 = vsub.s32 %v704, 127
    %v706 = vand.u32 2147483647, %v469
    %v707 = vand.u32 %v706, 8388607
    %v708 = vor.u32 %v707, 8388608
    %v709 = vsub.s32 0, %v708
    %v710 = vadd.s32 %v705, 1
    %vm711 = vcmp.gt.s32.totalorder %v710, 0
    %v712 = vsel %vm711, %v710, 0
    %v713 = vshrl.u32 %v712, 5
    %v714 = vand.u32 %v712, 31
    %v715 = vsub.s32 32, %v714
    %v716 = vshrl.u32 683565275, %v715
    %v717 = vshll.u32 683565275, %v714
    %v718 = vshrl.u32 2475754826, %v715
    %v719 = vor.u32 %v717, %v718
    %v720 = vshll.u32 2475754826, %v714
    %v721 = vshrl.u32 2131351028, %v715
    %v722 = vor.u32 %v720, %v721
    %v723 = vshll.u32 2131351028, %v714
    %v724 = vshrl.u32 2102212464, %v715
    %v725 = vor.u32 %v723, %v724
    %v726 = vshll.u32 2102212464, %v714
    %v727 = vshrl.u32 920167782, %v715
    %v728 = vor.u32 %v726, %v727
    %v729 = vshll.u32 920167782, %v714
    %v730 = vshrl.u32 1326507024, %v715
    %v731 = vor.u32 %v729, %v730
    %vm732 = vcmp.lt.s32.totalorder %v713, 1
    %vm733 = vcmp.lt.s32.totalorder %v713, 2
    %vm734 = vcmp.lt.s32.totalorder %v713, 3
    %vm735 = vcmp.lt.s32.totalorder %v713, 4
    %v736 = vsel %vm732, %v716, %v719
    %v737 = vsel %vm735, %v725, 2102212464
    %v738 = vsel %vm734, %v722, %v737
    %v739 = vsel %vm733, %v736, %v738
    %v740 = vsel %vm732, %v719, %v722
    %v741 = vsel %vm735, %v728, 920167782
    %v742 = vsel %vm734, %v725, %v741
    %v743 = vsel %vm733, %v740, %v742
    %v744 = vsel %vm732, %v722, %v725
    %v745 = vsel %vm735, %v731, 1326507024
    %v746 = vsel %vm734, %v728, %v745
    %v747 = vsel %vm733, %v744, %v746
    %v748 = vshll.u32 %v708, 8
    %v749 = vmul.u32.u64.compose %v748, %v747
    %v750 = vextract.low.u32 %v749
    %v751 = vextract.high.u32 %v749
    %v752 = vmul.u32.u64.compose %v748, %v743
    %v753 = vextract.low.u32 %v752
    %v754 = vextract.high.u32 %v752
    %v755 = vmul.u32 %v748, %v739
    %v756 = vadd.s32 %v751, %v753
    %vm757 = vc.u32 %v751, %v753
    %v758 = vadd.s32 %v754, 1
    %v759 = vsel %vm757, %v758, %v754
    %v760 = vadd.s32 %v755, %v759
    %v761 = vadd.s32 %v760, 536870912
    %v762 = vshrl.u32 %v761, 30
    %v763 = vshll.u32 %v762, 30
    %v764 = vsub.s32 %v760, %v763
    %vm765 = vcmp.lt.s32.totalorder %v764, 0
    %v766 = vsub.s32 0, %v764
    %v767 = vsel %vm765, %v766, %v764
    %v768 = vclz %v767
    %v769 = vsub.s32 %v768, 2
    %vm770 = vcmp.gt.s32.totalorder 0, %v769
    %v771 = vsel %vm770, 0, %v769
    %v772 = vsub.s32 32, %v771
    %v773 = vshll.u32 %v764, %v771
    %v774 = vshrl.u32 %v756, %v772
    %v775 = vor.u32 %v773, %v774
    %v776 = vsub.s32 4294967266, %v771
    %v777 = vadd.s32 %v776, 127
    %v778 = vshll.u32 %v777, 23
    %v779 = vor.u32 4788187, %v778
    %v780 = vand.u32 2147483647, %v779
    %v782 = vcvt.s32.f32 %v775
    %v783 = vmul.f32 %v782, %v780
    %v784 = vxor.u32 %v783, 2147483648
    %v785 = vsel %vm702, %v784, %v783
    %v786 = vsub.s32 4, %v762
    %v787 = vsel %vm702, %v786, %v762
    %v788 = vsel %vm701, %v469, %v785
    %v789 = vsel %vm701, 0, %v787
    %v790 = vcosq.f32.pop %v788
    %v791 = vsinq.f32.pop %v788
    %vm792 = vweird.f32 %v469
    %v793 = vadd.s32 %v789, 3
    %v794 = vand.u32 %v793, 3
    %vm795 = vcmp.lt.s32.totalorder %v794, 2
    %vm796 = vcmp.eq.s32.totalorder %v794, 0
    %v797 = vxor.u32 %v791, 2147483648
    %v798 = vsel %vm796, %v790, %v797
    %vm799 = vcmp.eq.s32.totalorder %v794, 2
    %v800 = vxor.u32 %v790, 2147483648
    %v801 = vsel %vm799, %v800, %v791
    %v802 = vsel %vm795, %v798, %v801
    %v803 = vsel %vm792, nan, %v802
    %v804 = vand.u32 2147483647, %v470
    %vm805 = vcmp.le.f32.partialorder %v804, 0.7853982
    %vm806 = vcmp.lt.s32.totalorder %v470, 0
    %v807 = vand.u32 %v470, 2139095040
    %v808 = vshrl.u32 %v807, 23
    %v809 = vsub.s32 %v808, 127
    %v810 = vand.u32 2147483647, %v470
    %v811 = vand.u32 %v810, 8388607
    %v812 = vor.u32 %v811, 8388608
    %v813 = vsub.s32 0, %v812
    %v814 = vadd.s32 %v809, 1
    %vm815 = vcmp.gt.s32.totalorder %v814, 0
    %v816 = vsel %vm815, %v814, 0
    %v817 = vshrl.u32 %v816, 5
    %v818 = vand.u32 %v816, 31
    %v819 = vsub.s32 32, %v818
    %v820 = vshrl.u32 683565275, %v819
    %v821 = vshll.u32 683565275, %v818
    %v822 = vshrl.u32 2475754826, %v819
    %v823 = vor.u32 %v821, %v822
    %v824 = vshll.u32 2475754826, %v818
    %v825 = vshrl.u32 2131351028, %v819
    %v826 = vor.u32 %v824, %v825
    %v827 = vshll.u32 2131351028, %v818
    %v828 = vshrl.u32 2102212464, %v819
    %v829 = vor.u32 %v827, %v828
    %v830 = vshll.u32 2102212464, %v818
    %v831 = vshrl.u32 920167782, %v819
    %v832 = vor.u32 %v830, %v831
    %v833 = vshll.u32 920167782, %v818
    %v834 = vshrl.u32 1326507024, %v819
    %v835 = vor.u32 %v833, %v834
    %vm836 = vcmp.lt.s32.totalorder %v817, 1
    %vm837 = vcmp.lt.s32.totalorder %v817, 2
    %vm838 = vcmp.lt.s32.totalorder %v817, 3
    %vm839 = vcmp.lt.s32.totalorder %v817, 4
    %v840 = vsel %vm836, %v820, %v823
    %v841 = vsel %vm839, %v829, 2102212464
    %v842 = vsel %vm838, %v826, %v841
    %v843 = vsel %vm837, %v840, %v842
    %v844 = vsel %vm836, %v823, %v826
    %v845 = vsel %vm839, %v832, 920167782
    %v846 = vsel %vm838, %v829, %v845
    %v847 = vsel %vm837, %v844, %v846
    %v848 = vsel %vm836, %v826, %v829
    %v849 = vsel %vm839, %v835, 1326507024
    %v850 = vsel %vm838, %v832, %v849
    %v851 = vsel %vm837, %v848, %v850
    %v852 = vshll.u32 %v812, 8
    %v853 = vmul.u32.u64.compose %v852, %v851
    %v854 = vextract.low.u32 %v853
    %v855 = vextract.high.u32 %v853
    %v856 = vmul.u32.u64.compose %v852, %v847
    %v857 = vextract.low.u32 %v856
    %v858 = vextract.high.u32 %v856
    %v859 = vmul.u32 %v852, %v843
    %v860 = vadd.s32 %v855, %v857
    %vm861 = vc.u32 %v855, %v857
    %v862 = vadd.s32 %v858, 1
    %v863 = vsel %vm861, %v862, %v858
    %v864 = vadd.s32 %v859, %v863
    %v865 = vadd.s32 %v864, 536870912
    %v866 = vshrl.u32 %v865, 30
    %v867 = vshll.u32 %v866, 30
    %v868 = vsub.s32 %v864, %v867
    %vm869 = vcmp.lt.s32.totalorder %v868, 0
    %v870 = vsub.s32 0, %v868
    %v871 = vsel %vm869, %v870, %v868
    %v872 = vclz %v871
    %v873 = vsub.s32 %v872, 2
    %vm874 = vcmp.gt.s32.totalorder 0, %v873
    %v875 = vsel %vm874, 0, %v873
    %v876 = vsub.s32 32, %v875
    %v877 = vshll.u32 %v868, %v875
    %v878 = vshrl.u32 %v860, %v876
    %v879 = vor.u32 %v877, %v878
    %v880 = vsub.s32 4294967266, %v875
    %v881 = vadd.s32 %v880, 127
    %v882 = vshll.u32 %v881, 23
    %v883 = vor.u32 4788187, %v882
    %v884 = vand.u32 2147483647, %v883
    %v886 = vcvt.s32.f32 %v879
    %v887 = vmul.f32 %v886, %v884
    %v888 = vxor.u32 %v887, 2147483648
    %v889 = vsel %vm806, %v888, %v887
    %v890 = vsub.s32 4, %v866
    %v891 = vsel %vm806, %v890, %v866
    %v892 = vsel %vm805, %v470, %v889
    %v893 = vsel %vm805, 0, %v891
    %v894 = vcosq.f32.pop %v892
    %v895 = vsinq.f32.pop %v892
    %vm896 = vweird.f32 %v470
    %v897 = vadd.s32 %v893, 3
    %v898 = vand.u32 %v897, 3
    %vm899 = vcmp.lt.s32.totalorder %v898, 2
    %vm900 = vcmp.eq.s32.totalorder %v898, 0
    %v901 = vxor.u32 %v895, 2147483648
    %v902 = vsel %vm900, %v894, %v901
    %vm903 = vcmp.eq.s32.totalorder %v898, 2
    %v904 = vxor.u32 %v894, 2147483648
    %v905 = vsel %vm903, %v904, %v895
    %v906 = vsel %vm899, %v902, %v905
    %v907 = vsel %vm896, nan, %v906
    %v908 = vand.u32 2147483647, %v471
    %vm909 = vcmp.le.f32.partialorder %v908, 0.7853982
    %vm910 = vcmp.lt.s32.totalorder %v471, 0
    %v911 = vand.u32 %v471, 2139095040
    %v912 = vshrl.u32 %v911, 23
    %v913 = vsub.s32 %v912, 127
    %v914 = vand.u32 2147483647, %v471
    %v915 = vand.u32 %v914, 8388607
    %v916 = vor.u32 %v915, 8388608
    %v917 = vsub.s32 0, %v916
    %v918 = vadd.s32 %v913, 1
    %vm919 = vcmp.gt.s32.totalorder %v918, 0
    %v920 = vsel %vm919, %v918, 0
    %v921 = vshrl.u32 %v920, 5
    %v922 = vand.u32 %v920, 31
    %v923 = vsub.s32 32, %v922
    %v924 = vshrl.u32 683565275, %v923
    %v925 = vshll.u32 683565275, %v922
    %v926 = vshrl.u32 2475754826, %v923
    %v927 = vor.u32 %v925, %v926
    %v928 = vshll.u32 2475754826, %v922
    %v929 = vshrl.u32 2131351028, %v923
    %v930 = vor.u32 %v928, %v929
    %v931 = vshll.u32 2131351028, %v922
    %v932 = vshrl.u32 2102212464, %v923
    %v933 = vor.u32 %v931, %v932
    %v934 = vshll.u32 2102212464, %v922
    %v935 = vshrl.u32 920167782, %v923
    %v936 = vor.u32 %v934, %v935
    %v937 = vshll.u32 920167782, %v922
    %v938 = vshrl.u32 1326507024, %v923
    %v939 = vor.u32 %v937, %v938
    %vm940 = vcmp.lt.s32.totalorder %v921, 1
    %vm941 = vcmp.lt.s32.totalorder %v921, 2
    %vm942 = vcmp.lt.s32.totalorder %v921, 3
    %vm943 = vcmp.lt.s32.totalorder %v921, 4
    %v944 = vsel %vm940, %v924, %v927
    %v945 = vsel %vm943, %v933, 2102212464
    %v946 = vsel %vm942, %v930, %v945
    %v947 = vsel %vm941, %v944, %v946
    %v948 = vsel %vm940, %v927, %v930
    %v949 = vsel %vm943, %v936, 920167782
    %v950 = vsel %vm942, %v933, %v949
    %v951 = vsel %vm941, %v948, %v950
    %v952 = vsel %vm940, %v930, %v933
    %v953 = vsel %vm943, %v939, 1326507024
    %v954 = vsel %vm942, %v936, %v953
    %v955 = vsel %vm941, %v952, %v954
    %v956 = vshll.u32 %v916, 8
    %v957 = vmul.u32.u64.compose %v956, %v955
    %v958 = vextract.low.u32 %v957
    %v959 = vextract.high.u32 %v957
    %v960 = vmul.u32.u64.compose %v956, %v951
    %v961 = vextract.low.u32 %v960
    %v962 = vextract.high.u32 %v960
    %v963 = vmul.u32 %v956, %v947
    %v964 = vadd.s32 %v959, %v961
    %vm965 = vc.u32 %v959, %v961
    %v966 = vadd.s32 %v962, 1
    %v967 = vsel %vm965, %v966, %v962
    %v968 = vadd.s32 %v963, %v967
    %v969 = vadd.s32 %v968, 536870912
    %v970 = vshrl.u32 %v969, 30
    %v971 = vshll.u32 %v970, 30
    %v972 = vsub.s32 %v968, %v971
    %vm973 = vcmp.lt.s32.totalorder %v972, 0
    %v974 = vsub.s32 0, %v972
    %v975 = vsel %vm973, %v974, %v972
    %v976 = vclz %v975
    %v977 = vsub.s32 %v976, 2
    %vm978 = vcmp.gt.s32.totalorder 0, %v977
    %v979 = vsel %vm978, 0, %v977
    %v980 = vsub.s32 32, %v979
    %v981 = vshll.u32 %v972, %v979
    %v982 = vshrl.u32 %v964, %v980
    %v983 = vor.u32 %v981, %v982
    %v984 = vsub.s32 4294967266, %v979
    %v985 = vadd.s32 %v984, 127
    %v986 = vshll.u32 %v985, 23
    %v987 = vor.u32 4788187, %v986
    %v988 = vand.u32 2147483647, %v987
    %v990 = vcvt.s32.f32 %v983
    %v991 = vmul.f32 %v990, %v988
    %v992 = vxor.u32 %v991, 2147483648
    %v993 = vsel %vm910, %v992, %v991
    %v994 = vsub.s32 4, %v970
    %v995 = vsel %vm910, %v994, %v970
    %v996 = vsel %vm909, %v471, %v993
    %v997 = vsel %vm909, 0, %v995
    %v998 = vcosq.f32.pop %v996
    %v999 = vsinq.f32.pop %v996
    %vm1000 = vweird.f32 %v471
    %v1001 = vadd.s32 %v997, 3
    %v1002 = vand.u32 %v1001, 3
    %vm1003 = vcmp.lt.s32.totalorder %v1002, 2
    %vm1004 = vcmp.eq.s32.totalorder %v1002, 0
    %v1005 = vxor.u32 %v999, 2147483648
    %v1006 = vsel %vm1004, %v998, %v1005
    %vm1007 = vcmp.eq.s32.totalorder %v1002, 2
    %v1008 = vxor.u32 %v998, 2147483648
    %v1009 = vsel %vm1007, %v1008, %v999
    %v1010 = vsel %vm1003, %v1006, %v1009
    %v1011 = vsel %vm1000, nan, %v1010
    %v1012 = vand.u32 2147483647, %v472
    %vm1013 = vcmp.le.f32.partialorder %v1012, 0.7853982
    %vm1014 = vcmp.lt.s32.totalorder %v472, 0
    %v1015 = vand.u32 %v472, 2139095040
    %v1016 = vshrl.u32 %v1015, 23
    %v1017 = vsub.s32 %v1016, 127
    %v1018 = vand.u32 2147483647, %v472
    %v1019 = vand.u32 %v1018, 8388607
    %v1020 = vor.u32 %v1019, 8388608
    %v1021 = vsub.s32 0, %v1020
    %v1022 = vadd.s32 %v1017, 1
    %vm1023 = vcmp.gt.s32.totalorder %v1022, 0
    %v1024 = vsel %vm1023, %v1022, 0
    %v1025 = vshrl.u32 %v1024, 5
    %v1026 = vand.u32 %v1024, 31
    %v1027 = vsub.s32 32, %v1026
    %v1028 = vshrl.u32 683565275, %v1027
    %v1029 = vshll.u32 683565275, %v1026
    %v1030 = vshrl.u32 2475754826, %v1027
    %v1031 = vor.u32 %v1029, %v1030
    %v1032 = vshll.u32 2475754826, %v1026
    %v1033 = vshrl.u32 2131351028, %v1027
    %v1034 = vor.u32 %v1032, %v1033
    %v1035 = vshll.u32 2131351028, %v1026
    %v1036 = vshrl.u32 2102212464, %v1027
    %v1037 = vor.u32 %v1035, %v1036
    %v1038 = vshll.u32 2102212464, %v1026
    %v1039 = vshrl.u32 920167782, %v1027
    %v1040 = vor.u32 %v1038, %v1039
    %v1041 = vshll.u32 920167782, %v1026
    %v1042 = vshrl.u32 1326507024, %v1027
    %v1043 = vor.u32 %v1041, %v1042
    %vm1044 = vcmp.lt.s32.totalorder %v1025, 1
    %vm1045 = vcmp.lt.s32.totalorder %v1025, 2
    %vm1046 = vcmp.lt.s32.totalorder %v1025, 3
    %vm1047 = vcmp.lt.s32.totalorder %v1025, 4
    %v1048 = vsel %vm1044, %v1028, %v1031
    %v1049 = vsel %vm1047, %v1037, 2102212464
    %v1050 = vsel %vm1046, %v1034, %v1049
    %v1051 = vsel %vm1045, %v1048, %v1050
    %v1052 = vsel %vm1044, %v1031, %v1034
    %v1053 = vsel %vm1047, %v1040, 920167782
    %v1054 = vsel %vm1046, %v1037, %v1053
    %v1055 = vsel %vm1045, %v1052, %v1054
    %v1056 = vsel %vm1044, %v1034, %v1037
    %v1057 = vsel %vm1047, %v1043, 1326507024
    %v1058 = vsel %vm1046, %v1040, %v1057
    %v1059 = vsel %vm1045, %v1056, %v1058
    %v1060 = vshll.u32 %v1020, 8
    %v1061 = vmul.u32.u64.compose %v1060, %v1059
    %v1062 = vextract.low.u32 %v1061
    %v1063 = vextract.high.u32 %v1061
    %v1064 = vmul.u32.u64.compose %v1060, %v1055
    %v1065 = vextract.low.u32 %v1064
    %v1066 = vextract.high.u32 %v1064
    %v1067 = vmul.u32 %v1060, %v1051
    %v1068 = vadd.s32 %v1063, %v1065
    %vm1069 = vc.u32 %v1063, %v1065
    %v1070 = vadd.s32 %v1066, 1
    %v1071 = vsel %vm1069, %v1070, %v1066
    %v1072 = vadd.s32 %v1067, %v1071
    %v1073 = vadd.s32 %v1072, 536870912
    %v1074 = vshrl.u32 %v1073, 30
    %v1075 = vshll.u32 %v1074, 30
    %v1076 = vsub.s32 %v1072, %v1075
    %vm1077 = vcmp.lt.s32.totalorder %v1076, 0
    %v1078 = vsub.s32 0, %v1076
    %v1079 = vsel %vm1077, %v1078, %v1076
    %v1080 = vclz %v1079
    %v1081 = vsub.s32 %v1080, 2
    %vm1082 = vcmp.gt.s32.totalorder 0, %v1081
    %v1083 = vsel %vm1082, 0, %v1081
    %v1084 = vsub.s32 32, %v1083
    %v1085 = vshll.u32 %v1076, %v1083
    %v1086 = vshrl.u32 %v1068, %v1084
    %v1087 = vor.u32 %v1085, %v1086
    %v1088 = vsub.s32 4294967266, %v1083
    %v1089 = vadd.s32 %v1088, 127
    %v1090 = vshll.u32 %v1089, 23
    %v1091 = vor.u32 4788187, %v1090
    %v1092 = vand.u32 2147483647, %v1091
    %v1094 = vcvt.s32.f32 %v1087
    %v1095 = vmul.f32 %v1094, %v1092
    %v1096 = vxor.u32 %v1095, 2147483648
    %v1097 = vsel %vm1014, %v1096, %v1095
    %v1098 = vsub.s32 4, %v1074
    %v1099 = vsel %vm1014, %v1098, %v1074
    %v1100 = vsel %vm1013, %v472, %v1097
    %v1101 = vsel %vm1013, 0, %v1099
    %v1102 = vcosq.f32.pop %v1100
    %v1103 = vsinq.f32.pop %v1100
    %vm1104 = vweird.f32 %v472
    %v1105 = vadd.s32 %v1101, 3
    %v1106 = vand.u32 %v1105, 3
    %vm1107 = vcmp.lt.s32.totalorder %v1106, 2
    %vm1108 = vcmp.eq.s32.totalorder %v1106, 0
    %v1109 = vxor.u32 %v1103, 2147483648
    %v1110 = vsel %vm1108, %v1102, %v1109
    %vm1111 = vcmp.eq.s32.totalorder %v1106, 2
    %v1112 = vxor.u32 %v1102, 2147483648
    %v1113 = vsel %vm1111, %v1112, %v1103
    %v1114 = vsel %vm1107, %v1110, %v1113
    %v1115 = vsel %vm1104, nan, %v1114
    %v1116 = vand.u32 2147483647, %v473
    %vm1117 = vcmp.le.f32.partialorder %v1116, 0.7853982
    %vm1118 = vcmp.lt.s32.totalorder %v473, 0
    %v1119 = vand.u32 %v473, 2139095040
    %v1120 = vshrl.u32 %v1119, 23
    %v1121 = vsub.s32 %v1120, 127
    %v1122 = vand.u32 2147483647, %v473
    %v1123 = vand.u32 %v1122, 8388607
    %v1124 = vor.u32 %v1123, 8388608
    %v1125 = vsub.s32 0, %v1124
    %v1126 = vadd.s32 %v1121, 1
    %vm1127 = vcmp.gt.s32.totalorder %v1126, 0
    %v1128 = vsel %vm1127, %v1126, 0
    %v1129 = vshrl.u32 %v1128, 5
    %v1130 = vand.u32 %v1128, 31
    %v1131 = vsub.s32 32, %v1130
    %v1132 = vshrl.u32 683565275, %v1131
    %v1133 = vshll.u32 683565275, %v1130
    %v1134 = vshrl.u32 2475754826, %v1131
    %v1135 = vor.u32 %v1133, %v1134
    %v1136 = vshll.u32 2475754826, %v1130
    %v1137 = vshrl.u32 2131351028, %v1131
    %v1138 = vor.u32 %v1136, %v1137
    %v1139 = vshll.u32 2131351028, %v1130
    %v1140 = vshrl.u32 2102212464, %v1131
    %v1141 = vor.u32 %v1139, %v1140
    %v1142 = vshll.u32 2102212464, %v1130
    %v1143 = vshrl.u32 920167782, %v1131
    %v1144 = vor.u32 %v1142, %v1143
    %v1145 = vshll.u32 920167782, %v1130
    %v1146 = vshrl.u32 1326507024, %v1131
    %v1147 = vor.u32 %v1145, %v1146
    %vm1148 = vcmp.lt.s32.totalorder %v1129, 1
    %vm1149 = vcmp.lt.s32.totalorder %v1129, 2
    %vm1150 = vcmp.lt.s32.totalorder %v1129, 3
    %vm1151 = vcmp.lt.s32.totalorder %v1129, 4
    %v1152 = vsel %vm1148, %v1132, %v1135
    %v1153 = vsel %vm1151, %v1141, 2102212464
    %v1154 = vsel %vm1150, %v1138, %v1153
    %v1155 = vsel %vm1149, %v1152, %v1154
    %v1156 = vsel %vm1148, %v1135, %v1138
    %v1157 = vsel %vm1151, %v1144, 920167782
    %v1158 = vsel %vm1150, %v1141, %v1157
    %v1159 = vsel %vm1149, %v1156, %v1158
    %v1160 = vsel %vm1148, %v1138, %v1141
    %v1161 = vsel %vm1151, %v1147, 1326507024
    %v1162 = vsel %vm1150, %v1144, %v1161
    %v1163 = vsel %vm1149, %v1160, %v1162
    %v1164 = vshll.u32 %v1124, 8
    %v1165 = vmul.u32.u64.compose %v1164, %v1163
    %v1166 = vextract.low.u32 %v1165
    %v1167 = vextract.high.u32 %v1165
    %v1168 = vmul.u32.u64.compose %v1164, %v1159
    %v1169 = vextract.low.u32 %v1168
    %v1170 = vextract.high.u32 %v1168
    %v1171 = vmul.u32 %v1164, %v1155
    %v1172 = vadd.s32 %v1167, %v1169
    %vm1173 = vc.u32 %v1167, %v1169
    %v1174 = vadd.s32 %v1170, 1
    %v1175 = vsel %vm1173, %v1174, %v1170
    %v1176 = vadd.s32 %v1171, %v1175
    %v1177 = vadd.s32 %v1176, 536870912
    %v1178 = vshrl.u32 %v1177, 30
    %v1179 = vshll.u32 %v1178, 30
    %v1180 = vsub.s32 %v1176, %v1179
    %vm1181 = vcmp.lt.s32.totalorder %v1180, 0
    %v1182 = vsub.s32 0, %v1180
    %v1183 = vsel %vm1181, %v1182, %v1180
    %v1184 = vclz %v1183
    %v1185 = vsub.s32 %v1184, 2
    %vm1186 = vcmp.gt.s32.totalorder 0, %v1185
    %v1187 = vsel %vm1186, 0, %v1185
    %v1188 = vsub.s32 32, %v1187
    %v1189 = vshll.u32 %v1180, %v1187
    %v1190 = vshrl.u32 %v1172, %v1188
    %v1191 = vor.u32 %v1189, %v1190
    %v1192 = vsub.s32 4294967266, %v1187
    %v1193 = vadd.s32 %v1192, 127
    %v1194 = vshll.u32 %v1193, 23
    %v1195 = vor.u32 4788187, %v1194
    %v1196 = vand.u32 2147483647, %v1195
    %v1198 = vcvt.s32.f32 %v1191
    %v1199 = vmul.f32 %v1198, %v1196
    %v1200 = vxor.u32 %v1199, 2147483648
    %v1201 = vsel %vm1118, %v1200, %v1199
    %v1202 = vsub.s32 4, %v1178
    %v1203 = vsel %vm1118, %v1202, %v1178
    %v1204 = vsel %vm1117, %v473, %v1201
    %v1205 = vsel %vm1117, 0, %v1203
    %v1206 = vcosq.f32.pop %v1204
    %v1207 = vsinq.f32.pop %v1204
    %vm1208 = vweird.f32 %v473
    %v1209 = vadd.s32 %v1205, 3
    %v1210 = vand.u32 %v1209, 3
    %vm1211 = vcmp.lt.s32.totalorder %v1210, 2
    %vm1212 = vcmp.eq.s32.totalorder %v1210, 0
    %v1213 = vxor.u32 %v1207, 2147483648
    %v1214 = vsel %vm1212, %v1206, %v1213
    %vm1215 = vcmp.eq.s32.totalorder %v1210, 2
    %v1216 = vxor.u32 %v1206, 2147483648
    %v1217 = vsel %vm1215, %v1216, %v1207
    %v1218 = vsel %vm1211, %v1214, %v1217
    %v1219 = vsel %vm1208, nan, %v1218
    %v1220 = vand.u32 2147483647, %v474
    %vm1221 = vcmp.le.f32.partialorder %v1220, 0.7853982
    %vm1222 = vcmp.lt.s32.totalorder %v474, 0
    %v1223 = vand.u32 %v474, 2139095040
    %v1224 = vshrl.u32 %v1223, 23
    %v1225 = vsub.s32 %v1224, 127
    %v1226 = vand.u32 2147483647, %v474
    %v1227 = vand.u32 %v1226, 8388607
    %v1228 = vor.u32 %v1227, 8388608
    %v1229 = vsub.s32 0, %v1228
    %v1230 = vadd.s32 %v1225, 1
    %vm1231 = vcmp.gt.s32.totalorder %v1230, 0
    %v1232 = vsel %vm1231, %v1230, 0
    %v1233 = vshrl.u32 %v1232, 5
    %v1234 = vand.u32 %v1232, 31
    %v1235 = vsub.s32 32, %v1234
    %v1236 = vshrl.u32 683565275, %v1235
    %v1237 = vshll.u32 683565275, %v1234
    %v1238 = vshrl.u32 2475754826, %v1235
    %v1239 = vor.u32 %v1237, %v1238
    %v1240 = vshll.u32 2475754826, %v1234
    %v1241 = vshrl.u32 2131351028, %v1235
    %v1242 = vor.u32 %v1240, %v1241
    %v1243 = vshll.u32 2131351028, %v1234
    %v1244 = vshrl.u32 2102212464, %v1235
    %v1245 = vor.u32 %v1243, %v1244
    %v1246 = vshll.u32 2102212464, %v1234
    %v1247 = vshrl.u32 920167782, %v1235
    %v1248 = vor.u32 %v1246, %v1247
    %v1249 = vshll.u32 920167782, %v1234
    %v1250 = vshrl.u32 1326507024, %v1235
    %v1251 = vor.u32 %v1249, %v1250
    %vm1252 = vcmp.lt.s32.totalorder %v1233, 1
    %vm1253 = vcmp.lt.s32.totalorder %v1233, 2
    %vm1254 = vcmp.lt.s32.totalorder %v1233, 3
    %vm1255 = vcmp.lt.s32.totalorder %v1233, 4
    %v1256 = vsel %vm1252, %v1236, %v1239
    %v1257 = vsel %vm1255, %v1245, 2102212464
    %v1258 = vsel %vm1254, %v1242, %v1257
    %v1259 = vsel %vm1253, %v1256, %v1258
    %v1260 = vsel %vm1252, %v1239, %v1242
    %v1261 = vsel %vm1255, %v1248, 920167782
    %v1262 = vsel %vm1254, %v1245, %v1261
    %v1263 = vsel %vm1253, %v1260, %v1262
    %v1264 = vsel %vm1252, %v1242, %v1245
    %v1265 = vsel %vm1255, %v1251, 1326507024
    %v1266 = vsel %vm1254, %v1248, %v1265
    %v1267 = vsel %vm1253, %v1264, %v1266
    %v1268 = vshll.u32 %v1228, 8
    %v1269 = vmul.u32.u64.compose %v1268, %v1267
    %v1270 = vextract.low.u32 %v1269
    %v1271 = vextract.high.u32 %v1269
    %v1272 = vmul.u32.u64.compose %v1268, %v1263
    %v1273 = vextract.low.u32 %v1272
    %v1274 = vextract.high.u32 %v1272
    %v1275 = vmul.u32 %v1268, %v1259
    %v1276 = vadd.s32 %v1271, %v1273
    %vm1277 = vc.u32 %v1271, %v1273
    %v1278 = vadd.s32 %v1274, 1
    %v1279 = vsel %vm1277, %v1278, %v1274
    %v1280 = vadd.s32 %v1275, %v1279
    %v1281 = vadd.s32 %v1280, 536870912
    %v1282 = vshrl.u32 %v1281, 30
    %v1283 = vshll.u32 %v1282, 30
    %v1284 = vsub.s32 %v1280, %v1283
    %vm1285 = vcmp.lt.s32.totalorder %v1284, 0
    %v1286 = vsub.s32 0, %v1284
    %v1287 = vsel %vm1285, %v1286, %v1284
    %v1288 = vclz %v1287
    %v1289 = vsub.s32 %v1288, 2
    %vm1290 = vcmp.gt.s32.totalorder 0, %v1289
    %v1291 = vsel %vm1290, 0, %v1289
    %v1292 = vsub.s32 32, %v1291
    %v1293 = vshll.u32 %v1284, %v1291
    %v1294 = vshrl.u32 %v1276, %v1292
    %v1295 = vor.u32 %v1293, %v1294
    %v1296 = vsub.s32 4294967266, %v1291
    %v1297 = vadd.s32 %v1296, 127
    %v1298 = vshll.u32 %v1297, 23
    %v1299 = vor.u32 4788187, %v1298
    %v1300 = vand.u32 2147483647, %v1299
    %v1302 = vcvt.s32.f32 %v1295
    %v1303 = vmul.f32 %v1302, %v1300
    %v1304 = vxor.u32 %v1303, 2147483648
    %v1305 = vsel %vm1222, %v1304, %v1303
    %v1306 = vsub.s32 4, %v1282
    %v1307 = vsel %vm1222, %v1306, %v1282
    %v1308 = vsel %vm1221, %v474, %v1305
    %v1309 = vsel %vm1221, 0, %v1307
    %v1310 = vcosq.f32.pop %v1308
    %v1311 = vsinq.f32.pop %v1308
    %vm1312 = vweird.f32 %v474
    %v1313 = vadd.s32 %v1309, 3
    %v1314 = vand.u32 %v1313, 3
    %vm1315 = vcmp.lt.s32.totalorder %v1314, 2
    %vm1316 = vcmp.eq.s32.totalorder %v1314, 0
    %v1317 = vxor.u32 %v1311, 2147483648
    %v1318 = vsel %vm1316, %v1310, %v1317
    %vm1319 = vcmp.eq.s32.totalorder %v1314, 2
    %v1320 = vxor.u32 %v1310, 2147483648
    %v1321 = vsel %vm1319, %v1320, %v1311
    %v1322 = vsel %vm1315, %v1318, %v1321
    %v1323 = vsel %vm1312, nan, %v1322
    %v1324 = vand.u32 2147483647, %v475
    %vm1325 = vcmp.le.f32.partialorder %v1324, 0.7853982
    %vm1326 = vcmp.lt.s32.totalorder %v475, 0
    %v1327 = vand.u32 %v475, 2139095040
    %v1328 = vshrl.u32 %v1327, 23
    %v1329 = vsub.s32 %v1328, 127
    %v1330 = vand.u32 2147483647, %v475
    %v1331 = vand.u32 %v1330, 8388607
    %v1332 = vor.u32 %v1331, 8388608
    %v1333 = vsub.s32 0, %v1332
    %v1334 = vadd.s32 %v1329, 1
    %vm1335 = vcmp.gt.s32.totalorder %v1334, 0
    %v1336 = vsel %vm1335, %v1334, 0
    %v1337 = vshrl.u32 %v1336, 5
    %v1338 = vand.u32 %v1336, 31
    %v1339 = vsub.s32 32, %v1338
    %v1340 = vshrl.u32 683565275, %v1339
    %v1341 = vshll.u32 683565275, %v1338
    %v1342 = vshrl.u32 2475754826, %v1339
    %v1343 = vor.u32 %v1341, %v1342
    %v1344 = vshll.u32 2475754826, %v1338
    %v1345 = vshrl.u32 2131351028, %v1339
    %v1346 = vor.u32 %v1344, %v1345
    %v1347 = vshll.u32 2131351028, %v1338
    %v1348 = vshrl.u32 2102212464, %v1339
    %v1349 = vor.u32 %v1347, %v1348
    %v1350 = vshll.u32 2102212464, %v1338
    %v1351 = vshrl.u32 920167782, %v1339
    %v1352 = vor.u32 %v1350, %v1351
    %v1353 = vshll.u32 920167782, %v1338
    %v1354 = vshrl.u32 1326507024, %v1339
    %v1355 = vor.u32 %v1353, %v1354
    %vm1356 = vcmp.lt.s32.totalorder %v1337, 1
    %vm1357 = vcmp.lt.s32.totalorder %v1337, 2
    %vm1358 = vcmp.lt.s32.totalorder %v1337, 3
    %vm1359 = vcmp.lt.s32.totalorder %v1337, 4
    %v1360 = vsel %vm1356, %v1340, %v1343
    %v1361 = vsel %vm1359, %v1349, 2102212464
    %v1362 = vsel %vm1358, %v1346, %v1361
    %v1363 = vsel %vm1357, %v1360, %v1362
    %v1364 = vsel %vm1356, %v1343, %v1346
    %v1365 = vsel %vm1359, %v1352, 920167782
    %v1366 = vsel %vm1358, %v1349, %v1365
    %v1367 = vsel %vm1357, %v1364, %v1366
    %v1368 = vsel %vm1356, %v1346, %v1349
    %v1369 = vsel %vm1359, %v1355, 1326507024
    %v1370 = vsel %vm1358, %v1352, %v1369
    %v1371 = vsel %vm1357, %v1368, %v1370
    %v1372 = vshll.u32 %v1332, 8
    %v1373 = vmul.u32.u64.compose %v1372, %v1371
    %v1374 = vextract.low.u32 %v1373
    %v1375 = vextract.high.u32 %v1373
    %v1376 = vmul.u32.u64.compose %v1372, %v1367
    %v1377 = vextract.low.u32 %v1376
    %v1378 = vextract.high.u32 %v1376
    %v1379 = vmul.u32 %v1372, %v1363
    %v1380 = vadd.s32 %v1375, %v1377
    %vm1381 = vc.u32 %v1375, %v1377
    %v1382 = vadd.s32 %v1378, 1
    %v1383 = vsel %vm1381, %v1382, %v1378
    %v1384 = vadd.s32 %v1379, %v1383
    %v1385 = vadd.s32 %v1384, 536870912
    %v1386 = vshrl.u32 %v1385, 30
    %v1387 = vshll.u32 %v1386, 30
    %v1388 = vsub.s32 %v1384, %v1387
    %vm1389 = vcmp.lt.s32.totalorder %v1388, 0
    %v1390 = vsub.s32 0, %v1388
    %v1391 = vsel %vm1389, %v1390, %v1388
    %v1392 = vclz %v1391
    %v1393 = vsub.s32 %v1392, 2
    %vm1394 = vcmp.gt.s32.totalorder 0, %v1393
    %v1395 = vsel %vm1394, 0, %v1393
    %v1396 = vsub.s32 32, %v1395
    %v1397 = vshll.u32 %v1388, %v1395
    %v1398 = vshrl.u32 %v1380, %v1396
    %v1399 = vor.u32 %v1397, %v1398
    %v1400 = vsub.s32 4294967266, %v1395
    %v1401 = vadd.s32 %v1400, 127
    %v1402 = vshll.u32 %v1401, 23
    %v1403 = vor.u32 4788187, %v1402
    %v1404 = vand.u32 2147483647, %v1403
    %v1406 = vcvt.s32.f32 %v1399
    %v1407 = vmul.f32 %v1406, %v1404
    %v1408 = vxor.u32 %v1407, 2147483648
    %v1409 = vsel %vm1326, %v1408, %v1407
    %v1410 = vsub.s32 4, %v1386
    %v1411 = vsel %vm1326, %v1410, %v1386
    %v1412 = vsel %vm1325, %v475, %v1409
    %v1413 = vsel %vm1325, 0, %v1411
    %v1414 = vcosq.f32.pop %v1412
    %v1415 = vsinq.f32.pop %v1412
    %vm1416 = vweird.f32 %v475
    %v1417 = vadd.s32 %v1413, 3
    %v1418 = vand.u32 %v1417, 3
    %vm1419 = vcmp.lt.s32.totalorder %v1418, 2
    %vm1420 = vcmp.eq.s32.totalorder %v1418, 0
    %v1421 = vxor.u32 %v1415, 2147483648
    %v1422 = vsel %vm1420, %v1414, %v1421
    %vm1423 = vcmp.eq.s32.totalorder %v1418, 2
    %v1424 = vxor.u32 %v1414, 2147483648
    %v1425 = vsel %vm1423, %v1424, %v1415
    %v1426 = vsel %vm1419, %v1422, %v1425
    %v1427 = vsel %vm1416, nan, %v1426
    %v1428 = vand.u32 2147483647, %v476
    %vm1429 = vcmp.le.f32.partialorder %v1428, 0.7853982
    %vm1430 = vcmp.lt.s32.totalorder %v476, 0
    %v1431 = vand.u32 %v476, 2139095040
    %v1432 = vshrl.u32 %v1431, 23
    %v1433 = vsub.s32 %v1432, 127
    %v1434 = vand.u32 2147483647, %v476
    %v1435 = vand.u32 %v1434, 8388607
    %v1436 = vor.u32 %v1435, 8388608
    %v1437 = vsub.s32 0, %v1436
    %v1438 = vadd.s32 %v1433, 1
    %vm1439 = vcmp.gt.s32.totalorder %v1438, 0
    %v1440 = vsel %vm1439, %v1438, 0
    %v1441 = vshrl.u32 %v1440, 5
    %v1442 = vand.u32 %v1440, 31
    %v1443 = vsub.s32 32, %v1442
    %v1444 = vshrl.u32 683565275, %v1443
    %v1445 = vshll.u32 683565275, %v1442
    %v1446 = vshrl.u32 2475754826, %v1443
    %v1447 = vor.u32 %v1445, %v1446
    %v1448 = vshll.u32 2475754826, %v1442
    %v1449 = vshrl.u32 2131351028, %v1443
    %v1450 = vor.u32 %v1448, %v1449
    %v1451 = vshll.u32 2131351028, %v1442
    %v1452 = vshrl.u32 2102212464, %v1443
    %v1453 = vor.u32 %v1451, %v1452
    %v1454 = vshll.u32 2102212464, %v1442
    %v1455 = vshrl.u32 920167782, %v1443
    %v1456 = vor.u32 %v1454, %v1455
    %v1457 = vshll.u32 920167782, %v1442
    %v1458 = vshrl.u32 1326507024, %v1443
    %v1459 = vor.u32 %v1457, %v1458
    %vm1460 = vcmp.lt.s32.totalorder %v1441, 1
    %vm1461 = vcmp.lt.s32.totalorder %v1441, 2
    %vm1462 = vcmp.lt.s32.totalorder %v1441, 3
    %vm1463 = vcmp.lt.s32.totalorder %v1441, 4
    %v1464 = vsel %vm1460, %v1444, %v1447
    %v1465 = vsel %vm1463, %v1453, 2102212464
    %v1466 = vsel %vm1462, %v1450, %v1465
    %v1467 = vsel %vm1461, %v1464, %v1466
    %v1468 = vsel %vm1460, %v1447, %v1450
    %v1469 = vsel %vm1463, %v1456, 920167782
    %v1470 = vsel %vm1462, %v1453, %v1469
    %v1471 = vsel %vm1461, %v1468, %v1470
    %v1472 = vsel %vm1460, %v1450, %v1453
    %v1473 = vsel %vm1463, %v1459, 1326507024
    %v1474 = vsel %vm1462, %v1456, %v1473
    %v1475 = vsel %vm1461, %v1472, %v1474
    %v1476 = vshll.u32 %v1436, 8
    %v1477 = vmul.u32.u64.compose %v1476, %v1475
    %v1478 = vextract.low.u32 %v1477
    %v1479 = vextract.high.u32 %v1477
    %v1480 = vmul.u32.u64.compose %v1476, %v1471
    %v1481 = vextract.low.u32 %v1480
    %v1482 = vextract.high.u32 %v1480
    %v1483 = vmul.u32 %v1476, %v1467
    %v1484 = vadd.s32 %v1479, %v1481
    %vm1485 = vc.u32 %v1479, %v1481
    %v1486 = vadd.s32 %v1482, 1
    %v1487 = vsel %vm1485, %v1486, %v1482
    %v1488 = vadd.s32 %v1483, %v1487
    %v1489 = vadd.s32 %v1488, 536870912
    %v1490 = vshrl.u32 %v1489, 30
    %v1491 = vshll.u32 %v1490, 30
    %v1492 = vsub.s32 %v1488, %v1491
    %vm1493 = vcmp.lt.s32.totalorder %v1492, 0
    %v1494 = vsub.s32 0, %v1492
    %v1495 = vsel %vm1493, %v1494, %v1492
    %v1496 = vclz %v1495
    %v1497 = vsub.s32 %v1496, 2
    %vm1498 = vcmp.gt.s32.totalorder 0, %v1497
    %v1499 = vsel %vm1498, 0, %v1497
    %v1500 = vsub.s32 32, %v1499
    %v1501 = vshll.u32 %v1492, %v1499
    %v1502 = vshrl.u32 %v1484, %v1500
    %v1503 = vor.u32 %v1501, %v1502
    %v1504 = vsub.s32 4294967266, %v1499
    %v1505 = vadd.s32 %v1504, 127
    %v1506 = vshll.u32 %v1505, 23
    %v1507 = vor.u32 4788187, %v1506
    %v1508 = vand.u32 2147483647, %v1507
    %v1510 = vcvt.s32.f32 %v1503
    %v1511 = vmul.f32 %v1510, %v1508
    %v1512 = vxor.u32 %v1511, 2147483648
    %v1513 = vsel %vm1430, %v1512, %v1511
    %v1514 = vsub.s32 4, %v1490
    %v1515 = vsel %vm1430, %v1514, %v1490
    %v1516 = vsel %vm1429, %v476, %v1513
    %v1517 = vsel %vm1429, 0, %v1515
    %v1518 = vcosq.f32.pop %v1516
    %v1519 = vsinq.f32.pop %v1516
    %vm1520 = vweird.f32 %v476
    %v1521 = vadd.s32 %v1517, 3
    %v1522 = vand.u32 %v1521, 3
    %vm1523 = vcmp.lt.s32.totalorder %v1522, 2
    %vm1524 = vcmp.eq.s32.totalorder %v1522, 0
    %v1525 = vxor.u32 %v1519, 2147483648
    %v1526 = vsel %vm1524, %v1518, %v1525
    %vm1527 = vcmp.eq.s32.totalorder %v1522, 2
    %v1528 = vxor.u32 %v1518, 2147483648
    %v1529 = vsel %vm1527, %v1528, %v1519
    %v1530 = vsel %vm1523, %v1526, %v1529
    %v1531 = vsel %vm1520, nan, %v1530
    %v1532 = vand.u32 2147483647, %v477
    %vm1533 = vcmp.le.f32.partialorder %v1532, 0.7853982
    %vm1534 = vcmp.lt.s32.totalorder %v477, 0
    %v1535 = vand.u32 %v477, 2139095040
    %v1536 = vshrl.u32 %v1535, 23
    %v1537 = vsub.s32 %v1536, 127
    %v1538 = vand.u32 2147483647, %v477
    %v1539 = vand.u32 %v1538, 8388607
    %v1540 = vor.u32 %v1539, 8388608
    %v1541 = vsub.s32 0, %v1540
    %v1542 = vadd.s32 %v1537, 1
    %vm1543 = vcmp.gt.s32.totalorder %v1542, 0
    %v1544 = vsel %vm1543, %v1542, 0
    %v1545 = vshrl.u32 %v1544, 5
    %v1546 = vand.u32 %v1544, 31
    %v1547 = vsub.s32 32, %v1546
    %v1548 = vshrl.u32 683565275, %v1547
    %v1549 = vshll.u32 683565275, %v1546
    %v1550 = vshrl.u32 2475754826, %v1547
    %v1551 = vor.u32 %v1549, %v1550
    %v1552 = vshll.u32 2475754826, %v1546
    %v1553 = vshrl.u32 2131351028, %v1547
    %v1554 = vor.u32 %v1552, %v1553
    %v1555 = vshll.u32 2131351028, %v1546
    %v1556 = vshrl.u32 2102212464, %v1547
    %v1557 = vor.u32 %v1555, %v1556
    %v1558 = vshll.u32 2102212464, %v1546
    %v1559 = vshrl.u32 920167782, %v1547
    %v1560 = vor.u32 %v1558, %v1559
    %v1561 = vshll.u32 920167782, %v1546
    %v1562 = vshrl.u32 1326507024, %v1547
    %v1563 = vor.u32 %v1561, %v1562
    %vm1564 = vcmp.lt.s32.totalorder %v1545, 1
    %vm1565 = vcmp.lt.s32.totalorder %v1545, 2
    %vm1566 = vcmp.lt.s32.totalorder %v1545, 3
    %vm1567 = vcmp.lt.s32.totalorder %v1545, 4
    %v1568 = vsel %vm1564, %v1548, %v1551
    %v1569 = vsel %vm1567, %v1557, 2102212464
    %v1570 = vsel %vm1566, %v1554, %v1569
    %v1571 = vsel %vm1565, %v1568, %v1570
    %v1572 = vsel %vm1564, %v1551, %v1554
    %v1573 = vsel %vm1567, %v1560, 920167782
    %v1574 = vsel %vm1566, %v1557, %v1573
    %v1575 = vsel %vm1565, %v1572, %v1574
    %v1576 = vsel %vm1564, %v1554, %v1557
    %v1577 = vsel %vm1567, %v1563, 1326507024
    %v1578 = vsel %vm1566, %v1560, %v1577
    %v1579 = vsel %vm1565, %v1576, %v1578
    %v1580 = vshll.u32 %v1540, 8
    %v1581 = vmul.u32.u64.compose %v1580, %v1579
    %v1582 = vextract.low.u32 %v1581
    %v1583 = vextract.high.u32 %v1581
    %v1584 = vmul.u32.u64.compose %v1580, %v1575
    %v1585 = vextract.low.u32 %v1584
    %v1586 = vextract.high.u32 %v1584
    %v1587 = vmul.u32 %v1580, %v1571
    %v1588 = vadd.s32 %v1583, %v1585
    %vm1589 = vc.u32 %v1583, %v1585
    %v1590 = vadd.s32 %v1586, 1
    %v1591 = vsel %vm1589, %v1590, %v1586
    %v1592 = vadd.s32 %v1587, %v1591
    %v1593 = vadd.s32 %v1592, 536870912
    %v1594 = vshrl.u32 %v1593, 30
    %v1595 = vshll.u32 %v1594, 30
    %v1596 = vsub.s32 %v1592, %v1595
    %vm1597 = vcmp.lt.s32.totalorder %v1596, 0
    %v1598 = vsub.s32 0, %v1596
    %v1599 = vsel %vm1597, %v1598, %v1596
    %v1600 = vclz %v1599
    %v1601 = vsub.s32 %v1600, 2
    %vm1602 = vcmp.gt.s32.totalorder 0, %v1601
    %v1603 = vsel %vm1602, 0, %v1601
    %v1604 = vsub.s32 32, %v1603
    %v1605 = vshll.u32 %v1596, %v1603
    %v1606 = vshrl.u32 %v1588, %v1604
    %v1607 = vor.u32 %v1605, %v1606
    %v1608 = vsub.s32 4294967266, %v1603
    %v1609 = vadd.s32 %v1608, 127
    %v1610 = vshll.u32 %v1609, 23
    %v1611 = vor.u32 4788187, %v1610
    %v1612 = vand.u32 2147483647, %v1611
    %v1614 = vcvt.s32.f32 %v1607
    %v1615 = vmul.f32 %v1614, %v1612
    %v1616 = vxor.u32 %v1615, 2147483648
    %v1617 = vsel %vm1534, %v1616, %v1615
    %v1618 = vsub.s32 4, %v1594
    %v1619 = vsel %vm1534, %v1618, %v1594
    %v1620 = vsel %vm1533, %v477, %v1617
    %v1621 = vsel %vm1533, 0, %v1619
    %v1622 = vcosq.f32.pop %v1620
    %v1623 = vsinq.f32.pop %v1620
    %vm1624 = vweird.f32 %v477
    %v1625 = vadd.s32 %v1621, 3
    %v1626 = vand.u32 %v1625, 3
    %vm1627 = vcmp.lt.s32.totalorder %v1626, 2
    %vm1628 = vcmp.eq.s32.totalorder %v1626, 0
    %v1629 = vxor.u32 %v1623, 2147483648
    %v1630 = vsel %vm1628, %v1622, %v1629
    %vm1631 = vcmp.eq.s32.totalorder %v1626, 2
    %v1632 = vxor.u32 %v1622, 2147483648
    %v1633 = vsel %vm1631, %v1632, %v1623
    %v1634 = vsel %vm1627, %v1630, %v1633
    %v1635 = vsel %vm1624, nan, %v1634
    %v1636 = vand.u32 2147483647, %v478
    %vm1637 = vcmp.le.f32.partialorder %v1636, 0.7853982
    %vm1638 = vcmp.lt.s32.totalorder %v478, 0
    %v1639 = vand.u32 %v478, 2139095040
    %v1640 = vshrl.u32 %v1639, 23
    %v1641 = vsub.s32 %v1640, 127
    %v1642 = vand.u32 2147483647, %v478
    %v1643 = vand.u32 %v1642, 8388607
    %v1644 = vor.u32 %v1643, 8388608
    %v1645 = vsub.s32 0, %v1644
    %v1646 = vadd.s32 %v1641, 1
    %vm1647 = vcmp.gt.s32.totalorder %v1646, 0
    %v1648 = vsel %vm1647, %v1646, 0
    %v1649 = vshrl.u32 %v1648, 5
    %v1650 = vand.u32 %v1648, 31
    %v1651 = vsub.s32 32, %v1650
    %v1652 = vshrl.u32 683565275, %v1651
    %v1653 = vshll.u32 683565275, %v1650
    %v1654 = vshrl.u32 2475754826, %v1651
    %v1655 = vor.u32 %v1653, %v1654
    %v1656 = vshll.u32 2475754826, %v1650
    %v1657 = vshrl.u32 2131351028, %v1651
    %v1658 = vor.u32 %v1656, %v1657
    %v1659 = vshll.u32 2131351028, %v1650
    %v1660 = vshrl.u32 2102212464, %v1651
    %v1661 = vor.u32 %v1659, %v1660
    %v1662 = vshll.u32 2102212464, %v1650
    %v1663 = vshrl.u32 920167782, %v1651
    %v1664 = vor.u32 %v1662, %v1663
    %v1665 = vshll.u32 920167782, %v1650
    %v1666 = vshrl.u32 1326507024, %v1651
    %v1667 = vor.u32 %v1665, %v1666
    %vm1668 = vcmp.lt.s32.totalorder %v1649, 1
    %vm1669 = vcmp.lt.s32.totalorder %v1649, 2
    %vm1670 = vcmp.lt.s32.totalorder %v1649, 3
    %vm1671 = vcmp.lt.s32.totalorder %v1649, 4
    %v1672 = vsel %vm1668, %v1652, %v1655
    %v1673 = vsel %vm1671, %v1661, 2102212464
    %v1674 = vsel %vm1670, %v1658, %v1673
    %v1675 = vsel %vm1669, %v1672, %v1674
    %v1676 = vsel %vm1668, %v1655, %v1658
    %v1677 = vsel %vm1671, %v1664, 920167782
    %v1678 = vsel %vm1670, %v1661, %v1677
    %v1679 = vsel %vm1669, %v1676, %v1678
    %v1680 = vsel %vm1668, %v1658, %v1661
    %v1681 = vsel %vm1671, %v1667, 1326507024
    %v1682 = vsel %vm1670, %v1664, %v1681
    %v1683 = vsel %vm1669, %v1680, %v1682
    %v1684 = vshll.u32 %v1644, 8
    %v1685 = vmul.u32.u64.compose %v1684, %v1683
    %v1686 = vextract.low.u32 %v1685
    %v1687 = vextract.high.u32 %v1685
    %v1688 = vmul.u32.u64.compose %v1684, %v1679
    %v1689 = vextract.low.u32 %v1688
    %v1690 = vextract.high.u32 %v1688
    %v1691 = vmul.u32 %v1684, %v1675
    %v1692 = vadd.s32 %v1687, %v1689
    %vm1693 = vc.u32 %v1687, %v1689
    %v1694 = vadd.s32 %v1690, 1
    %v1695 = vsel %vm1693, %v1694, %v1690
    %v1696 = vadd.s32 %v1691, %v1695
    %v1697 = vadd.s32 %v1696, 536870912
    %v1698 = vshrl.u32 %v1697, 30
    %v1699 = vshll.u32 %v1698, 30
    %v1700 = vsub.s32 %v1696, %v1699
    %vm1701 = vcmp.lt.s32.totalorder %v1700, 0
    %v1702 = vsub.s32 0, %v1700
    %v1703 = vsel %vm1701, %v1702, %v1700
    %v1704 = vclz %v1703
    %v1705 = vsub.s32 %v1704, 2
    %vm1706 = vcmp.gt.s32.totalorder 0, %v1705
    %v1707 = vsel %vm1706, 0, %v1705
    %v1708 = vsub.s32 32, %v1707
    %v1709 = vshll.u32 %v1700, %v1707
    %v1710 = vshrl.u32 %v1692, %v1708
    %v1711 = vor.u32 %v1709, %v1710
    %v1712 = vsub.s32 4294967266, %v1707
    %v1713 = vadd.s32 %v1712, 127
    %v1714 = vshll.u32 %v1713, 23
    %v1715 = vor.u32 4788187, %v1714
    %v1716 = vand.u32 2147483647, %v1715
    %v1718 = vcvt.s32.f32 %v1711
    %v1719 = vmul.f32 %v1718, %v1716
    %v1720 = vxor.u32 %v1719, 2147483648
    %v1721 = vsel %vm1638, %v1720, %v1719
    %v1722 = vsub.s32 4, %v1698
    %v1723 = vsel %vm1638, %v1722, %v1698
    %v1724 = vsel %vm1637, %v478, %v1721
    %v1725 = vsel %vm1637, 0, %v1723
    %v1726 = vcosq.f32.pop %v1724
    %v1727 = vsinq.f32.pop %v1724
    %vm1728 = vweird.f32 %v478
    %v1729 = vadd.s32 %v1725, 3
    %v1730 = vand.u32 %v1729, 3
    %vm1731 = vcmp.lt.s32.totalorder %v1730, 2
    %vm1732 = vcmp.eq.s32.totalorder %v1730, 0
    %v1733 = vxor.u32 %v1727, 2147483648
    %v1734 = vsel %vm1732, %v1726, %v1733
    %vm1735 = vcmp.eq.s32.totalorder %v1730, 2
    %v1736 = vxor.u32 %v1726, 2147483648
    %v1737 = vsel %vm1735, %v1736, %v1727
    %v1738 = vsel %vm1731, %v1734, %v1737
    %v1739 = vsel %vm1728, nan, %v1738
    %v1740 = vand.u32 2147483647, %v479
    %vm1741 = vcmp.le.f32.partialorder %v1740, 0.7853982
    %vm1742 = vcmp.lt.s32.totalorder %v479, 0
    %v1743 = vand.u32 %v479, 2139095040
    %v1744 = vshrl.u32 %v1743, 23
    %v1745 = vsub.s32 %v1744, 127
    %v1746 = vand.u32 2147483647, %v479
    %v1747 = vand.u32 %v1746, 8388607
    %v1748 = vor.u32 %v1747, 8388608
    %v1749 = vsub.s32 0, %v1748
    %v1750 = vadd.s32 %v1745, 1
    %vm1751 = vcmp.gt.s32.totalorder %v1750, 0
    %v1752 = vsel %vm1751, %v1750, 0
    %v1753 = vshrl.u32 %v1752, 5
    %v1754 = vand.u32 %v1752, 31
    %v1755 = vsub.s32 32, %v1754
    %v1756 = vshrl.u32 683565275, %v1755
    %v1757 = vshll.u32 683565275, %v1754
    %v1758 = vshrl.u32 2475754826, %v1755
    %v1759 = vor.u32 %v1757, %v1758
    %v1760 = vshll.u32 2475754826, %v1754
    %v1761 = vshrl.u32 2131351028, %v1755
    %v1762 = vor.u32 %v1760, %v1761
    %v1763 = vshll.u32 2131351028, %v1754
    %v1764 = vshrl.u32 2102212464, %v1755
    %v1765 = vor.u32 %v1763, %v1764
    %v1766 = vshll.u32 2102212464, %v1754
    %v1767 = vshrl.u32 920167782, %v1755
    %v1768 = vor.u32 %v1766, %v1767
    %v1769 = vshll.u32 920167782, %v1754
    %v1770 = vshrl.u32 1326507024, %v1755
    %v1771 = vor.u32 %v1769, %v1770
    %vm1772 = vcmp.lt.s32.totalorder %v1753, 1
    %vm1773 = vcmp.lt.s32.totalorder %v1753, 2
    %vm1774 = vcmp.lt.s32.totalorder %v1753, 3
    %vm1775 = vcmp.lt.s32.totalorder %v1753, 4
    %v1776 = vsel %vm1772, %v1756, %v1759
    %v1777 = vsel %vm1775, %v1765, 2102212464
    %v1778 = vsel %vm1774, %v1762, %v1777
    %v1779 = vsel %vm1773, %v1776, %v1778
    %v1780 = vsel %vm1772, %v1759, %v1762
    %v1781 = vsel %vm1775, %v1768, 920167782
    %v1782 = vsel %vm1774, %v1765, %v1781
    %v1783 = vsel %vm1773, %v1780, %v1782
    %v1784 = vsel %vm1772, %v1762, %v1765
    %v1785 = vsel %vm1775, %v1771, 1326507024
    %v1786 = vsel %vm1774, %v1768, %v1785
    %v1787 = vsel %vm1773, %v1784, %v1786
    %v1788 = vshll.u32 %v1748, 8
    %v1789 = vmul.u32.u64.compose %v1788, %v1787
    %v1790 = vextract.low.u32 %v1789
    %v1791 = vextract.high.u32 %v1789
    %v1792 = vmul.u32.u64.compose %v1788, %v1783
    %v1793 = vextract.low.u32 %v1792
    %v1794 = vextract.high.u32 %v1792
    %v1795 = vmul.u32 %v1788, %v1779
    %v1796 = vadd.s32 %v1791, %v1793
    %vm1797 = vc.u32 %v1791, %v1793
    %v1798 = vadd.s32 %v1794, 1
    %v1799 = vsel %vm1797, %v1798, %v1794
    %v1800 = vadd.s32 %v1795, %v1799
    %v1801 = vadd.s32 %v1800, 536870912
    %v1802 = vshrl.u32 %v1801, 30
    %v1803 = vshll.u32 %v1802, 30
    %v1804 = vsub.s32 %v1800, %v1803
    %vm1805 = vcmp.lt.s32.totalorder %v1804, 0
    %v1806 = vsub.s32 0, %v1804
    %v1807 = vsel %vm1805, %v1806, %v1804
    %v1808 = vclz %v1807
    %v1809 = vsub.s32 %v1808, 2
    %vm1810 = vcmp.gt.s32.totalorder 0, %v1809
    %v1811 = vsel %vm1810, 0, %v1809
    %v1812 = vsub.s32 32, %v1811
    %v1813 = vshll.u32 %v1804, %v1811
    %v1814 = vshrl.u32 %v1796, %v1812
    %v1815 = vor.u32 %v1813, %v1814
    %v1816 = vsub.s32 4294967266, %v1811
    %v1817 = vadd.s32 %v1816, 127
    %v1818 = vshll.u32 %v1817, 23
    %v1819 = vor.u32 4788187, %v1818
    %v1820 = vand.u32 2147483647, %v1819
    %v1822 = vcvt.s32.f32 %v1815
    %v1823 = vmul.f32 %v1822, %v1820
    %v1824 = vxor.u32 %v1823, 2147483648
    %v1825 = vsel %vm1742, %v1824, %v1823
    %v1826 = vsub.s32 4, %v1802
    %v1827 = vsel %vm1742, %v1826, %v1802
    %v1828 = vsel %vm1741, %v479, %v1825
    %v1829 = vsel %vm1741, 0, %v1827
    %v1830 = vcosq.f32.pop %v1828
    %v1831 = vsinq.f32.pop %v1828
    %vm1832 = vweird.f32 %v479
    %v1833 = vadd.s32 %v1829, 3
    %v1834 = vand.u32 %v1833, 3
    %vm1835 = vcmp.lt.s32.totalorder %v1834, 2
    %vm1836 = vcmp.eq.s32.totalorder %v1834, 0
    %v1837 = vxor.u32 %v1831, 2147483648
    %v1838 = vsel %vm1836, %v1830, %v1837
    %vm1839 = vcmp.eq.s32.totalorder %v1834, 2
    %v1840 = vxor.u32 %v1830, 2147483648
    %v1841 = vsel %vm1839, %v1840, %v1831
    %v1842 = vsel %vm1835, %v1838, %v1841
    %v1843 = vsel %vm1832, nan, %v1842
    %v1844 = vand.u32 2147483647, %v480
    %vm1845 = vcmp.le.f32.partialorder %v1844, 0.7853982
    %vm1846 = vcmp.lt.s32.totalorder %v480, 0
    %v1847 = vand.u32 %v480, 2139095040
    %v1848 = vshrl.u32 %v1847, 23
    %v1849 = vsub.s32 %v1848, 127
    %v1850 = vand.u32 2147483647, %v480
    %v1851 = vand.u32 %v1850, 8388607
    %v1852 = vor.u32 %v1851, 8388608
    %v1853 = vsub.s32 0, %v1852
    %v1854 = vadd.s32 %v1849, 1
    %vm1855 = vcmp.gt.s32.totalorder %v1854, 0
    %v1856 = vsel %vm1855, %v1854, 0
    %v1857 = vshrl.u32 %v1856, 5
    %v1858 = vand.u32 %v1856, 31
    %v1859 = vsub.s32 32, %v1858
    %v1860 = vshrl.u32 683565275, %v1859
    %v1861 = vshll.u32 683565275, %v1858
    %v1862 = vshrl.u32 2475754826, %v1859
    %v1863 = vor.u32 %v1861, %v1862
    %v1864 = vshll.u32 2475754826, %v1858
    %v1865 = vshrl.u32 2131351028, %v1859
    %v1866 = vor.u32 %v1864, %v1865
    %v1867 = vshll.u32 2131351028, %v1858
    %v1868 = vshrl.u32 2102212464, %v1859
    %v1869 = vor.u32 %v1867, %v1868
    %v1870 = vshll.u32 2102212464, %v1858
    %v1871 = vshrl.u32 920167782, %v1859
    %v1872 = vor.u32 %v1870, %v1871
    %v1873 = vshll.u32 920167782, %v1858
    %v1874 = vshrl.u32 1326507024, %v1859
    %v1875 = vor.u32 %v1873, %v1874
    %vm1876 = vcmp.lt.s32.totalorder %v1857, 1
    %vm1877 = vcmp.lt.s32.totalorder %v1857, 2
    %vm1878 = vcmp.lt.s32.totalorder %v1857, 3
    %vm1879 = vcmp.lt.s32.totalorder %v1857, 4
    %v1880 = vsel %vm1876, %v1860, %v1863
    %v1881 = vsel %vm1879, %v1869, 2102212464
    %v1882 = vsel %vm1878, %v1866, %v1881
    %v1883 = vsel %vm1877, %v1880, %v1882
    %v1884 = vsel %vm1876, %v1863, %v1866
    %v1885 = vsel %vm1879, %v1872, 920167782
    %v1886 = vsel %vm1878, %v1869, %v1885
    %v1887 = vsel %vm1877, %v1884, %v1886
    %v1888 = vsel %vm1876, %v1866, %v1869
    %v1889 = vsel %vm1879, %v1875, 1326507024
    %v1890 = vsel %vm1878, %v1872, %v1889
    %v1891 = vsel %vm1877, %v1888, %v1890
    %v1892 = vshll.u32 %v1852, 8
    %v1893 = vmul.u32.u64.compose %v1892, %v1891
    %v1894 = vextract.low.u32 %v1893
    %v1895 = vextract.high.u32 %v1893
    %v1896 = vmul.u32.u64.compose %v1892, %v1887
    %v1897 = vextract.low.u32 %v1896
    %v1898 = vextract.high.u32 %v1896
    %v1899 = vmul.u32 %v1892, %v1883
    %v1900 = vadd.s32 %v1895, %v1897
    %vm1901 = vc.u32 %v1895, %v1897
    %v1902 = vadd.s32 %v1898, 1
    %v1903 = vsel %vm1901, %v1902, %v1898
    %v1904 = vadd.s32 %v1899, %v1903
    %v1905 = vadd.s32 %v1904, 536870912
    %v1906 = vshrl.u32 %v1905, 30
    %v1907 = vshll.u32 %v1906, 30
    %v1908 = vsub.s32 %v1904, %v1907
    %vm1909 = vcmp.lt.s32.totalorder %v1908, 0
    %v1910 = vsub.s32 0, %v1908
    %v1911 = vsel %vm1909, %v1910, %v1908
    %v1912 = vclz %v1911
    %v1913 = vsub.s32 %v1912, 2
    %vm1914 = vcmp.gt.s32.totalorder 0, %v1913
    %v1915 = vsel %vm1914, 0, %v1913
    %v1916 = vsub.s32 32, %v1915
    %v1917 = vshll.u32 %v1908, %v1915
    %v1918 = vshrl.u32 %v1900, %v1916
    %v1919 = vor.u32 %v1917, %v1918
    %v1920 = vsub.s32 4294967266, %v1915
    %v1921 = vadd.s32 %v1920, 127
    %v1922 = vshll.u32 %v1921, 23
    %v1923 = vor.u32 4788187, %v1922
    %v1924 = vand.u32 2147483647, %v1923
    %v1926 = vcvt.s32.f32 %v1919
    %v1927 = vmul.f32 %v1926, %v1924
    %v1928 = vxor.u32 %v1927, 2147483648
    %v1929 = vsel %vm1846, %v1928, %v1927
    %v1930 = vsub.s32 4, %v1906
    %v1931 = vsel %vm1846, %v1930, %v1906
    %v1932 = vsel %vm1845, %v480, %v1929
    %v1933 = vsel %vm1845, 0, %v1931
    %v1934 = vcosq.f32.pop %v1932
    %v1935 = vsinq.f32.pop %v1932
    %vm1936 = vweird.f32 %v480
    %v1937 = vadd.s32 %v1933, 3
    %v1938 = vand.u32 %v1937, 3
    %vm1939 = vcmp.lt.s32.totalorder %v1938, 2
    %vm1940 = vcmp.eq.s32.totalorder %v1938, 0
    %v1941 = vxor.u32 %v1935, 2147483648
    %v1942 = vsel %vm1940, %v1934, %v1941
    %vm1943 = vcmp.eq.s32.totalorder %v1938, 2
    %v1944 = vxor.u32 %v1934, 2147483648
    %v1945 = vsel %vm1943, %v1944, %v1935
    %v1946 = vsel %vm1939, %v1942, %v1945
    %v1947 = vsel %vm1936, nan, %v1946
    %v1948 = vand.u32 2147483647, %v481
    %vm1949 = vcmp.le.f32.partialorder %v1948, 0.7853982
    %vm1950 = vcmp.lt.s32.totalorder %v481, 0
    %v1951 = vand.u32 %v481, 2139095040
    %v1952 = vshrl.u32 %v1951, 23
    %v1953 = vsub.s32 %v1952, 127
    %v1954 = vand.u32 2147483647, %v481
    %v1955 = vand.u32 %v1954, 8388607
    %v1956 = vor.u32 %v1955, 8388608
    %v1957 = vsub.s32 0, %v1956
    %v1958 = vadd.s32 %v1953, 1
    %vm1959 = vcmp.gt.s32.totalorder %v1958, 0
    %v1960 = vsel %vm1959, %v1958, 0
    %v1961 = vshrl.u32 %v1960, 5
    %v1962 = vand.u32 %v1960, 31
    %v1963 = vsub.s32 32, %v1962
    %v1964 = vshrl.u32 683565275, %v1963
    %v1965 = vshll.u32 683565275, %v1962
    %v1966 = vshrl.u32 2475754826, %v1963
    %v1967 = vor.u32 %v1965, %v1966
    %v1968 = vshll.u32 2475754826, %v1962
    %v1969 = vshrl.u32 2131351028, %v1963
    %v1970 = vor.u32 %v1968, %v1969
    %v1971 = vshll.u32 2131351028, %v1962
    %v1972 = vshrl.u32 2102212464, %v1963
    %v1973 = vor.u32 %v1971, %v1972
    %v1974 = vshll.u32 2102212464, %v1962
    %v1975 = vshrl.u32 920167782, %v1963
    %v1976 = vor.u32 %v1974, %v1975
    %v1977 = vshll.u32 920167782, %v1962
    %v1978 = vshrl.u32 1326507024, %v1963
    %v1979 = vor.u32 %v1977, %v1978
    %vm1980 = vcmp.lt.s32.totalorder %v1961, 1
    %vm1981 = vcmp.lt.s32.totalorder %v1961, 2
    %vm1982 = vcmp.lt.s32.totalorder %v1961, 3
    %vm1983 = vcmp.lt.s32.totalorder %v1961, 4
    %v1984 = vsel %vm1980, %v1964, %v1967
    %v1985 = vsel %vm1983, %v1973, 2102212464
    %v1986 = vsel %vm1982, %v1970, %v1985
    %v1987 = vsel %vm1981, %v1984, %v1986
    %v1988 = vsel %vm1980, %v1967, %v1970
    %v1989 = vsel %vm1983, %v1976, 920167782
    %v1990 = vsel %vm1982, %v1973, %v1989
    %v1991 = vsel %vm1981, %v1988, %v1990
    %v1992 = vsel %vm1980, %v1970, %v1973
    %v1993 = vsel %vm1983, %v1979, 1326507024
    %v1994 = vsel %vm1982, %v1976, %v1993
    %v1995 = vsel %vm1981, %v1992, %v1994
    %v1996 = vshll.u32 %v1956, 8
    %v1997 = vmul.u32.u64.compose %v1996, %v1995
    %v1998 = vextract.low.u32 %v1997
    %v1999 = vextract.high.u32 %v1997
    %v2000 = vmul.u32.u64.compose %v1996, %v1991
    %v2001 = vextract.low.u32 %v2000
    %v2002 = vextract.high.u32 %v2000
    %v2003 = vmul.u32 %v1996, %v1987
    %v2004 = vadd.s32 %v1999, %v2001
    %vm2005 = vc.u32 %v1999, %v2001
    %v2006 = vadd.s32 %v2002, 1
    %v2007 = vsel %vm2005, %v2006, %v2002
    %v2008 = vadd.s32 %v2003, %v2007
    %v2009 = vadd.s32 %v2008, 536870912
    %v2010 = vshrl.u32 %v2009, 30
    %v2011 = vshll.u32 %v2010, 30
    %v2012 = vsub.s32 %v2008, %v2011
    %vm2013 = vcmp.lt.s32.totalorder %v2012, 0
    %v2014 = vsub.s32 0, %v2012
    %v2015 = vsel %vm2013, %v2014, %v2012
    %v2016 = vclz %v2015
    %v2017 = vsub.s32 %v2016, 2
    %vm2018 = vcmp.gt.s32.totalorder 0, %v2017
    %v2019 = vsel %vm2018, 0, %v2017
    %v2020 = vsub.s32 32, %v2019
    %v2021 = vshll.u32 %v2012, %v2019
    %v2022 = vshrl.u32 %v2004, %v2020
    %v2023 = vor.u32 %v2021, %v2022
    %v2024 = vsub.s32 4294967266, %v2019
    %v2025 = vadd.s32 %v2024, 127
    %v2026 = vshll.u32 %v2025, 23
    %v2027 = vor.u32 4788187, %v2026
    %v2028 = vand.u32 2147483647, %v2027
    %v2030 = vcvt.s32.f32 %v2023
    %v2031 = vmul.f32 %v2030, %v2028
    %v2032 = vxor.u32 %v2031, 2147483648
    %v2033 = vsel %vm1950, %v2032, %v2031
    %v2034 = vsub.s32 4, %v2010
    %v2035 = vsel %vm1950, %v2034, %v2010
    %v2036 = vsel %vm1949, %v481, %v2033
    %v2037 = vsel %vm1949, 0, %v2035
    %v2038 = vcosq.f32.pop %v2036
    %v2039 = vsinq.f32.pop %v2036
    %vm2040 = vweird.f32 %v481
    %v2041 = vadd.s32 %v2037, 3
    %v2042 = vand.u32 %v2041, 3
    %vm2043 = vcmp.lt.s32.totalorder %v2042, 2
    %vm2044 = vcmp.eq.s32.totalorder %v2042, 0
    %v2045 = vxor.u32 %v2039, 2147483648
    %v2046 = vsel %vm2044, %v2038, %v2045
    %vm2047 = vcmp.eq.s32.totalorder %v2042, 2
    %v2048 = vxor.u32 %v2038, 2147483648
    %v2049 = vsel %vm2047, %v2048, %v2039
    %v2050 = vsel %vm2043, %v2046, %v2049
    %v2051 = vsel %vm2040, nan, %v2050
    %v2052 = vand.u32 2147483647, %v482
    %vm2053 = vcmp.le.f32.partialorder %v2052, 0.7853982
    %vm2054 = vcmp.lt.s32.totalorder %v482, 0
    %v2055 = vand.u32 %v482, 2139095040
    %v2056 = vshrl.u32 %v2055, 23
    %v2057 = vsub.s32 %v2056, 127
    %v2058 = vand.u32 2147483647, %v482
    %v2059 = vand.u32 %v2058, 8388607
    %v2060 = vor.u32 %v2059, 8388608
    %v2061 = vsub.s32 0, %v2060
    %v2062 = vadd.s32 %v2057, 1
    %vm2063 = vcmp.gt.s32.totalorder %v2062, 0
    %v2064 = vsel %vm2063, %v2062, 0
    %v2065 = vshrl.u32 %v2064, 5
    %v2066 = vand.u32 %v2064, 31
    %v2067 = vsub.s32 32, %v2066
    %v2068 = vshrl.u32 683565275, %v2067
    %v2069 = vshll.u32 683565275, %v2066
    %v2070 = vshrl.u32 2475754826, %v2067
    %v2071 = vor.u32 %v2069, %v2070
    %v2072 = vshll.u32 2475754826, %v2066
    %v2073 = vshrl.u32 2131351028, %v2067
    %v2074 = vor.u32 %v2072, %v2073
    %v2075 = vshll.u32 2131351028, %v2066
    %v2076 = vshrl.u32 2102212464, %v2067
    %v2077 = vor.u32 %v2075, %v2076
    %v2078 = vshll.u32 2102212464, %v2066
    %v2079 = vshrl.u32 920167782, %v2067
    %v2080 = vor.u32 %v2078, %v2079
    %v2081 = vshll.u32 920167782, %v2066
    %v2082 = vshrl.u32 1326507024, %v2067
    %v2083 = vor.u32 %v2081, %v2082
    %vm2084 = vcmp.lt.s32.totalorder %v2065, 1
    %vm2085 = vcmp.lt.s32.totalorder %v2065, 2
    %vm2086 = vcmp.lt.s32.totalorder %v2065, 3
    %vm2087 = vcmp.lt.s32.totalorder %v2065, 4
    %v2088 = vsel %vm2084, %v2068, %v2071
    %v2089 = vsel %vm2087, %v2077, 2102212464
    %v2090 = vsel %vm2086, %v2074, %v2089
    %v2091 = vsel %vm2085, %v2088, %v2090
    %v2092 = vsel %vm2084, %v2071, %v2074
    %v2093 = vsel %vm2087, %v2080, 920167782
    %v2094 = vsel %vm2086, %v2077, %v2093
    %v2095 = vsel %vm2085, %v2092, %v2094
    %v2096 = vsel %vm2084, %v2074, %v2077
    %v2097 = vsel %vm2087, %v2083, 1326507024
    %v2098 = vsel %vm2086, %v2080, %v2097
    %v2099 = vsel %vm2085, %v2096, %v2098
    %v2100 = vshll.u32 %v2060, 8
    %v2101 = vmul.u32.u64.compose %v2100, %v2099
    %v2102 = vextract.low.u32 %v2101
    %v2103 = vextract.high.u32 %v2101
    %v2104 = vmul.u32.u64.compose %v2100, %v2095
    %v2105 = vextract.low.u32 %v2104
    %v2106 = vextract.high.u32 %v2104
    %v2107 = vmul.u32 %v2100, %v2091
    %v2108 = vadd.s32 %v2103, %v2105
    %vm2109 = vc.u32 %v2103, %v2105
    %v2110 = vadd.s32 %v2106, 1
    %v2111 = vsel %vm2109, %v2110, %v2106
    %v2112 = vadd.s32 %v2107, %v2111
    %v2113 = vadd.s32 %v2112, 536870912
    %v2114 = vshrl.u32 %v2113, 30
    %v2115 = vshll.u32 %v2114, 30
    %v2116 = vsub.s32 %v2112, %v2115
    %vm2117 = vcmp.lt.s32.totalorder %v2116, 0
    %v2118 = vsub.s32 0, %v2116
    %v2119 = vsel %vm2117, %v2118, %v2116
    %v2120 = vclz %v2119
    %v2121 = vsub.s32 %v2120, 2
    %vm2122 = vcmp.gt.s32.totalorder 0, %v2121
    %v2123 = vsel %vm2122, 0, %v2121
    %v2124 = vsub.s32 32, %v2123
    %v2125 = vshll.u32 %v2116, %v2123
    %v2126 = vshrl.u32 %v2108, %v2124
    %v2127 = vor.u32 %v2125, %v2126
    %v2128 = vsub.s32 4294967266, %v2123
    %v2129 = vadd.s32 %v2128, 127
    %v2130 = vshll.u32 %v2129, 23
    %v2131 = vor.u32 4788187, %v2130
    %v2132 = vand.u32 2147483647, %v2131
    %v2134 = vcvt.s32.f32 %v2127
    %v2135 = vmul.f32 %v2134, %v2132
    %v2136 = vxor.u32 %v2135, 2147483648
    %v2137 = vsel %vm2054, %v2136, %v2135
    %v2138 = vsub.s32 4, %v2114
    %v2139 = vsel %vm2054, %v2138, %v2114
    %v2140 = vsel %vm2053, %v482, %v2137
    %v2141 = vsel %vm2053, 0, %v2139
    %v2142 = vcosq.f32.pop %v2140
    %v2143 = vsinq.f32.pop %v2140
    %vm2144 = vweird.f32 %v482
    %v2145 = vadd.s32 %v2141, 3
    %v2146 = vand.u32 %v2145, 3
    %vm2147 = vcmp.lt.s32.totalorder %v2146, 2
    %vm2148 = vcmp.eq.s32.totalorder %v2146, 0
    %v2149 = vxor.u32 %v2143, 2147483648
    %v2150 = vsel %vm2148, %v2142, %v2149
    %vm2151 = vcmp.eq.s32.totalorder %v2146, 2
    %v2152 = vxor.u32 %v2142, 2147483648
    %v2153 = vsel %vm2151, %v2152, %v2143
    %v2154 = vsel %vm2147, %v2150, %v2153
    %v2155 = vsel %vm2144, nan, %v2154
    %v2156 = vand.u32 2147483647, %v483
    %vm2157 = vcmp.le.f32.partialorder %v2156, 0.7853982
    %vm2158 = vcmp.lt.s32.totalorder %v483, 0
    %v2159 = vand.u32 %v483, 2139095040
    %v2160 = vshrl.u32 %v2159, 23
    %v2161 = vsub.s32 %v2160, 127
    %v2162 = vand.u32 2147483647, %v483
    %v2163 = vand.u32 %v2162, 8388607
    %v2164 = vor.u32 %v2163, 8388608
    %v2165 = vsub.s32 0, %v2164
    %v2166 = vadd.s32 %v2161, 1
    %vm2167 = vcmp.gt.s32.totalorder %v2166, 0
    %v2168 = vsel %vm2167, %v2166, 0
    %v2169 = vshrl.u32 %v2168, 5
    %v2170 = vand.u32 %v2168, 31
    %v2171 = vsub.s32 32, %v2170
    %v2172 = vshrl.u32 683565275, %v2171
    %v2173 = vshll.u32 683565275, %v2170
    %v2174 = vshrl.u32 2475754826, %v2171
    %v2175 = vor.u32 %v2173, %v2174
    %v2176 = vshll.u32 2475754826, %v2170
    %v2177 = vshrl.u32 2131351028, %v2171
    %v2178 = vor.u32 %v2176, %v2177
    %v2179 = vshll.u32 2131351028, %v2170
    %v2180 = vshrl.u32 2102212464, %v2171
    %v2181 = vor.u32 %v2179, %v2180
    %v2182 = vshll.u32 2102212464, %v2170
    %v2183 = vshrl.u32 920167782, %v2171
    %v2184 = vor.u32 %v2182, %v2183
    %v2185 = vshll.u32 920167782, %v2170
    %v2186 = vshrl.u32 1326507024, %v2171
    %v2187 = vor.u32 %v2185, %v2186
    %vm2188 = vcmp.lt.s32.totalorder %v2169, 1
    %vm2189 = vcmp.lt.s32.totalorder %v2169, 2
    %vm2190 = vcmp.lt.s32.totalorder %v2169, 3
    %vm2191 = vcmp.lt.s32.totalorder %v2169, 4
    %v2192 = vsel %vm2188, %v2172, %v2175
    %v2193 = vsel %vm2191, %v2181, 2102212464
    %v2194 = vsel %vm2190, %v2178, %v2193
    %v2195 = vsel %vm2189, %v2192, %v2194
    %v2196 = vsel %vm2188, %v2175, %v2178
    %v2197 = vsel %vm2191, %v2184, 920167782
    %v2198 = vsel %vm2190, %v2181, %v2197
    %v2199 = vsel %vm2189, %v2196, %v2198
    %v2200 = vsel %vm2188, %v2178, %v2181
    %v2201 = vsel %vm2191, %v2187, 1326507024
    %v2202 = vsel %vm2190, %v2184, %v2201
    %v2203 = vsel %vm2189, %v2200, %v2202
    %v2204 = vshll.u32 %v2164, 8
    %v2205 = vmul.u32.u64.compose %v2204, %v2203
    %v2206 = vextract.low.u32 %v2205
    %v2207 = vextract.high.u32 %v2205
    %v2208 = vmul.u32.u64.compose %v2204, %v2199
    %v2209 = vextract.low.u32 %v2208
    %v2210 = vextract.high.u32 %v2208
    %v2211 = vmul.u32 %v2204, %v2195
    %v2212 = vadd.s32 %v2207, %v2209
    %vm2213 = vc.u32 %v2207, %v2209
    %v2214 = vadd.s32 %v2210, 1
    %v2215 = vsel %vm2213, %v2214, %v2210
    %v2216 = vadd.s32 %v2211, %v2215
    %v2217 = vadd.s32 %v2216, 536870912
    %v2218 = vshrl.u32 %v2217, 30
    %v2219 = vshll.u32 %v2218, 30
    %v2220 = vsub.s32 %v2216, %v2219
    %vm2221 = vcmp.lt.s32.totalorder %v2220, 0
    %v2222 = vsub.s32 0, %v2220
    %v2223 = vsel %vm2221, %v2222, %v2220
    %v2224 = vclz %v2223
    %v2225 = vsub.s32 %v2224, 2
    %vm2226 = vcmp.gt.s32.totalorder 0, %v2225
    %v2227 = vsel %vm2226, 0, %v2225
    %v2228 = vsub.s32 32, %v2227
    %v2229 = vshll.u32 %v2220, %v2227
    %v2230 = vshrl.u32 %v2212, %v2228
    %v2231 = vor.u32 %v2229, %v2230
    %v2232 = vsub.s32 4294967266, %v2227
    %v2233 = vadd.s32 %v2232, 127
    %v2234 = vshll.u32 %v2233, 23
    %v2235 = vor.u32 4788187, %v2234
    %v2236 = vand.u32 2147483647, %v2235
    %v2238 = vcvt.s32.f32 %v2231
    %v2239 = vmul.f32 %v2238, %v2236
    %v2240 = vxor.u32 %v2239, 2147483648
    %v2241 = vsel %vm2158, %v2240, %v2239
    %v2242 = vsub.s32 4, %v2218
    %v2243 = vsel %vm2158, %v2242, %v2218
    %v2244 = vsel %vm2157, %v483, %v2241
    %v2245 = vsel %vm2157, 0, %v2243
    %v2246 = vcosq.f32.pop %v2244
    %v2247 = vsinq.f32.pop %v2244
    %vm2248 = vweird.f32 %v483
    %v2249 = vadd.s32 %v2245, 3
    %v2250 = vand.u32 %v2249, 3
    %vm2251 = vcmp.lt.s32.totalorder %v2250, 2
    %vm2252 = vcmp.eq.s32.totalorder %v2250, 0
    %v2253 = vxor.u32 %v2247, 2147483648
    %v2254 = vsel %vm2252, %v2246, %v2253
    %vm2255 = vcmp.eq.s32.totalorder %v2250, 2
    %v2256 = vxor.u32 %v2246, 2147483648
    %v2257 = vsel %vm2255, %v2256, %v2247
    %v2258 = vsel %vm2251, %v2254, %v2257
    %v2259 = vsel %vm2248, nan, %v2258
    %v2260 = vand.u32 2147483647, %v484
    %vm2261 = vcmp.le.f32.partialorder %v2260, 0.7853982
    %vm2262 = vcmp.lt.s32.totalorder %v484, 0
    %v2263 = vand.u32 %v484, 2139095040
    %v2264 = vshrl.u32 %v2263, 23
    %v2265 = vsub.s32 %v2264, 127
    %v2266 = vand.u32 2147483647, %v484
    %v2267 = vand.u32 %v2266, 8388607
    %v2268 = vor.u32 %v2267, 8388608
    %v2269 = vsub.s32 0, %v2268
    %v2270 = vadd.s32 %v2265, 1
    %vm2271 = vcmp.gt.s32.totalorder %v2270, 0
    %v2272 = vsel %vm2271, %v2270, 0
    %v2273 = vshrl.u32 %v2272, 5
    %v2274 = vand.u32 %v2272, 31
    %v2275 = vsub.s32 32, %v2274
    %v2276 = vshrl.u32 683565275, %v2275
    %v2277 = vshll.u32 683565275, %v2274
    %v2278 = vshrl.u32 2475754826, %v2275
    %v2279 = vor.u32 %v2277, %v2278
    %v2280 = vshll.u32 2475754826, %v2274
    %v2281 = vshrl.u32 2131351028, %v2275
    %v2282 = vor.u32 %v2280, %v2281
    %v2283 = vshll.u32 2131351028, %v2274
    %v2284 = vshrl.u32 2102212464, %v2275
    %v2285 = vor.u32 %v2283, %v2284
    %v2286 = vshll.u32 2102212464, %v2274
    %v2287 = vshrl.u32 920167782, %v2275
    %v2288 = vor.u32 %v2286, %v2287
    %v2289 = vshll.u32 920167782, %v2274
    %v2290 = vshrl.u32 1326507024, %v2275
    %v2291 = vor.u32 %v2289, %v2290
    %vm2292 = vcmp.lt.s32.totalorder %v2273, 1
    %vm2293 = vcmp.lt.s32.totalorder %v2273, 2
    %vm2294 = vcmp.lt.s32.totalorder %v2273, 3
    %vm2295 = vcmp.lt.s32.totalorder %v2273, 4
    %v2296 = vsel %vm2292, %v2276, %v2279
    %v2297 = vsel %vm2295, %v2285, 2102212464
    %v2298 = vsel %vm2294, %v2282, %v2297
    %v2299 = vsel %vm2293, %v2296, %v2298
    %v2300 = vsel %vm2292, %v2279, %v2282
    %v2301 = vsel %vm2295, %v2288, 920167782
    %v2302 = vsel %vm2294, %v2285, %v2301
    %v2303 = vsel %vm2293, %v2300, %v2302
    %v2304 = vsel %vm2292, %v2282, %v2285
    %v2305 = vsel %vm2295, %v2291, 1326507024
    %v2306 = vsel %vm2294, %v2288, %v2305
    %v2307 = vsel %vm2293, %v2304, %v2306
    %v2308 = vshll.u32 %v2268, 8
    %v2309 = vmul.u32.u64.compose %v2308, %v2307
    %v2310 = vextract.low.u32 %v2309
    %v2311 = vextract.high.u32 %v2309
    %v2312 = vmul.u32.u64.compose %v2308, %v2303
    %v2313 = vextract.low.u32 %v2312
    %v2314 = vextract.high.u32 %v2312
    %v2315 = vmul.u32 %v2308, %v2299
    %v2316 = vadd.s32 %v2311, %v2313
    %vm2317 = vc.u32 %v2311, %v2313
    %v2318 = vadd.s32 %v2314, 1
    %v2319 = vsel %vm2317, %v2318, %v2314
    %v2320 = vadd.s32 %v2315, %v2319
    %v2321 = vadd.s32 %v2320, 536870912
    %v2322 = vshrl.u32 %v2321, 30
    %v2323 = vshll.u32 %v2322, 30
    %v2324 = vsub.s32 %v2320, %v2323
    %vm2325 = vcmp.lt.s32.totalorder %v2324, 0
    %v2326 = vsub.s32 0, %v2324
    %v2327 = vsel %vm2325, %v2326, %v2324
    %v2328 = vclz %v2327
    %v2329 = vsub.s32 %v2328, 2
    %vm2330 = vcmp.gt.s32.totalorder 0, %v2329
    %v2331 = vsel %vm2330, 0, %v2329
    %v2332 = vsub.s32 32, %v2331
    %v2333 = vshll.u32 %v2324, %v2331
    %v2334 = vshrl.u32 %v2316, %v2332
    %v2335 = vor.u32 %v2333, %v2334
    %v2336 = vsub.s32 4294967266, %v2331
    %v2337 = vadd.s32 %v2336, 127
    %v2338 = vshll.u32 %v2337, 23
    %v2339 = vor.u32 4788187, %v2338
    %v2340 = vand.u32 2147483647, %v2339
    %v2342 = vcvt.s32.f32 %v2335
    %v2343 = vmul.f32 %v2342, %v2340
    %v2344 = vxor.u32 %v2343, 2147483648
    %v2345 = vsel %vm2262, %v2344, %v2343
    %v2346 = vsub.s32 4, %v2322
    %v2347 = vsel %vm2262, %v2346, %v2322
    %v2348 = vsel %vm2261, %v484, %v2345
    %v2349 = vsel %vm2261, 0, %v2347
    %v2350 = vcosq.f32.pop %v2348
    %v2351 = vsinq.f32.pop %v2348
    %vm2352 = vweird.f32 %v484
    %v2353 = vadd.s32 %v2349, 3
    %v2354 = vand.u32 %v2353, 3
    %vm2355 = vcmp.lt.s32.totalorder %v2354, 2
    %vm2356 = vcmp.eq.s32.totalorder %v2354, 0
    %v2357 = vxor.u32 %v2351, 2147483648
    %v2358 = vsel %vm2356, %v2350, %v2357
    %vm2359 = vcmp.eq.s32.totalorder %v2354, 2
    %v2360 = vxor.u32 %v2350, 2147483648
    %v2361 = vsel %vm2359, %v2360, %v2351
    %v2362 = vsel %vm2355, %v2358, %v2361
    %v2363 = vsel %vm2352, nan, %v2362
    %v2364 = vand.u32 2147483647, %v485
    %vm2365 = vcmp.le.f32.partialorder %v2364, 0.7853982
    %vm2366 = vcmp.lt.s32.totalorder %v485, 0
    %v2367 = vand.u32 %v485, 2139095040
    %v2368 = vshrl.u32 %v2367, 23
    %v2369 = vsub.s32 %v2368, 127
    %v2370 = vand.u32 2147483647, %v485
    %v2371 = vand.u32 %v2370, 8388607
    %v2372 = vor.u32 %v2371, 8388608
    %v2373 = vsub.s32 0, %v2372
    %v2374 = vadd.s32 %v2369, 1
    %vm2375 = vcmp.gt.s32.totalorder %v2374, 0
    %v2376 = vsel %vm2375, %v2374, 0
    %v2377 = vshrl.u32 %v2376, 5
    %v2378 = vand.u32 %v2376, 31
    %v2379 = vsub.s32 32, %v2378
    %v2380 = vshrl.u32 683565275, %v2379
    %v2381 = vshll.u32 683565275, %v2378
    %v2382 = vshrl.u32 2475754826, %v2379
    %v2383 = vor.u32 %v2381, %v2382
    %v2384 = vshll.u32 2475754826, %v2378
    %v2385 = vshrl.u32 2131351028, %v2379
    %v2386 = vor.u32 %v2384, %v2385
    %v2387 = vshll.u32 2131351028, %v2378
    %v2388 = vshrl.u32 2102212464, %v2379
    %v2389 = vor.u32 %v2387, %v2388
    %v2390 = vshll.u32 2102212464, %v2378
    %v2391 = vshrl.u32 920167782, %v2379
    %v2392 = vor.u32 %v2390, %v2391
    %v2393 = vshll.u32 920167782, %v2378
    %v2394 = vshrl.u32 1326507024, %v2379
    %v2395 = vor.u32 %v2393, %v2394
    %vm2396 = vcmp.lt.s32.totalorder %v2377, 1
    %vm2397 = vcmp.lt.s32.totalorder %v2377, 2
    %vm2398 = vcmp.lt.s32.totalorder %v2377, 3
    %vm2399 = vcmp.lt.s32.totalorder %v2377, 4
    %v2400 = vsel %vm2396, %v2380, %v2383
    %v2401 = vsel %vm2399, %v2389, 2102212464
    %v2402 = vsel %vm2398, %v2386, %v2401
    %v2403 = vsel %vm2397, %v2400, %v2402
    %v2404 = vsel %vm2396, %v2383, %v2386
    %v2405 = vsel %vm2399, %v2392, 920167782
    %v2406 = vsel %vm2398, %v2389, %v2405
    %v2407 = vsel %vm2397, %v2404, %v2406
    %v2408 = vsel %vm2396, %v2386, %v2389
    %v2409 = vsel %vm2399, %v2395, 1326507024
    %v2410 = vsel %vm2398, %v2392, %v2409
    %v2411 = vsel %vm2397, %v2408, %v2410
    %v2412 = vshll.u32 %v2372, 8
    %v2413 = vmul.u32.u64.compose %v2412, %v2411
    %v2414 = vextract.low.u32 %v2413
    %v2415 = vextract.high.u32 %v2413
    %v2416 = vmul.u32.u64.compose %v2412, %v2407
    %v2417 = vextract.low.u32 %v2416
    %v2418 = vextract.high.u32 %v2416
    %v2419 = vmul.u32 %v2412, %v2403
    %v2420 = vadd.s32 %v2415, %v2417
    %vm2421 = vc.u32 %v2415, %v2417
    %v2422 = vadd.s32 %v2418, 1
    %v2423 = vsel %vm2421, %v2422, %v2418
    %v2424 = vadd.s32 %v2419, %v2423
    %v2425 = vadd.s32 %v2424, 536870912
    %v2426 = vshrl.u32 %v2425, 30
    %v2427 = vshll.u32 %v2426, 30
    %v2428 = vsub.s32 %v2424, %v2427
    %vm2429 = vcmp.lt.s32.totalorder %v2428, 0
    %v2430 = vsub.s32 0, %v2428
    %v2431 = vsel %vm2429, %v2430, %v2428
    %v2432 = vclz %v2431
    %v2433 = vsub.s32 %v2432, 2
    %vm2434 = vcmp.gt.s32.totalorder 0, %v2433
    %v2435 = vsel %vm2434, 0, %v2433
    %v2436 = vsub.s32 32, %v2435
    %v2437 = vshll.u32 %v2428, %v2435
    %v2438 = vshrl.u32 %v2420, %v2436
    %v2439 = vor.u32 %v2437, %v2438
    %v2440 = vsub.s32 4294967266, %v2435
    %v2441 = vadd.s32 %v2440, 127
    %v2442 = vshll.u32 %v2441, 23
    %v2443 = vor.u32 4788187, %v2442
    %v2444 = vand.u32 2147483647, %v2443
    %v2446 = vcvt.s32.f32 %v2439
    %v2447 = vmul.f32 %v2446, %v2444
    %v2448 = vxor.u32 %v2447, 2147483648
    %v2449 = vsel %vm2366, %v2448, %v2447
    %v2450 = vsub.s32 4, %v2426
    %v2451 = vsel %vm2366, %v2450, %v2426
    %v2452 = vsel %vm2365, %v485, %v2449
    %v2453 = vsel %vm2365, 0, %v2451
    %v2454 = vcosq.f32.pop %v2452
    %v2455 = vsinq.f32.pop %v2452
    %vm2456 = vweird.f32 %v485
    %v2457 = vadd.s32 %v2453, 3
    %v2458 = vand.u32 %v2457, 3
    %vm2459 = vcmp.lt.s32.totalorder %v2458, 2
    %vm2460 = vcmp.eq.s32.totalorder %v2458, 0
    %v2461 = vxor.u32 %v2455, 2147483648
    %v2462 = vsel %vm2460, %v2454, %v2461
    %vm2463 = vcmp.eq.s32.totalorder %v2458, 2
    %v2464 = vxor.u32 %v2454, 2147483648
    %v2465 = vsel %vm2463, %v2464, %v2455
    %v2466 = vsel %vm2459, %v2462, %v2465
    %v2467 = vsel %vm2456, nan, %v2466
    %v2468 = vand.u32 2147483647, %v486
    %vm2469 = vcmp.le.f32.partialorder %v2468, 0.7853982
    %vm2470 = vcmp.lt.s32.totalorder %v486, 0
    %v2471 = vand.u32 %v486, 2139095040
    %v2472 = vshrl.u32 %v2471, 23
    %v2473 = vsub.s32 %v2472, 127
    %v2474 = vand.u32 2147483647, %v486
    %v2475 = vand.u32 %v2474, 8388607
    %v2476 = vor.u32 %v2475, 8388608
    %v2477 = vsub.s32 0, %v2476
    %v2478 = vadd.s32 %v2473, 1
    %vm2479 = vcmp.gt.s32.totalorder %v2478, 0
    %v2480 = vsel %vm2479, %v2478, 0
    %v2481 = vshrl.u32 %v2480, 5
    %v2482 = vand.u32 %v2480, 31
    %v2483 = vsub.s32 32, %v2482
    %v2484 = vshrl.u32 683565275, %v2483
    %v2485 = vshll.u32 683565275, %v2482
    %v2486 = vshrl.u32 2475754826, %v2483
    %v2487 = vor.u32 %v2485, %v2486
    %v2488 = vshll.u32 2475754826, %v2482
    %v2489 = vshrl.u32 2131351028, %v2483
    %v2490 = vor.u32 %v2488, %v2489
    %v2491 = vshll.u32 2131351028, %v2482
    %v2492 = vshrl.u32 2102212464, %v2483
    %v2493 = vor.u32 %v2491, %v2492
    %v2494 = vshll.u32 2102212464, %v2482
    %v2495 = vshrl.u32 920167782, %v2483
    %v2496 = vor.u32 %v2494, %v2495
    %v2497 = vshll.u32 920167782, %v2482
    %v2498 = vshrl.u32 1326507024, %v2483
    %v2499 = vor.u32 %v2497, %v2498
    %vm2500 = vcmp.lt.s32.totalorder %v2481, 1
    %vm2501 = vcmp.lt.s32.totalorder %v2481, 2
    %vm2502 = vcmp.lt.s32.totalorder %v2481, 3
    %vm2503 = vcmp.lt.s32.totalorder %v2481, 4
    %v2504 = vsel %vm2500, %v2484, %v2487
    %v2505 = vsel %vm2503, %v2493, 2102212464
    %v2506 = vsel %vm2502, %v2490, %v2505
    %v2507 = vsel %vm2501, %v2504, %v2506
    %v2508 = vsel %vm2500, %v2487, %v2490
    %v2509 = vsel %vm2503, %v2496, 920167782
    %v2510 = vsel %vm2502, %v2493, %v2509
    %v2511 = vsel %vm2501, %v2508, %v2510
    %v2512 = vsel %vm2500, %v2490, %v2493
    %v2513 = vsel %vm2503, %v2499, 1326507024
    %v2514 = vsel %vm2502, %v2496, %v2513
    %v2515 = vsel %vm2501, %v2512, %v2514
    %v2516 = vshll.u32 %v2476, 8
    %v2517 = vmul.u32.u64.compose %v2516, %v2515
    %v2518 = vextract.low.u32 %v2517
    %v2519 = vextract.high.u32 %v2517
    %v2520 = vmul.u32.u64.compose %v2516, %v2511
    %v2521 = vextract.low.u32 %v2520
    %v2522 = vextract.high.u32 %v2520
    %v2523 = vmul.u32 %v2516, %v2507
    %v2524 = vadd.s32 %v2519, %v2521
    %vm2525 = vc.u32 %v2519, %v2521
    %v2526 = vadd.s32 %v2522, 1
    %v2527 = vsel %vm2525, %v2526, %v2522
    %v2528 = vadd.s32 %v2523, %v2527
    %v2529 = vadd.s32 %v2528, 536870912
    %v2530 = vshrl.u32 %v2529, 30
    %v2531 = vshll.u32 %v2530, 30
    %v2532 = vsub.s32 %v2528, %v2531
    %vm2533 = vcmp.lt.s32.totalorder %v2532, 0
    %v2534 = vsub.s32 0, %v2532
    %v2535 = vsel %vm2533, %v2534, %v2532
    %v2536 = vclz %v2535
    %v2537 = vsub.s32 %v2536, 2
    %vm2538 = vcmp.gt.s32.totalorder 0, %v2537
    %v2539 = vsel %vm2538, 0, %v2537
    %v2540 = vsub.s32 32, %v2539
    %v2541 = vshll.u32 %v2532, %v2539
    %v2542 = vshrl.u32 %v2524, %v2540
    %v2543 = vor.u32 %v2541, %v2542
    %v2544 = vsub.s32 4294967266, %v2539
    %v2545 = vadd.s32 %v2544, 127
    %v2546 = vshll.u32 %v2545, 23
    %v2547 = vor.u32 4788187, %v2546
    %v2548 = vand.u32 2147483647, %v2547
    %v2550 = vcvt.s32.f32 %v2543
    %v2551 = vmul.f32 %v2550, %v2548
    %v2552 = vxor.u32 %v2551, 2147483648
    %v2553 = vsel %vm2470, %v2552, %v2551
    %v2554 = vsub.s32 4, %v2530
    %v2555 = vsel %vm2470, %v2554, %v2530
    %v2556 = vsel %vm2469, %v486, %v2553
    %v2557 = vsel %vm2469, 0, %v2555
    %v2558 = vcosq.f32.pop %v2556
    %v2559 = vsinq.f32.pop %v2556
    %vm2560 = vweird.f32 %v486
    %v2561 = vadd.s32 %v2557, 3
    %v2562 = vand.u32 %v2561, 3
    %vm2563 = vcmp.lt.s32.totalorder %v2562, 2
    %vm2564 = vcmp.eq.s32.totalorder %v2562, 0
    %v2565 = vxor.u32 %v2559, 2147483648
    %v2566 = vsel %vm2564, %v2558, %v2565
    %vm2567 = vcmp.eq.s32.totalorder %v2562, 2
    %v2568 = vxor.u32 %v2558, 2147483648
    %v2569 = vsel %vm2567, %v2568, %v2559
    %v2570 = vsel %vm2563, %v2566, %v2569
    %v2571 = vsel %vm2560, nan, %v2570
    %v2572 = vand.u32 2147483647, %v487
    %vm2573 = vcmp.le.f32.partialorder %v2572, 0.7853982
    %vm2574 = vcmp.lt.s32.totalorder %v487, 0
    %v2575 = vand.u32 %v487, 2139095040
    %v2576 = vshrl.u32 %v2575, 23
    %v2577 = vsub.s32 %v2576, 127
    %v2578 = vand.u32 2147483647, %v487
    %v2579 = vand.u32 %v2578, 8388607
    %v2580 = vor.u32 %v2579, 8388608
    %v2581 = vsub.s32 0, %v2580
    %v2582 = vadd.s32 %v2577, 1
    %vm2583 = vcmp.gt.s32.totalorder %v2582, 0
    %v2584 = vsel %vm2583, %v2582, 0
    %v2585 = vshrl.u32 %v2584, 5
    %v2586 = vand.u32 %v2584, 31
    %v2587 = vsub.s32 32, %v2586
    %v2588 = vshrl.u32 683565275, %v2587
    %v2589 = vshll.u32 683565275, %v2586
    %v2590 = vshrl.u32 2475754826, %v2587
    %v2591 = vor.u32 %v2589, %v2590
    %v2592 = vshll.u32 2475754826, %v2586
    %v2593 = vshrl.u32 2131351028, %v2587
    %v2594 = vor.u32 %v2592, %v2593
    %v2595 = vshll.u32 2131351028, %v2586
    %v2596 = vshrl.u32 2102212464, %v2587
    %v2597 = vor.u32 %v2595, %v2596
    %v2598 = vshll.u32 2102212464, %v2586
    %v2599 = vshrl.u32 920167782, %v2587
    %v2600 = vor.u32 %v2598, %v2599
    %v2601 = vshll.u32 920167782, %v2586
    %v2602 = vshrl.u32 1326507024, %v2587
    %v2603 = vor.u32 %v2601, %v2602
    %vm2604 = vcmp.lt.s32.totalorder %v2585, 1
    %vm2605 = vcmp.lt.s32.totalorder %v2585, 2
    %vm2606 = vcmp.lt.s32.totalorder %v2585, 3
    %vm2607 = vcmp.lt.s32.totalorder %v2585, 4
    %v2608 = vsel %vm2604, %v2588, %v2591
    %v2609 = vsel %vm2607, %v2597, 2102212464
    %v2610 = vsel %vm2606, %v2594, %v2609
    %v2611 = vsel %vm2605, %v2608, %v2610
    %v2612 = vsel %vm2604, %v2591, %v2594
    %v2613 = vsel %vm2607, %v2600, 920167782
    %v2614 = vsel %vm2606, %v2597, %v2613
    %v2615 = vsel %vm2605, %v2612, %v2614
    %v2616 = vsel %vm2604, %v2594, %v2597
    %v2617 = vsel %vm2607, %v2603, 1326507024
    %v2618 = vsel %vm2606, %v2600, %v2617
    %v2619 = vsel %vm2605, %v2616, %v2618
    %v2620 = vshll.u32 %v2580, 8
    %v2621 = vmul.u32.u64.compose %v2620, %v2619
    %v2622 = vextract.low.u32 %v2621
    %v2623 = vextract.high.u32 %v2621
    %v2624 = vmul.u32.u64.compose %v2620, %v2615
    %v2625 = vextract.low.u32 %v2624
    %v2626 = vextract.high.u32 %v2624
    %v2627 = vmul.u32 %v2620, %v2611
    %v2628 = vadd.s32 %v2623, %v2625
    %vm2629 = vc.u32 %v2623, %v2625
    %v2630 = vadd.s32 %v2626, 1
    %v2631 = vsel %vm2629, %v2630, %v2626
    %v2632 = vadd.s32 %v2627, %v2631
    %v2633 = vadd.s32 %v2632, 536870912
    %v2634 = vshrl.u32 %v2633, 30
    %v2635 = vshll.u32 %v2634, 30
    %v2636 = vsub.s32 %v2632, %v2635
    %vm2637 = vcmp.lt.s32.totalorder %v2636, 0
    %v2638 = vsub.s32 0, %v2636
    %v2639 = vsel %vm2637, %v2638, %v2636
    %v2640 = vclz %v2639
    %v2641 = vsub.s32 %v2640, 2
    %vm2642 = vcmp.gt.s32.totalorder 0, %v2641
    %v2643 = vsel %vm2642, 0, %v2641
    %v2644 = vsub.s32 32, %v2643
    %v2645 = vshll.u32 %v2636, %v2643
    %v2646 = vshrl.u32 %v2628, %v2644
    %v2647 = vor.u32 %v2645, %v2646
    %v2648 = vsub.s32 4294967266, %v2643
    %v2649 = vadd.s32 %v2648, 127
    %v2650 = vshll.u32 %v2649, 23
    %v2651 = vor.u32 4788187, %v2650
    %v2652 = vand.u32 2147483647, %v2651
    %v2654 = vcvt.s32.f32 %v2647
    %v2655 = vmul.f32 %v2654, %v2652
    %v2656 = vxor.u32 %v2655, 2147483648
    %v2657 = vsel %vm2574, %v2656, %v2655
    %v2658 = vsub.s32 4, %v2634
    %v2659 = vsel %vm2574, %v2658, %v2634
    %v2660 = vsel %vm2573, %v487, %v2657
    %v2661 = vsel %vm2573, 0, %v2659
    %v2662 = vcosq.f32.pop %v2660
    %v2663 = vsinq.f32.pop %v2660
    %vm2664 = vweird.f32 %v487
    %v2665 = vadd.s32 %v2661, 3
    %v2666 = vand.u32 %v2665, 3
    %vm2667 = vcmp.lt.s32.totalorder %v2666, 2
    %vm2668 = vcmp.eq.s32.totalorder %v2666, 0
    %v2669 = vxor.u32 %v2663, 2147483648
    %v2670 = vsel %vm2668, %v2662, %v2669
    %vm2671 = vcmp.eq.s32.totalorder %v2666, 2
    %v2672 = vxor.u32 %v2662, 2147483648
    %v2673 = vsel %vm2671, %v2672, %v2663
    %v2674 = vsel %vm2667, %v2670, %v2673
    %v2675 = vsel %vm2664, nan, %v2674
    %v2676 = vand.u32 2147483647, %v488
    %vm2677 = vcmp.le.f32.partialorder %v2676, 0.7853982
    %vm2678 = vcmp.lt.s32.totalorder %v488, 0
    %v2679 = vand.u32 %v488, 2139095040
    %v2680 = vshrl.u32 %v2679, 23
    %v2681 = vsub.s32 %v2680, 127
    %v2682 = vand.u32 2147483647, %v488
    %v2683 = vand.u32 %v2682, 8388607
    %v2684 = vor.u32 %v2683, 8388608
    %v2685 = vsub.s32 0, %v2684
    %v2686 = vadd.s32 %v2681, 1
    %vm2687 = vcmp.gt.s32.totalorder %v2686, 0
    %v2688 = vsel %vm2687, %v2686, 0
    %v2689 = vshrl.u32 %v2688, 5
    %v2690 = vand.u32 %v2688, 31
    %v2691 = vsub.s32 32, %v2690
    %v2692 = vshrl.u32 683565275, %v2691
    %v2693 = vshll.u32 683565275, %v2690
    %v2694 = vshrl.u32 2475754826, %v2691
    %v2695 = vor.u32 %v2693, %v2694
    %v2696 = vshll.u32 2475754826, %v2690
    %v2697 = vshrl.u32 2131351028, %v2691
    %v2698 = vor.u32 %v2696, %v2697
    %v2699 = vshll.u32 2131351028, %v2690
    %v2700 = vshrl.u32 2102212464, %v2691
    %v2701 = vor.u32 %v2699, %v2700
    %v2702 = vshll.u32 2102212464, %v2690
    %v2703 = vshrl.u32 920167782, %v2691
    %v2704 = vor.u32 %v2702, %v2703
    %v2705 = vshll.u32 920167782, %v2690
    %v2706 = vshrl.u32 1326507024, %v2691
    %v2707 = vor.u32 %v2705, %v2706
    %vm2708 = vcmp.lt.s32.totalorder %v2689, 1
    %vm2709 = vcmp.lt.s32.totalorder %v2689, 2
    %vm2710 = vcmp.lt.s32.totalorder %v2689, 3
    %vm2711 = vcmp.lt.s32.totalorder %v2689, 4
    %v2712 = vsel %vm2708, %v2692, %v2695
    %v2713 = vsel %vm2711, %v2701, 2102212464
    %v2714 = vsel %vm2710, %v2698, %v2713
    %v2715 = vsel %vm2709, %v2712, %v2714
    %v2716 = vsel %vm2708, %v2695, %v2698
    %v2717 = vsel %vm2711, %v2704, 920167782
    %v2718 = vsel %vm2710, %v2701, %v2717
    %v2719 = vsel %vm2709, %v2716, %v2718
    %v2720 = vsel %vm2708, %v2698, %v2701
    %v2721 = vsel %vm2711, %v2707, 1326507024
    %v2722 = vsel %vm2710, %v2704, %v2721
    %v2723 = vsel %vm2709, %v2720, %v2722
    %v2724 = vshll.u32 %v2684, 8
    %v2725 = vmul.u32.u64.compose %v2724, %v2723
    %v2726 = vextract.low.u32 %v2725
    %v2727 = vextract.high.u32 %v2725
    %v2728 = vmul.u32.u64.compose %v2724, %v2719
    %v2729 = vextract.low.u32 %v2728
    %v2730 = vextract.high.u32 %v2728
    %v2731 = vmul.u32 %v2724, %v2715
    %v2732 = vadd.s32 %v2727, %v2729
    %vm2733 = vc.u32 %v2727, %v2729
    %v2734 = vadd.s32 %v2730, 1
    %v2735 = vsel %vm2733, %v2734, %v2730
    %v2736 = vadd.s32 %v2731, %v2735
    %v2737 = vadd.s32 %v2736, 536870912
    %v2738 = vshrl.u32 %v2737, 30
    %v2739 = vshll.u32 %v2738, 30
    %v2740 = vsub.s32 %v2736, %v2739
    %vm2741 = vcmp.lt.s32.totalorder %v2740, 0
    %v2742 = vsub.s32 0, %v2740
    %v2743 = vsel %vm2741, %v2742, %v2740
    %v2744 = vclz %v2743
    %v2745 = vsub.s32 %v2744, 2
    %vm2746 = vcmp.gt.s32.totalorder 0, %v2745
    %v2747 = vsel %vm2746, 0, %v2745
    %v2748 = vsub.s32 32, %v2747
    %v2749 = vshll.u32 %v2740, %v2747
    %v2750 = vshrl.u32 %v2732, %v2748
    %v2751 = vor.u32 %v2749, %v2750
    %v2752 = vsub.s32 4294967266, %v2747
    %v2753 = vadd.s32 %v2752, 127
    %v2754 = vshll.u32 %v2753, 23
    %v2755 = vor.u32 4788187, %v2754
    %v2756 = vand.u32 2147483647, %v2755
    %v2758 = vcvt.s32.f32 %v2751
    %v2759 = vmul.f32 %v2758, %v2756
    %v2760 = vxor.u32 %v2759, 2147483648
    %v2761 = vsel %vm2678, %v2760, %v2759
    %v2762 = vsub.s32 4, %v2738
    %v2763 = vsel %vm2678, %v2762, %v2738
    %v2764 = vsel %vm2677, %v488, %v2761
    %v2765 = vsel %vm2677, 0, %v2763
    %v2766 = vcosq.f32.pop %v2764
    %v2767 = vsinq.f32.pop %v2764
    %vm2768 = vweird.f32 %v488
    %v2769 = vadd.s32 %v2765, 3
    %v2770 = vand.u32 %v2769, 3
    %vm2771 = vcmp.lt.s32.totalorder %v2770, 2
    %vm2772 = vcmp.eq.s32.totalorder %v2770, 0
    %v2773 = vxor.u32 %v2767, 2147483648
    %v2774 = vsel %vm2772, %v2766, %v2773
    %vm2775 = vcmp.eq.s32.totalorder %v2770, 2
    %v2776 = vxor.u32 %v2766, 2147483648
    %v2777 = vsel %vm2775, %v2776, %v2767
    %v2778 = vsel %vm2771, %v2774, %v2777
    %v2779 = vsel %vm2768, nan, %v2778
    %v2780 = vand.u32 2147483647, %v489
    %vm2781 = vcmp.le.f32.partialorder %v2780, 0.7853982
    %vm2782 = vcmp.lt.s32.totalorder %v489, 0
    %v2783 = vand.u32 %v489, 2139095040
    %v2784 = vshrl.u32 %v2783, 23
    %v2785 = vsub.s32 %v2784, 127
    %v2786 = vand.u32 2147483647, %v489
    %v2787 = vand.u32 %v2786, 8388607
    %v2788 = vor.u32 %v2787, 8388608
    %v2789 = vsub.s32 0, %v2788
    %v2790 = vadd.s32 %v2785, 1
    %vm2791 = vcmp.gt.s32.totalorder %v2790, 0
    %v2792 = vsel %vm2791, %v2790, 0
    %v2793 = vshrl.u32 %v2792, 5
    %v2794 = vand.u32 %v2792, 31
    %v2795 = vsub.s32 32, %v2794
    %v2796 = vshrl.u32 683565275, %v2795
    %v2797 = vshll.u32 683565275, %v2794
    %v2798 = vshrl.u32 2475754826, %v2795
    %v2799 = vor.u32 %v2797, %v2798
    %v2800 = vshll.u32 2475754826, %v2794
    %v2801 = vshrl.u32 2131351028, %v2795
    %v2802 = vor.u32 %v2800, %v2801
    %v2803 = vshll.u32 2131351028, %v2794
    %v2804 = vshrl.u32 2102212464, %v2795
    %v2805 = vor.u32 %v2803, %v2804
    %v2806 = vshll.u32 2102212464, %v2794
    %v2807 = vshrl.u32 920167782, %v2795
    %v2808 = vor.u32 %v2806, %v2807
    %v2809 = vshll.u32 920167782, %v2794
    %v2810 = vshrl.u32 1326507024, %v2795
    %v2811 = vor.u32 %v2809, %v2810
    %vm2812 = vcmp.lt.s32.totalorder %v2793, 1
    %vm2813 = vcmp.lt.s32.totalorder %v2793, 2
    %vm2814 = vcmp.lt.s32.totalorder %v2793, 3
    %vm2815 = vcmp.lt.s32.totalorder %v2793, 4
    %v2816 = vsel %vm2812, %v2796, %v2799
    %v2817 = vsel %vm2815, %v2805, 2102212464
    %v2818 = vsel %vm2814, %v2802, %v2817
    %v2819 = vsel %vm2813, %v2816, %v2818
    %v2820 = vsel %vm2812, %v2799, %v2802
    %v2821 = vsel %vm2815, %v2808, 920167782
    %v2822 = vsel %vm2814, %v2805, %v2821
    %v2823 = vsel %vm2813, %v2820, %v2822
    %v2824 = vsel %vm2812, %v2802, %v2805
    %v2825 = vsel %vm2815, %v2811, 1326507024
    %v2826 = vsel %vm2814, %v2808, %v2825
    %v2827 = vsel %vm2813, %v2824, %v2826
    %v2828 = vshll.u32 %v2788, 8
    %v2829 = vmul.u32.u64.compose %v2828, %v2827
    %v2830 = vextract.low.u32 %v2829
    %v2831 = vextract.high.u32 %v2829
    %v2832 = vmul.u32.u64.compose %v2828, %v2823
    %v2833 = vextract.low.u32 %v2832
    %v2834 = vextract.high.u32 %v2832
    %v2835 = vmul.u32 %v2828, %v2819
    %v2836 = vadd.s32 %v2831, %v2833
    %vm2837 = vc.u32 %v2831, %v2833
    %v2838 = vadd.s32 %v2834, 1
    %v2839 = vsel %vm2837, %v2838, %v2834
    %v2840 = vadd.s32 %v2835, %v2839
    %v2841 = vadd.s32 %v2840, 536870912
    %v2842 = vshrl.u32 %v2841, 30
    %v2843 = vshll.u32 %v2842, 30
    %v2844 = vsub.s32 %v2840, %v2843
    %vm2845 = vcmp.lt.s32.totalorder %v2844, 0
    %v2846 = vsub.s32 0, %v2844
    %v2847 = vsel %vm2845, %v2846, %v2844
    %v2848 = vclz %v2847
    %v2849 = vsub.s32 %v2848, 2
    %vm2850 = vcmp.gt.s32.totalorder 0, %v2849
    %v2851 = vsel %vm2850, 0, %v2849
    %v2852 = vsub.s32 32, %v2851
    %v2853 = vshll.u32 %v2844, %v2851
    %v2854 = vshrl.u32 %v2836, %v2852
    %v2855 = vor.u32 %v2853, %v2854
    %v2856 = vsub.s32 4294967266, %v2851
    %v2857 = vadd.s32 %v2856, 127
    %v2858 = vshll.u32 %v2857, 23
    %v2859 = vor.u32 4788187, %v2858
    %v2860 = vand.u32 2147483647, %v2859
    %v2862 = vcvt.s32.f32 %v2855
    %v2863 = vmul.f32 %v2862, %v2860
    %v2864 = vxor.u32 %v2863, 2147483648
    %v2865 = vsel %vm2782, %v2864, %v2863
    %v2866 = vsub.s32 4, %v2842
    %v2867 = vsel %vm2782, %v2866, %v2842
    %v2868 = vsel %vm2781, %v489, %v2865
    %v2869 = vsel %vm2781, 0, %v2867
    %v2870 = vcosq.f32.pop %v2868
    %v2871 = vsinq.f32.pop %v2868
    %vm2872 = vweird.f32 %v489
    %v2873 = vadd.s32 %v2869, 3
    %v2874 = vand.u32 %v2873, 3
    %vm2875 = vcmp.lt.s32.totalorder %v2874, 2
    %vm2876 = vcmp.eq.s32.totalorder %v2874, 0
    %v2877 = vxor.u32 %v2871, 2147483648
    %v2878 = vsel %vm2876, %v2870, %v2877
    %vm2879 = vcmp.eq.s32.totalorder %v2874, 2
    %v2880 = vxor.u32 %v2870, 2147483648
    %v2881 = vsel %vm2879, %v2880, %v2871
    %v2882 = vsel %vm2875, %v2878, %v2881
    %v2883 = vsel %vm2872, nan, %v2882
    %v2884 = vand.u32 2147483647, %v490
    %vm2885 = vcmp.le.f32.partialorder %v2884, 0.7853982
    %vm2886 = vcmp.lt.s32.totalorder %v490, 0
    %v2887 = vand.u32 %v490, 2139095040
    %v2888 = vshrl.u32 %v2887, 23
    %v2889 = vsub.s32 %v2888, 127
    %v2890 = vand.u32 2147483647, %v490
    %v2891 = vand.u32 %v2890, 8388607
    %v2892 = vor.u32 %v2891, 8388608
    %v2893 = vsub.s32 0, %v2892
    %v2894 = vadd.s32 %v2889, 1
    %vm2895 = vcmp.gt.s32.totalorder %v2894, 0
    %v2896 = vsel %vm2895, %v2894, 0
    %v2897 = vshrl.u32 %v2896, 5
    %v2898 = vand.u32 %v2896, 31
    %v2899 = vsub.s32 32, %v2898
    %v2900 = vshrl.u32 683565275, %v2899
    %v2901 = vshll.u32 683565275, %v2898
    %v2902 = vshrl.u32 2475754826, %v2899
    %v2903 = vor.u32 %v2901, %v2902
    %v2904 = vshll.u32 2475754826, %v2898
    %v2905 = vshrl.u32 2131351028, %v2899
    %v2906 = vor.u32 %v2904, %v2905
    %v2907 = vshll.u32 2131351028, %v2898
    %v2908 = vshrl.u32 2102212464, %v2899
    %v2909 = vor.u32 %v2907, %v2908
    %v2910 = vshll.u32 2102212464, %v2898
    %v2911 = vshrl.u32 920167782, %v2899
    %v2912 = vor.u32 %v2910, %v2911
    %v2913 = vshll.u32 920167782, %v2898
    %v2914 = vshrl.u32 1326507024, %v2899
    %v2915 = vor.u32 %v2913, %v2914
    %vm2916 = vcmp.lt.s32.totalorder %v2897, 1
    %vm2917 = vcmp.lt.s32.totalorder %v2897, 2
    %vm2918 = vcmp.lt.s32.totalorder %v2897, 3
    %vm2919 = vcmp.lt.s32.totalorder %v2897, 4
    %v2920 = vsel %vm2916, %v2900, %v2903
    %v2921 = vsel %vm2919, %v2909, 2102212464
    %v2922 = vsel %vm2918, %v2906, %v2921
    %v2923 = vsel %vm2917, %v2920, %v2922
    %v2924 = vsel %vm2916, %v2903, %v2906
    %v2925 = vsel %vm2919, %v2912, 920167782
    %v2926 = vsel %vm2918, %v2909, %v2925
    %v2927 = vsel %vm2917, %v2924, %v2926
    %v2928 = vsel %vm2916, %v2906, %v2909
    %v2929 = vsel %vm2919, %v2915, 1326507024
    %v2930 = vsel %vm2918, %v2912, %v2929
    %v2931 = vsel %vm2917, %v2928, %v2930
    %v2932 = vshll.u32 %v2892, 8
    %v2933 = vmul.u32.u64.compose %v2932, %v2931
    %v2934 = vextract.low.u32 %v2933
    %v2935 = vextract.high.u32 %v2933
    %v2936 = vmul.u32.u64.compose %v2932, %v2927
    %v2937 = vextract.low.u32 %v2936
    %v2938 = vextract.high.u32 %v2936
    %v2939 = vmul.u32 %v2932, %v2923
    %v2940 = vadd.s32 %v2935, %v2937
    %vm2941 = vc.u32 %v2935, %v2937
    %v2942 = vadd.s32 %v2938, 1
    %v2943 = vsel %vm2941, %v2942, %v2938
    %v2944 = vadd.s32 %v2939, %v2943
    %v2945 = vadd.s32 %v2944, 536870912
    %v2946 = vshrl.u32 %v2945, 30
    %v2947 = vshll.u32 %v2946, 30
    %v2948 = vsub.s32 %v2944, %v2947
    %vm2949 = vcmp.lt.s32.totalorder %v2948, 0
    %v2950 = vsub.s32 0, %v2948
    %v2951 = vsel %vm2949, %v2950, %v2948
    %v2952 = vclz %v2951
    %v2953 = vsub.s32 %v2952, 2
    %vm2954 = vcmp.gt.s32.totalorder 0, %v2953
    %v2955 = vsel %vm2954, 0, %v2953
    %v2956 = vsub.s32 32, %v2955
    %v2957 = vshll.u32 %v2948, %v2955
    %v2958 = vshrl.u32 %v2940, %v2956
    %v2959 = vor.u32 %v2957, %v2958
    %v2960 = vsub.s32 4294967266, %v2955
    %v2961 = vadd.s32 %v2960, 127
    %v2962 = vshll.u32 %v2961, 23
    %v2963 = vor.u32 4788187, %v2962
    %v2964 = vand.u32 2147483647, %v2963
    %v2966 = vcvt.s32.f32 %v2959
    %v2967 = vmul.f32 %v2966, %v2964
    %v2968 = vxor.u32 %v2967, 2147483648
    %v2969 = vsel %vm2886, %v2968, %v2967
    %v2970 = vsub.s32 4, %v2946
    %v2971 = vsel %vm2886, %v2970, %v2946
    %v2972 = vsel %vm2885, %v490, %v2969
    %v2973 = vsel %vm2885, 0, %v2971
    %v2974 = vcosq.f32.pop %v2972
    %v2975 = vsinq.f32.pop %v2972
    %vm2976 = vweird.f32 %v490
    %v2977 = vadd.s32 %v2973, 3
    %v2978 = vand.u32 %v2977, 3
    %vm2979 = vcmp.lt.s32.totalorder %v2978, 2
    %vm2980 = vcmp.eq.s32.totalorder %v2978, 0
    %v2981 = vxor.u32 %v2975, 2147483648
    %v2982 = vsel %vm2980, %v2974, %v2981
    %vm2983 = vcmp.eq.s32.totalorder %v2978, 2
    %v2984 = vxor.u32 %v2974, 2147483648
    %v2985 = vsel %vm2983, %v2984, %v2975
    %v2986 = vsel %vm2979, %v2982, %v2985
    %v2987 = vsel %vm2976, nan, %v2986
    %v2988 = vand.u32 2147483647, %v491
    %vm2989 = vcmp.le.f32.partialorder %v2988, 0.7853982
    %vm2990 = vcmp.lt.s32.totalorder %v491, 0
    %v2991 = vand.u32 %v491, 2139095040
    %v2992 = vshrl.u32 %v2991, 23
    %v2993 = vsub.s32 %v2992, 127
    %v2994 = vand.u32 2147483647, %v491
    %v2995 = vand.u32 %v2994, 8388607
    %v2996 = vor.u32 %v2995, 8388608
    %v2997 = vsub.s32 0, %v2996
    %v2998 = vadd.s32 %v2993, 1
    %vm2999 = vcmp.gt.s32.totalorder %v2998, 0
    %v3000 = vsel %vm2999, %v2998, 0
    %v3001 = vshrl.u32 %v3000, 5
    %v3002 = vand.u32 %v3000, 31
    %v3003 = vsub.s32 32, %v3002
    %v3004 = vshrl.u32 683565275, %v3003
    %v3005 = vshll.u32 683565275, %v3002
    %v3006 = vshrl.u32 2475754826, %v3003
    %v3007 = vor.u32 %v3005, %v3006
    %v3008 = vshll.u32 2475754826, %v3002
    %v3009 = vshrl.u32 2131351028, %v3003
    %v3010 = vor.u32 %v3008, %v3009
    %v3011 = vshll.u32 2131351028, %v3002
    %v3012 = vshrl.u32 2102212464, %v3003
    %v3013 = vor.u32 %v3011, %v3012
    %v3014 = vshll.u32 2102212464, %v3002
    %v3015 = vshrl.u32 920167782, %v3003
    %v3016 = vor.u32 %v3014, %v3015
    %v3017 = vshll.u32 920167782, %v3002
    %v3018 = vshrl.u32 1326507024, %v3003
    %v3019 = vor.u32 %v3017, %v3018
    %vm3020 = vcmp.lt.s32.totalorder %v3001, 1
    %vm3021 = vcmp.lt.s32.totalorder %v3001, 2
    %vm3022 = vcmp.lt.s32.totalorder %v3001, 3
    %vm3023 = vcmp.lt.s32.totalorder %v3001, 4
    %v3024 = vsel %vm3020, %v3004, %v3007
    %v3025 = vsel %vm3023, %v3013, 2102212464
    %v3026 = vsel %vm3022, %v3010, %v3025
    %v3027 = vsel %vm3021, %v3024, %v3026
    %v3028 = vsel %vm3020, %v3007, %v3010
    %v3029 = vsel %vm3023, %v3016, 920167782
    %v3030 = vsel %vm3022, %v3013, %v3029
    %v3031 = vsel %vm3021, %v3028, %v3030
    %v3032 = vsel %vm3020, %v3010, %v3013
    %v3033 = vsel %vm3023, %v3019, 1326507024
    %v3034 = vsel %vm3022, %v3016, %v3033
    %v3035 = vsel %vm3021, %v3032, %v3034
    %v3036 = vshll.u32 %v2996, 8
    %v3037 = vmul.u32.u64.compose %v3036, %v3035
    %v3038 = vextract.low.u32 %v3037
    %v3039 = vextract.high.u32 %v3037
    %v3040 = vmul.u32.u64.compose %v3036, %v3031
    %v3041 = vextract.low.u32 %v3040
    %v3042 = vextract.high.u32 %v3040
    %v3043 = vmul.u32 %v3036, %v3027
    %v3044 = vadd.s32 %v3039, %v3041
    %vm3045 = vc.u32 %v3039, %v3041
    %v3046 = vadd.s32 %v3042, 1
    %v3047 = vsel %vm3045, %v3046, %v3042
    %v3048 = vadd.s32 %v3043, %v3047
    %v3049 = vadd.s32 %v3048, 536870912
    %v3050 = vshrl.u32 %v3049, 30
    %v3051 = vshll.u32 %v3050, 30
    %v3052 = vsub.s32 %v3048, %v3051
    %vm3053 = vcmp.lt.s32.totalorder %v3052, 0
    %v3054 = vsub.s32 0, %v3052
    %v3055 = vsel %vm3053, %v3054, %v3052
    %v3056 = vclz %v3055
    %v3057 = vsub.s32 %v3056, 2
    %vm3058 = vcmp.gt.s32.totalorder 0, %v3057
    %v3059 = vsel %vm3058, 0, %v3057
    %v3060 = vsub.s32 32, %v3059
    %v3061 = vshll.u32 %v3052, %v3059
    %v3062 = vshrl.u32 %v3044, %v3060
    %v3063 = vor.u32 %v3061, %v3062
    %v3064 = vsub.s32 4294967266, %v3059
    %v3065 = vadd.s32 %v3064, 127
    %v3066 = vshll.u32 %v3065, 23
    %v3067 = vor.u32 4788187, %v3066
    %v3068 = vand.u32 2147483647, %v3067
    %v3070 = vcvt.s32.f32 %v3063
    %v3071 = vmul.f32 %v3070, %v3068
    %v3072 = vxor.u32 %v3071, 2147483648
    %v3073 = vsel %vm2990, %v3072, %v3071
    %v3074 = vsub.s32 4, %v3050
    %v3075 = vsel %vm2990, %v3074, %v3050
    %v3076 = vsel %vm2989, %v491, %v3073
    %v3077 = vsel %vm2989, 0, %v3075
    %v3078 = vcosq.f32.pop %v3076
    %v3079 = vsinq.f32.pop %v3076
    %vm3080 = vweird.f32 %v491
    %v3081 = vadd.s32 %v3077, 3
    %v3082 = vand.u32 %v3081, 3
    %vm3083 = vcmp.lt.s32.totalorder %v3082, 2
    %vm3084 = vcmp.eq.s32.totalorder %v3082, 0
    %v3085 = vxor.u32 %v3079, 2147483648
    %v3086 = vsel %vm3084, %v3078, %v3085
    %vm3087 = vcmp.eq.s32.totalorder %v3082, 2
    %v3088 = vxor.u32 %v3078, 2147483648
    %v3089 = vsel %vm3087, %v3088, %v3079
    %v3090 = vsel %vm3083, %v3086, %v3089
    %v3091 = vsel %vm3080, nan, %v3090
    %v3092 = vld [vmem:[%s0] sm:$0xff]
    %v3093 = vld [vmem:[%s0 + $0x8] sm:$0xff]
    %v3094 = vld [vmem:[%s0 + $0x10] sm:$0xff]
    %v3095 = vld [vmem:[%s0 + $0x18] sm:$0xff]
    %v3096 = vld [vmem:[%s0 + $0x20] sm:$0xff]
    %v3097 = vld [vmem:[%s0 + $0x28] sm:$0xff]
    %v3098 = vld [vmem:[%s0 + $0x30] sm:$0xff]
    %v3099 = vld [vmem:[%s0 + $0x38] sm:$0xff]
    %v3100 = vld [vmem:[%s0 + $0x40] sm:$0xff]
    %v3101 = vld [vmem:[%s0 + $0x48] sm:$0xff]
    %v3102 = vld [vmem:[%s0 + $0x50] sm:$0xff]
    %v3103 = vld [vmem:[%s0 + $0x58] sm:$0xff]
    %v3104 = vld [vmem:[%s0 + $0x60] sm:$0xff]
    %v3105 = vld [vmem:[%s0 + $0x68] sm:$0xff]
    %v3106 = vld [vmem:[%s0 + $0x70] sm:$0xff]
    %v3107 = vld [vmem:[%s0 + $0x78] sm:$0xff]
    %v3108 = vld [vmem:[%s0 + $0x80] sm:$0xff]
    %v3109 = vld [vmem:[%s0 + $0x88] sm:$0xff]
    %v3110 = vld [vmem:[%s0 + $0x90] sm:$0xff]
    %v3111 = vld [vmem:[%s0 + $0x98] sm:$0xff]
    %v3112 = vld [vmem:[%s0 + $0xa0] sm:$0xff]
    %v3113 = vld [vmem:[%s0 + $0xa8] sm:$0xff]
    %v3114 = vld [vmem:[%s0 + $0xb0] sm:$0xff]
    %v3115 = vld [vmem:[%s0 + $0xb8] sm:$0xff]
    %v3116 = vld [vmem:[%s0 + $0xc0] sm:$0xff]
    %3118 = vset.pattern.permute.xlu0 0
    %3119 = vperm.xlu0 %3118, %v207
    %v3120 = vpop.permute.xlu0 %3119
    %3123 = vset.pattern.permute.xlu0 0
    %3124 = vperm.xlu0 %3123, %v208
    %v3125 = vpop.permute.xlu0 %3124
    %3128 = vset.pattern.permute.xlu0 0
    %3129 = vperm.xlu0 %3128, %v209
    %v3130 = vpop.permute.xlu0 %3129
    %3133 = vset.pattern.permute.xlu0 0
    %3134 = vperm.xlu0 %3133, %v210
    %v3135 = vpop.permute.xlu0 %3134
    %3138 = vset.pattern.permute.xlu0 0
    %3139 = vperm.xlu0 %3138, %v211
    %v3140 = vpop.permute.xlu0 %3139
    %3143 = vset.pattern.permute.xlu0 0
    %3144 = vperm.xlu0 %3143, %v212
    %v3145 = vpop.permute.xlu0 %3144
    %3148 = vset.pattern.permute.xlu0 0
    %3149 = vperm.xlu0 %3148, %v213
    %v3150 = vpop.permute.xlu0 %3149
    %3153 = vset.pattern.permute.xlu0 0
    %3154 = vperm.xlu0 %3153, %v214
    %v3155 = vpop.permute.xlu0 %3154
    %3158 = vset.pattern.permute.xlu0 0
    %3159 = vperm.xlu0 %3158, %v215
    %v3160 = vpop.permute.xlu0 %3159
    %3163 = vset.pattern.permute.xlu0 0
    %3164 = vperm.xlu0 %3163, %v216
    %v3165 = vpop.permute.xlu0 %3164
    %3168 = vset.pattern.permute.xlu0 0
    %3169 = vperm.xlu0 %3168, %v217
    %v3170 = vpop.permute.xlu0 %3169
    %3173 = vset.pattern.permute.xlu0 0
    %3174 = vperm.xlu0 %3173, %v218
    %v3175 = vpop.permute.xlu0 %3174
    %3178 = vset.pattern.permute.xlu0 0
    %3179 = vperm.xlu0 %3178, %v219
    %v3180 = vpop.permute.xlu0 %3179
    %3183 = vset.pattern.permute.xlu0 0
    %3184 = vperm.xlu0 %3183, %v220
    %v3185 = vpop.permute.xlu0 %3184
    %3188 = vset.pattern.permute.xlu0 0
    %3189 = vperm.xlu0 %3188, %v221
    %v3190 = vpop.permute.xlu0 %3189
    %3193 = vset.pattern.permute.xlu0 0
    %3194 = vperm.xlu0 %3193, %v222
    %v3195 = vpop.permute.xlu0 %3194
    %3198 = vset.pattern.permute.xlu0 0
    %3199 = vperm.xlu0 %3198, %v223
    %v3200 = vpop.permute.xlu0 %3199
    %3203 = vset.pattern.permute.xlu0 0
    %3204 = vperm.xlu0 %3203, %v224
    %v3205 = vpop.permute.xlu0 %3204
    %3208 = vset.pattern.permute.xlu0 0
    %3209 = vperm.xlu0 %3208, %v225
    %v3210 = vpop.permute.xlu0 %3209
    %3213 = vset.pattern.permute.xlu0 0
    %3214 = vperm.xlu0 %3213, %v226
    %v3215 = vpop.permute.xlu0 %3214
    %3218 = vset.pattern.permute.xlu0 0
    %3219 = vperm.xlu0 %3218, %v227
    %v3220 = vpop.permute.xlu0 %3219
    %3223 = vset.pattern.permute.xlu0 0
    %3224 = vperm.xlu0 %3223, %v228
    %v3225 = vpop.permute.xlu0 %3224
    %3228 = vset.pattern.permute.xlu0 0
    %3229 = vperm.xlu0 %3228, %v229
    %v3230 = vpop.permute.xlu0 %3229
    %3233 = vset.pattern.permute.xlu0 0
    %3234 = vperm.xlu0 %3233, %v230
    %v3235 = vpop.permute.xlu0 %3234
    %3238 = vset.pattern.permute.xlu0 0
    %3239 = vperm.xlu0 %3238, %v231
    %v3240 = vpop.permute.xlu0 %3239
    %v3242 = vmul.f32 %v3092, %v3120
    %v3243 = vmul.f32 %v3093, %v3125
    %v3244 = vmul.f32 %v3094, %v3130
    %v3245 = vmul.f32 %v3095, %v3135
    %v3246 = vmul.f32 %v3096, %v3140
    %v3247 = vmul.f32 %v3097, %v3145
    %v3248 = vmul.f32 %v3098, %v3150
    %v3249 = vmul.f32 %v3099, %v3155
    %v3250 = vmul.f32 %v3100, %v3160
    %v3251 = vmul.f32 %v3101, %v3165
    %v3252 = vmul.f32 %v3102, %v3170
    %v3253 = vmul.f32 %v3103, %v3175
    %v3254 = vmul.f32 %v3104, %v3180
    %v3255 = vmul.f32 %v3105, %v3185
    %v3256 = vmul.f32 %v3106, %v3190
    %v3257 = vmul.f32 %v3107, %v3195
    %v3258 = vmul.f32 %v3108, %v3200
    %v3259 = vmul.f32 %v3109, %v3205
    %v3260 = vmul.f32 %v3110, %v3210
    %v3261 = vmul.f32 %v3111, %v3215
    %v3262 = vmul.f32 %v3112, %v3220
    %v3263 = vmul.f32 %v3113, %v3225
    %v3264 = vmul.f32 %v3114, %v3230
    %v3265 = vmul.f32 %v3115, %v3235
    %v3266 = vmul.f32 %v3116, %v3240
    %v3267 = vadd.f32 %v3242, %v595
    %v3268 = vadd.f32 %v3243, %v699
    %v3269 = vadd.f32 %v3244, %v803
    %v3270 = vadd.f32 %v3245, %v907
    %v3271 = vadd.f32 %v3246, %v1011
    %v3272 = vadd.f32 %v3247, %v1115
    %v3273 = vadd.f32 %v3248, %v1219
    %v3274 = vadd.f32 %v3249, %v1323
    %v3275 = vadd.f32 %v3250, %v1427
    %v3276 = vadd.f32 %v3251, %v1531
    %v3277 = vadd.f32 %v3252, %v1635
    %v3278 = vadd.f32 %v3253, %v1739
    %v3279 = vadd.f32 %v3254, %v1843
    %v3280 = vadd.f32 %v3255, %v1947
    %v3281 = vadd.f32 %v3256, %v2051
    %v3282 = vadd.f32 %v3257, %v2155
    %v3283 = vadd.f32 %v3258, %v2259
    %v3284 = vadd.f32 %v3259, %v2363
    %v3285 = vadd.f32 %v3260, %v2467
    %v3286 = vadd.f32 %v3261, %v2571
    %v3287 = vadd.f32 %v3262, %v2675
    %v3288 = vadd.f32 %v3263, %v2779
    %v3289 = vadd.f32 %v3264, %v2883
    %v3290 = vadd.f32 %v3265, %v2987
    %v3291 = vadd.f32 %v3266, %v3091
    %v3292 = vld [vmem:[#allocation2] sm:$0xff]
    %v3293 = vld [vmem:[#allocation2 + $0x8] sm:$0xff]
    %v3294 = vld [vmem:[#allocation2 + $0x10] sm:$0xff]
    %v3295 = vld [vmem:[#allocation2 + $0x18] sm:$0xff]
    %v3296 = vld [vmem:[#allocation2 + $0x20] sm:$0xff]
    %v3297 = vld [vmem:[#allocation2 + $0x28] sm:$0xff]
    %v3298 = vld [vmem:[#allocation2 + $0x30] sm:$0xff]
    %v3299 = vld [vmem:[#allocation2 + $0x38] sm:$0xff]
    %v3300 = vld [vmem:[#allocation2 + $0x40] sm:$0xff]
    %v3301 = vld [vmem:[#allocation2 + $0x48] sm:$0xff]
    %v3302 = vld [vmem:[#allocation2 + $0x50] sm:$0xff]
    %v3303 = vld [vmem:[#allocation2 + $0x58] sm:$0xff]
    %v3304 = vld [vmem:[#allocation2 + $0x60] sm:$0xff]
    %v3305 = vld [vmem:[#allocation2 + $0x68] sm:$0xff]
    %v3306 = vld [vmem:[#allocation2 + $0x70] sm:$0xff]
    %v3307 = vld [vmem:[#allocation2 + $0x78] sm:$0xff]
    %v3308 = vld [vmem:[%s2] sm:$0x1]
    %v3309 = vlaneseq
    %v3310 = vshrl.u32 %v3309, 7
    %v3311 = vsub.s32 0, %v3310
    %v3312 = vrot.slane %v3308, %v3311
    %3313 = vmatprep.subr.mxu0 0.0
    %3314 = vmatpush1.msra.mxu0 %v3292
    %3315 = vmatprep.subr.mxu0 0.0
    %3316 = vmatpush1.msra.mxu0 %v3293
    %3317 = vmatprep.subr.mxu0 0.0
    %3318 = vmatpush1.msra.mxu0 %v3294
    %3319 = vmatprep.subr.mxu0 0.0
    %3320 = vmatpush1.msra.mxu0 %v3295
    %3321 = vmatprep.subr.mxu0 0.0
    %3322 = vmatpush1.msra.mxu0 %v3296
    %3323 = vmatprep.subr.mxu0 0.0
    %3324 = vmatpush1.msra.mxu0 %v3297
    %3325 = vmatprep.subr.mxu0 0.0
    %3326 = vmatpush1.msra.mxu0 %v3298
    %3327 = vmatprep.subr.mxu0 0.0
    %3328 = vmatpush1.msra.mxu0 %v3299
    %3329 = vmatprep.subr.mxu0 0.0
    %3330 = vmatpush1.msra.mxu0 %v3300
    %3331 = vmatprep.subr.mxu0 0.0
    %3332 = vmatpush1.msra.mxu0 %v3301
    %3333 = vmatprep.subr.mxu0 0.0
    %3334 = vmatpush1.msra.mxu0 %v3302
    %3335 = vmatprep.subr.mxu0 0.0
    %3336 = vmatpush1.msra.mxu0 %v3303
    %3337 = vmatprep.subr.mxu0 0.0
    %3338 = vmatpush1.msra.mxu0 %v3304
    %3339 = vmatprep.subr.mxu0 0.0
    %3340 = vmatpush1.msra.mxu0 %v3305
    %3341 = vmatprep.subr.mxu0 0.0
    %3342 = vmatpush1.msra.mxu0 %v3306
    %3343 = vmatprep.subr.mxu0 0.0
    %3344 = vmatpush1.msra.mxu0 %v3307
    %3345 = vmatprep.subr.mxu0 0.0
    %3346 = vmatpush1.msra.mxu0 0.0
    %3347 = vmatprep.subr.mxu0 0.0
    %3348 = vmatpush1.msra.mxu0 0.0
    %3349 = vmatprep.subr.mxu0 0.0
    %3350 = vmatpush1.msra.mxu0 0.0
    %3351 = vmatprep.subr.mxu0 0.0
    %3352 = vmatpush1.msra.mxu0 0.0
    %3353 = vmatprep.subr.mxu0 0.0
    %3354 = vmatpush1.msra.mxu0 0.0
    %3355 = vmatprep.subr.mxu0 0.0
    %3356 = vmatpush1.msra.mxu0 0.0
    %3357 = vmatprep.subr.mxu0 0.0
    %3358 = vmatpush1.msra.mxu0 0.0
    %3359 = vmatprep.subr.mxu0 0.0
    %3360 = vmatpush1.msra.mxu0 0.0
    %3361 = vmatprep.subr.mxu0 0.0
    %3362 = vmatpush1.msra.mxu0 0.0
    %3363 = vmatprep.subr.mxu0 0.0
    %3364 = vmatpush1.msra.mxu0 0.0
    %3365 = vmatprep.subr.mxu0 0.0
    %3366 = vmatpush1.msra.mxu0 0.0
    %3367 = vmatprep.subr.mxu0 0.0
    %3368 = vmatpush1.msra.mxu0 0.0
    %3369 = vmatprep.subr.mxu0 0.0
    %3370 = vmatpush1.msra.mxu0 0.0
    %3371 = vmatprep.subr.mxu0 0.0
    %3372 = vmatpush1.msra.mxu0 0.0
    %3373 = vmatprep.subr.mxu0 0.0
    %3374 = vmatpush1.msra.mxu0 0.0
    %3375 = vmatprep.subr.mxu0 0.0
    %3376 = vmatpush1.msra.mxu0 0.0
    %3377 = vmatprep.mubr.f32.mxu0 0.0
    %3378 = vmatmul.mubr.f32.gmra.mrb[0].mxu0 %v3267
    %v3379 = vpop.f32.mrb[0].mxu0
    %v3380 = vadd.f32 %v3312, %v3379
    %v3381 = vpop.f32.mrb[0].mxu0
    %3382 = vmatprep.mubr.f32.mxu0 0.0
    %3383 = vmatmul.mubr.f32.gmra.mrb[0].mxu0 %v3268
    %v3384 = vpop.f32.mrb[0].mxu0
    %v3385 = vadd.f32 %v3312, %v3384
    %v3386 = vpop.f32.mrb[0].mxu0
    %3387 = vmatprep.mubr.f32.mxu0 0.0
    %3388 = vmatmul.mubr.f32.gmra.mrb[0].mxu0 %v3269
    %v3389 = vpop.f32.mrb[0].mxu0
    %v3390 = vadd.f32 %v3312, %v3389
    %v3391 = vpop.f32.mrb[0].mxu0
    %3392 = vmatprep.mubr.f32.mxu0 0.0
    %3393 = vmatmul.mubr.f32.gmra.mrb[0].mxu0 %v3270
    %v3394 = vpop.f32.mrb[0].mxu0
    %v3395 = vadd.f32 %v3312, %v3394
    %v3396 = vpop.f32.mrb[0].mxu0
    %3397 = vmatprep.mubr.f32.mxu0 0.0
    %3398 = vmatmul.mubr.f32.gmra.mrb[0].mxu0 %v3271
    %v3399 = vpop.f32.mrb[0].mxu0
    %v3400 = vadd.f32 %v3312, %v3399
    %v3401 = vpop.f32.mrb[0].mxu0
    %3402 = vmatprep.mubr.f32.mxu0 0.0
    %3403 = vmatmul.mubr.f32.gmra.mrb[0].mxu0 %v3272
    %v3404 = vpop.f32.mrb[0].mxu0
    %v3405 = vadd.f32 %v3312, %v3404
    %v3406 = vpop.f32.mrb[0].mxu0
    %3407 = vmatprep.mubr.f32.mxu0 0.0
    %3408 = vmatmul.mubr.f32.gmra.mrb[0].mxu0 %v3273
    %v3409 = vpop.f32.mrb[0].mxu0
    %v3410 = vadd.f32 %v3312, %v3409
    %v3411 = vpop.f32.mrb[0].mxu0
    %3412 = vmatprep.mubr.f32.mxu0 0.0
    %3413 = vmatmul.mubr.f32.gmra.mrb[0].mxu0 %v3274
    %v3414 = vpop.f32.mrb[0].mxu0
    %v3415 = vadd.f32 %v3312, %v3414
    %v3416 = vpop.f32.mrb[0].mxu0
    %3417 = vmatprep.mubr.f32.mxu0 0.0
    %3418 = vmatmul.mubr.f32.gmra.mrb[0].mxu0 %v3275
    %v3419 = vpop.f32.mrb[0].mxu0
    %v3420 = vadd.f32 %v3312, %v3419
    %v3421 = vpop.f32.mrb[0].mxu0
    %3422 = vmatprep.mubr.f32.mxu0 0.0
    %3423 = vmatmul.mubr.f32.gmra.mrb[0].mxu0 %v3276
    %v3424 = vpop.f32.mrb[0].mxu0
    %v3425 = vadd.f32 %v3312, %v3424
    %v3426 = vpop.f32.mrb[0].mxu0
    %3427 = vmatprep.mubr.f32.mxu0 0.0
    %3428 = vmatmul.mubr.f32.gmra.mrb[0].mxu0 %v3277
    %v3429 = vpop.f32.mrb[0].mxu0
    %v3430 = vadd.f32 %v3312, %v3429
    %v3431 = vpop.f32.mrb[0].mxu0
    %3432 = vmatprep.mubr.f32.mxu0 0.0
    %3433 = vmatmul.mubr.f32.gmra.mrb[0].mxu0 %v3278
    %v3434 = vpop.f32.mrb[0].mxu0
    %v3435 = vadd.f32 %v3312, %v3434
    %v3436 = vpop.f32.mrb[0].mxu0
    %3437 = vmatprep.mubr.f32.mxu0 0.0
    %3438 = vmatmul.mubr.f32.gmra.mrb[0].mxu0 %v3279
    %v3439 = vpop.f32.mrb[0].mxu0
    %v3440 = vadd.f32 %v3312, %v3439
    %v3441 = vpop.f32.mrb[0].mxu0
    %3442 = vmatprep.mubr.f32.mxu0 0.0
    %3443 = vmatmul.mubr.f32.gmra.mrb[0].mxu0 %v3280
    %v3444 = vpop.f32.mrb[0].mxu0
    %v3445 = vadd.f32 %v3312, %v3444
    %v3446 = vpop.f32.mrb[0].mxu0
    %3447 = vmatprep.mubr.f32.mxu0 0.0
    %3448 = vmatmul.mubr.f32.gmra.mrb[0].mxu0 %v3281
    %v3449 = vpop.f32.mrb[0].mxu0
    %v3450 = vadd.f32 %v3312, %v3449
    %v3451 = vpop.f32.mrb[0].mxu0
    %3452 = vmatprep.mubr.f32.mxu0 0.0
    %3453 = vmatmul.mubr.f32.gmra.mrb[0].mxu0 %v3282
    %v3454 = vpop.f32.mrb[0].mxu0
    %v3455 = vadd.f32 %v3312, %v3454
    %v3456 = vpop.f32.mrb[0].mxu0
    %3457 = vmatprep.mubr.f32.mxu0 0.0
    %3458 = vmatmul.mubr.f32.gmra.mrb[0].mxu0 %v3283
    %v3459 = vpop.f32.mrb[0].mxu0
    %v3460 = vadd.f32 %v3312, %v3459
    %v3461 = vpop.f32.mrb[0].mxu0
    %3462 = vmatprep.mubr.f32.mxu0 0.0
    %3463 = vmatmul.mubr.f32.gmra.mrb[0].mxu0 %v3284
    %v3464 = vpop.f32.mrb[0].mxu0
    %v3465 = vadd.f32 %v3312, %v3464
    %v3466 = vpop.f32.mrb[0].mxu0
    %3467 = vmatprep.mubr.f32.mxu0 0.0
    %3468 = vmatmul.mubr.f32.gmra.mrb[0].mxu0 %v3285
    %v3469 = vpop.f32.mrb[0].mxu0
    %v3470 = vadd.f32 %v3312, %v3469
    %v3471 = vpop.f32.mrb[0].mxu0
    %3472 = vmatprep.mubr.f32.mxu0 0.0
    %3473 = vmatmul.mubr.f32.gmra.mrb[0].mxu0 %v3286
    %v3474 = vpop.f32.mrb[0].mxu0
    %v3475 = vadd.f32 %v3312, %v3474
    %v3476 = vpop.f32.mrb[0].mxu0
    %3477 = vmatprep.mubr.f32.mxu0 0.0
    %3478 = vmatmul.mubr.f32.gmra.mrb[0].mxu0 %v3287
    %v3479 = vpop.f32.mrb[0].mxu0
    %v3480 = vadd.f32 %v3312, %v3479
    %v3481 = vpop.f32.mrb[0].mxu0
    %3482 = vmatprep.mubr.f32.mxu0 0.0
    %3483 = vmatmul.mubr.f32.gmra.mrb[0].mxu0 %v3288
    %v3484 = vpop.f32.mrb[0].mxu0
    %v3485 = vadd.f32 %v3312, %v3484
    %v3486 = vpop.f32.mrb[0].mxu0
    %3487 = vmatprep.mubr.f32.mxu0 0.0
    %3488 = vmatmul.mubr.f32.gmra.mrb[0].mxu0 %v3289
    %v3489 = vpop.f32.mrb[0].mxu0
    %v3490 = vadd.f32 %v3312, %v3489
    %v3491 = vpop.f32.mrb[0].mxu0
    %3492 = vmatprep.mubr.f32.mxu0 0.0
    %3493 = vmatmul.mubr.f32.gmra.mrb[0].mxu0 %v3290
    %v3494 = vpop.f32.mrb[0].mxu0
    %v3495 = vadd.f32 %v3312, %v3494
    %v3496 = vpop.f32.mrb[0].mxu0
    %3497 = vmatprep.mubr.f32.mxu0 0.0
    %3498 = vmatmul.mubr.f32.gmra.mrb[0].mxu0 %v3291
    %v3499 = vpop.f32.mrb[0].mxu0
    %v3500 = vadd.f32 %v3312, %v3499
    %v3501 = vpop.f32.mrb[0].mxu0
    %3502 = vdwg.mxu0
    %v3503 = vtanh.pop %v3380
    %v3504 = vtanh.pop %v3385
    %v3505 = vtanh.pop %v3390
    %v3506 = vtanh.pop %v3395
    %v3507 = vtanh.pop %v3400
    %v3508 = vtanh.pop %v3405
    %v3509 = vtanh.pop %v3410
    %v3510 = vtanh.pop %v3415
    %v3511 = vtanh.pop %v3420
    %v3512 = vtanh.pop %v3425
    %v3513 = vtanh.pop %v3430
    %v3514 = vtanh.pop %v3435
    %v3515 = vtanh.pop %v3440
    %v3516 = vtanh.pop %v3445
    %v3517 = vtanh.pop %v3450
    %v3518 = vtanh.pop %v3455
    %v3519 = vtanh.pop %v3460
    %v3520 = vtanh.pop %v3465
    %v3521 = vtanh.pop %v3470
    %v3522 = vtanh.pop %v3475
    %v3523 = vtanh.pop %v3480
    %v3524 = vtanh.pop %v3485
    %v3525 = vtanh.pop %v3490
    %v3526 = vtanh.pop %v3495
    %v3527 = vtanh.pop %v3500
    %s3528 = scalar_lea.vmem [#allocation2], 128
    %v3529 = vld [vmem:[%s3528] sm:$0xff]
    %v3530 = vld [vmem:[%s3528 + $0x8] sm:$0xff]
    %v3531 = vld [vmem:[%s3528 + $0x10] sm:$0xff]
    %v3532 = vld [vmem:[%s3528 + $0x18] sm:$0xff]
    %v3533 = vld [vmem:[%s3528 + $0x20] sm:$0xff]
    %v3534 = vld [vmem:[%s3528 + $0x28] sm:$0xff]
    %v3535 = vld [vmem:[%s3528 + $0x30] sm:$0xff]
    %v3536 = vld [vmem:[%s3528 + $0x38] sm:$0xff]
    %v3537 = vld [vmem:[%s3528 + $0x40] sm:$0xff]
    %v3538 = vld [vmem:[%s3528 + $0x48] sm:$0xff]
    %v3539 = vld [vmem:[%s3528 + $0x50] sm:$0xff]
    %v3540 = vld [vmem:[%s3528 + $0x58] sm:$0xff]
    %v3541 = vld [vmem:[%s3528 + $0x60] sm:$0xff]
    %v3542 = vld [vmem:[%s3528 + $0x68] sm:$0xff]
    %v3543 = vld [vmem:[%s3528 + $0x70] sm:$0xff]
    %v3544 = vld [vmem:[%s3528 + $0x78] sm:$0xff]
    %v3545 = vld [vmem:[%s2 + $0x1] sm:$0x1]
    %v3546 = vlaneseq
    %v3547 = vshrl.u32 %v3546, 7
    %v3548 = vsub.s32 0, %v3547
    %v3549 = vrot.slane %v3545, %v3548
    %3550 = vmatprep.subr.mxu0 0.0
    %3551 = vmatpush1.msra.mxu0 %v3529
    %3552 = vmatprep.subr.mxu0 0.0
    %3553 = vmatpush1.msra.mxu0 %v3530
    %3554 = vmatprep.subr.mxu0 0.0
    %3555 = vmatpush1.msra.mxu0 %v3531
    %3556 = vmatprep.subr.mxu0 0.0
    %3557 = vmatpush1.msra.mxu0 %v3532
    %3558 = vmatprep.subr.mxu0 0.0
    %3559 = vmatpush1.msra.mxu0 %v3533
    %3560 = vmatprep.subr.mxu0 0.0
    %3561 = vmatpush1.msra.mxu0 %v3534
    %3562 = vmatprep.subr.mxu0 0.0
    %3563 = vmatpush1.msra.mxu0 %v3535
    %3564 = vmatprep.subr.mxu0 0.0
    %3565 = vmatpush1.msra.mxu0 %v3536
    %3566 = vmatprep.subr.mxu0 0.0
    %3567 = vmatpush1.msra.mxu0 %v3537
    %3568 = vmatprep.subr.mxu0 0.0
    %3569 = vmatpush1.msra.mxu0 %v3538
    %3570 = vmatprep.subr.mxu0 0.0
    %3571 = vmatpush1.msra.mxu0 %v3539
    %3572 = vmatprep.subr.mxu0 0.0
    %3573 = vmatpush1.msra.mxu0 %v3540
    %3574 = vmatprep.subr.mxu0 0.0
    %3575 = vmatpush1.msra.mxu0 %v3541
    %3576 = vmatprep.subr.mxu0 0.0
    %3577 = vmatpush1.msra.mxu0 %v3542
    %3578 = vmatprep.subr.mxu0 0.0
    %3579 = vmatpush1.msra.mxu0 %v3543
    %3580 = vmatprep.subr.mxu0 0.0
    %3581 = vmatpush1.msra.mxu0 %v3544
    %3582 = vmatprep.subr.mxu0 0.0
    %3583 = vmatpush1.msra.mxu0 0.0
    %3584 = vmatprep.subr.mxu0 0.0
    %3585 = vmatpush1.msra.mxu0 0.0
    %3586 = vmatprep.subr.mxu0 0.0
    %3587 = vmatpush1.msra.mxu0 0.0
    %3588 = vmatprep.subr.mxu0 0.0
    %3589 = vmatpush1.msra.mxu0 0.0
    %3590 = vmatprep.subr.mxu0 0.0
    %3591 = vmatpush1.msra.mxu0 0.0
    %3592 = vmatprep.subr.mxu0 0.0
    %3593 = vmatpush1.msra.mxu0 0.0
    %3594 = vmatprep.subr.mxu0 0.0
    %3595 = vmatpush1.msra.mxu0 0.0
    %3596 = vmatprep.subr.mxu0 0.0
    %3597 = vmatpush1.msra.mxu0 0.0
    %3598 = vmatprep.subr.mxu0 0.0
    %3599 = vmatpush1.msra.mxu0 0.0
    %3600 = vmatprep.subr.mxu0 0.0
    %3601 = vmatpush1.msra.mxu0 0.0
    %3602 = vmatprep.subr.mxu0 0.0
    %3603 = vmatpush1.msra.mxu0 0.0
    %3604 = vmatprep.subr.mxu0 0.0
    %3605 = vmatpush1.msra.mxu0 0.0
    %3606 = vmatprep.subr.mxu0 0.0
    %3607 = vmatpush1.msra.mxu0 0.0
    %3608 = vmatprep.subr.mxu0 0.0
    %3609 = vmatpush1.msra.mxu0 0.0
    %3610 = vmatprep.subr.mxu0 0.0
    %3611 = vmatpush1.msra.mxu0 0.0
    %3612 = vmatprep.subr.mxu0 0.0
    %3613 = vmatpush1.msra.mxu0 0.0
    %3614 = vmatprep.mubr.f32.mxu0 0.0
    %3615 = vmatmul.mubr.f32.gmra.mrb[0].mxu0 %v3503
    %v3616 = vpop.f32.mrb[0].mxu0
    %v3617 = vadd.f32 %v3549, %v3616
    %v3618 = vpop.f32.mrb[0].mxu0
    %3619 = vmatprep.mubr.f32.mxu0 0.0
    %3620 = vmatmul.mubr.f32.gmra.mrb[0].mxu0 %v3504
    %v3621 = vpop.f32.mrb[0].mxu0
    %v3622 = vadd.f32 %v3549, %v3621
    %v3623 = vpop.f32.mrb[0].mxu0
    %3624 = vmatprep.mubr.f32.mxu0 0.0
    %3625 = vmatmul.mubr.f32.gmra.mrb[0].mxu0 %v3505
    %v3626 = vpop.f32.mrb[0].mxu0
    %v3627 = vadd.f32 %v3549, %v3626
    %v3628 = vpop.f32.mrb[0].mxu0
    %3629 = vmatprep.mubr.f32.mxu0 0.0
    %3630 = vmatmul.mubr.f32.gmra.mrb[0].mxu0 %v3506
    %v3631 = vpop.f32.mrb[0].mxu0
    %v3632 = vadd.f32 %v3549, %v3631
    %v3633 = vpop.f32.mrb[0].mxu0
    %3634 = vmatprep.mubr.f32.mxu0 0.0
    %3635 = vmatmul.mubr.f32.gmra.mrb[0].mxu0 %v3507
    %v3636 = vpop.f32.mrb[0].mxu0
    %v3637 = vadd.f32 %v3549, %v3636
    %v3638 = vpop.f32.mrb[0].mxu0
    %3639 = vmatprep.mubr.f32.mxu0 0.0
    %3640 = vmatmul.mubr.f32.gmra.mrb[0].mxu0 %v3508
    %v3641 = vpop.f32.mrb[0].mxu0
    %v3642 = vadd.f32 %v3549, %v3641
    %v3643 = vpop.f32.mrb[0].mxu0
    %3644 = vmatprep.mubr.f32.mxu0 0.0
    %3645 = vmatmul.mubr.f32.gmra.mrb[0].mxu0 %v3509
    %v3646 = vpop.f32.mrb[0].mxu0
    %v3647 = vadd.f32 %v3549, %v3646
    %v3648 = vpop.f32.mrb[0].mxu0
    %3649 = vmatprep.mubr.f32.mxu0 0.0
    %3650 = vmatmul.mubr.f32.gmra.mrb[0].mxu0 %v3510
    %v3651 = vpop.f32.mrb[0].mxu0
    %v3652 = vadd.f32 %v3549, %v3651
    %v3653 = vpop.f32.mrb[0].mxu0
    %3654 = vmatprep.mubr.f32.mxu0 0.0
    %3655 = vmatmul.mubr.f32.gmra.mrb[0].mxu0 %v3511
    %v3656 = vpop.f32.mrb[0].mxu0
    %v3657 = vadd.f32 %v3549, %v3656
    %v3658 = vpop.f32.mrb[0].mxu0
    %3659 = vmatprep.mubr.f32.mxu0 0.0
    %3660 = vmatmul.mubr.f32.gmra.mrb[0].mxu0 %v3512
    %v3661 = vpop.f32.mrb[0].mxu0
    %v3662 = vadd.f32 %v3549, %v3661
    %v3663 = vpop.f32.mrb[0].mxu0
    %3664 = vmatprep.mubr.f32.mxu0 0.0
    %3665 = vmatmul.mubr.f32.gmra.mrb[0].mxu0 %v3513
    %v3666 = vpop.f32.mrb[0].mxu0
    %v3667 = vadd.f32 %v3549, %v3666
    %v3668 = vpop.f32.mrb[0].mxu0
    %3669 = vmatprep.mubr.f32.mxu0 0.0
    %3670 = vmatmul.mubr.f32.gmra.mrb[0].mxu0 %v3514
    %v3671 = vpop.f32.mrb[0].mxu0
    %v3672 = vadd.f32 %v3549, %v3671
    %v3673 = vpop.f32.mrb[0].mxu0
    %3674 = vmatprep.mubr.f32.mxu0 0.0
    %3675 = vmatmul.mubr.f32.gmra.mrb[0].mxu0 %v3515
    %v3676 = vpop.f32.mrb[0].mxu0
    %v3677 = vadd.f32 %v3549, %v3676
    %v3678 = vpop.f32.mrb[0].mxu0
    %3679 = vmatprep.mubr.f32.mxu0 0.0
    %3680 = vmatmul.mubr.f32.gmra.mrb[0].mxu0 %v3516
    %v3681 = vpop.f32.mrb[0].mxu0
    %v3682 = vadd.f32 %v3549, %v3681
    %v3683 = vpop.f32.mrb[0].mxu0
    %3684 = vmatprep.mubr.f32.mxu0 0.0
    %3685 = vmatmul.mubr.f32.gmra.mrb[0].mxu0 %v3517
    %v3686 = vpop.f32.mrb[0].mxu0
    %v3687 = vadd.f32 %v3549, %v3686
    %v3688 = vpop.f32.mrb[0].mxu0
    %3689 = vmatprep.mubr.f32.mxu0 0.0
    %3690 = vmatmul.mubr.f32.gmra.mrb[0].mxu0 %v3518
    %v3691 = vpop.f32.mrb[0].mxu0
    %v3692 = vadd.f32 %v3549, %v3691
    %v3693 = vpop.f32.mrb[0].mxu0
    %3694 = vmatprep.mubr.f32.mxu0 0.0
    %3695 = vmatmul.mubr.f32.gmra.mrb[0].mxu0 %v3519
    %v3696 = vpop.f32.mrb[0].mxu0
    %v3697 = vadd.f32 %v3549, %v3696
    %v3698 = vpop.f32.mrb[0].mxu0
    %3699 = vmatprep.mubr.f32.mxu0 0.0
    %3700 = vmatmul.mubr.f32.gmra.mrb[0].mxu0 %v3520
    %v3701 = vpop.f32.mrb[0].mxu0
    %v3702 = vadd.f32 %v3549, %v3701
    %v3703 = vpop.f32.mrb[0].mxu0
    %3704 = vmatprep.mubr.f32.mxu0 0.0
    %3705 = vmatmul.mubr.f32.gmra.mrb[0].mxu0 %v3521
    %v3706 = vpop.f32.mrb[0].mxu0
    %v3707 = vadd.f32 %v3549, %v3706
    %v3708 = vpop.f32.mrb[0].mxu0
    %3709 = vmatprep.mubr.f32.mxu0 0.0
    %3710 = vmatmul.mubr.f32.gmra.mrb[0].mxu0 %v3522
    %v3711 = vpop.f32.mrb[0].mxu0
    %v3712 = vadd.f32 %v3549, %v3711
    %v3713 = vpop.f32.mrb[0].mxu0
    %3714 = vmatprep.mubr.f32.mxu0 0.0
    %3715 = vmatmul.mubr.f32.gmra.mrb[0].mxu0 %v3523
    %v3716 = vpop.f32.mrb[0].mxu0
    %v3717 = vadd.f32 %v3549, %v3716
    %v3718 = vpop.f32.mrb[0].mxu0
    %3719 = vmatprep.mubr.f32.mxu0 0.0
    %3720 = vmatmul.mubr.f32.gmra.mrb[0].mxu0 %v3524
    %v3721 = vpop.f32.mrb[0].mxu0
    %v3722 = vadd.f32 %v3549, %v3721
    %v3723 = vpop.f32.mrb[0].mxu0
    %3724 = vmatprep.mubr.f32.mxu0 0.0
    %3725 = vmatmul.mubr.f32.gmra.mrb[0].mxu0 %v3525
    %v3726 = vpop.f32.mrb[0].mxu0
    %v3727 = vadd.f32 %v3549, %v3726
    %v3728 = vpop.f32.mrb[0].mxu0
    %3729 = vmatprep.mubr.f32.mxu0 0.0
    %3730 = vmatmul.mubr.f32.gmra.mrb[0].mxu0 %v3526
    %v3731 = vpop.f32.mrb[0].mxu0
    %v3732 = vadd.f32 %v3549, %v3731
    %v3733 = vpop.f32.mrb[0].mxu0
    %3734 = vmatprep.mubr.f32.mxu0 0.0
    %3735 = vmatmul.mubr.f32.gmra.mrb[0].mxu0 %v3527
    %v3736 = vpop.f32.mrb[0].mxu0
    %v3737 = vadd.f32 %v3549, %v3736
    %v3738 = vpop.f32.mrb[0].mxu0
    %3739 = vdwg.mxu0
    %v3740 = vtanh.pop %v3617
    %v3741 = vtanh.pop %v3622
    %v3742 = vtanh.pop %v3627
    %v3743 = vtanh.pop %v3632
    %v3744 = vtanh.pop %v3637
    %v3745 = vtanh.pop %v3642
    %v3746 = vtanh.pop %v3647
    %v3747 = vtanh.pop %v3652
    %v3748 = vtanh.pop %v3657
    %v3749 = vtanh.pop %v3662
    %v3750 = vtanh.pop %v3667
    %v3751 = vtanh.pop %v3672
    %v3752 = vtanh.pop %v3677
    %v3753 = vtanh.pop %v3682
    %v3754 = vtanh.pop %v3687
    %v3755 = vtanh.pop %v3692
    %v3756 = vtanh.pop %v3697
    %v3757 = vtanh.pop %v3702
    %v3758 = vtanh.pop %v3707
    %v3759 = vtanh.pop %v3712
    %v3760 = vtanh.pop %v3717
    %v3761 = vtanh.pop %v3722
    %v3762 = vtanh.pop %v3727
    %v3763 = vtanh.pop %v3732
    %v3764 = vtanh.pop %v3737
    %s3765 = scalar_lea.vmem [#allocation2], 256
    %v3766 = vld [vmem:[%s3765] sm:$0xff]
    %v3767 = vld [vmem:[%s3765 + $0x8] sm:$0xff]
    %v3768 = vld [vmem:[%s3765 + $0x10] sm:$0xff]
    %v3769 = vld [vmem:[%s3765 + $0x18] sm:$0xff]
    %v3770 = vld [vmem:[%s3765 + $0x20] sm:$0xff]
    %v3771 = vld [vmem:[%s3765 + $0x28] sm:$0xff]
    %v3772 = vld [vmem:[%s3765 + $0x30] sm:$0xff]
    %v3773 = vld [vmem:[%s3765 + $0x38] sm:$0xff]
    %v3774 = vld [vmem:[%s3765 + $0x40] sm:$0xff]
    %v3775 = vld [vmem:[%s3765 + $0x48] sm:$0xff]
    %v3776 = vld [vmem:[%s3765 + $0x50] sm:$0xff]
    %v3777 = vld [vmem:[%s3765 + $0x58] sm:$0xff]
    %v3778 = vld [vmem:[%s3765 + $0x60] sm:$0xff]
    %v3779 = vld [vmem:[%s3765 + $0x68] sm:$0xff]
    %v3780 = vld [vmem:[%s3765 + $0x70] sm:$0xff]
    %v3781 = vld [vmem:[%s3765 + $0x78] sm:$0xff]
    %v3782 = vld [vmem:[%s2 + $0x2] sm:$0x1]
    %v3783 = vlaneseq
    %v3784 = vshrl.u32 %v3783, 7
    %v3785 = vsub.s32 0, %v3784
    %v3786 = vrot.slane %v3782, %v3785
    %3787 = vmatprep.subr.mxu0 0.0
    %3788 = vmatpush1.msra.mxu0 %v3766
    %3789 = vmatprep.subr.mxu0 0.0
    %3790 = vmatpush1.msra.mxu0 %v3767
    %3791 = vmatprep.subr.mxu0 0.0
    %3792 = vmatpush1.msra.mxu0 %v3768
    %3793 = vmatprep.subr.mxu0 0.0
    %3794 = vmatpush1.msra.mxu0 %v3769
    %3795 = vmatprep.subr.mxu0 0.0
    %3796 = vmatpush1.msra.mxu0 %v3770
    %3797 = vmatprep.subr.mxu0 0.0
    %3798 = vmatpush1.msra.mxu0 %v3771
    %3799 = vmatprep.subr.mxu0 0.0
    %3800 = vmatpush1.msra.mxu0 %v3772
    %3801 = vmatprep.subr.mxu0 0.0
    %3802 = vmatpush1.msra.mxu0 %v3773
    %3803 = vmatprep.subr.mxu0 0.0
    %3804 = vmatpush1.msra.mxu0 %v3774
    %3805 = vmatprep.subr.mxu0 0.0
    %3806 = vmatpush1.msra.mxu0 %v3775
    %3807 = vmatprep.subr.mxu0 0.0
    %3808 = vmatpush1.msra.mxu0 %v3776
    %3809 = vmatprep.subr.mxu0 0.0
    %3810 = vmatpush1.msra.mxu0 %v3777
    %3811 = vmatprep.subr.mxu0 0.0
    %3812 = vmatpush1.msra.mxu0 %v3778
    %3813 = vmatprep.subr.mxu0 0.0
    %3814 = vmatpush1.msra.mxu0 %v3779
    %3815 = vmatprep.subr.mxu0 0.0
    %3816 = vmatpush1.msra.mxu0 %v3780
    %3817 = vmatprep.subr.mxu0 0.0
    %3818 = vmatpush1.msra.mxu0 %v3781
    %3819 = vmatprep.subr.mxu0 0.0
    %3820 = vmatpush1.msra.mxu0 0.0
    %3821 = vmatprep.subr.mxu0 0.0
    %3822 = vmatpush1.msra.mxu0 0.0
    %3823 = vmatprep.subr.mxu0 0.0
    %3824 = vmatpush1.msra.mxu0 0.0
    %3825 = vmatprep.subr.mxu0 0.0
    %3826 = vmatpush1.msra.mxu0 0.0
    %3827 = vmatprep.subr.mxu0 0.0
    %3828 = vmatpush1.msra.mxu0 0.0
    %3829 = vmatprep.subr.mxu0 0.0
    %3830 = vmatpush1.msra.mxu0 0.0
    %3831 = vmatprep.subr.mxu0 0.0
    %3832 = vmatpush1.msra.mxu0 0.0
    %3833 = vmatprep.subr.mxu0 0.0
    %3834 = vmatpush1.msra.mxu0 0.0
    %3835 = vmatprep.subr.mxu0 0.0
    %3836 = vmatpush1.msra.mxu0 0.0
    %3837 = vmatprep.subr.mxu0 0.0
    %3838 = vmatpush1.msra.mxu0 0.0
    %3839 = vmatprep.subr.mxu0 0.0
    %3840 = vmatpush1.msra.mxu0 0.0
    %3841 = vmatprep.subr.mxu0 0.0
    %3842 = vmatpush1.msra.mxu0 0.0
    %3843 = vmatprep.subr.mxu0 0.0
    %3844 = vmatpush1.msra.mxu0 0.0
    %3845 = vmatprep.subr.mxu0 0.0
    %3846 = vmatpush1.msra.mxu0 0.0
    %3847 = vmatprep.subr.mxu0 0.0
    %3848 = vmatpush1.msra.mxu0 0.0
    %3849 = vmatprep.subr.mxu0 0.0
    %3850 = vmatpush1.msra.mxu0 0.0
    %3851 = vmatprep.mubr.f32.mxu0 0.0
    %3852 = vmatmul.mubr.f32.gmra.mrb[0].mxu0 %v3740
    %v3853 = vpop.f32.mrb[0].mxu0
    %v3854 = vadd.f32 %v3786, %v3853
    %v3855 = vpop.f32.mrb[0].mxu0
    %3856 = vmatprep.mubr.f32.mxu0 0.0
    %3857 = vmatmul.mubr.f32.gmra.mrb[0].mxu0 %v3741
    %v3858 = vpop.f32.mrb[0].mxu0
    %v3859 = vadd.f32 %v3786, %v3858
    %v3860 = vpop.f32.mrb[0].mxu0
    %3861 = vmatprep.mubr.f32.mxu0 0.0
    %3862 = vmatmul.mubr.f32.gmra.mrb[0].mxu0 %v3742
    %v3863 = vpop.f32.mrb[0].mxu0
    %v3864 = vadd.f32 %v3786, %v3863
    %v3865 = vpop.f32.mrb[0].mxu0
    %3866 = vmatprep.mubr.f32.mxu0 0.0
    %3867 = vmatmul.mubr.f32.gmra.mrb[0].mxu0 %v3743
    %v3868 = vpop.f32.mrb[0].mxu0
    %v3869 = vadd.f32 %v3786, %v3868
    %v3870 = vpop.f32.mrb[0].mxu0
    %3871 = vmatprep.mubr.f32.mxu0 0.0
    %3872 = vmatmul.mubr.f32.gmra.mrb[0].mxu0 %v3744
    %v3873 = vpop.f32.mrb[0].mxu0
    %v3874 = vadd.f32 %v3786, %v3873
    %v3875 = vpop.f32.mrb[0].mxu0
    %3876 = vmatprep.mubr.f32.mxu0 0.0
    %3877 = vmatmul.mubr.f32.gmra.mrb[0].mxu0 %v3745
    %v3878 = vpop.f32.mrb[0].mxu0
    %v3879 = vadd.f32 %v3786, %v3878
    %v3880 = vpop.f32.mrb[0].mxu0
    %3881 = vmatprep.mubr.f32.mxu0 0.0
    %3882 = vmatmul.mubr.f32.gmra.mrb[0].mxu0 %v3746
    %v3883 = vpop.f32.mrb[0].mxu0
    %v3884 = vadd.f32 %v3786, %v3883
    %v3885 = vpop.f32.mrb[0].mxu0
    %3886 = vmatprep.mubr.f32.mxu0 0.0
    %3887 = vmatmul.mubr.f32.gmra.mrb[0].mxu0 %v3747
    %v3888 = vpop.f32.mrb[0].mxu0
    %v3889 = vadd.f32 %v3786, %v3888
    %v3890 = vpop.f32.mrb[0].mxu0
    %3891 = vmatprep.mubr.f32.mxu0 0.0
    %3892 = vmatmul.mubr.f32.gmra.mrb[0].mxu0 %v3748
    %v3893 = vpop.f32.mrb[0].mxu0
    %v3894 = vadd.f32 %v3786, %v3893
    %v3895 = vpop.f32.mrb[0].mxu0
    %3896 = vmatprep.mubr.f32.mxu0 0.0
    %3897 = vmatmul.mubr.f32.gmra.mrb[0].mxu0 %v3749
    %v3898 = vpop.f32.mrb[0].mxu0
    %v3899 = vadd.f32 %v3786, %v3898
    %v3900 = vpop.f32.mrb[0].mxu0
    %3901 = vmatprep.mubr.f32.mxu0 0.0
    %3902 = vmatmul.mubr.f32.gmra.mrb[0].mxu0 %v3750
    %v3903 = vpop.f32.mrb[0].mxu0
    %v3904 = vadd.f32 %v3786, %v3903
    %v3905 = vpop.f32.mrb[0].mxu0
    %3906 = vmatprep.mubr.f32.mxu0 0.0
    %3907 = vmatmul.mubr.f32.gmra.mrb[0].mxu0 %v3751
    %v3908 = vpop.f32.mrb[0].mxu0
    %v3909 = vadd.f32 %v3786, %v3908
    %v3910 = vpop.f32.mrb[0].mxu0
    %3911 = vmatprep.mubr.f32.mxu0 0.0
    %3912 = vmatmul.mubr.f32.gmra.mrb[0].mxu0 %v3752
    %v3913 = vpop.f32.mrb[0].mxu0
    %v3914 = vadd.f32 %v3786, %v3913
    %v3915 = vpop.f32.mrb[0].mxu0
    %3916 = vmatprep.mubr.f32.mxu0 0.0
    %3917 = vmatmul.mubr.f32.gmra.mrb[0].mxu0 %v3753
    %v3918 = vpop.f32.mrb[0].mxu0
    %v3919 = vadd.f32 %v3786, %v3918
    %v3920 = vpop.f32.mrb[0].mxu0
    %3921 = vmatprep.mubr.f32.mxu0 0.0
    %3922 = vmatmul.mubr.f32.gmra.mrb[0].mxu0 %v3754
    %v3923 = vpop.f32.mrb[0].mxu0
    %v3924 = vadd.f32 %v3786, %v3923
    %v3925 = vpop.f32.mrb[0].mxu0
    %3926 = vmatprep.mubr.f32.mxu0 0.0
    %3927 = vmatmul.mubr.f32.gmra.mrb[0].mxu0 %v3755
    %v3928 = vpop.f32.mrb[0].mxu0
    %v3929 = vadd.f32 %v3786, %v3928
    %v3930 = vpop.f32.mrb[0].mxu0
    %3931 = vmatprep.mubr.f32.mxu0 0.0
    %3932 = vmatmul.mubr.f32.gmra.mrb[0].mxu0 %v3756
    %v3933 = vpop.f32.mrb[0].mxu0
    %v3934 = vadd.f32 %v3786, %v3933
    %v3935 = vpop.f32.mrb[0].mxu0
    %3936 = vmatprep.mubr.f32.mxu0 0.0
    %3937 = vmatmul.mubr.f32.gmra.mrb[0].mxu0 %v3757
    %v3938 = vpop.f32.mrb[0].mxu0
    %v3939 = vadd.f32 %v3786, %v3938
    %v3940 = vpop.f32.mrb[0].mxu0
    %3941 = vmatprep.mubr.f32.mxu0 0.0
    %3942 = vmatmul.mubr.f32.gmra.mrb[0].mxu0 %v3758
    %v3943 = vpop.f32.mrb[0].mxu0
    %v3944 = vadd.f32 %v3786, %v3943
    %v3945 = vpop.f32.mrb[0].mxu0
    %3946 = vmatprep.mubr.f32.mxu0 0.0
    %3947 = vmatmul.mubr.f32.gmra.mrb[0].mxu0 %v3759
    %v3948 = vpop.f32.mrb[0].mxu0
    %v3949 = vadd.f32 %v3786, %v3948
    %v3950 = vpop.f32.mrb[0].mxu0
    %3951 = vmatprep.mubr.f32.mxu0 0.0
    %3952 = vmatmul.mubr.f32.gmra.mrb[0].mxu0 %v3760
    %v3953 = vpop.f32.mrb[0].mxu0
    %v3954 = vadd.f32 %v3786, %v3953
    %v3955 = vpop.f32.mrb[0].mxu0
    %3956 = vmatprep.mubr.f32.mxu0 0.0
    %3957 = vmatmul.mubr.f32.gmra.mrb[0].mxu0 %v3761
    %v3958 = vpop.f32.mrb[0].mxu0
    %v3959 = vadd.f32 %v3786, %v3958
    %v3960 = vpop.f32.mrb[0].mxu0
    %3961 = vmatprep.mubr.f32.mxu0 0.0
    %3962 = vmatmul.mubr.f32.gmra.mrb[0].mxu0 %v3762
    %v3963 = vpop.f32.mrb[0].mxu0
    %v3964 = vadd.f32 %v3786, %v3963
    %v3965 = vpop.f32.mrb[0].mxu0
    %3966 = vmatprep.mubr.f32.mxu0 0.0
    %3967 = vmatmul.mubr.f32.gmra.mrb[0].mxu0 %v3763
    %v3968 = vpop.f32.mrb[0].mxu0
    %v3969 = vadd.f32 %v3786, %v3968
    %v3970 = vpop.f32.mrb[0].mxu0
    %3971 = vmatprep.mubr.f32.mxu0 0.0
    %3972 = vmatmul.mubr.f32.gmra.mrb[0].mxu0 %v3764
    %v3973 = vpop.f32.mrb[0].mxu0
    %v3974 = vadd.f32 %v3786, %v3973
    %v3975 = vpop.f32.mrb[0].mxu0
    %3976 = vdwg.mxu0
    %v3977 = vtanh.pop %v3854
    %v3978 = vtanh.pop %v3859
    %v3979 = vtanh.pop %v3864
    %v3980 = vtanh.pop %v3869
    %v3981 = vtanh.pop %v3874
    %v3982 = vtanh.pop %v3879
    %v3983 = vtanh.pop %v3884
    %v3984 = vtanh.pop %v3889
    %v3985 = vtanh.pop %v3894
    %v3986 = vtanh.pop %v3899
    %v3987 = vtanh.pop %v3904
    %v3988 = vtanh.pop %v3909
    %v3989 = vtanh.pop %v3914
    %v3990 = vtanh.pop %v3919
    %v3991 = vtanh.pop %v3924
    %v3992 = vtanh.pop %v3929
    %v3993 = vtanh.pop %v3934
    %v3994 = vtanh.pop %v3939
    %v3995 = vtanh.pop %v3944
    %v3996 = vtanh.pop %v3949
    %v3997 = vtanh.pop %v3954
    %v3998 = vtanh.pop %v3959
    %v3999 = vtanh.pop %v3964
    %v4000 = vtanh.pop %v3969
    %v4001 = vtanh.pop %v3974
    %s4002 = scalar_lea.vmem [#allocation2], 384
    %v4003 = vld [vmem:[%s4002] sm:$0xff]
    %v4004 = vld [vmem:[%s4002 + $0x8] sm:$0xff]
    %v4005 = vld [vmem:[%s4002 + $0x10] sm:$0xff]
    %v4006 = vld [vmem:[%s4002 + $0x18] sm:$0xff]
    %v4007 = vld [vmem:[%s4002 + $0x20] sm:$0xff]
    %v4008 = vld [vmem:[%s4002 + $0x28] sm:$0xff]
    %v4009 = vld [vmem:[%s4002 + $0x30] sm:$0xff]
    %v4010 = vld [vmem:[%s4002 + $0x38] sm:$0xff]
    %v4011 = vld [vmem:[%s4002 + $0x40] sm:$0xff]
    %v4012 = vld [vmem:[%s4002 + $0x48] sm:$0xff]
    %v4013 = vld [vmem:[%s4002 + $0x50] sm:$0xff]
    %v4014 = vld [vmem:[%s4002 + $0x58] sm:$0xff]
    %v4015 = vld [vmem:[%s4002 + $0x60] sm:$0xff]
    %v4016 = vld [vmem:[%s4002 + $0x68] sm:$0xff]
    %v4017 = vld [vmem:[%s4002 + $0x70] sm:$0xff]
    %v4018 = vld [vmem:[%s4002 + $0x78] sm:$0xff]
    %v4019 = vld [vmem:[%s2 + $0x3] sm:$0x1]
    %v4020 = vlaneseq
    %v4021 = vshrl.u32 %v4020, 7
    %v4022 = vsub.s32 0, %v4021
    %v4023 = vrot.slane %v4019, %v4022
    %4024 = vmatprep.subr.mxu0 0.0
    %4025 = vmatpush1.msra.mxu0 %v4003
    %4026 = vmatprep.subr.mxu0 0.0
    %4027 = vmatpush1.msra.mxu0 %v4004
    %4028 = vmatprep.subr.mxu0 0.0
    %4029 = vmatpush1.msra.mxu0 %v4005
    %4030 = vmatprep.subr.mxu0 0.0
    %4031 = vmatpush1.msra.mxu0 %v4006
    %4032 = vmatprep.subr.mxu0 0.0
    %4033 = vmatpush1.msra.mxu0 %v4007
    %4034 = vmatprep.subr.mxu0 0.0
    %4035 = vmatpush1.msra.mxu0 %v4008
    %4036 = vmatprep.subr.mxu0 0.0
    %4037 = vmatpush1.msra.mxu0 %v4009
    %4038 = vmatprep.subr.mxu0 0.0
    %4039 = vmatpush1.msra.mxu0 %v4010
    %4040 = vmatprep.subr.mxu0 0.0
    %4041 = vmatpush1.msra.mxu0 %v4011
    %4042 = vmatprep.subr.mxu0 0.0
    %4043 = vmatpush1.msra.mxu0 %v4012
    %4044 = vmatprep.subr.mxu0 0.0
    %4045 = vmatpush1.msra.mxu0 %v4013
    %4046 = vmatprep.subr.mxu0 0.0
    %4047 = vmatpush1.msra.mxu0 %v4014
    %4048 = vmatprep.subr.mxu0 0.0
    %4049 = vmatpush1.msra.mxu0 %v4015
    %4050 = vmatprep.subr.mxu0 0.0
    %4051 = vmatpush1.msra.mxu0 %v4016
    %4052 = vmatprep.subr.mxu0 0.0
    %4053 = vmatpush1.msra.mxu0 %v4017
    %4054 = vmatprep.subr.mxu0 0.0
    %4055 = vmatpush1.msra.mxu0 %v4018
    %4056 = vmatprep.subr.mxu0 0.0
    %4057 = vmatpush1.msra.mxu0 0.0
    %4058 = vmatprep.subr.mxu0 0.0
    %4059 = vmatpush1.msra.mxu0 0.0
    %4060 = vmatprep.subr.mxu0 0.0
    %4061 = vmatpush1.msra.mxu0 0.0
    %4062 = vmatprep.subr.mxu0 0.0
    %4063 = vmatpush1.msra.mxu0 0.0
    %4064 = vmatprep.subr.mxu0 0.0
    %4065 = vmatpush1.msra.mxu0 0.0
    %4066 = vmatprep.subr.mxu0 0.0
    %4067 = vmatpush1.msra.mxu0 0.0
    %4068 = vmatprep.subr.mxu0 0.0
    %4069 = vmatpush1.msra.mxu0 0.0
    %4070 = vmatprep.subr.mxu0 0.0
    %4071 = vmatpush1.msra.mxu0 0.0
    %4072 = vmatprep.subr.mxu0 0.0
    %4073 = vmatpush1.msra.mxu0 0.0
    %4074 = vmatprep.subr.mxu0 0.0
    %4075 = vmatpush1.msra.mxu0 0.0
    %4076 = vmatprep.subr.mxu0 0.0
    %4077 = vmatpush1.msra.mxu0 0.0
    %4078 = vmatprep.subr.mxu0 0.0
    %4079 = vmatpush1.msra.mxu0 0.0
    %4080 = vmatprep.subr.mxu0 0.0
    %4081 = vmatpush1.msra.mxu0 0.0
    %4082 = vmatprep.subr.mxu0 0.0
    %4083 = vmatpush1.msra.mxu0 0.0
    %4084 = vmatprep.subr.mxu0 0.0
    %4085 = vmatpush1.msra.mxu0 0.0
    %4086 = vmatprep.subr.mxu0 0.0
    %4087 = vmatpush1.msra.mxu0 0.0
    %4088 = vmatprep.mubr.f32.mxu0 0.0
    %4089 = vmatmul.mubr.f32.gmra.mrb[0].mxu0 %v3977
    %v4090 = vpop.f32.mrb[0].mxu0
    %v4091 = vadd.f32 %v4023, %v4090
    %v4092 = vpop.f32.mrb[0].mxu0
    %4093 = vmatprep.mubr.f32.mxu0 0.0
    %4094 = vmatmul.mubr.f32.gmra.mrb[0].mxu0 %v3978
    %v4095 = vpop.f32.mrb[0].mxu0
    %v4096 = vadd.f32 %v4023, %v4095
    %v4097 = vpop.f32.mrb[0].mxu0
    %4098 = vmatprep.mubr.f32.mxu0 0.0
    %4099 = vmatmul.mubr.f32.gmra.mrb[0].mxu0 %v3979
    %v4100 = vpop.f32.mrb[0].mxu0
    %v4101 = vadd.f32 %v4023, %v4100
    %v4102 = vpop.f32.mrb[0].mxu0
    %4103 = vmatprep.mubr.f32.mxu0 0.0
    %4104 = vmatmul.mubr.f32.gmra.mrb[0].mxu0 %v3980
    %v4105 = vpop.f32.mrb[0].mxu0
    %v4106 = vadd.f32 %v4023, %v4105
    %v4107 = vpop.f32.mrb[0].mxu0
    %4108 = vmatprep.mubr.f32.mxu0 0.0
    %4109 = vmatmul.mubr.f32.gmra.mrb[0].mxu0 %v3981
    %v4110 = vpop.f32.mrb[0].mxu0
    %v4111 = vadd.f32 %v4023, %v4110
    %v4112 = vpop.f32.mrb[0].mxu0
    %4113 = vmatprep.mubr.f32.mxu0 0.0
    %4114 = vmatmul.mubr.f32.gmra.mrb[0].mxu0 %v3982
    %v4115 = vpop.f32.mrb[0].mxu0
    %v4116 = vadd.f32 %v4023, %v4115
    %v4117 = vpop.f32.mrb[0].mxu0
    %4118 = vmatprep.mubr.f32.mxu0 0.0
    %4119 = vmatmul.mubr.f32.gmra.mrb[0].mxu0 %v3983
    %v4120 = vpop.f32.mrb[0].mxu0
    %v4121 = vadd.f32 %v4023, %v4120
    %v4122 = vpop.f32.mrb[0].mxu0
    %4123 = vmatprep.mubr.f32.mxu0 0.0
    %4124 = vmatmul.mubr.f32.gmra.mrb[0].mxu0 %v3984
    %v4125 = vpop.f32.mrb[0].mxu0
    %v4126 = vadd.f32 %v4023, %v4125
    %v4127 = vpop.f32.mrb[0].mxu0
    %4128 = vmatprep.mubr.f32.mxu0 0.0
    %4129 = vmatmul.mubr.f32.gmra.mrb[0].mxu0 %v3985
    %v4130 = vpop.f32.mrb[0].mxu0
    %v4131 = vadd.f32 %v4023, %v4130
    %v4132 = vpop.f32.mrb[0].mxu0
    %4133 = vmatprep.mubr.f32.mxu0 0.0
    %4134 = vmatmul.mubr.f32.gmra.mrb[0].mxu0 %v3986
    %v4135 = vpop.f32.mrb[0].mxu0
    %v4136 = vadd.f32 %v4023, %v4135
    %v4137 = vpop.f32.mrb[0].mxu0
    %4138 = vmatprep.mubr.f32.mxu0 0.0
    %4139 = vmatmul.mubr.f32.gmra.mrb[0].mxu0 %v3987
    %v4140 = vpop.f32.mrb[0].mxu0
    %v4141 = vadd.f32 %v4023, %v4140
    %v4142 = vpop.f32.mrb[0].mxu0
    %4143 = vmatprep.mubr.f32.mxu0 0.0
    %4144 = vmatmul.mubr.f32.gmra.mrb[0].mxu0 %v3988
    %v4145 = vpop.f32.mrb[0].mxu0
    %v4146 = vadd.f32 %v4023, %v4145
    %v4147 = vpop.f32.mrb[0].mxu0
    %4148 = vmatprep.mubr.f32.mxu0 0.0
    %4149 = vmatmul.mubr.f32.gmra.mrb[0].mxu0 %v3989
    %v4150 = vpop.f32.mrb[0].mxu0
    %v4151 = vadd.f32 %v4023, %v4150
    %v4152 = vpop.f32.mrb[0].mxu0
    %4153 = vmatprep.mubr.f32.mxu0 0.0
    %4154 = vmatmul.mubr.f32.gmra.mrb[0].mxu0 %v3990
    %v4155 = vpop.f32.mrb[0].mxu0
    %v4156 = vadd.f32 %v4023, %v4155
    %v4157 = vpop.f32.mrb[0].mxu0
    %4158 = vmatprep.mubr.f32.mxu0 0.0
    %4159 = vmatmul.mubr.f32.gmra.mrb[0].mxu0 %v3991
    %v4160 = vpop.f32.mrb[0].mxu0
    %v4161 = vadd.f32 %v4023, %v4160
    %v4162 = vpop.f32.mrb[0].mxu0
    %4163 = vmatprep.mubr.f32.mxu0 0.0
    %4164 = vmatmul.mubr.f32.gmra.mrb[0].mxu0 %v3992
    %v4165 = vpop.f32.mrb[0].mxu0
    %v4166 = vadd.f32 %v4023, %v4165
    %v4167 = vpop.f32.mrb[0].mxu0
    %4168 = vmatprep.mubr.f32.mxu0 0.0
    %4169 = vmatmul.mubr.f32.gmra.mrb[0].mxu0 %v3993
    %v4170 = vpop.f32.mrb[0].mxu0
    %v4171 = vadd.f32 %v4023, %v4170
    %v4172 = vpop.f32.mrb[0].mxu0
    %4173 = vmatprep.mubr.f32.mxu0 0.0
    %4174 = vmatmul.mubr.f32.gmra.mrb[0].mxu0 %v3994
    %v4175 = vpop.f32.mrb[0].mxu0
    %v4176 = vadd.f32 %v4023, %v4175
    %v4177 = vpop.f32.mrb[0].mxu0
    %4178 = vmatprep.mubr.f32.mxu0 0.0
    %4179 = vmatmul.mubr.f32.gmra.mrb[0].mxu0 %v3995
    %v4180 = vpop.f32.mrb[0].mxu0
    %v4181 = vadd.f32 %v4023, %v4180
    %v4182 = vpop.f32.mrb[0].mxu0
    %4183 = vmatprep.mubr.f32.mxu0 0.0
    %4184 = vmatmul.mubr.f32.gmra.mrb[0].mxu0 %v3996
    %v4185 = vpop.f32.mrb[0].mxu0
    %v4186 = vadd.f32 %v4023, %v4185
    %v4187 = vpop.f32.mrb[0].mxu0
    %4188 = vmatprep.mubr.f32.mxu0 0.0
    %4189 = vmatmul.mubr.f32.gmra.mrb[0].mxu0 %v3997
    %v4190 = vpop.f32.mrb[0].mxu0
    %v4191 = vadd.f32 %v4023, %v4190
    %v4192 = vpop.f32.mrb[0].mxu0
    %4193 = vmatprep.mubr.f32.mxu0 0.0
    %4194 = vmatmul.mubr.f32.gmra.mrb[0].mxu0 %v3998
    %v4195 = vpop.f32.mrb[0].mxu0
    %v4196 = vadd.f32 %v4023, %v4195
    %v4197 = vpop.f32.mrb[0].mxu0
    %4198 = vmatprep.mubr.f32.mxu0 0.0
    %4199 = vmatmul.mubr.f32.gmra.mrb[0].mxu0 %v3999
    %v4200 = vpop.f32.mrb[0].mxu0
    %v4201 = vadd.f32 %v4023, %v4200
    %v4202 = vpop.f32.mrb[0].mxu0
    %4203 = vmatprep.mubr.f32.mxu0 0.0
    %4204 = vmatmul.mubr.f32.gmra.mrb[0].mxu0 %v4000
    %v4205 = vpop.f32.mrb[0].mxu0
    %v4206 = vadd.f32 %v4023, %v4205
    %v4207 = vpop.f32.mrb[0].mxu0
    %4208 = vmatprep.mubr.f32.mxu0 0.0
    %4209 = vmatmul.mubr.f32.gmra.mrb[0].mxu0 %v4001
    %v4210 = vpop.f32.mrb[0].mxu0
    %v4211 = vadd.f32 %v4023, %v4210
    %v4212 = vpop.f32.mrb[0].mxu0
    %4213 = vdwg.mxu0
    %v4214 = vtanh.pop %v4091
    %v4215 = vtanh.pop %v4096
    %v4216 = vtanh.pop %v4101
    %v4217 = vtanh.pop %v4106
    %v4218 = vtanh.pop %v4111
    %v4219 = vtanh.pop %v4116
    %v4220 = vtanh.pop %v4121
    %v4221 = vtanh.pop %v4126
    %v4222 = vtanh.pop %v4131
    %v4223 = vtanh.pop %v4136
    %v4224 = vtanh.pop %v4141
    %v4225 = vtanh.pop %v4146
    %v4226 = vtanh.pop %v4151
    %v4227 = vtanh.pop %v4156
    %v4228 = vtanh.pop %v4161
    %v4229 = vtanh.pop %v4166
    %v4230 = vtanh.pop %v4171
    %v4231 = vtanh.pop %v4176
    %v4232 = vtanh.pop %v4181
    %v4233 = vtanh.pop %v4186
    %v4234 = vtanh.pop %v4191
    %v4235 = vtanh.pop %v4196
    %v4236 = vtanh.pop %v4201
    %v4237 = vtanh.pop %v4206
    %v4238 = vtanh.pop %v4211
    %s4239 = scalar_lea.vmem [#allocation2], 512
    %v4240 = vld [vmem:[%s4239] sm:$0xff]
    %v4241 = vld [vmem:[%s4239 + $0x8] sm:$0xff]
    %v4242 = vld [vmem:[%s4239 + $0x10] sm:$0xff]
    %v4243 = vld [vmem:[%s4239 + $0x18] sm:$0xff]
    %v4244 = vld [vmem:[%s4239 + $0x20] sm:$0xff]
    %v4245 = vld [vmem:[%s4239 + $0x28] sm:$0xff]
    %v4246 = vld [vmem:[%s4239 + $0x30] sm:$0xff]
    %v4247 = vld [vmem:[%s4239 + $0x38] sm:$0xff]
    %v4248 = vld [vmem:[%s4239 + $0x40] sm:$0xff]
    %v4249 = vld [vmem:[%s4239 + $0x48] sm:$0xff]
    %v4250 = vld [vmem:[%s4239 + $0x50] sm:$0xff]
    %v4251 = vld [vmem:[%s4239 + $0x58] sm:$0xff]
    %v4252 = vld [vmem:[%s4239 + $0x60] sm:$0xff]
    %v4253 = vld [vmem:[%s4239 + $0x68] sm:$0xff]
    %v4254 = vld [vmem:[%s4239 + $0x70] sm:$0xff]
    %v4255 = vld [vmem:[%s4239 + $0x78] sm:$0xff]
    %v4256 = vld [vmem:[%s2 + $0x4] sm:$0x1]
    %v4257 = vlaneseq
    %v4258 = vshrl.u32 %v4257, 7
    %v4259 = vsub.s32 0, %v4258
    %v4260 = vrot.slane %v4256, %v4259
    %4261 = vmatprep.subr.mxu0 0.0
    %4262 = vmatpush1.msra.mxu0 %v4240
    %4263 = vmatprep.subr.mxu0 0.0
    %4264 = vmatpush1.msra.mxu0 %v4241
    %4265 = vmatprep.subr.mxu0 0.0
    %4266 = vmatpush1.msra.mxu0 %v4242
    %4267 = vmatprep.subr.mxu0 0.0
    %4268 = vmatpush1.msra.mxu0 %v4243
    %4269 = vmatprep.subr.mxu0 0.0
    %4270 = vmatpush1.msra.mxu0 %v4244
    %4271 = vmatprep.subr.mxu0 0.0
    %4272 = vmatpush1.msra.mxu0 %v4245
    %4273 = vmatprep.subr.mxu0 0.0
    %4274 = vmatpush1.msra.mxu0 %v4246
    %4275 = vmatprep.subr.mxu0 0.0
    %4276 = vmatpush1.msra.mxu0 %v4247
    %4277 = vmatprep.subr.mxu0 0.0
    %4278 = vmatpush1.msra.mxu0 %v4248
    %4279 = vmatprep.subr.mxu0 0.0
    %4280 = vmatpush1.msra.mxu0 %v4249
    %4281 = vmatprep.subr.mxu0 0.0
    %4282 = vmatpush1.msra.mxu0 %v4250
    %4283 = vmatprep.subr.mxu0 0.0
    %4284 = vmatpush1.msra.mxu0 %v4251
    %4285 = vmatprep.subr.mxu0 0.0
    %4286 = vmatpush1.msra.mxu0 %v4252
    %4287 = vmatprep.subr.mxu0 0.0
    %4288 = vmatpush1.msra.mxu0 %v4253
    %4289 = vmatprep.subr.mxu0 0.0
    %4290 = vmatpush1.msra.mxu0 %v4254
    %4291 = vmatprep.subr.mxu0 0.0
    %4292 = vmatpush1.msra.mxu0 %v4255
    %4293 = vmatprep.subr.mxu0 0.0
    %4294 = vmatpush1.msra.mxu0 0.0
    %4295 = vmatprep.subr.mxu0 0.0
    %4296 = vmatpush1.msra.mxu0 0.0
    %4297 = vmatprep.subr.mxu0 0.0
    %4298 = vmatpush1.msra.mxu0 0.0
    %4299 = vmatprep.subr.mxu0 0.0
    %4300 = vmatpush1.msra.mxu0 0.0
    %4301 = vmatprep.subr.mxu0 0.0
    %4302 = vmatpush1.msra.mxu0 0.0
    %4303 = vmatprep.subr.mxu0 0.0
    %4304 = vmatpush1.msra.mxu0 0.0
    %4305 = vmatprep.subr.mxu0 0.0
    %4306 = vmatpush1.msra.mxu0 0.0
    %4307 = vmatprep.subr.mxu0 0.0
    %4308 = vmatpush1.msra.mxu0 0.0
    %4309 = vmatprep.subr.mxu0 0.0
    %4310 = vmatpush1.msra.mxu0 0.0
    %4311 = vmatprep.subr.mxu0 0.0
    %4312 = vmatpush1.msra.mxu0 0.0
    %4313 = vmatprep.subr.mxu0 0.0
    %4314 = vmatpush1.msra.mxu0 0.0
    %4315 = vmatprep.subr.mxu0 0.0
    %4316 = vmatpush1.msra.mxu0 0.0
    %4317 = vmatprep.subr.mxu0 0.0
    %4318 = vmatpush1.msra.mxu0 0.0
    %4319 = vmatprep.subr.mxu0 0.0
    %4320 = vmatpush1.msra.mxu0 0.0
    %4321 = vmatprep.subr.mxu0 0.0
    %4322 = vmatpush1.msra.mxu0 0.0
    %4323 = vmatprep.subr.mxu0 0.0
    %4324 = vmatpush1.msra.mxu0 0.0
    %4325 = vmatprep.mubr.f32.mxu0 0.0
    %4326 = vmatmul.mubr.f32.gmra.mrb[0].mxu0 %v4214
    %v4327 = vpop.f32.mrb[0].mxu0
    %v4328 = vadd.f32 %v4260, %v4327
    %v4329 = vpop.f32.mrb[0].mxu0
    %4330 = vmatprep.mubr.f32.mxu0 0.0
    %4331 = vmatmul.mubr.f32.gmra.mrb[0].mxu0 %v4215
    %v4332 = vpop.f32.mrb[0].mxu0
    %v4333 = vadd.f32 %v4260, %v4332
    %v4334 = vpop.f32.mrb[0].mxu0
    %4335 = vmatprep.mubr.f32.mxu0 0.0
    %4336 = vmatmul.mubr.f32.gmra.mrb[0].mxu0 %v4216
    %v4337 = vpop.f32.mrb[0].mxu0
    %v4338 = vadd.f32 %v4260, %v4337
    %v4339 = vpop.f32.mrb[0].mxu0
    %4340 = vmatprep.mubr.f32.mxu0 0.0
    %4341 = vmatmul.mubr.f32.gmra.mrb[0].mxu0 %v4217
    %v4342 = vpop.f32.mrb[0].mxu0
    %v4343 = vadd.f32 %v4260, %v4342
    %v4344 = vpop.f32.mrb[0].mxu0
    %4345 = vmatprep.mubr.f32.mxu0 0.0
    %4346 = vmatmul.mubr.f32.gmra.mrb[0].mxu0 %v4218
    %v4347 = vpop.f32.mrb[0].mxu0
    %v4348 = vadd.f32 %v4260, %v4347
    %v4349 = vpop.f32.mrb[0].mxu0
    %4350 = vmatprep.mubr.f32.mxu0 0.0
    %4351 = vmatmul.mubr.f32.gmra.mrb[0].mxu0 %v4219
    %v4352 = vpop.f32.mrb[0].mxu0
    %v4353 = vadd.f32 %v4260, %v4352
    %v4354 = vpop.f32.mrb[0].mxu0
    %4355 = vmatprep.mubr.f32.mxu0 0.0
    %4356 = vmatmul.mubr.f32.gmra.mrb[0].mxu0 %v4220
    %v4357 = vpop.f32.mrb[0].mxu0
    %v4358 = vadd.f32 %v4260, %v4357
    %v4359 = vpop.f32.mrb[0].mxu0
    %4360 = vmatprep.mubr.f32.mxu0 0.0
    %4361 = vmatmul.mubr.f32.gmra.mrb[0].mxu0 %v4221
    %v4362 = vpop.f32.mrb[0].mxu0
    %v4363 = vadd.f32 %v4260, %v4362
    %v4364 = vpop.f32.mrb[0].mxu0
    %4365 = vmatprep.mubr.f32.mxu0 0.0
    %4366 = vmatmul.mubr.f32.gmra.mrb[0].mxu0 %v4222
    %v4367 = vpop.f32.mrb[0].mxu0
    %v4368 = vadd.f32 %v4260, %v4367
    %v4369 = vpop.f32.mrb[0].mxu0
    %4370 = vmatprep.mubr.f32.mxu0 0.0
    %4371 = vmatmul.mubr.f32.gmra.mrb[0].mxu0 %v4223
    %v4372 = vpop.f32.mrb[0].mxu0
    %v4373 = vadd.f32 %v4260, %v4372
    %v4374 = vpop.f32.mrb[0].mxu0
    %4375 = vmatprep.mubr.f32.mxu0 0.0
    %4376 = vmatmul.mubr.f32.gmra.mrb[0].mxu0 %v4224
    %v4377 = vpop.f32.mrb[0].mxu0
    %v4378 = vadd.f32 %v4260, %v4377
    %v4379 = vpop.f32.mrb[0].mxu0
    %4380 = vmatprep.mubr.f32.mxu0 0.0
    %4381 = vmatmul.mubr.f32.gmra.mrb[0].mxu0 %v4225
    %v4382 = vpop.f32.mrb[0].mxu0
    %v4383 = vadd.f32 %v4260, %v4382
    %v4384 = vpop.f32.mrb[0].mxu0
    %4385 = vmatprep.mubr.f32.mxu0 0.0
    %4386 = vmatmul.mubr.f32.gmra.mrb[0].mxu0 %v4226
    %v4387 = vpop.f32.mrb[0].mxu0
    %v4388 = vadd.f32 %v4260, %v4387
    %v4389 = vpop.f32.mrb[0].mxu0
    %4390 = vmatprep.mubr.f32.mxu0 0.0
    %4391 = vmatmul.mubr.f32.gmra.mrb[0].mxu0 %v4227
    %v4392 = vpop.f32.mrb[0].mxu0
    %v4393 = vadd.f32 %v4260, %v4392
    %v4394 = vpop.f32.mrb[0].mxu0
    %4395 = vmatprep.mubr.f32.mxu0 0.0
    %4396 = vmatmul.mubr.f32.gmra.mrb[0].mxu0 %v4228
    %v4397 = vpop.f32.mrb[0].mxu0
    %v4398 = vadd.f32 %v4260, %v4397
    %v4399 = vpop.f32.mrb[0].mxu0
    %4400 = vmatprep.mubr.f32.mxu0 0.0
    %4401 = vmatmul.mubr.f32.gmra.mrb[0].mxu0 %v4229
    %v4402 = vpop.f32.mrb[0].mxu0
    %v4403 = vadd.f32 %v4260, %v4402
    %v4404 = vpop.f32.mrb[0].mxu0
    %4405 = vmatprep.mubr.f32.mxu0 0.0
    %4406 = vmatmul.mubr.f32.gmra.mrb[0].mxu0 %v4230
    %v4407 = vpop.f32.mrb[0].mxu0
    %v4408 = vadd.f32 %v4260, %v4407
    %v4409 = vpop.f32.mrb[0].mxu0
    %4410 = vmatprep.mubr.f32.mxu0 0.0
    %4411 = vmatmul.mubr.f32.gmra.mrb[0].mxu0 %v4231
    %v4412 = vpop.f32.mrb[0].mxu0
    %v4413 = vadd.f32 %v4260, %v4412
    %v4414 = vpop.f32.mrb[0].mxu0
    %4415 = vmatprep.mubr.f32.mxu0 0.0
    %4416 = vmatmul.mubr.f32.gmra.mrb[0].mxu0 %v4232
    %v4417 = vpop.f32.mrb[0].mxu0
    %v4418 = vadd.f32 %v4260, %v4417
    %v4419 = vpop.f32.mrb[0].mxu0
    %4420 = vmatprep.mubr.f32.mxu0 0.0
    %4421 = vmatmul.mubr.f32.gmra.mrb[0].mxu0 %v4233
    %v4422 = vpop.f32.mrb[0].mxu0
    %v4423 = vadd.f32 %v4260, %v4422
    %v4424 = vpop.f32.mrb[0].mxu0
    %4425 = vmatprep.mubr.f32.mxu0 0.0
    %4426 = vmatmul.mubr.f32.gmra.mrb[0].mxu0 %v4234
    %v4427 = vpop.f32.mrb[0].mxu0
    %v4428 = vadd.f32 %v4260, %v4427
    %v4429 = vpop.f32.mrb[0].mxu0
    %4430 = vmatprep.mubr.f32.mxu0 0.0
    %4431 = vmatmul.mubr.f32.gmra.mrb[0].mxu0 %v4235
    %v4432 = vpop.f32.mrb[0].mxu0
    %v4433 = vadd.f32 %v4260, %v4432
    %v4434 = vpop.f32.mrb[0].mxu0
    %4435 = vmatprep.mubr.f32.mxu0 0.0
    %4436 = vmatmul.mubr.f32.gmra.mrb[0].mxu0 %v4236
    %v4437 = vpop.f32.mrb[0].mxu0
    %v4438 = vadd.f32 %v4260, %v4437
    %v4439 = vpop.f32.mrb[0].mxu0
    %4440 = vmatprep.mubr.f32.mxu0 0.0
    %4441 = vmatmul.mubr.f32.gmra.mrb[0].mxu0 %v4237
    %v4442 = vpop.f32.mrb[0].mxu0
    %v4443 = vadd.f32 %v4260, %v4442
    %v4444 = vpop.f32.mrb[0].mxu0
    %4445 = vmatprep.mubr.f32.mxu0 0.0
    %4446 = vmatmul.mubr.f32.gmra.mrb[0].mxu0 %v4238
    %v4447 = vpop.f32.mrb[0].mxu0
    %v4448 = vadd.f32 %v4260, %v4447
    %v4449 = vpop.f32.mrb[0].mxu0
    %4450 = vdwg.mxu0
    %v4451 = vrsqrt.pop %v157
    %v4452 = vrsqrt.pop %v158
    %v4453 = vrsqrt.pop %v159
    %v4454 = vrsqrt.pop %v160
    %v4455 = vrsqrt.pop %v161
    %v4456 = vrsqrt.pop %v162
    %v4457 = vrsqrt.pop %v163
    %v4458 = vrsqrt.pop %v164
    %v4459 = vrsqrt.pop %v165
    %v4460 = vrsqrt.pop %v166
    %v4461 = vrsqrt.pop %v167
    %v4462 = vrsqrt.pop %v168
    %v4463 = vrsqrt.pop %v169
    %v4464 = vrsqrt.pop %v170
    %v4465 = vrsqrt.pop %v171
    %v4466 = vrsqrt.pop %v172
    %v4467 = vrsqrt.pop %v173
    %v4468 = vrsqrt.pop %v174
    %v4469 = vrsqrt.pop %v175
    %v4470 = vrsqrt.pop %v176
    %v4471 = vrsqrt.pop %v177
    %v4472 = vrsqrt.pop %v178
    %v4473 = vrsqrt.pop %v179
    %v4474 = vrsqrt.pop %v180
    %v4475 = vrsqrt.pop %v181
    %4477 = vset.pattern.permute.xlu0 0
    %4478 = vperm.xlu0 %4477, %v4451
    %v4479 = vpop.permute.xlu0 %4478
    %4482 = vset.pattern.permute.xlu0 0
    %4483 = vperm.xlu0 %4482, %v4452
    %v4484 = vpop.permute.xlu0 %4483
    %4487 = vset.pattern.permute.xlu0 0
    %4488 = vperm.xlu0 %4487, %v4453
    %v4489 = vpop.permute.xlu0 %4488
    %4492 = vset.pattern.permute.xlu0 0
    %4493 = vperm.xlu0 %4492, %v4454
    %v4494 = vpop.permute.xlu0 %4493
    %4497 = vset.pattern.permute.xlu0 0
    %4498 = vperm.xlu0 %4497, %v4455
    %v4499 = vpop.permute.xlu0 %4498
    %4502 = vset.pattern.permute.xlu0 0
    %4503 = vperm.xlu0 %4502, %v4456
    %v4504 = vpop.permute.xlu0 %4503
    %4507 = vset.pattern.permute.xlu0 0
    %4508 = vperm.xlu0 %4507, %v4457
    %v4509 = vpop.permute.xlu0 %4508
    %4512 = vset.pattern.permute.xlu0 0
    %4513 = vperm.xlu0 %4512, %v4458
    %v4514 = vpop.permute.xlu0 %4513
    %4517 = vset.pattern.permute.xlu0 0
    %4518 = vperm.xlu0 %4517, %v4459
    %v4519 = vpop.permute.xlu0 %4518
    %4522 = vset.pattern.permute.xlu0 0
    %4523 = vperm.xlu0 %4522, %v4460
    %v4524 = vpop.permute.xlu0 %4523
    %4527 = vset.pattern.permute.xlu0 0
    %4528 = vperm.xlu0 %4527, %v4461
    %v4529 = vpop.permute.xlu0 %4528
    %4532 = vset.pattern.permute.xlu0 0
    %4533 = vperm.xlu0 %4532, %v4462
    %v4534 = vpop.permute.xlu0 %4533
    %4537 = vset.pattern.permute.xlu0 0
    %4538 = vperm.xlu0 %4537, %v4463
    %v4539 = vpop.permute.xlu0 %4538
    %4542 = vset.pattern.permute.xlu0 0
    %4543 = vperm.xlu0 %4542, %v4464
    %v4544 = vpop.permute.xlu0 %4543
    %4547 = vset.pattern.permute.xlu0 0
    %4548 = vperm.xlu0 %4547, %v4465
    %v4549 = vpop.permute.xlu0 %4548
    %4552 = vset.pattern.permute.xlu0 0
    %4553 = vperm.xlu0 %4552, %v4466
    %v4554 = vpop.permute.xlu0 %4553
    %4557 = vset.pattern.permute.xlu0 0
    %4558 = vperm.xlu0 %4557, %v4467
    %v4559 = vpop.permute.xlu0 %4558
    %4562 = vset.pattern.permute.xlu0 0
    %4563 = vperm.xlu0 %4562, %v4468
    %v4564 = vpop.permute.xlu0 %4563
    %4567 = vset.pattern.permute.xlu0 0
    %4568 = vperm.xlu0 %4567, %v4469
    %v4569 = vpop.permute.xlu0 %4568
    %4572 = vset.pattern.permute.xlu0 0
    %4573 = vperm.xlu0 %4572, %v4470
    %v4574 = vpop.permute.xlu0 %4573
    %4577 = vset.pattern.permute.xlu0 0
    %4578 = vperm.xlu0 %4577, %v4471
    %v4579 = vpop.permute.xlu0 %4578
    %4582 = vset.pattern.permute.xlu0 0
    %4583 = vperm.xlu0 %4582, %v4472
    %v4584 = vpop.permute.xlu0 %4583
    %4587 = vset.pattern.permute.xlu0 0
    %4588 = vperm.xlu0 %4587, %v4473
    %v4589 = vpop.permute.xlu0 %4588
    %4592 = vset.pattern.permute.xlu0 0
    %4593 = vperm.xlu0 %4592, %v4474
    %v4594 = vpop.permute.xlu0 %4593
    %4597 = vset.pattern.permute.xlu0 0
    %4598 = vperm.xlu0 %4597, %v4475
    %v4599 = vpop.permute.xlu0 %4598
    %v4601 = vmul.f32 %v4328, %v4479
    %v4602 = vmul.f32 %v4333, %v4484
    %v4603 = vmul.f32 %v4338, %v4489
    %v4604 = vmul.f32 %v4343, %v4494
    %v4605 = vmul.f32 %v4348, %v4499
    %v4606 = vmul.f32 %v4353, %v4504
    %v4607 = vmul.f32 %v4358, %v4509
    %v4608 = vmul.f32 %v4363, %v4514
    %v4609 = vmul.f32 %v4368, %v4519
    %v4610 = vmul.f32 %v4373, %v4524
    %v4611 = vmul.f32 %v4378, %v4529
    %v4612 = vmul.f32 %v4383, %v4534
    %v4613 = vmul.f32 %v4388, %v4539
    %v4614 = vmul.f32 %v4393, %v4544
    %v4615 = vmul.f32 %v4398, %v4549
    %v4616 = vmul.f32 %v4403, %v4554
    %v4617 = vmul.f32 %v4408, %v4559
    %v4618 = vmul.f32 %v4413, %v4564
    %v4619 = vmul.f32 %v4418, %v4569
    %v4620 = vmul.f32 %v4423, %v4574
    %v4621 = vmul.f32 %v4428, %v4579
    %v4622 = vmul.f32 %v4433, %v4584
    %v4623 = vmul.f32 %v4438, %v4589
    %v4624 = vmul.f32 %v4443, %v4594
    %v4625 = vmul.f32 %v4448, %v4599
    %v4626 = vmul.f32 %v207, %v207
    %v4627 = vmul.f32 %v208, %v208
    %v4628 = vmul.f32 %v209, %v209
    %v4629 = vmul.f32 %v210, %v210
    %v4630 = vmul.f32 %v211, %v211
    %v4631 = vmul.f32 %v212, %v212
    %v4632 = vmul.f32 %v213, %v213
    %v4633 = vmul.f32 %v214, %v214
    %v4634 = vmul.f32 %v215, %v215
    %v4635 = vmul.f32 %v216, %v216
    %v4636 = vmul.f32 %v217, %v217
    %v4637 = vmul.f32 %v218, %v218
    %v4638 = vmul.f32 %v219, %v219
    %v4639 = vmul.f32 %v220, %v220
    %v4640 = vmul.f32 %v221, %v221
    %v4641 = vmul.f32 %v222, %v222
    %v4642 = vmul.f32 %v223, %v223
    %v4643 = vmul.f32 %v224, %v224
    %v4644 = vmul.f32 %v225, %v225
    %v4645 = vmul.f32 %v226, %v226
    %v4646 = vmul.f32 %v227, %v227
    %v4647 = vmul.f32 %v228, %v228
    %v4648 = vmul.f32 %v229, %v229
    %v4649 = vmul.f32 %v230, %v230
    %v4650 = vmul.f32 %v231, %v231
    %4652 = vset.pattern.permute.xlu0 0
    %4653 = vperm.xlu0 %4652, %v4626
    %v4654 = vpop.permute.xlu0 %4653
    %4657 = vset.pattern.permute.xlu0 0
    %4658 = vperm.xlu0 %4657, %v4627
    %v4659 = vpop.permute.xlu0 %4658
    %4662 = vset.pattern.permute.xlu0 0
    %4663 = vperm.xlu0 %4662, %v4628
    %v4664 = vpop.permute.xlu0 %4663
    %4667 = vset.pattern.permute.xlu0 0
    %4668 = vperm.xlu0 %4667, %v4629
    %v4669 = vpop.permute.xlu0 %4668
    %4672 = vset.pattern.permute.xlu0 0
    %4673 = vperm.xlu0 %4672, %v4630
    %v4674 = vpop.permute.xlu0 %4673
    %4677 = vset.pattern.permute.xlu0 0
    %4678 = vperm.xlu0 %4677, %v4631
    %v4679 = vpop.permute.xlu0 %4678
    %4682 = vset.pattern.permute.xlu0 0
    %4683 = vperm.xlu0 %4682, %v4632
    %v4684 = vpop.permute.xlu0 %4683
    %4687 = vset.pattern.permute.xlu0 0
    %4688 = vperm.xlu0 %4687, %v4633
    %v4689 = vpop.permute.xlu0 %4688
    %4692 = vset.pattern.permute.xlu0 0
    %4693 = vperm.xlu0 %4692, %v4634
    %v4694 = vpop.permute.xlu0 %4693
    %4697 = vset.pattern.permute.xlu0 0
    %4698 = vperm.xlu0 %4697, %v4635
    %v4699 = vpop.permute.xlu0 %4698
    %4702 = vset.pattern.permute.xlu0 0
    %4703 = vperm.xlu0 %4702, %v4636
    %v4704 = vpop.permute.xlu0 %4703
    %4707 = vset.pattern.permute.xlu0 0
    %4708 = vperm.xlu0 %4707, %v4637
    %v4709 = vpop.permute.xlu0 %4708
    %4712 = vset.pattern.permute.xlu0 0
    %4713 = vperm.xlu0 %4712, %v4638
    %v4714 = vpop.permute.xlu0 %4713
    %4717 = vset.pattern.permute.xlu0 0
    %4718 = vperm.xlu0 %4717, %v4639
    %v4719 = vpop.permute.xlu0 %4718
    %4722 = vset.pattern.permute.xlu0 0
    %4723 = vperm.xlu0 %4722, %v4640
    %v4724 = vpop.permute.xlu0 %4723
    %4727 = vset.pattern.permute.xlu0 0
    %4728 = vperm.xlu0 %4727, %v4641
    %v4729 = vpop.permute.xlu0 %4728
    %4732 = vset.pattern.permute.xlu0 0
    %4733 = vperm.xlu0 %4732, %v4642
    %v4734 = vpop.permute.xlu0 %4733
    %4737 = vset.pattern.permute.xlu0 0
    %4738 = vperm.xlu0 %4737, %v4643
    %v4739 = vpop.permute.xlu0 %4738
    %4742 = vset.pattern.permute.xlu0 0
    %4743 = vperm.xlu0 %4742, %v4644
    %v4744 = vpop.permute.xlu0 %4743
    %4747 = vset.pattern.permute.xlu0 0
    %4748 = vperm.xlu0 %4747, %v4645
    %v4749 = vpop.permute.xlu0 %4748
    %4752 = vset.pattern.permute.xlu0 0
    %4753 = vperm.xlu0 %4752, %v4646
    %v4754 = vpop.permute.xlu0 %4753
    %4757 = vset.pattern.permute.xlu0 0
    %4758 = vperm.xlu0 %4757, %v4647
    %v4759 = vpop.permute.xlu0 %4758
    %4762 = vset.pattern.permute.xlu0 0
    %4763 = vperm.xlu0 %4762, %v4648
    %v4764 = vpop.permute.xlu0 %4763
    %4767 = vset.pattern.permute.xlu0 0
    %4768 = vperm.xlu0 %4767, %v4649
    %v4769 = vpop.permute.xlu0 %4768
    %4772 = vset.pattern.permute.xlu0 0
    %4773 = vperm.xlu0 %4772, %v4650
    %v4774 = vpop.permute.xlu0 %4773
    %v4776 = vmul.f32 %v3092, %v4654
    %v4777 = vmul.f32 %v3093, %v4659
    %v4778 = vmul.f32 %v3094, %v4664
    %v4779 = vmul.f32 %v3095, %v4669
    %v4780 = vmul.f32 %v3096, %v4674
    %v4781 = vmul.f32 %v3097, %v4679
    %v4782 = vmul.f32 %v3098, %v4684
    %v4783 = vmul.f32 %v3099, %v4689
    %v4784 = vmul.f32 %v3100, %v4694
    %v4785 = vmul.f32 %v3101, %v4699
    %v4786 = vmul.f32 %v3102, %v4704
    %v4787 = vmul.f32 %v3103, %v4709
    %v4788 = vmul.f32 %v3104, %v4714
    %v4789 = vmul.f32 %v3105, %v4719
    %v4790 = vmul.f32 %v3106, %v4724
    %v4791 = vmul.f32 %v3107, %v4729
    %v4792 = vmul.f32 %v3108, %v4734
    %v4793 = vmul.f32 %v3109, %v4739
    %v4794 = vmul.f32 %v3110, %v4744
    %v4795 = vmul.f32 %v3111, %v4749
    %v4796 = vmul.f32 %v3112, %v4754
    %v4797 = vmul.f32 %v3113, %v4759
    %v4798 = vmul.f32 %v3114, %v4764
    %v4799 = vmul.f32 %v3115, %v4769
    %v4800 = vmul.f32 %v3116, %v4774
    %v4801 = vsub.f32 %v4601, %v4776
    %v4802 = vsub.f32 %v4602, %v4777
    %v4803 = vsub.f32 %v4603, %v4778
    %v4804 = vsub.f32 %v4604, %v4779
    %v4805 = vsub.f32 %v4605, %v4780
    %v4806 = vsub.f32 %v4606, %v4781
    %v4807 = vsub.f32 %v4607, %v4782
    %v4808 = vsub.f32 %v4608, %v4783
    %v4809 = vsub.f32 %v4609, %v4784
    %v4810 = vsub.f32 %v4610, %v4785
    %v4811 = vsub.f32 %v4611, %v4786
    %v4812 = vsub.f32 %v4612, %v4787
    %v4813 = vsub.f32 %v4613, %v4788
    %v4814 = vsub.f32 %v4614, %v4789
    %v4815 = vsub.f32 %v4615, %v4790
    %v4816 = vsub.f32 %v4616, %v4791
    %v4817 = vsub.f32 %v4617, %v4792
    %v4818 = vsub.f32 %v4618, %v4793
    %v4819 = vsub.f32 %v4619, %v4794
    %v4820 = vsub.f32 %v4620, %v4795
    %v4821 = vsub.f32 %v4621, %v4796
    %v4822 = vsub.f32 %v4622, %v4797
    %v4823 = vsub.f32 %v4623, %v4798
    %v4824 = vsub.f32 %v4624, %v4799
    %v4825 = vsub.f32 %v4625, %v4800
    %4826 = vst [vmem:[#allocation5] sm:$0xff] %v4801
    %4827 = vst [vmem:[#allocation5 + $0x8] sm:$0xff] %v4802
    %4828 = vst [vmem:[#allocation5 + $0x10] sm:$0xff] %v4803
    %4829 = vst [vmem:[#allocation5 + $0x18] sm:$0xff] %v4804
    %4830 = vst [vmem:[#allocation5 + $0x20] sm:$0xff] %v4805
    %4831 = vst [vmem:[#allocation5 + $0x28] sm:$0xff] %v4806
    %4832 = vst [vmem:[#allocation5 + $0x30] sm:$0xff] %v4807
    %4833 = vst [vmem:[#allocation5 + $0x38] sm:$0xff] %v4808
    %4834 = vst [vmem:[#allocation5 + $0x40] sm:$0xff] %v4809
    %4835 = vst [vmem:[#allocation5 + $0x48] sm:$0xff] %v4810
    %4836 = vst [vmem:[#allocation5 + $0x50] sm:$0xff] %v4811
    %4837 = vst [vmem:[#allocation5 + $0x58] sm:$0xff] %v4812
    %4838 = vst [vmem:[#allocation5 + $0x60] sm:$0xff] %v4813
    %4839 = vst [vmem:[#allocation5 + $0x68] sm:$0xff] %v4814
    %4840 = vst [vmem:[#allocation5 + $0x70] sm:$0xff] %v4815
    %4841 = vst [vmem:[#allocation5 + $0x78] sm:$0xff] %v4816
    %4842 = vst [vmem:[#allocation5 + $0x80] sm:$0xff] %v4817
    %4843 = vst [vmem:[#allocation5 + $0x88] sm:$0xff] %v4818
    %4844 = vst [vmem:[#allocation5 + $0x90] sm:$0xff] %v4819
    %4845 = vst [vmem:[#allocation5 + $0x98] sm:$0xff] %v4820
    %4846 = vst [vmem:[#allocation5 + $0xa0] sm:$0xff] %v4821
    %4847 = vst [vmem:[#allocation5 + $0xa8] sm:$0xff] %v4822
    %4848 = vst [vmem:[#allocation5 + $0xb0] sm:$0xff] %v4823
    %4849 = vst [vmem:[#allocation5 + $0xb8] sm:$0xff] %v4824
    %4850 = vst [vmem:[#allocation5 + $0xc0] sm:$0xff] %v4825
    // Predicated region
    $region22: #{tpu_custom_call.1} parent=1 // pred_check
      _
    $region23: #{tpu_custom_call.1} parent=1 // pred_check_branch
      %4852 = sbr.rel (0) target = $region25
    $region24: #{tpu_custom_call.1} parent=1 // pred_region
      %s4854 = ssub.s32 3200, 3200
      %4855 = vsyncadd [#allocation4], %s4854
      %s4856 = sshll.u32 [#allocation5], 4
      %s4857 = int_to_ptr.vmem [resolvable:$true] %s4856
      %4862 = dma.vmem_to_hbm [thread:$0]  %s4857, 3200, %s4, [#allocation4], 128, 128, 8
    $region25: #{tpu_custom_call.1} parent=1 // pred_fallthru
      _
    // Predicated region
    $region26: #{tpu_custom_call.1} parent=1 // pred_check
      _
    $region27: #{tpu_custom_call.1} parent=1 // pred_check_branch
      %4864 = sbr.rel (0) target = $region29
    $region28: #{tpu_custom_call.1} parent=1 // pred_region
      %4865 = dma.done [#allocation4], 3200
    $region29: #{tpu_custom_call.1} parent=1 // pred_fallthru
      _
    %4866 = vsyncpa [#allocation3], 1
    %4867 = vsyncpa [#allocation4], 1

</llo_original>
